<compile_context>
chip_gen: v7x
topology: tpu7x:2x2x1
jax: 0.10.0
libtpu: 0.0.40
codegen_flags: <defaults>
</compile_context>

<pallas_src>
import math
import functools

import jax
import jax.numpy as jnp
from jax.experimental import pallas as pl
from jax.experimental.pallas import tpu as pltpu

# ---- model hyperparameters (from the PyTorch module) ----
d_k = d_v = 64
d_model = 512
n_heads = 8
d_ff = 2048
LN_EPS = 1e-5


def _layernorm(x):
    # LayerNorm over last dim, gamma=1, beta=0, eps=1e-5 (PyTorch default), f32.
    mean = jnp.mean(x, axis=-1, keepdims=True)
    var = jnp.mean((x - mean) ** 2, axis=-1, keepdims=True)
    return (x - mean) * jax.lax.rsqrt(var + LN_EPS)


# ---------------------------------------------------------------------------
# Fused kernel: MHA + residual + LN + FFN + residual + LN   (one batch / step)
# ---------------------------------------------------------------------------
def encoder_layer_kernel(x_ref, mask_ref, wqkv_ref, wo_ref, w1_ref, w2_ref,
                         out_ref, attn_ref, ctx_ref):
    xb = x_ref[0].astype(jnp.float32)            # [S, d_model]  (residual, f32)
    mask = mask_ref[0]                           # [S, S] int32 (nonzero = masked)
    masked = mask != 0

    xb_bf = xb.astype(jnp.bfloat16)

    # Fused Q/K/V projection: [S, 512] @ [512, 1536] -> [S, 1536], f32 accum.
    qkv = jnp.dot(xb_bf, wqkv_ref[...], preferred_element_type=jnp.float32)
    Q = qkv[:, 0 * n_heads * d_k:1 * n_heads * d_k]
    K = qkv[:, 1 * n_heads * d_k:2 * n_heads * d_k]
    V = qkv[:, 2 * n_heads * d_k:3 * n_heads * d_k]

    Qb = Q.astype(jnp.bfloat16)
    Kb = K.astype(jnp.bfloat16)
    Vb = V.astype(jnp.bfloat16)

    scale = jnp.float32(1.0 / math.sqrt(d_k))

    for h in range(n_heads):                     # static unrolled loop over heads
        Qh = Qb[:, h * d_k:(h + 1) * d_k]
        Kh = Kb[:, h * d_k:(h + 1) * d_k]
        Vh = Vb[:, h * d_v:(h + 1) * d_v]

        # scores in f32, softmax in f32 (v5e-safe), MXU inputs bf16.
        scores = jnp.dot(Qh, Kh.T, preferred_element_type=jnp.float32) * scale
        scores = jnp.where(masked, jnp.float32(-1e9), scores)
        m = jnp.max(scores, axis=-1, keepdims=True)
        e = jnp.exp(scores - m)
        denom = jnp.sum(e, axis=-1, keepdims=True)
        attn_h = e * pl.reciprocal(denom, approx=True)        # softmax(dim=-1)
        attn_ref[0, h] = attn_h

        # Write head context into the VMEM scratch slab (no concatenate).
        ctx_ref[:, h * d_v:(h + 1) * d_v] = jnp.dot(
            attn_h.astype(jnp.bfloat16), Vh, preferred_element_type=jnp.float32)

    # Output projection + residual + LayerNorm (f32).
    context = ctx_ref[...].astype(jnp.bfloat16)                # [S, H*d_v]
    attn_out = jnp.dot(context, wo_ref[...], preferred_element_type=jnp.float32)
    y = _layernorm(attn_out + xb)                              # [S, d_model] f32

    # Position-wise FFN + residual + LayerNorm.
    yb = y.astype(jnp.bfloat16)
    hdn = jnp.dot(yb, w1_ref[...], preferred_element_type=jnp.float32)   # [S, d_ff]
    hdn = jnp.maximum(hdn, 0.0)                                          # ReLU
    ffn = jnp.dot(hdn.astype(jnp.bfloat16), w2_ref[...],
                  preferred_element_type=jnp.float32)                    # [S, d_model]
    out_ref[0] = _layernorm(ffn + y)


# ---------------------------------------------------------------------------
# Wrapper
# ---------------------------------------------------------------------------
@jax.jit
def encoder_layer(enc_inputs, enc_self_attn_mask, params):
    """enc_inputs: [B, S, d_model] f32; enc_self_attn_mask: [B, S, S] bool."""
    B, S, D = enc_inputs.shape
    assert D == d_model
    mask_i32 = enc_self_attn_mask.astype(jnp.int32)

    # Pre-cast / pack weights once (bf16 MXU operands, fused QKV).
    wqkv = jnp.concatenate(
        [params["wq"], params["wk"], params["wv"]], axis=1).astype(jnp.bfloat16)
    wo = params["wo"].astype(jnp.bfloat16)
    w1 = params["w1"].astype(jnp.bfloat16)
    w2 = params["w2"].astype(jnp.bfloat16)

    cparams = pltpu.CompilerParams(
        dimension_semantics=("parallel",),
        vmem_limit_bytes=40 * 1024 * 1024,       # fits v7x's 64 MiB VMEM
    )

    full = lambda b: (0, 0)                      # grid-invariant weight blocks

    enc_outputs, attn_probs = pl.pallas_call(
        encoder_layer_kernel,
        out_shape=(
            jax.ShapeDtypeStruct((B, S, d_model), jnp.float32),
            jax.ShapeDtypeStruct((B, n_heads, S, S), jnp.float32),
        ),
        grid_spec=pltpu.PrefetchScalarGridSpec(
            num_scalar_prefetch=0,
            grid=(B,),
            in_specs=[
                pl.BlockSpec((1, S, d_model), lambda b: (b, 0, 0)),
                pl.BlockSpec((1, S, S), lambda b: (b, 0, 0)),
                pl.BlockSpec((d_model, 3 * n_heads * d_k), full),
                pl.BlockSpec((n_heads * d_v, d_model), full),
                pl.BlockSpec((d_model, d_ff), full),
                pl.BlockSpec((d_ff, d_model), full),
            ],
            out_specs=[
                pl.BlockSpec((1, S, d_model), lambda b: (b, 0, 0)),
                pl.BlockSpec((1, n_heads, S, S), lambda b: (b, 0, 0, 0)),
            ],
            scratch_shapes=[pltpu.VMEM((S, n_heads * d_v), jnp.float32)],
        ),
        compiler_params=cparams,
    )(enc_inputs, mask_i32, wqkv, wo, w1, w2)

    return enc_outputs, attn_probs


# ---------------------------------------------------------------------------
# Pure-JAX f32 reference (mirrors the PyTorch forward) for a correctness check
# ---------------------------------------------------------------------------
def encoder_layer_ref(x, mask, params):
    B, S, _ = x.shape
    Q = (x @ params["wq"]).reshape(B, S, n_heads, d_k).transpose(0, 2, 1, 3)
    K = (x @ params["wk"]).reshape(B, S, n_heads, d_k).transpose(0, 2, 1, 3)
    V = (x @ params["wv"]).reshape(B, S, n_heads, d_v).transpose(0, 2, 1, 3)
    scores = jnp.einsum("bhqd,bhkd->bhqk", Q, K) / math.sqrt(d_k)
    scores = jnp.where(mask[:, None, :, :], -1e9, scores)
    attn = jax.nn.softmax(scores, axis=-1)
    ctx = jnp.einsum("bhqk,bhkd->bhqd", attn, V)
    ctx = ctx.transpose(0, 2, 1, 3).reshape(B, S, n_heads * d_v)
    out = _layernorm(ctx @ params["wo"] + x)
    ffn = jnp.maximum(out @ params["w1"], 0.0) @ params["w2"]
    return _layernorm(ffn + out), attn


def init_params(key):
    ks = jax.random.split(key, 6)

    def linear_w(k, fan_in, fan_out):
        bound = 1.0 / math.sqrt(fan_in)   # PyTorch nn.Linear default init range
        return jax.random.uniform(k, (fan_in, fan_out), jnp.float32, -bound, bound)

    return {
        "wq": linear_w(ks[0], d_model, n_heads * d_k),
        "wk": linear_w(ks[1], d_model, n_heads * d_k),
        "wv": linear_w(ks[2], d_model, n_heads * d_v),
        "wo": linear_w(ks[3], n_heads * d_v, d_model),
        "w1": linear_w(ks[4], d_model, d_ff),
        "w2": linear_w(ks[5], d_ff, d_model),
    }


if __name__ == "__main__":
    key = jax.random.PRNGKey(0)
    k_x, k_m, k_p = jax.random.split(key, 3)

    B, S = 2, 8
    enc_inputs = jax.random.normal(k_x, (B, S, d_model), jnp.float32)
    enc_self_attn_mask = jax.random.bernoulli(k_m, 0.2, (B, S, S))  # True = masked
    params = init_params(k_p)

    out, attn = encoder_layer(enc_inputs, enc_self_attn_mask, params)
    out, attn = jax.block_until_ready((out, attn))

    ref_out, ref_attn = encoder_layer_ref(enc_inputs, enc_self_attn_mask, params)
    assert out.shape == (B, S, d_model) and attn.shape == (B, n_heads, S, S)
    # bf16 MXU operands + approx softmax reciprocal -> loosened tolerances.
    assert jnp.allclose(out, ref_out, atol=5e-2, rtol=5e-2)
    assert jnp.allclose(attn, ref_attn, atol=1e-2, rtol=1e-2)

    print("KERNEL_OK")
</pallas_src>

<mosaic_0001>
module attributes {stable_mosaic.version = 11 : i64} {
  func.func @encoder_layer_kernel(%arg0: i32, %arg1: memref<1x8x512xf32, #tpu.memory_space<vmem>>, %arg2: memref<1x8x8xi32, #tpu.memory_space<vmem>>, %arg3: memref<512x1536xbf16, #tpu.memory_space<vmem>>, %arg4: memref<512x512xbf16, #tpu.memory_space<vmem>>, %arg5: memref<512x2048xbf16, #tpu.memory_space<vmem>>, %arg6: memref<2048x512xbf16, #tpu.memory_space<vmem>>, %arg7: memref<1x8x512xf32, #tpu.memory_space<vmem>>, %arg8: memref<1x8x8x8xf32, #tpu.memory_space<vmem>>, %arg9: memref<8x512xf32, #tpu.memory_space<vmem>>) attributes {dimension_semantics = [#tpu.dimension_semantics<parallel>], iteration_bounds = array<i64: 2>, scalar_prefetch = 0 : i64, scratch_operands = 1 : i64, tpu.core_type = #tpu.core_type<tc>, window_params = [{transform_indices = @transform_0, window_bounds = array<i64: 1, 8, 512>}, {transform_indices = @transform_1, window_bounds = array<i64: 1, 8, 8>}, {pipeline_mode = #tpu.pipeline_mode<synchronous>, transform_indices = @transform_2, window_bounds = array<i64: 512, 1536>}, {pipeline_mode = #tpu.pipeline_mode<synchronous>, transform_indices = @transform_3, window_bounds = array<i64: 512, 512>}, {pipeline_mode = #tpu.pipeline_mode<synchronous>, transform_indices = @transform_4, window_bounds = array<i64: 512, 2048>}, {pipeline_mode = #tpu.pipeline_mode<synchronous>, transform_indices = @transform_5, window_bounds = array<i64: 2048, 512>}, {transform_indices = @transform_6, window_bounds = array<i64: 1, 8, 512>}, {transform_indices = @transform_7, window_bounds = array<i64: 1, 8, 8, 8>}]} {
    %c0 = arith.constant 0 : index
    %c0_0 = arith.constant 0 : index
    %c0_1 = arith.constant 0 : index
    %0 = vector.load %arg1[%c0, %c0_0, %c0_1] : memref<1x8x512xf32, #tpu.memory_space<vmem>>, vector<1x8x512xf32>
    %1 = vector.shape_cast %0 : vector<1x8x512xf32> to vector<8x512xf32>
    %c0_2 = arith.constant 0 : index
    %c0_3 = arith.constant 0 : index
    %c0_4 = arith.constant 0 : index
    %2 = vector.load %arg2[%c0_2, %c0_3, %c0_4] : memref<1x8x8xi32, #tpu.memory_space<vmem>>, vector<1x8x8xi32>
    %3 = vector.shape_cast %2 : vector<1x8x8xi32> to vector<8x8xi32>
    %c0_i32 = arith.constant 0 : i32
    %4 = vector.broadcast %c0_i32 : i32 to vector<8x8xi32>
    %5 = arith.cmpi ne, %3, %4 : vector<8x8xi32>
    %6 = arith.truncf %1 : vector<8x512xf32> to vector<8x512xbf16>
    %c0_5 = arith.constant 0 : index
    %c0_6 = arith.constant 0 : index
    %7 = vector.load %arg3[%c0_5, %c0_6] : memref<512x1536xbf16, #tpu.memory_space<vmem>>, vector<512x1536xbf16>
    %cst = arith.constant dense<0.000000e+00> : vector<8x1536xf32>
    %8 = tpu.matmul %6, %7, %cst {dimension_numbers = #tpu.dot_dimension_numbers<[1], [0], [0], [1], [0, 0, 1, 1], [], []>} : vector<8x512xbf16>, vector<512x1536xbf16>, vector<8x1536xf32> -> vector<8x1536xf32>
    %9 = vector.extract_strided_slice %8 {offsets = [0, 0], sizes = [8, 512], strides = [1, 1]} : vector<8x1536xf32> to vector<8x512xf32>
    %10 = vector.extract_strided_slice %8 {offsets = [0, 512], sizes = [8, 512], strides = [1, 1]} : vector<8x1536xf32> to vector<8x512xf32>
    %11 = vector.extract_strided_slice %8 {offsets = [0, 1024], sizes = [8, 512], strides = [1, 1]} : vector<8x1536xf32> to vector<8x512xf32>
    %12 = arith.truncf %9 : vector<8x512xf32> to vector<8x512xbf16>
    %13 = arith.truncf %10 : vector<8x512xf32> to vector<8x512xbf16>
    %14 = arith.truncf %11 : vector<8x512xf32> to vector<8x512xbf16>
    %15 = vector.extract_strided_slice %12 {offsets = [0, 0], sizes = [8, 64], strides = [1, 1]} : vector<8x512xbf16> to vector<8x64xbf16>
    %16 = vector.extract_strided_slice %13 {offsets = [0, 0], sizes = [8, 64], strides = [1, 1]} : vector<8x512xbf16> to vector<8x64xbf16>
    %17 = vector.extract_strided_slice %14 {offsets = [0, 0], sizes = [8, 64], strides = [1, 1]} : vector<8x512xbf16> to vector<8x64xbf16>
    %18 = tpu.transpose %16, [1, 0] : vector<8x64xbf16> -> vector<64x8xbf16>
    %cst_7 = arith.constant dense<0.000000e+00> : vector<8x8xf32>
    %19 = tpu.matmul %15, %18, %cst_7 {dimension_numbers = #tpu.dot_dimension_numbers<[1], [0], [0], [1], [0, 0, 1, 1], [], []>} : vector<8x64xbf16>, vector<64x8xbf16>, vector<8x8xf32> -> vector<8x8xf32>
    %cst_8 = arith.constant 1.250000e-01 : f32
    %20 = vector.broadcast %cst_8 : f32 to vector<8x8xf32>
    %21 = arith.mulf %19, %20 : vector<8x8xf32>
    %cst_9 = arith.constant -1.000000e+09 : f32
    %22 = vector.broadcast %cst_9 : f32 to vector<8x8xf32>
    %23 = arith.select %5, %22, %21 : vector<8x8xi1>, vector<8x8xf32>
    %cst_10 = arith.constant dense<0xFF800000> : vector<8xf32>
    %24 = vector.multi_reduction <maximumf>, %23, %cst_10 [1] : vector<8x8xf32> to vector<8xf32>
    %25 = vector.shape_cast %24 : vector<8xf32> to vector<8x1xf32>
    %26 = vector.broadcast %25 : vector<8x1xf32> to vector<8x8xf32>
    %27 = arith.subf %23, %26 : vector<8x8xf32>
    %28 = math.exp %27 : vector<8x8xf32>
    %cst_11 = arith.constant dense<0.000000e+00> : vector<8xf32>
    %29 = vector.multi_reduction <add>, %28, %cst_11 [1] : vector<8x8xf32> to vector<8xf32>
    %30 = vector.shape_cast %29 : vector<8xf32> to vector<8x1xf32>
    %31 = tpu.reciprocal %30 {approx = true} : vector<8x1xf32> -> vector<8x1xf32>
    %32 = vector.broadcast %31 : vector<8x1xf32> to vector<8x8xf32>
    %33 = arith.mulf %28, %32 : vector<8x8xf32>
    %c0_12 = arith.constant 0 : index
    %c0_13 = arith.constant 0 : index
    %c0_14 = arith.constant 0 : index
    %c0_15 = arith.constant 0 : index
    %34 = vector.load %arg8[%c0_12, %c0_13, %c0_14, %c0_15] : memref<1x8x8x8xf32, #tpu.memory_space<vmem>>, vector<1x1x8x8xf32>
    %35 = vector.shape_cast %34 : vector<1x1x8x8xf32> to vector<8x8xf32>
    %36 = vector.shape_cast %33 : vector<8x8xf32> to vector<1x1x8x8xf32>
    tpu.vector_store %arg8[%c0_12, %c0_13, %c0_14, %c0_15], %36 {strides = array<i32>} : memref<1x8x8x8xf32, #tpu.memory_space<vmem>>, vector<1x1x8x8xf32>,
    %37 = arith.truncf %33 : vector<8x8xf32> to vector<8x8xbf16>
    %cst_16 = arith.constant dense<0.000000e+00> : vector<8x64xf32>
    %38 = tpu.matmul %37, %17, %cst_16 {dimension_numbers = #tpu.dot_dimension_numbers<[1], [0], [0], [1], [0, 0, 1, 1], [], []>} : vector<8x8xbf16>, vector<8x64xbf16>, vector<8x64xf32> -> vector<8x64xf32>
    %c0_17 = arith.constant 0 : index
    %c0_18 = arith.constant 0 : index
    %39 = vector.load %arg9[%c0_17, %c0_18] : memref<8x512xf32, #tpu.memory_space<vmem>>, vector<8x64xf32>
    tpu.vector_store %arg9[%c0_17, %c0_18], %38 {strides = array<i32>} : memref<8x512xf32, #tpu.memory_space<vmem>>, vector<8x64xf32>,
    %40 = vector.extract_strided_slice %12 {offsets = [0, 64], sizes = [8, 64], strides = [1, 1]} : vector<8x512xbf16> to vector<8x64xbf16>
    %41 = vector.extract_strided_slice %13 {offsets = [0, 64], sizes = [8, 64], strides = [1, 1]} : vector<8x512xbf16> to vector<8x64xbf16>
    %42 = vector.extract_strided_slice %14 {offsets = [0, 64], sizes = [8, 64], strides = [1, 1]} : vector<8x512xbf16> to vector<8x64xbf16>
    %43 = tpu.transpose %41, [1, 0] : vector<8x64xbf16> -> vector<64x8xbf16>
    %cst_19 = arith.constant dense<0.000000e+00> : vector<8x8xf32>
    %44 = tpu.matmul %40, %43, %cst_19 {dimension_numbers = #tpu.dot_dimension_numbers<[1], [0], [0], [1], [0, 0, 1, 1], [], []>} : vector<8x64xbf16>, vector<64x8xbf16>, vector<8x8xf32> -> vector<8x8xf32>
    %cst_20 = arith.constant 1.250000e-01 : f32
    %45 = vector.broadcast %cst_20 : f32 to vector<8x8xf32>
    %46 = arith.mulf %44, %45 : vector<8x8xf32>
    %cst_21 = arith.constant -1.000000e+09 : f32
    %47 = vector.broadcast %cst_21 : f32 to vector<8x8xf32>
    %48 = arith.select %5, %47, %46 : vector<8x8xi1>, vector<8x8xf32>
    %cst_22 = arith.constant dense<0xFF800000> : vector<8xf32>
    %49 = vector.multi_reduction <maximumf>, %48, %cst_22 [1] : vector<8x8xf32> to vector<8xf32>
    %50 = vector.shape_cast %49 : vector<8xf32> to vector<8x1xf32>
    %51 = vector.broadcast %50 : vector<8x1xf32> to vector<8x8xf32>
    %52 = arith.subf %48, %51 : vector<8x8xf32>
    %53 = math.exp %52 : vector<8x8xf32>
    %cst_23 = arith.constant dense<0.000000e+00> : vector<8xf32>
    %54 = vector.multi_reduction <add>, %53, %cst_23 [1] : vector<8x8xf32> to vector<8xf32>
    %55 = vector.shape_cast %54 : vector<8xf32> to vector<8x1xf32>
    %56 = tpu.reciprocal %55 {approx = true} : vector<8x1xf32> -> vector<8x1xf32>
    %57 = vector.broadcast %56 : vector<8x1xf32> to vector<8x8xf32>
    %58 = arith.mulf %53, %57 : vector<8x8xf32>
    %c0_24 = arith.constant 0 : index
    %c1 = arith.constant 1 : index
    %c0_25 = arith.constant 0 : index
    %c0_26 = arith.constant 0 : index
    %59 = vector.load %arg8[%c0_24, %c1, %c0_25, %c0_26] : memref<1x8x8x8xf32, #tpu.memory_space<vmem>>, vector<1x1x8x8xf32>
    %60 = vector.shape_cast %59 : vector<1x1x8x8xf32> to vector<8x8xf32>
    %61 = vector.shape_cast %58 : vector<8x8xf32> to vector<1x1x8x8xf32>
    tpu.vector_store %arg8[%c0_24, %c1, %c0_25, %c0_26], %61 {strides = array<i32>} : memref<1x8x8x8xf32, #tpu.memory_space<vmem>>, vector<1x1x8x8xf32>,
    %62 = arith.truncf %58 : vector<8x8xf32> to vector<8x8xbf16>
    %cst_27 = arith.constant dense<0.000000e+00> : vector<8x64xf32>
    %63 = tpu.matmul %62, %42, %cst_27 {dimension_numbers = #tpu.dot_dimension_numbers<[1], [0], [0], [1], [0, 0, 1, 1], [], []>} : vector<8x8xbf16>, vector<8x64xbf16>, vector<8x64xf32> -> vector<8x64xf32>
    %c0_28 = arith.constant 0 : index
    %c64 = arith.constant 64 : index
    %64 = vector.load %arg9[%c0_28, %c64] : memref<8x512xf32, #tpu.memory_space<vmem>>, vector<8x64xf32>
    tpu.vector_store %arg9[%c0_28, %c64], %63 {strides = array<i32>} : memref<8x512xf32, #tpu.memory_space<vmem>>, vector<8x64xf32>,
    %65 = vector.extract_strided_slice %12 {offsets = [0, 128], sizes = [8, 64], strides = [1, 1]} : vector<8x512xbf16> to vector<8x64xbf16>
    %66 = vector.extract_strided_slice %13 {offsets = [0, 128], sizes = [8, 64], strides = [1, 1]} : vector<8x512xbf16> to vector<8x64xbf16>
    %67 = vector.extract_strided_slice %14 {offsets = [0, 128], sizes = [8, 64], strides = [1, 1]} : vector<8x512xbf16> to vector<8x64xbf16>
    %68 = tpu.transpose %66, [1, 0] : vector<8x64xbf16> -> vector<64x8xbf16>
    %cst_29 = arith.constant dense<0.000000e+00> : vector<8x8xf32>
    %69 = tpu.matmul %65, %68, %cst_29 {dimension_numbers = #tpu.dot_dimension_numbers<[1], [0], [0], [1], [0, 0, 1, 1], [], []>} : vector<8x64xbf16>, vector<64x8xbf16>, vector<8x8xf32> -> vector<8x8xf32>
    %cst_30 = arith.constant 1.250000e-01 : f32
    %70 = vector.broadcast %cst_30 : f32 to vector<8x8xf32>
    %71 = arith.mulf %69, %70 : vector<8x8xf32>
    %cst_31 = arith.constant -1.000000e+09 : f32
    %72 = vector.broadcast %cst_31 : f32 to vector<8x8xf32>
    %73 = arith.select %5, %72, %71 : vector<8x8xi1>, vector<8x8xf32>
    %cst_32 = arith.constant dense<0xFF800000> : vector<8xf32>
    %74 = vector.multi_reduction <maximumf>, %73, %cst_32 [1] : vector<8x8xf32> to vector<8xf32>
    %75 = vector.shape_cast %74 : vector<8xf32> to vector<8x1xf32>
    %76 = vector.broadcast %75 : vector<8x1xf32> to vector<8x8xf32>
    %77 = arith.subf %73, %76 : vector<8x8xf32>
    %78 = math.exp %77 : vector<8x8xf32>
    %cst_33 = arith.constant dense<0.000000e+00> : vector<8xf32>
    %79 = vector.multi_reduction <add>, %78, %cst_33 [1] : vector<8x8xf32> to vector<8xf32>
    %80 = vector.shape_cast %79 : vector<8xf32> to vector<8x1xf32>
    %81 = tpu.reciprocal %80 {approx = true} : vector<8x1xf32> -> vector<8x1xf32>
    %82 = vector.broadcast %81 : vector<8x1xf32> to vector<8x8xf32>
    %83 = arith.mulf %78, %82 : vector<8x8xf32>
    %c0_34 = arith.constant 0 : index
    %c2 = arith.constant 2 : index
    %c0_35 = arith.constant 0 : index
    %c0_36 = arith.constant 0 : index
    %84 = vector.load %arg8[%c0_34, %c2, %c0_35, %c0_36] : memref<1x8x8x8xf32, #tpu.memory_space<vmem>>, vector<1x1x8x8xf32>
    %85 = vector.shape_cast %84 : vector<1x1x8x8xf32> to vector<8x8xf32>
    %86 = vector.shape_cast %83 : vector<8x8xf32> to vector<1x1x8x8xf32>
    tpu.vector_store %arg8[%c0_34, %c2, %c0_35, %c0_36], %86 {strides = array<i32>} : memref<1x8x8x8xf32, #tpu.memory_space<vmem>>, vector<1x1x8x8xf32>,
    %87 = arith.truncf %83 : vector<8x8xf32> to vector<8x8xbf16>
    %cst_37 = arith.constant dense<0.000000e+00> : vector<8x64xf32>
    %88 = tpu.matmul %87, %67, %cst_37 {dimension_numbers = #tpu.dot_dimension_numbers<[1], [0], [0], [1], [0, 0, 1, 1], [], []>} : vector<8x8xbf16>, vector<8x64xbf16>, vector<8x64xf32> -> vector<8x64xf32>
    %c0_38 = arith.constant 0 : index
    %c128 = arith.constant 128 : index
    %89 = vector.load %arg9[%c0_38, %c128] : memref<8x512xf32, #tpu.memory_space<vmem>>, vector<8x64xf32>
    tpu.vector_store %arg9[%c0_38, %c128], %88 {strides = array<i32>} : memref<8x512xf32, #tpu.memory_space<vmem>>, vector<8x64xf32>,
    %90 = vector.extract_strided_slice %12 {offsets = [0, 192], sizes = [8, 64], strides = [1, 1]} : vector<8x512xbf16> to vector<8x64xbf16>
    %91 = vector.extract_strided_slice %13 {offsets = [0, 192], sizes = [8, 64], strides = [1, 1]} : vector<8x512xbf16> to vector<8x64xbf16>
    %92 = vector.extract_strided_slice %14 {offsets = [0, 192], sizes = [8, 64], strides = [1, 1]} : vector<8x512xbf16> to vector<8x64xbf16>
    %93 = tpu.transpose %91, [1, 0] : vector<8x64xbf16> -> vector<64x8xbf16>
    %cst_39 = arith.constant dense<0.000000e+00> : vector<8x8xf32>
    %94 = tpu.matmul %90, %93, %cst_39 {dimension_numbers = #tpu.dot_dimension_numbers<[1], [0], [0], [1], [0, 0, 1, 1], [], []>} : vector<8x64xbf16>, vector<64x8xbf16>, vector<8x8xf32> -> vector<8x8xf32>
    %cst_40 = arith.constant 1.250000e-01 : f32
    %95 = vector.broadcast %cst_40 : f32 to vector<8x8xf32>
    %96 = arith.mulf %94, %95 : vector<8x8xf32>
    %cst_41 = arith.constant -1.000000e+09 : f32
    %97 = vector.broadcast %cst_41 : f32 to vector<8x8xf32>
    %98 = arith.select %5, %97, %96 : vector<8x8xi1>, vector<8x8xf32>
    %cst_42 = arith.constant dense<0xFF800000> : vector<8xf32>
    %99 = vector.multi_reduction <maximumf>, %98, %cst_42 [1] : vector<8x8xf32> to vector<8xf32>
    %100 = vector.shape_cast %99 : vector<8xf32> to vector<8x1xf32>
    %101 = vector.broadcast %100 : vector<8x1xf32> to vector<8x8xf32>
    %102 = arith.subf %98, %101 : vector<8x8xf32>
    %103 = math.exp %102 : vector<8x8xf32>
    %cst_43 = arith.constant dense<0.000000e+00> : vector<8xf32>
    %104 = vector.multi_reduction <add>, %103, %cst_43 [1] : vector<8x8xf32> to vector<8xf32>
    %105 = vector.shape_cast %104 : vector<8xf32> to vector<8x1xf32>
    %106 = tpu.reciprocal %105 {approx = true} : vector<8x1xf32> -> vector<8x1xf32>
    %107 = vector.broadcast %106 : vector<8x1xf32> to vector<8x8xf32>
    %108 = arith.mulf %103, %107 : vector<8x8xf32>
    %c0_44 = arith.constant 0 : index
    %c3 = arith.constant 3 : index
    %c0_45 = arith.constant 0 : index
    %c0_46 = arith.constant 0 : index
    %109 = vector.load %arg8[%c0_44, %c3, %c0_45, %c0_46] : memref<1x8x8x8xf32, #tpu.memory_space<vmem>>, vector<1x1x8x8xf32>
    %110 = vector.shape_cast %109 : vector<1x1x8x8xf32> to vector<8x8xf32>
    %111 = vector.shape_cast %108 : vector<8x8xf32> to vector<1x1x8x8xf32>
    tpu.vector_store %arg8[%c0_44, %c3, %c0_45, %c0_46], %111 {strides = array<i32>} : memref<1x8x8x8xf32, #tpu.memory_space<vmem>>, vector<1x1x8x8xf32>,
    %112 = arith.truncf %108 : vector<8x8xf32> to vector<8x8xbf16>
    %cst_47 = arith.constant dense<0.000000e+00> : vector<8x64xf32>
    %113 = tpu.matmul %112, %92, %cst_47 {dimension_numbers = #tpu.dot_dimension_numbers<[1], [0], [0], [1], [0, 0, 1, 1], [], []>} : vector<8x8xbf16>, vector<8x64xbf16>, vector<8x64xf32> -> vector<8x64xf32>
    %c0_48 = arith.constant 0 : index
    %c192 = arith.constant 192 : index
    %114 = vector.load %arg9[%c0_48, %c192] : memref<8x512xf32, #tpu.memory_space<vmem>>, vector<8x64xf32>
    tpu.vector_store %arg9[%c0_48, %c192], %113 {strides = array<i32>} : memref<8x512xf32, #tpu.memory_space<vmem>>, vector<8x64xf32>,
    %115 = vector.extract_strided_slice %12 {offsets = [0, 256], sizes = [8, 64], strides = [1, 1]} : vector<8x512xbf16> to vector<8x64xbf16>
    %116 = vector.extract_strided_slice %13 {offsets = [0, 256], sizes = [8, 64], strides = [1, 1]} : vector<8x512xbf16> to vector<8x64xbf16>
    %117 = vector.extract_strided_slice %14 {offsets = [0, 256], sizes = [8, 64], strides = [1, 1]} : vector<8x512xbf16> to vector<8x64xbf16>
    %118 = tpu.transpose %116, [1, 0] : vector<8x64xbf16> -> vector<64x8xbf16>
    %cst_49 = arith.constant dense<0.000000e+00> : vector<8x8xf32>
    %119 = tpu.matmul %115, %118, %cst_49 {dimension_numbers = #tpu.dot_dimension_numbers<[1], [0], [0], [1], [0, 0, 1, 1], [], []>} : vector<8x64xbf16>, vector<64x8xbf16>, vector<8x8xf32> -> vector<8x8xf32>
    %cst_50 = arith.constant 1.250000e-01 : f32
    %120 = vector.broadcast %cst_50 : f32 to vector<8x8xf32>
    %121 = arith.mulf %119, %120 : vector<8x8xf32>
    %cst_51 = arith.constant -1.000000e+09 : f32
    %122 = vector.broadcast %cst_51 : f32 to vector<8x8xf32>
    %123 = arith.select %5, %122, %121 : vector<8x8xi1>, vector<8x8xf32>
    %cst_52 = arith.constant dense<0xFF800000> : vector<8xf32>
    %124 = vector.multi_reduction <maximumf>, %123, %cst_52 [1] : vector<8x8xf32> to vector<8xf32>
    %125 = vector.shape_cast %124 : vector<8xf32> to vector<8x1xf32>
    %126 = vector.broadcast %125 : vector<8x1xf32> to vector<8x8xf32>
    %127 = arith.subf %123, %126 : vector<8x8xf32>
    %128 = math.exp %127 : vector<8x8xf32>
    %cst_53 = arith.constant dense<0.000000e+00> : vector<8xf32>
    %129 = vector.multi_reduction <add>, %128, %cst_53 [1] : vector<8x8xf32> to vector<8xf32>
    %130 = vector.shape_cast %129 : vector<8xf32> to vector<8x1xf32>
    %131 = tpu.reciprocal %130 {approx = true} : vector<8x1xf32> -> vector<8x1xf32>
    %132 = vector.broadcast %131 : vector<8x1xf32> to vector<8x8xf32>
    %133 = arith.mulf %128, %132 : vector<8x8xf32>
    %c0_54 = arith.constant 0 : index
    %c4 = arith.constant 4 : index
    %c0_55 = arith.constant 0 : index
    %c0_56 = arith.constant 0 : index
    %134 = vector.load %arg8[%c0_54, %c4, %c0_55, %c0_56] : memref<1x8x8x8xf32, #tpu.memory_space<vmem>>, vector<1x1x8x8xf32>
    %135 = vector.shape_cast %134 : vector<1x1x8x8xf32> to vector<8x8xf32>
    %136 = vector.shape_cast %133 : vector<8x8xf32> to vector<1x1x8x8xf32>
    tpu.vector_store %arg8[%c0_54, %c4, %c0_55, %c0_56], %136 {strides = array<i32>} : memref<1x8x8x8xf32, #tpu.memory_space<vmem>>, vector<1x1x8x8xf32>,
    %137 = arith.truncf %133 : vector<8x8xf32> to vector<8x8xbf16>
    %cst_57 = arith.constant dense<0.000000e+00> : vector<8x64xf32>
    %138 = tpu.matmul %137, %117, %cst_57 {dimension_numbers = #tpu.dot_dimension_numbers<[1], [0], [0], [1], [0, 0, 1, 1], [], []>} : vector<8x8xbf16>, vector<8x64xbf16>, vector<8x64xf32> -> vector<8x64xf32>
    %c0_58 = arith.constant 0 : index
    %c256 = arith.constant 256 : index
    %139 = vector.load %arg9[%c0_58, %c256] : memref<8x512xf32, #tpu.memory_space<vmem>>, vector<8x64xf32>
    tpu.vector_store %arg9[%c0_58, %c256], %138 {strides = array<i32>} : memref<8x512xf32, #tpu.memory_space<vmem>>, vector<8x64xf32>,
    %140 = vector.extract_strided_slice %12 {offsets = [0, 320], sizes = [8, 64], strides = [1, 1]} : vector<8x512xbf16> to vector<8x64xbf16>
    %141 = vector.extract_strided_slice %13 {offsets = [0, 320], sizes = [8, 64], strides = [1, 1]} : vector<8x512xbf16> to vector<8x64xbf16>
    %142 = vector.extract_strided_slice %14 {offsets = [0, 320], sizes = [8, 64], strides = [1, 1]} : vector<8x512xbf16> to vector<8x64xbf16>
    %143 = tpu.transpose %141, [1, 0] : vector<8x64xbf16> -> vector<64x8xbf16>
    %cst_59 = arith.constant dense<0.000000e+00> : vector<8x8xf32>
    %144 = tpu.matmul %140, %143, %cst_59 {dimension_numbers = #tpu.dot_dimension_numbers<[1], [0], [0], [1], [0, 0, 1, 1], [], []>} : vector<8x64xbf16>, vector<64x8xbf16>, vector<8x8xf32> -> vector<8x8xf32>
    %cst_60 = arith.constant 1.250000e-01 : f32
    %145 = vector.broadcast %cst_60 : f32 to vector<8x8xf32>
    %146 = arith.mulf %144, %145 : vector<8x8xf32>
    %cst_61 = arith.constant -1.000000e+09 : f32
    %147 = vector.broadcast %cst_61 : f32 to vector<8x8xf32>
    %148 = arith.select %5, %147, %146 : vector<8x8xi1>, vector<8x8xf32>
    %cst_62 = arith.constant dense<0xFF800000> : vector<8xf32>
    %149 = vector.multi_reduction <maximumf>, %148, %cst_62 [1] : vector<8x8xf32> to vector<8xf32>
    %150 = vector.shape_cast %149 : vector<8xf32> to vector<8x1xf32>
    %151 = vector.broadcast %150 : vector<8x1xf32> to vector<8x8xf32>
    %152 = arith.subf %148, %151 : vector<8x8xf32>
    %153 = math.exp %152 : vector<8x8xf32>
    %cst_63 = arith.constant dense<0.000000e+00> : vector<8xf32>
    %154 = vector.multi_reduction <add>, %153, %cst_63 [1] : vector<8x8xf32> to vector<8xf32>
    %155 = vector.shape_cast %154 : vector<8xf32> to vector<8x1xf32>
    %156 = tpu.reciprocal %155 {approx = true} : vector<8x1xf32> -> vector<8x1xf32>
    %157 = vector.broadcast %156 : vector<8x1xf32> to vector<8x8xf32>
    %158 = arith.mulf %153, %157 : vector<8x8xf32>
    %c0_64 = arith.constant 0 : index
    %c5 = arith.constant 5 : index
    %c0_65 = arith.constant 0 : index
    %c0_66 = arith.constant 0 : index
    %159 = vector.load %arg8[%c0_64, %c5, %c0_65, %c0_66] : memref<1x8x8x8xf32, #tpu.memory_space<vmem>>, vector<1x1x8x8xf32>
    %160 = vector.shape_cast %159 : vector<1x1x8x8xf32> to vector<8x8xf32>
    %161 = vector.shape_cast %158 : vector<8x8xf32> to vector<1x1x8x8xf32>
    tpu.vector_store %arg8[%c0_64, %c5, %c0_65, %c0_66], %161 {strides = array<i32>} : memref<1x8x8x8xf32, #tpu.memory_space<vmem>>, vector<1x1x8x8xf32>,
    %162 = arith.truncf %158 : vector<8x8xf32> to vector<8x8xbf16>
    %cst_67 = arith.constant dense<0.000000e+00> : vector<8x64xf32>
    %163 = tpu.matmul %162, %142, %cst_67 {dimension_numbers = #tpu.dot_dimension_numbers<[1], [0], [0], [1], [0, 0, 1, 1], [], []>} : vector<8x8xbf16>, vector<8x64xbf16>, vector<8x64xf32> -> vector<8x64xf32>
    %c0_68 = arith.constant 0 : index
    %c320 = arith.constant 320 : index
    %164 = vector.load %arg9[%c0_68, %c320] : memref<8x512xf32, #tpu.memory_space<vmem>>, vector<8x64xf32>
    tpu.vector_store %arg9[%c0_68, %c320], %163 {strides = array<i32>} : memref<8x512xf32, #tpu.memory_space<vmem>>, vector<8x64xf32>,
    %165 = vector.extract_strided_slice %12 {offsets = [0, 384], sizes = [8, 64], strides = [1, 1]} : vector<8x512xbf16> to vector<8x64xbf16>
    %166 = vector.extract_strided_slice %13 {offsets = [0, 384], sizes = [8, 64], strides = [1, 1]} : vector<8x512xbf16> to vector<8x64xbf16>
    %167 = vector.extract_strided_slice %14 {offsets = [0, 384], sizes = [8, 64], strides = [1, 1]} : vector<8x512xbf16> to vector<8x64xbf16>
    %168 = tpu.transpose %166, [1, 0] : vector<8x64xbf16> -> vector<64x8xbf16>
    %cst_69 = arith.constant dense<0.000000e+00> : vector<8x8xf32>
    %169 = tpu.matmul %165, %168, %cst_69 {dimension_numbers = #tpu.dot_dimension_numbers<[1], [0], [0], [1], [0, 0, 1, 1], [], []>} : vector<8x64xbf16>, vector<64x8xbf16>, vector<8x8xf32> -> vector<8x8xf32>
    %cst_70 = arith.constant 1.250000e-01 : f32
    %170 = vector.broadcast %cst_70 : f32 to vector<8x8xf32>
    %171 = arith.mulf %169, %170 : vector<8x8xf32>
    %cst_71 = arith.constant -1.000000e+09 : f32
    %172 = vector.broadcast %cst_71 : f32 to vector<8x8xf32>
    %173 = arith.select %5, %172, %171 : vector<8x8xi1>, vector<8x8xf32>
    %cst_72 = arith.constant dense<0xFF800000> : vector<8xf32>
    %174 = vector.multi_reduction <maximumf>, %173, %cst_72 [1] : vector<8x8xf32> to vector<8xf32>
    %175 = vector.shape_cast %174 : vector<8xf32> to vector<8x1xf32>
    %176 = vector.broadcast %175 : vector<8x1xf32> to vector<8x8xf32>
    %177 = arith.subf %173, %176 : vector<8x8xf32>
    %178 = math.exp %177 : vector<8x8xf32>
    %cst_73 = arith.constant dense<0.000000e+00> : vector<8xf32>
    %179 = vector.multi_reduction <add>, %178, %cst_73 [1] : vector<8x8xf32> to vector<8xf32>
    %180 = vector.shape_cast %179 : vector<8xf32> to vector<8x1xf32>
    %181 = tpu.reciprocal %180 {approx = true} : vector<8x1xf32> -> vector<8x1xf32>
    %182 = vector.broadcast %181 : vector<8x1xf32> to vector<8x8xf32>
    %183 = arith.mulf %178, %182 : vector<8x8xf32>
    %c0_74 = arith.constant 0 : index
    %c6 = arith.constant 6 : index
    %c0_75 = arith.constant 0 : index
    %c0_76 = arith.constant 0 : index
    %184 = vector.load %arg8[%c0_74, %c6, %c0_75, %c0_76] : memref<1x8x8x8xf32, #tpu.memory_space<vmem>>, vector<1x1x8x8xf32>
    %185 = vector.shape_cast %184 : vector<1x1x8x8xf32> to vector<8x8xf32>
    %186 = vector.shape_cast %183 : vector<8x8xf32> to vector<1x1x8x8xf32>
    tpu.vector_store %arg8[%c0_74, %c6, %c0_75, %c0_76], %186 {strides = array<i32>} : memref<1x8x8x8xf32, #tpu.memory_space<vmem>>, vector<1x1x8x8xf32>,
    %187 = arith.truncf %183 : vector<8x8xf32> to vector<8x8xbf16>
    %cst_77 = arith.constant dense<0.000000e+00> : vector<8x64xf32>
    %188 = tpu.matmul %187, %167, %cst_77 {dimension_numbers = #tpu.dot_dimension_numbers<[1], [0], [0], [1], [0, 0, 1, 1], [], []>} : vector<8x8xbf16>, vector<8x64xbf16>, vector<8x64xf32> -> vector<8x64xf32>
    %c0_78 = arith.constant 0 : index
    %c384 = arith.constant 384 : index
    %189 = vector.load %arg9[%c0_78, %c384] : memref<8x512xf32, #tpu.memory_space<vmem>>, vector<8x64xf32>
    tpu.vector_store %arg9[%c0_78, %c384], %188 {strides = array<i32>} : memref<8x512xf32, #tpu.memory_space<vmem>>, vector<8x64xf32>,
    %190 = vector.extract_strided_slice %12 {offsets = [0, 448], sizes = [8, 64], strides = [1, 1]} : vector<8x512xbf16> to vector<8x64xbf16>
    %191 = vector.extract_strided_slice %13 {offsets = [0, 448], sizes = [8, 64], strides = [1, 1]} : vector<8x512xbf16> to vector<8x64xbf16>
    %192 = vector.extract_strided_slice %14 {offsets = [0, 448], sizes = [8, 64], strides = [1, 1]} : vector<8x512xbf16> to vector<8x64xbf16>
    %193 = tpu.transpose %191, [1, 0] : vector<8x64xbf16> -> vector<64x8xbf16>
    %cst_79 = arith.constant dense<0.000000e+00> : vector<8x8xf32>
    %194 = tpu.matmul %190, %193, %cst_79 {dimension_numbers = #tpu.dot_dimension_numbers<[1], [0], [0], [1], [0, 0, 1, 1], [], []>} : vector<8x64xbf16>, vector<64x8xbf16>, vector<8x8xf32> -> vector<8x8xf32>
    %cst_80 = arith.constant 1.250000e-01 : f32
    %195 = vector.broadcast %cst_80 : f32 to vector<8x8xf32>
    %196 = arith.mulf %194, %195 : vector<8x8xf32>
    %cst_81 = arith.constant -1.000000e+09 : f32
    %197 = vector.broadcast %cst_81 : f32 to vector<8x8xf32>
    %198 = arith.select %5, %197, %196 : vector<8x8xi1>, vector<8x8xf32>
    %cst_82 = arith.constant dense<0xFF800000> : vector<8xf32>
    %199 = vector.multi_reduction <maximumf>, %198, %cst_82 [1] : vector<8x8xf32> to vector<8xf32>
    %200 = vector.shape_cast %199 : vector<8xf32> to vector<8x1xf32>
    %201 = vector.broadcast %200 : vector<8x1xf32> to vector<8x8xf32>
    %202 = arith.subf %198, %201 : vector<8x8xf32>
    %203 = math.exp %202 : vector<8x8xf32>
    %cst_83 = arith.constant dense<0.000000e+00> : vector<8xf32>
    %204 = vector.multi_reduction <add>, %203, %cst_83 [1] : vector<8x8xf32> to vector<8xf32>
    %205 = vector.shape_cast %204 : vector<8xf32> to vector<8x1xf32>
    %206 = tpu.reciprocal %205 {approx = true} : vector<8x1xf32> -> vector<8x1xf32>
    %207 = vector.broadcast %206 : vector<8x1xf32> to vector<8x8xf32>
    %208 = arith.mulf %203, %207 : vector<8x8xf32>
    %c0_84 = arith.constant 0 : index
    %c7 = arith.constant 7 : index
    %c0_85 = arith.constant 0 : index
    %c0_86 = arith.constant 0 : index
    %209 = vector.load %arg8[%c0_84, %c7, %c0_85, %c0_86] : memref<1x8x8x8xf32, #tpu.memory_space<vmem>>, vector<1x1x8x8xf32>
    %210 = vector.shape_cast %209 : vector<1x1x8x8xf32> to vector<8x8xf32>
    %211 = vector.shape_cast %208 : vector<8x8xf32> to vector<1x1x8x8xf32>
    tpu.vector_store %arg8[%c0_84, %c7, %c0_85, %c0_86], %211 {strides = array<i32>} : memref<1x8x8x8xf32, #tpu.memory_space<vmem>>, vector<1x1x8x8xf32>,
    %212 = arith.truncf %208 : vector<8x8xf32> to vector<8x8xbf16>
    %cst_87 = arith.constant dense<0.000000e+00> : vector<8x64xf32>
    %213 = tpu.matmul %212, %192, %cst_87 {dimension_numbers = #tpu.dot_dimension_numbers<[1], [0], [0], [1], [0, 0, 1, 1], [], []>} : vector<8x8xbf16>, vector<8x64xbf16>, vector<8x64xf32> -> vector<8x64xf32>
    %c0_88 = arith.constant 0 : index
    %c448 = arith.constant 448 : index
    %214 = vector.load %arg9[%c0_88, %c448] : memref<8x512xf32, #tpu.memory_space<vmem>>, vector<8x64xf32>
    tpu.vector_store %arg9[%c0_88, %c448], %213 {strides = array<i32>} : memref<8x512xf32, #tpu.memory_space<vmem>>, vector<8x64xf32>,
    %c0_89 = arith.constant 0 : index
    %c0_90 = arith.constant 0 : index
    %215 = vector.load %arg9[%c0_89, %c0_90] : memref<8x512xf32, #tpu.memory_space<vmem>>, vector<8x512xf32>
    %216 = arith.truncf %215 : vector<8x512xf32> to vector<8x512xbf16>
    %c0_91 = arith.constant 0 : index
    %c0_92 = arith.constant 0 : index
    %217 = vector.load %arg4[%c0_91, %c0_92] : memref<512x512xbf16, #tpu.memory_space<vmem>>, vector<512x512xbf16>
    %cst_93 = arith.constant dense<0.000000e+00> : vector<8x512xf32>
    %218 = tpu.matmul %216, %217, %cst_93 {dimension_numbers = #tpu.dot_dimension_numbers<[1], [0], [0], [1], [0, 0, 1, 1], [], []>} : vector<8x512xbf16>, vector<512x512xbf16>, vector<8x512xf32> -> vector<8x512xf32>
    %219 = arith.addf %218, %1 : vector<8x512xf32>
    %cst_94 = arith.constant dense<0.000000e+00> : vector<8xf32>
    %220 = vector.multi_reduction <add>, %219, %cst_94 [1] : vector<8x512xf32> to vector<8xf32>
    %221 = vector.shape_cast %220 : vector<8xf32> to vector<8x1xf32>
    %cst_95 = arith.constant 5.120000e+02 : f32
    %222 = vector.broadcast %cst_95 : f32 to vector<8x1xf32>
    %223 = arith.divf %221, %222 : vector<8x1xf32>
    %224 = vector.broadcast %223 : vector<8x1xf32> to vector<8x512xf32>
    %225 = arith.subf %219, %224 : vector<8x512xf32>
    %226 = arith.mulf %225, %225 : vector<8x512xf32>
    %cst_96 = arith.constant dense<0.000000e+00> : vector<8xf32>
    %227 = vector.multi_reduction <add>, %226, %cst_96 [1] : vector<8x512xf32> to vector<8xf32>
    %228 = vector.shape_cast %227 : vector<8xf32> to vector<8x1xf32>
    %cst_97 = arith.constant 5.120000e+02 : f32
    %229 = vector.broadcast %cst_97 : f32 to vector<8x1xf32>
    %230 = arith.divf %228, %229 : vector<8x1xf32>
    %231 = vector.broadcast %223 : vector<8x1xf32> to vector<8x512xf32>
    %232 = arith.subf %219, %231 : vector<8x512xf32>
    %cst_98 = arith.constant 9.99999974E-6 : f32
    %233 = vector.broadcast %cst_98 : f32 to vector<8x1xf32>
    %234 = arith.addf %230, %233 : vector<8x1xf32>
    %235 = math.rsqrt %234 : vector<8x1xf32>
    %236 = vector.broadcast %235 : vector<8x1xf32> to vector<8x512xf32>
    %237 = arith.mulf %232, %236 : vector<8x512xf32>
    %238 = arith.truncf %237 : vector<8x512xf32> to vector<8x512xbf16>
    %c0_99 = arith.constant 0 : index
    %c0_100 = arith.constant 0 : index
    %239 = vector.load %arg5[%c0_99, %c0_100] : memref<512x2048xbf16, #tpu.memory_space<vmem>>, vector<512x2048xbf16>
    %cst_101 = arith.constant dense<0.000000e+00> : vector<8x2048xf32>
    %240 = tpu.matmul %238, %239, %cst_101 {dimension_numbers = #tpu.dot_dimension_numbers<[1], [0], [0], [1], [0, 0, 1, 1], [], []>} : vector<8x512xbf16>, vector<512x2048xbf16>, vector<8x2048xf32> -> vector<8x2048xf32>
    %cst_102 = arith.constant 0.000000e+00 : f32
    %241 = vector.broadcast %cst_102 : f32 to vector<8x2048xf32>
    %242 = arith.maximumf %240, %241 : vector<8x2048xf32>
    %243 = arith.truncf %242 : vector<8x2048xf32> to vector<8x2048xbf16>
    %c0_103 = arith.constant 0 : index
    %c0_104 = arith.constant 0 : index
    %244 = vector.load %arg6[%c0_103, %c0_104] : memref<2048x512xbf16, #tpu.memory_space<vmem>>, vector<2048x512xbf16>
    %cst_105 = arith.constant dense<0.000000e+00> : vector<8x512xf32>
    %245 = tpu.matmul %243, %244, %cst_105 {dimension_numbers = #tpu.dot_dimension_numbers<[1], [0], [0], [1], [0, 0, 1, 1], [], []>} : vector<8x2048xbf16>, vector<2048x512xbf16>, vector<8x512xf32> -> vector<8x512xf32>
    %246 = arith.addf %245, %237 : vector<8x512xf32>
    %cst_106 = arith.constant dense<0.000000e+00> : vector<8xf32>
    %247 = vector.multi_reduction <add>, %246, %cst_106 [1] : vector<8x512xf32> to vector<8xf32>
    %248 = vector.shape_cast %247 : vector<8xf32> to vector<8x1xf32>
    %cst_107 = arith.constant 5.120000e+02 : f32
    %249 = vector.broadcast %cst_107 : f32 to vector<8x1xf32>
    %250 = arith.divf %248, %249 : vector<8x1xf32>
    %251 = vector.broadcast %250 : vector<8x1xf32> to vector<8x512xf32>
    %252 = arith.subf %246, %251 : vector<8x512xf32>
    %253 = arith.mulf %252, %252 : vector<8x512xf32>
    %cst_108 = arith.constant dense<0.000000e+00> : vector<8xf32>
    %254 = vector.multi_reduction <add>, %253, %cst_108 [1] : vector<8x512xf32> to vector<8xf32>
    %255 = vector.shape_cast %254 : vector<8xf32> to vector<8x1xf32>
    %cst_109 = arith.constant 5.120000e+02 : f32
    %256 = vector.broadcast %cst_109 : f32 to vector<8x1xf32>
    %257 = arith.divf %255, %256 : vector<8x1xf32>
    %258 = vector.broadcast %250 : vector<8x1xf32> to vector<8x512xf32>
    %259 = arith.subf %246, %258 : vector<8x512xf32>
    %cst_110 = arith.constant 9.99999974E-6 : f32
    %260 = vector.broadcast %cst_110 : f32 to vector<8x1xf32>
    %261 = arith.addf %257, %260 : vector<8x1xf32>
    %262 = math.rsqrt %261 : vector<8x1xf32>
    %263 = vector.broadcast %262 : vector<8x1xf32> to vector<8x512xf32>
    %264 = arith.mulf %259, %263 : vector<8x512xf32>
    %c0_111 = arith.constant 0 : index
    %c0_112 = arith.constant 0 : index
    %c0_113 = arith.constant 0 : index
    %265 = vector.load %arg7[%c0_111, %c0_112, %c0_113] : memref<1x8x512xf32, #tpu.memory_space<vmem>>, vector<1x8x512xf32>
    %266 = vector.shape_cast %265 : vector<1x8x512xf32> to vector<8x512xf32>
    %267 = vector.shape_cast %264 : vector<8x512xf32> to vector<1x8x512xf32>
    tpu.vector_store %arg7[%c0_111, %c0_112, %c0_113], %267 {strides = array<i32>} : memref<1x8x512xf32, #tpu.memory_space<vmem>>, vector<1x8x512xf32>,
    return
  }
  func.func @transform_0(%arg0: i32) -> (i32, i32, i32) {
    %c0_i32 = arith.constant 0 : i32
    %c0_i32_0 = arith.constant 0 : i32
    %c0_i32_1 = arith.constant 0 : i32
    return %arg0, %c0_i32, %c0_i32_0 : i32, i32, i32
  }
  func.func @transform_1(%arg0: i32) -> (i32, i32, i32) {
    %c0_i32 = arith.constant 0 : i32
    %c0_i32_0 = arith.constant 0 : i32
    %c0_i32_1 = arith.constant 0 : i32
    return %arg0, %c0_i32, %c0_i32_0 : i32, i32, i32
  }
  func.func @transform_2(%arg0: i32) -> (i32, i32) {
    %c0_i32 = arith.constant 0 : i32
    %c0_i32_0 = arith.constant 0 : i32
    %c0_i32_1 = arith.constant 0 : i32
    return %c0_i32, %c0_i32_0 : i32, i32
  }
  func.func @transform_3(%arg0: i32) -> (i32, i32) {
    %c0_i32 = arith.constant 0 : i32
    %c0_i32_0 = arith.constant 0 : i32
    %c0_i32_1 = arith.constant 0 : i32
    return %c0_i32, %c0_i32_0 : i32, i32
  }
  func.func @transform_4(%arg0: i32) -> (i32, i32) {
    %c0_i32 = arith.constant 0 : i32
    %c0_i32_0 = arith.constant 0 : i32
    %c0_i32_1 = arith.constant 0 : i32
    return %c0_i32, %c0_i32_0 : i32, i32
  }
  func.func @transform_5(%arg0: i32) -> (i32, i32) {
    %c0_i32 = arith.constant 0 : i32
    %c0_i32_0 = arith.constant 0 : i32
    %c0_i32_1 = arith.constant 0 : i32
    return %c0_i32, %c0_i32_0 : i32, i32
  }
  func.func @transform_6(%arg0: i32) -> (i32, i32, i32) {
    %c0_i32 = arith.constant 0 : i32
    %c0_i32_0 = arith.constant 0 : i32
    %c0_i32_1 = arith.constant 0 : i32
    return %arg0, %c0_i32, %c0_i32_0 : i32, i32, i32
  }
  func.func @transform_7(%arg0: i32) -> (i32, i32, i32, i32) {
    %c0_i32 = arith.constant 0 : i32
    %c0_i32_0 = arith.constant 0 : i32
    %c0_i32_1 = arith.constant 0 : i32
    %c0_i32_2 = arith.constant 0 : i32
    return %arg0, %c0_i32, %c0_i32_0, %c0_i32_1 : i32, i32, i32, i32
  }
}

</mosaic_0001>

<llo_original>
// kernel: encoder_layer.1
$region0: #{encoder_layer.1}
  #allocation0 [shape = 'u32[]', space=smem, size = 0x4, offset = 0x4, fixed_abs, tag = 'smem constant byte address 0x4 - core index']
  #allocation1 [shape = 'u32[144,128]{1,0:T(1,128)}', space=vmem, size = 0x12000, scoped, tag = 'internal scratch']
  #allocation2 [shape = 'f32[8,512]{1,0:T(8,128)}', space=vmem, size = 0x4000, scoped, tag = 'scratch operand']
  %s0 = inlined_call_operand.vmem [shape: f32[2,8,512], index: 0, kind: input, shape index: {}]
  %s1 = inlined_call_operand.vmem [shape: s32[2,8,8], index: 1, kind: input, shape index: {}]
  %s2 = inlined_call_operand.vmem [shape: bf16[512,1536], index: 2, kind: input, shape index: {}]
  %s3 = inlined_call_operand.vmem [shape: bf16[512,512], index: 3, kind: input, shape index: {}]
  %s4 = inlined_call_operand.vmem [shape: bf16[512,2048], index: 4, kind: input, shape index: {}]
  %s5 = inlined_call_operand.vmem [shape: bf16[2048,512], index: 5, kind: input, shape index: {}]
  %s6 = inlined_call_operand.hbm [shape: f32[2,8,512], index: 6, kind: output, shape index: {0}]
  %s7 = inlined_call_operand.hbm [shape: f32[2,8,8,8], index: 7, kind: output, shape index: {1}]
  %8 = xla_tuple %s6, %s7
  %s9 = sld [smem:[#allocation0]]
  $region65: #{encoder_layer.1} parent=0
    _
  %s11 = ssub.s32 1, %s9
  %s12 = scalar_select 0, %s11, %s9
  $region1: #{encoder_layer.1} parent=0
    #allocation3 [shape = 'u8[32768]{0}', space=vmem, size = 0x8000, scoped, tag = 'output window, operand 0']
    #allocation4 [shape = 's32[2]{0}', space=sflag, size = 0x8, scoped, tag = 'scoped memory for encoder_layer.1']
    #allocation5 [shape = 'u8[65536]{0}', space=vmem, size = 0x10000, scoped, tag = 'output window, operand 1']
    #allocation6 [shape = 's32[2]{0}', space=sflag, size = 0x8, scoped, tag = 'scoped memory for encoder_layer.1']
    %13 = vsyncpa [#allocation4], 0
    %s14 = scalar_lea.sflag [#allocation4], 1
    %15 = vsyncpa %s14, 0
    %16 = vsyncpa [#allocation6], 0
    %s17 = scalar_lea.sflag [#allocation6], 1
    %18 = vsyncpa %s17, 0
    loop: start=0, step=1, limit=4
    $region2: #{encoder_layer.1} parent=1 // loop_pre_header
      _
    $region3: #{encoder_layer.1} parent=1 // loop_header
      %s20 = sphi 0, %s24
      %p21 = scmp.ge.s32.totalorder %s20, 4
      %s30 = sphi 0, %s32
      %s33 = sphi 0, %s30
      %s34 = sphi 0, %s33
      %s50 = sphi 0, %s34
      %s56 = sphi 0, %s58
      %s59 = sphi 0, %s56
      %s60 = sphi 0, %s59
      %s76 = sphi 0, %s60
      %s80 = sphi 0, %s80
      %s82 = sphi 0, %s80
      %s83 = sphi 0, %s82
      %s97 = sphi 0, %s83
      %s101 = sphi 0, %s101
      %s103 = sphi 0, %s101
      %s104 = sphi 0, %s103
      %s118 = sphi 0, %s104
      %s122 = sphi 0, %s122
      %s124 = sphi 0, %s122
      %s125 = sphi 0, %s124
      %s139 = sphi 0, %s125
      %s143 = sphi 0, %s143
      %s145 = sphi 0, %s143
      %s146 = sphi 0, %s145
      %s160 = sphi 0, %s146
      %s166 = sphi 0, %s168
      %s169 = sphi 0, %s166
      %s170 = sphi 0, %s169
      %s186 = sphi 0, %s170
      %s192 = sphi 0, %s194
      %s195 = sphi 0, %s192
      %s196 = sphi 0, %s195
      %s212 = sphi 0, %s196
    $region4: #{encoder_layer.1} parent=1 // loop_header_branch
      %23 = sbr.rel (%p21) target = $region8
    $region5: #{encoder_layer.1} parent=1 // loop_body
      %s25 = ssub.s32 %s20, 1
      %s26 = ssub.s32 %s20, 2
      %s27 = sadd.s32 %s20, 1
      %s28 = ssub.s32 %s20, %s27
      %p29 = scmp.eq.s32.totalorder %s28, 0
      %s31 = sadd.s32 %s30, 1
      %s32 = scalar_select %p29, %s30, %s31
      %p35 = pneg %p29
      %p36 = scmp.eq.s32.totalorder %s20, 1
      %p37 = por %p35, %p36
      %p38 = scmp.ne.s32.totalorder %s30, %s33
      %p39 = scmp.eq.s32.totalorder %s20, 0
      %p40 = por %p38, %p39
      %p41 = scmp.ne.s32.totalorder %s30, %s33
      %p42 = scmp.eq.s32.totalorder %s25, 1
      %p43 = por %p41, %p42
      %p44 = scmp.ne.s32.totalorder %s33, %s34
      %p45 = scmp.eq.s32.totalorder %s25, 0
      %p46 = por %p44, %p45
      %p47 = scmp.ne.s32.totalorder %s33, %s34
      %p48 = scmp.eq.s32.totalorder %s26, 1
      %p49 = por %p47, %p48
      %p51 = scmp.ne.s32.totalorder %s34, %s50
      %p52 = scmp.eq.s32.totalorder %s26, 0
      %p53 = por %p51, %p52
      %s54 = ssub.s32 %s20, %s27
      %p55 = scmp.eq.s32.totalorder %s54, 0
      %s57 = sadd.s32 %s56, 1
      %s58 = scalar_select %p55, %s56, %s57
      %p61 = pneg %p55
      %p62 = scmp.eq.s32.totalorder %s20, 1
      %p63 = por %p61, %p62
      %p64 = scmp.ne.s32.totalorder %s56, %s59
      %p65 = scmp.eq.s32.totalorder %s20, 0
      %p66 = por %p64, %p65
      %p67 = scmp.ne.s32.totalorder %s56, %s59
      %p68 = scmp.eq.s32.totalorder %s25, 1
      %p69 = por %p67, %p68
      %p70 = scmp.ne.s32.totalorder %s59, %s60
      %p71 = scmp.eq.s32.totalorder %s25, 0
      %p72 = por %p70, %p71
      %p73 = scmp.ne.s32.totalorder %s59, %s60
      %p74 = scmp.eq.s32.totalorder %s26, 1
      %p75 = por %p73, %p74
      %p77 = scmp.ne.s32.totalorder %s60, %s76
      %p78 = scmp.eq.s32.totalorder %s26, 0
      %p79 = por %p77, %p78
      %s81 = sadd.s32 %s80, 1
      %p84 = scmp.eq.s32.totalorder %s20, 1
      %p85 = scmp.ne.s32.totalorder %s80, %s82
      %p86 = scmp.eq.s32.totalorder %s20, 0
      %p87 = por %p85, %p86
      %p88 = scmp.ne.s32.totalorder %s80, %s82
      %p89 = scmp.eq.s32.totalorder %s25, 1
      %p90 = por %p88, %p89
      %p91 = scmp.ne.s32.totalorder %s82, %s83
      %p92 = scmp.eq.s32.totalorder %s25, 0
      %p93 = por %p91, %p92
      %p94 = scmp.ne.s32.totalorder %s82, %s83
      %p95 = scmp.eq.s32.totalorder %s26, 1
      %p96 = por %p94, %p95
      %p98 = scmp.ne.s32.totalorder %s83, %s97
      %p99 = scmp.eq.s32.totalorder %s26, 0
      %p100 = por %p98, %p99
      %s102 = sadd.s32 %s101, 1
      %p105 = scmp.eq.s32.totalorder %s20, 1
      %p106 = scmp.ne.s32.totalorder %s101, %s103
      %p107 = scmp.eq.s32.totalorder %s20, 0
      %p108 = por %p106, %p107
      %p109 = scmp.ne.s32.totalorder %s101, %s103
      %p110 = scmp.eq.s32.totalorder %s25, 1
      %p111 = por %p109, %p110
      %p112 = scmp.ne.s32.totalorder %s103, %s104
      %p113 = scmp.eq.s32.totalorder %s25, 0
      %p114 = por %p112, %p113
      %p115 = scmp.ne.s32.totalorder %s103, %s104
      %p116 = scmp.eq.s32.totalorder %s26, 1
      %p117 = por %p115, %p116
      %p119 = scmp.ne.s32.totalorder %s104, %s118
      %p120 = scmp.eq.s32.totalorder %s26, 0
      %p121 = por %p119, %p120
      %s123 = sadd.s32 %s122, 1
      %p126 = scmp.eq.s32.totalorder %s20, 1
      %p127 = scmp.ne.s32.totalorder %s122, %s124
      %p128 = scmp.eq.s32.totalorder %s20, 0
      %p129 = por %p127, %p128
      %p130 = scmp.ne.s32.totalorder %s122, %s124
      %p131 = scmp.eq.s32.totalorder %s25, 1
      %p132 = por %p130, %p131
      %p133 = scmp.ne.s32.totalorder %s124, %s125
      %p134 = scmp.eq.s32.totalorder %s25, 0
      %p135 = por %p133, %p134
      %p136 = scmp.ne.s32.totalorder %s124, %s125
      %p137 = scmp.eq.s32.totalorder %s26, 1
      %p138 = por %p136, %p137
      %p140 = scmp.ne.s32.totalorder %s125, %s139
      %p141 = scmp.eq.s32.totalorder %s26, 0
      %p142 = por %p140, %p141
      %s144 = sadd.s32 %s143, 1
      %p147 = scmp.eq.s32.totalorder %s20, 1
      %p148 = scmp.ne.s32.totalorder %s143, %s145
      %p149 = scmp.eq.s32.totalorder %s20, 0
      %p150 = por %p148, %p149
      %p151 = scmp.ne.s32.totalorder %s143, %s145
      %p152 = scmp.eq.s32.totalorder %s25, 1
      %p153 = por %p151, %p152
      %p154 = scmp.ne.s32.totalorder %s145, %s146
      %p155 = scmp.eq.s32.totalorder %s25, 0
      %p156 = por %p154, %p155
      %p157 = scmp.ne.s32.totalorder %s145, %s146
      %p158 = scmp.eq.s32.totalorder %s26, 1
      %p159 = por %p157, %p158
      %p161 = scmp.ne.s32.totalorder %s146, %s160
      %p162 = scmp.eq.s32.totalorder %s26, 0
      %p163 = por %p161, %p162
      %s164 = ssub.s32 %s20, %s27
      %p165 = scmp.eq.s32.totalorder %s164, 0
      %s167 = sadd.s32 %s166, 1
      %s168 = scalar_select %p165, %s166, %s167
      %p171 = pneg %p165
      %p172 = scmp.eq.s32.totalorder %s20, 1
      %p173 = por %p171, %p172
      %p174 = scmp.ne.s32.totalorder %s166, %s169
      %p175 = scmp.eq.s32.totalorder %s20, 0
      %p176 = por %p174, %p175
      %p177 = scmp.ne.s32.totalorder %s166, %s169
      %p178 = scmp.eq.s32.totalorder %s25, 1
      %p179 = por %p177, %p178
      %p180 = scmp.ne.s32.totalorder %s169, %s170
      %p181 = scmp.eq.s32.totalorder %s25, 0
      %p182 = por %p180, %p181
      %p183 = scmp.ne.s32.totalorder %s169, %s170
      %p184 = scmp.eq.s32.totalorder %s26, 1
      %p185 = por %p183, %p184
      %p187 = scmp.ne.s32.totalorder %s170, %s186
      %p188 = scmp.eq.s32.totalorder %s26, 0
      %p189 = por %p187, %p188
      %s190 = ssub.s32 %s20, %s27
      %p191 = scmp.eq.s32.totalorder %s190, 0
      %s193 = sadd.s32 %s192, 1
      %s194 = scalar_select %p191, %s192, %s193
      %p197 = pneg %p191
      %p198 = scmp.eq.s32.totalorder %s20, 1
      %p199 = por %p197, %p198
      %p200 = scmp.ne.s32.totalorder %s192, %s195
      %p201 = scmp.eq.s32.totalorder %s20, 0
      %p202 = por %p200, %p201
      %p203 = scmp.ne.s32.totalorder %s192, %s195
      %p204 = scmp.eq.s32.totalorder %s25, 1
      %p205 = por %p203, %p204
      %p206 = scmp.ne.s32.totalorder %s195, %s196
      %p207 = scmp.eq.s32.totalorder %s25, 0
      %p208 = por %p206, %p207
      %p209 = scmp.ne.s32.totalorder %s195, %s196
      %p210 = scmp.eq.s32.totalorder %s26, 1
      %p211 = por %p209, %p210
      %p213 = scmp.ne.s32.totalorder %s196, %s212
      %p214 = scmp.eq.s32.totalorder %s26, 0
      %p215 = por %p213, %p214
      %p216 = scmp.le.s32.totalorder 1, %s20
      %p217 = scmp.lt.s32.totalorder %s20, 3
      %p218 = pnand %p216, %p217
      %p219 = pneg %p218
      // Predicated region
      $region9: #{encoder_layer.1} parent=5 // pred_check
        _
      $region10: #{encoder_layer.1} parent=5 // pred_check_branch
        %221 = sbr.rel (%p218) target = $region12
      $region11: #{encoder_layer.1} parent=5 // pred_region
        %s222 = ssub.s32 %s20, 1
        // Predicated region
        $region13: #{encoder_layer.1} parent=11 // pred_check
          %p223 = pneg %p93
        $region14: #{encoder_layer.1} parent=11 // pred_check_branch
          %225 = sbr.rel (%p223) target = $region16
        $region15: #{encoder_layer.1} parent=11 // pred_region
          _
        $region16: #{encoder_layer.1} parent=11 // pred_fallthru
          _
        // Predicated region
        $region17: #{encoder_layer.1} parent=11 // pred_check
          %p226 = pneg %p114
        $region18: #{encoder_layer.1} parent=11 // pred_check_branch
          %228 = sbr.rel (%p226) target = $region20
        $region19: #{encoder_layer.1} parent=11 // pred_region
          _
        $region20: #{encoder_layer.1} parent=11 // pred_fallthru
          _
        // Predicated region
        $region21: #{encoder_layer.1} parent=11 // pred_check
          %p229 = pneg %p135
        $region22: #{encoder_layer.1} parent=11 // pred_check_branch
          %231 = sbr.rel (%p229) target = $region24
        $region23: #{encoder_layer.1} parent=11 // pred_region
          _
        $region24: #{encoder_layer.1} parent=11 // pred_fallthru
          _
        // Predicated region
        $region25: #{encoder_layer.1} parent=11 // pred_check
          %p232 = pneg %p156
        $region26: #{encoder_layer.1} parent=11 // pred_check_branch
          %234 = sbr.rel (%p232) target = $region28
        $region27: #{encoder_layer.1} parent=11 // pred_region
          _
        $region28: #{encoder_layer.1} parent=11 // pred_fallthru
          _
      $region12: #{encoder_layer.1} parent=5 // pred_fallthru
        _
      %p235 = scmp.lt.s32.totalorder %s20, 2
      // Predicated region
      $region29: #{encoder_layer.1} parent=5 // pred_check
        %p236 = pneg %p235
      $region30: #{encoder_layer.1} parent=5 // pred_check_branch
        %238 = sbr.rel (%p236) target = $region32
      $region31: #{encoder_layer.1} parent=5 // pred_region
        // Predicated region
        $region33: #{encoder_layer.1} parent=31 // pred_check
          %p239 = pneg %p40
        $region34: #{encoder_layer.1} parent=31 // pred_check_branch
          %241 = sbr.rel (%p239) target = $region36
        $region35: #{encoder_layer.1} parent=31 // pred_region
          %p242 = scmp.lt.s32.totalorder %s20, 1
          %s243 = scalar_select %p242, %s20, 1
          %s244 = smul.addr %s243, 4
          %s245 = smul.addr %s244, 8
          %s246 = scalar_lea.vmem %s0, %s245
        $region36: #{encoder_layer.1} parent=31 // pred_fallthru
          _
        // Predicated region
        $region37: #{encoder_layer.1} parent=31 // pred_check
          %p247 = pneg %p66
        $region38: #{encoder_layer.1} parent=31 // pred_check_branch
          %249 = sbr.rel (%p247) target = $region40
        $region39: #{encoder_layer.1} parent=31 // pred_region
          %p250 = scmp.lt.s32.totalorder %s20, 1
          %s251 = scalar_select %p250, %s20, 1
          %s252 = smul.addr %s251, 8
          %s253 = scalar_lea.vmem %s1, %s252
        $region40: #{encoder_layer.1} parent=31 // pred_fallthru
          _
      $region32: #{encoder_layer.1} parent=5 // pred_fallthru
        _
      %p254 = scmp.le.s32.totalorder 1, %s20
      %p255 = scmp.lt.s32.totalorder %s20, 3
      %p256 = pnand %p254, %p255
      %p257 = pneg %p256
      // Predicated region
      $region41: #{encoder_layer.1} parent=5 // pred_check
        _
      $region42: #{encoder_layer.1} parent=5 // pred_check_branch
        %259 = sbr.rel (%p256) target = $region44
      $region43: #{encoder_layer.1} parent=5 // pred_region
        %s260 = ssub.s32 %s20, 1
        %p261 = scmp.lt.s32.totalorder %s25, 1
        %s262 = scalar_select %p261, %s25, 1
        %s263 = smul.addr %s262, 4
        %s264 = smul.addr %s263, 8
        %s265 = scalar_lea.vmem %s0, %s264
        %p266 = pneg %p46
        %p267 = pneg %p43
        %p268 = scmp.lt.s32.totalorder %s25, 1
        %s269 = scalar_select %p268, %s25, 1
        %s270 = smul.addr %s269, 8
        %s271 = scalar_lea.vmem %s1, %s270
        %p272 = pneg %p72
        %p273 = pneg %p69
        %p274 = pneg %p93
        %p275 = pneg %p90
        %p276 = pneg %p114
        %p277 = pneg %p111
        %p278 = pneg %p135
        %p279 = pneg %p132
        %p280 = pneg %p156
        %p281 = pneg %p153
        %p282 = pneg %p182
        %p283 = pneg %p179
        %s284 = sand.u32 %s169, 1
        %s285 = scalar_lea.sflag [#allocation4], %s284
        %s286 = sand.u32 %s169, 1
        %s287 = smul.addr %s286, 32
        %s288 = scalar_lea.vmem [#allocation3], %s287
        %p289 = pneg %p208
        %p290 = pneg %p205
        %s291 = sand.u32 %s195, 1
        %s292 = scalar_lea.sflag [#allocation6], %s291
        %s293 = sand.u32 %s195, 1
        %s294 = smul.addr %s293, 64
        %s295 = scalar_lea.vmem [#allocation5], %s294
        %p296 = scmp.lt.s32.totalorder %s25, 1
        %s297 = scalar_select %p296, %s25, 1
        %s298 = smul.addr %s297, 4
        %s299 = smul.addr %s298, 8
        %s300 = scalar_lea.vmem %s0, %s299
        %p301 = scmp.lt.s32.totalorder %s25, 1
        %s302 = scalar_select %p301, %s25, 1
        %s303 = smul.addr %s302, 8
        %s304 = scalar_lea.vmem %s1, %s303
        %v306 = vld [vmem:[%s300] sm:$0xff]
        %v307 = vld [vmem:[%s300 + $0x8] sm:$0xff]
        %v308 = vld [vmem:[%s300 + $0x10] sm:$0xff]
        %v309 = vld [vmem:[%s300 + $0x18] sm:$0xff]
        %v310 = vld [vmem:[%s304] sm:$0xff]
        %vm311 = vcmp.ne.s32.totalorder %v310, 0
        %v312 = vpack.c.bf16 %v306, %v306
        %v313 = vpack.c.bf16 %v307, %v307
        %v314 = vpack.c.bf16 %v308, %v308
        %v315 = vpack.c.bf16 %v309, %v309
        %v316 = vld [vmem:[%s2] sm:$0xff]
        %v317 = vld [vmem:[%s2 + $0x8] sm:$0xff]
        %v318 = vld [vmem:[%s2 + $0x10] sm:$0xff]
        %v319 = vld [vmem:[%s2 + $0x18] sm:$0xff]
        %v320 = vld [vmem:[%s2 + $0x20] sm:$0xff]
        %v321 = vld [vmem:[%s2 + $0x28] sm:$0xff]
        %v322 = vld [vmem:[%s2 + $0x30] sm:$0xff]
        %v323 = vld [vmem:[%s2 + $0x38] sm:$0xff]
        %v324 = vld [vmem:[%s2 + $0x40] sm:$0xff]
        %v325 = vld [vmem:[%s2 + $0x48] sm:$0xff]
        %v326 = vld [vmem:[%s2 + $0x50] sm:$0xff]
        %v327 = vld [vmem:[%s2 + $0x58] sm:$0xff]
        %v328 = vld [vmem:[%s2 + $0x60] sm:$0xff]
        %v329 = vld [vmem:[%s2 + $0x68] sm:$0xff]
        %v330 = vld [vmem:[%s2 + $0x70] sm:$0xff]
        %v331 = vld [vmem:[%s2 + $0x78] sm:$0xff]
        %v332 = vld [vmem:[%s2 + $0x80] sm:$0xff]
        %v333 = vld [vmem:[%s2 + $0x88] sm:$0xff]
        %v334 = vld [vmem:[%s2 + $0x90] sm:$0xff]
        %v335 = vld [vmem:[%s2 + $0x98] sm:$0xff]
        %v336 = vld [vmem:[%s2 + $0xa0] sm:$0xff]
        %v337 = vld [vmem:[%s2 + $0xa8] sm:$0xff]
        %v338 = vld [vmem:[%s2 + $0xb0] sm:$0xff]
        %v339 = vld [vmem:[%s2 + $0xb8] sm:$0xff]
        %v340 = vld [vmem:[%s2 + $0xc0] sm:$0xff]
        %v341 = vld [vmem:[%s2 + $0xc8] sm:$0xff]
        %v342 = vld [vmem:[%s2 + $0xd0] sm:$0xff]
        %v343 = vld [vmem:[%s2 + $0xd8] sm:$0xff]
        %v344 = vld [vmem:[%s2 + $0xe0] sm:$0xff]
        %v345 = vld [vmem:[%s2 + $0xe8] sm:$0xff]
        %v346 = vld [vmem:[%s2 + $0xf0] sm:$0xff]
        %v347 = vld [vmem:[%s2 + $0xf8] sm:$0xff]
        %v348 = vld [vmem:[%s2 + $0x100] sm:$0xff]
        %v349 = vld [vmem:[%s2 + $0x108] sm:$0xff]
        %v350 = vld [vmem:[%s2 + $0x110] sm:$0xff]
        %v351 = vld [vmem:[%s2 + $0x118] sm:$0xff]
        %v352 = vld [vmem:[%s2 + $0x120] sm:$0xff]
        %v353 = vld [vmem:[%s2 + $0x128] sm:$0xff]
        %v354 = vld [vmem:[%s2 + $0x130] sm:$0xff]
        %v355 = vld [vmem:[%s2 + $0x138] sm:$0xff]
        %v356 = vld [vmem:[%s2 + $0x140] sm:$0xff]
        %v357 = vld [vmem:[%s2 + $0x148] sm:$0xff]
        %v358 = vld [vmem:[%s2 + $0x150] sm:$0xff]
        %v359 = vld [vmem:[%s2 + $0x158] sm:$0xff]
        %v360 = vld [vmem:[%s2 + $0x160] sm:$0xff]
        %v361 = vld [vmem:[%s2 + $0x168] sm:$0xff]
        %v362 = vld [vmem:[%s2 + $0x170] sm:$0xff]
        %v363 = vld [vmem:[%s2 + $0x178] sm:$0xff]
        %v364 = vld [vmem:[%s2 + $0x180] sm:$0xff]
        %v365 = vld [vmem:[%s2 + $0x188] sm:$0xff]
        %v366 = vld [vmem:[%s2 + $0x190] sm:$0xff]
        %v367 = vld [vmem:[%s2 + $0x198] sm:$0xff]
        %v368 = vld [vmem:[%s2 + $0x1a0] sm:$0xff]
        %v369 = vld [vmem:[%s2 + $0x1a8] sm:$0xff]
        %v370 = vld [vmem:[%s2 + $0x1b0] sm:$0xff]
        %v371 = vld [vmem:[%s2 + $0x1b8] sm:$0xff]
        %v372 = vld [vmem:[%s2 + $0x1c0] sm:$0xff]
        %v373 = vld [vmem:[%s2 + $0x1c8] sm:$0xff]
        %v374 = vld [vmem:[%s2 + $0x1d0] sm:$0xff]
        %v375 = vld [vmem:[%s2 + $0x1d8] sm:$0xff]
        %v376 = vld [vmem:[%s2 + $0x1e0] sm:$0xff]
        %v377 = vld [vmem:[%s2 + $0x1e8] sm:$0xff]
        %v378 = vld [vmem:[%s2 + $0x1f0] sm:$0xff]
        %v379 = vld [vmem:[%s2 + $0x1f8] sm:$0xff]
        %v380 = vld [vmem:[%s2 + $0x200] sm:$0xff]
        %v381 = vld [vmem:[%s2 + $0x208] sm:$0xff]
        %v382 = vld [vmem:[%s2 + $0x210] sm:$0xff]
        %v383 = vld [vmem:[%s2 + $0x218] sm:$0xff]
        %v384 = vld [vmem:[%s2 + $0x220] sm:$0xff]
        %v385 = vld [vmem:[%s2 + $0x228] sm:$0xff]
        %v386 = vld [vmem:[%s2 + $0x230] sm:$0xff]
        %v387 = vld [vmem:[%s2 + $0x238] sm:$0xff]
        %v388 = vld [vmem:[%s2 + $0x240] sm:$0xff]
        %v389 = vld [vmem:[%s2 + $0x248] sm:$0xff]
        %v390 = vld [vmem:[%s2 + $0x250] sm:$0xff]
        %v391 = vld [vmem:[%s2 + $0x258] sm:$0xff]
        %v392 = vld [vmem:[%s2 + $0x260] sm:$0xff]
        %v393 = vld [vmem:[%s2 + $0x268] sm:$0xff]
        %v394 = vld [vmem:[%s2 + $0x270] sm:$0xff]
        %v395 = vld [vmem:[%s2 + $0x278] sm:$0xff]
        %v396 = vld [vmem:[%s2 + $0x280] sm:$0xff]
        %v397 = vld [vmem:[%s2 + $0x288] sm:$0xff]
        %v398 = vld [vmem:[%s2 + $0x290] sm:$0xff]
        %v399 = vld [vmem:[%s2 + $0x298] sm:$0xff]
        %v400 = vld [vmem:[%s2 + $0x2a0] sm:$0xff]
        %v401 = vld [vmem:[%s2 + $0x2a8] sm:$0xff]
        %v402 = vld [vmem:[%s2 + $0x2b0] sm:$0xff]
        %v403 = vld [vmem:[%s2 + $0x2b8] sm:$0xff]
        %v404 = vld [vmem:[%s2 + $0x2c0] sm:$0xff]
        %v405 = vld [vmem:[%s2 + $0x2c8] sm:$0xff]
        %v406 = vld [vmem:[%s2 + $0x2d0] sm:$0xff]
        %v407 = vld [vmem:[%s2 + $0x2d8] sm:$0xff]
        %v408 = vld [vmem:[%s2 + $0x2e0] sm:$0xff]
        %v409 = vld [vmem:[%s2 + $0x2e8] sm:$0xff]
        %v410 = vld [vmem:[%s2 + $0x2f0] sm:$0xff]
        %v411 = vld [vmem:[%s2 + $0x2f8] sm:$0xff]
        %v412 = vld [vmem:[%s2 + $0x300] sm:$0xff]
        %v413 = vld [vmem:[%s2 + $0x308] sm:$0xff]
        %v414 = vld [vmem:[%s2 + $0x310] sm:$0xff]
        %v415 = vld [vmem:[%s2 + $0x318] sm:$0xff]
        %v416 = vld [vmem:[%s2 + $0x320] sm:$0xff]
        %v417 = vld [vmem:[%s2 + $0x328] sm:$0xff]
        %v418 = vld [vmem:[%s2 + $0x330] sm:$0xff]
        %v419 = vld [vmem:[%s2 + $0x338] sm:$0xff]
        %v420 = vld [vmem:[%s2 + $0x340] sm:$0xff]
        %v421 = vld [vmem:[%s2 + $0x348] sm:$0xff]
        %v422 = vld [vmem:[%s2 + $0x350] sm:$0xff]
        %v423 = vld [vmem:[%s2 + $0x358] sm:$0xff]
        %v424 = vld [vmem:[%s2 + $0x360] sm:$0xff]
        %v425 = vld [vmem:[%s2 + $0x368] sm:$0xff]
        %v426 = vld [vmem:[%s2 + $0x370] sm:$0xff]
        %v427 = vld [vmem:[%s2 + $0x378] sm:$0xff]
        %v428 = vld [vmem:[%s2 + $0x380] sm:$0xff]
        %v429 = vld [vmem:[%s2 + $0x388] sm:$0xff]
        %v430 = vld [vmem:[%s2 + $0x390] sm:$0xff]
        %v431 = vld [vmem:[%s2 + $0x398] sm:$0xff]
        %v432 = vld [vmem:[%s2 + $0x3a0] sm:$0xff]
        %v433 = vld [vmem:[%s2 + $0x3a8] sm:$0xff]
        %v434 = vld [vmem:[%s2 + $0x3b0] sm:$0xff]
        %v435 = vld [vmem:[%s2 + $0x3b8] sm:$0xff]
        %v436 = vld [vmem:[%s2 + $0x3c0] sm:$0xff]
        %v437 = vld [vmem:[%s2 + $0x3c8] sm:$0xff]
        %v438 = vld [vmem:[%s2 + $0x3d0] sm:$0xff]
        %v439 = vld [vmem:[%s2 + $0x3d8] sm:$0xff]
        %v440 = vld [vmem:[%s2 + $0x3e0] sm:$0xff]
        %v441 = vld [vmem:[%s2 + $0x3e8] sm:$0xff]
        %v442 = vld [vmem:[%s2 + $0x3f0] sm:$0xff]
        %v443 = vld [vmem:[%s2 + $0x3f8] sm:$0xff]
        %v444 = vld [vmem:[%s2 + $0x400] sm:$0xff]
        %v445 = vld [vmem:[%s2 + $0x408] sm:$0xff]
        %v446 = vld [vmem:[%s2 + $0x410] sm:$0xff]
        %v447 = vld [vmem:[%s2 + $0x418] sm:$0xff]
        %v448 = vld [vmem:[%s2 + $0x420] sm:$0xff]
        %v449 = vld [vmem:[%s2 + $0x428] sm:$0xff]
        %v450 = vld [vmem:[%s2 + $0x430] sm:$0xff]
        %v451 = vld [vmem:[%s2 + $0x438] sm:$0xff]
        %v452 = vld [vmem:[%s2 + $0x440] sm:$0xff]
        %v453 = vld [vmem:[%s2 + $0x448] sm:$0xff]
        %v454 = vld [vmem:[%s2 + $0x450] sm:$0xff]
        %v455 = vld [vmem:[%s2 + $0x458] sm:$0xff]
        %v456 = vld [vmem:[%s2 + $0x460] sm:$0xff]
        %v457 = vld [vmem:[%s2 + $0x468] sm:$0xff]
        %v458 = vld [vmem:[%s2 + $0x470] sm:$0xff]
        %v459 = vld [vmem:[%s2 + $0x478] sm:$0xff]
        %v460 = vld [vmem:[%s2 + $0x480] sm:$0xff]
        %v461 = vld [vmem:[%s2 + $0x488] sm:$0xff]
        %v462 = vld [vmem:[%s2 + $0x490] sm:$0xff]
        %v463 = vld [vmem:[%s2 + $0x498] sm:$0xff]
        %v464 = vld [vmem:[%s2 + $0x4a0] sm:$0xff]
        %v465 = vld [vmem:[%s2 + $0x4a8] sm:$0xff]
        %v466 = vld [vmem:[%s2 + $0x4b0] sm:$0xff]
        %v467 = vld [vmem:[%s2 + $0x4b8] sm:$0xff]
        %v468 = vld [vmem:[%s2 + $0x4c0] sm:$0xff]
        %v469 = vld [vmem:[%s2 + $0x4c8] sm:$0xff]
        %v470 = vld [vmem:[%s2 + $0x4d0] sm:$0xff]
        %v471 = vld [vmem:[%s2 + $0x4d8] sm:$0xff]
        %v472 = vld [vmem:[%s2 + $0x4e0] sm:$0xff]
        %v473 = vld [vmem:[%s2 + $0x4e8] sm:$0xff]
        %v474 = vld [vmem:[%s2 + $0x4f0] sm:$0xff]
        %v475 = vld [vmem:[%s2 + $0x4f8] sm:$0xff]
        %v476 = vld [vmem:[%s2 + $0x500] sm:$0xff]
        %v477 = vld [vmem:[%s2 + $0x508] sm:$0xff]
        %v478 = vld [vmem:[%s2 + $0x510] sm:$0xff]
        %v479 = vld [vmem:[%s2 + $0x518] sm:$0xff]
        %v480 = vld [vmem:[%s2 + $0x520] sm:$0xff]
        %v481 = vld [vmem:[%s2 + $0x528] sm:$0xff]
        %v482 = vld [vmem:[%s2 + $0x530] sm:$0xff]
        %v483 = vld [vmem:[%s2 + $0x538] sm:$0xff]
        %v484 = vld [vmem:[%s2 + $0x540] sm:$0xff]
        %v485 = vld [vmem:[%s2 + $0x548] sm:$0xff]
        %v486 = vld [vmem:[%s2 + $0x550] sm:$0xff]
        %v487 = vld [vmem:[%s2 + $0x558] sm:$0xff]
        %v488 = vld [vmem:[%s2 + $0x560] sm:$0xff]
        %v489 = vld [vmem:[%s2 + $0x568] sm:$0xff]
        %v490 = vld [vmem:[%s2 + $0x570] sm:$0xff]
        %v491 = vld [vmem:[%s2 + $0x578] sm:$0xff]
        %v492 = vld [vmem:[%s2 + $0x580] sm:$0xff]
        %v493 = vld [vmem:[%s2 + $0x588] sm:$0xff]
        %v494 = vld [vmem:[%s2 + $0x590] sm:$0xff]
        %v495 = vld [vmem:[%s2 + $0x598] sm:$0xff]
        %v496 = vld [vmem:[%s2 + $0x5a0] sm:$0xff]
        %v497 = vld [vmem:[%s2 + $0x5a8] sm:$0xff]
        %v498 = vld [vmem:[%s2 + $0x5b0] sm:$0xff]
        %v499 = vld [vmem:[%s2 + $0x5b8] sm:$0xff]
        %v500 = vld [vmem:[%s2 + $0x5c0] sm:$0xff]
        %v501 = vld [vmem:[%s2 + $0x5c8] sm:$0xff]
        %v502 = vld [vmem:[%s2 + $0x5d0] sm:$0xff]
        %v503 = vld [vmem:[%s2 + $0x5d8] sm:$0xff]
        %v504 = vld [vmem:[%s2 + $0x5e0] sm:$0xff]
        %v505 = vld [vmem:[%s2 + $0x5e8] sm:$0xff]
        %v506 = vld [vmem:[%s2 + $0x5f0] sm:$0xff]
        %v507 = vld [vmem:[%s2 + $0x5f8] sm:$0xff]
        %v508 = vld [vmem:[%s2 + $0x600] sm:$0xff]
        %v509 = vld [vmem:[%s2 + $0x608] sm:$0xff]
        %v510 = vld [vmem:[%s2 + $0x610] sm:$0xff]
        %v511 = vld [vmem:[%s2 + $0x618] sm:$0xff]
        %v512 = vld [vmem:[%s2 + $0x620] sm:$0xff]
        %v513 = vld [vmem:[%s2 + $0x628] sm:$0xff]
        %v514 = vld [vmem:[%s2 + $0x630] sm:$0xff]
        %v515 = vld [vmem:[%s2 + $0x638] sm:$0xff]
        %v516 = vld [vmem:[%s2 + $0x640] sm:$0xff]
        %v517 = vld [vmem:[%s2 + $0x648] sm:$0xff]
        %v518 = vld [vmem:[%s2 + $0x650] sm:$0xff]
        %v519 = vld [vmem:[%s2 + $0x658] sm:$0xff]
        %v520 = vld [vmem:[%s2 + $0x660] sm:$0xff]
        %v521 = vld [vmem:[%s2 + $0x668] sm:$0xff]
        %v522 = vld [vmem:[%s2 + $0x670] sm:$0xff]
        %v523 = vld [vmem:[%s2 + $0x678] sm:$0xff]
        %v524 = vld [vmem:[%s2 + $0x680] sm:$0xff]
        %v525 = vld [vmem:[%s2 + $0x688] sm:$0xff]
        %v526 = vld [vmem:[%s2 + $0x690] sm:$0xff]
        %v527 = vld [vmem:[%s2 + $0x698] sm:$0xff]
        %v528 = vld [vmem:[%s2 + $0x6a0] sm:$0xff]
        %v529 = vld [vmem:[%s2 + $0x6a8] sm:$0xff]
        %v530 = vld [vmem:[%s2 + $0x6b0] sm:$0xff]
        %v531 = vld [vmem:[%s2 + $0x6b8] sm:$0xff]
        %v532 = vld [vmem:[%s2 + $0x6c0] sm:$0xff]
        %v533 = vld [vmem:[%s2 + $0x6c8] sm:$0xff]
        %v534 = vld [vmem:[%s2 + $0x6d0] sm:$0xff]
        %v535 = vld [vmem:[%s2 + $0x6d8] sm:$0xff]
        %v536 = vld [vmem:[%s2 + $0x6e0] sm:$0xff]
        %v537 = vld [vmem:[%s2 + $0x6e8] sm:$0xff]
        %v538 = vld [vmem:[%s2 + $0x6f0] sm:$0xff]
        %v539 = vld [vmem:[%s2 + $0x6f8] sm:$0xff]
        %v540 = vld [vmem:[%s2 + $0x700] sm:$0xff]
        %v541 = vld [vmem:[%s2 + $0x708] sm:$0xff]
        %v542 = vld [vmem:[%s2 + $0x710] sm:$0xff]
        %v543 = vld [vmem:[%s2 + $0x718] sm:$0xff]
        %v544 = vld [vmem:[%s2 + $0x720] sm:$0xff]
        %v545 = vld [vmem:[%s2 + $0x728] sm:$0xff]
        %v546 = vld [vmem:[%s2 + $0x730] sm:$0xff]
        %v547 = vld [vmem:[%s2 + $0x738] sm:$0xff]
        %v548 = vld [vmem:[%s2 + $0x740] sm:$0xff]
        %v549 = vld [vmem:[%s2 + $0x748] sm:$0xff]
        %v550 = vld [vmem:[%s2 + $0x750] sm:$0xff]
        %v551 = vld [vmem:[%s2 + $0x758] sm:$0xff]
        %v552 = vld [vmem:[%s2 + $0x760] sm:$0xff]
        %v553 = vld [vmem:[%s2 + $0x768] sm:$0xff]
        %v554 = vld [vmem:[%s2 + $0x770] sm:$0xff]
        %v555 = vld [vmem:[%s2 + $0x778] sm:$0xff]
        %v556 = vld [vmem:[%s2 + $0x780] sm:$0xff]
        %v557 = vld [vmem:[%s2 + $0x788] sm:$0xff]
        %v558 = vld [vmem:[%s2 + $0x790] sm:$0xff]
        %v559 = vld [vmem:[%s2 + $0x798] sm:$0xff]
        %v560 = vld [vmem:[%s2 + $0x7a0] sm:$0xff]
        %v561 = vld [vmem:[%s2 + $0x7a8] sm:$0xff]
        %v562 = vld [vmem:[%s2 + $0x7b0] sm:$0xff]
        %v563 = vld [vmem:[%s2 + $0x7b8] sm:$0xff]
        %v564 = vld [vmem:[%s2 + $0x7c0] sm:$0xff]
        %v565 = vld [vmem:[%s2 + $0x7c8] sm:$0xff]
        %v566 = vld [vmem:[%s2 + $0x7d0] sm:$0xff]
        %v567 = vld [vmem:[%s2 + $0x7d8] sm:$0xff]
        %v568 = vld [vmem:[%s2 + $0x7e0] sm:$0xff]
        %v569 = vld [vmem:[%s2 + $0x7e8] sm:$0xff]
        %v570 = vld [vmem:[%s2 + $0x7f0] sm:$0xff]
        %v571 = vld [vmem:[%s2 + $0x7f8] sm:$0xff]
        %v572 = vld [vmem:[%s2 + $0x800] sm:$0xff]
        %v573 = vld [vmem:[%s2 + $0x808] sm:$0xff]
        %v574 = vld [vmem:[%s2 + $0x810] sm:$0xff]
        %v575 = vld [vmem:[%s2 + $0x818] sm:$0xff]
        %v576 = vld [vmem:[%s2 + $0x820] sm:$0xff]
        %v577 = vld [vmem:[%s2 + $0x828] sm:$0xff]
        %v578 = vld [vmem:[%s2 + $0x830] sm:$0xff]
        %v579 = vld [vmem:[%s2 + $0x838] sm:$0xff]
        %v580 = vld [vmem:[%s2 + $0x840] sm:$0xff]
        %v581 = vld [vmem:[%s2 + $0x848] sm:$0xff]
        %v582 = vld [vmem:[%s2 + $0x850] sm:$0xff]
        %v583 = vld [vmem:[%s2 + $0x858] sm:$0xff]
        %v584 = vld [vmem:[%s2 + $0x860] sm:$0xff]
        %v585 = vld [vmem:[%s2 + $0x868] sm:$0xff]
        %v586 = vld [vmem:[%s2 + $0x870] sm:$0xff]
        %v587 = vld [vmem:[%s2 + $0x878] sm:$0xff]
        %v588 = vld [vmem:[%s2 + $0x880] sm:$0xff]
        %v589 = vld [vmem:[%s2 + $0x888] sm:$0xff]
        %v590 = vld [vmem:[%s2 + $0x890] sm:$0xff]
        %v591 = vld [vmem:[%s2 + $0x898] sm:$0xff]
        %v592 = vld [vmem:[%s2 + $0x8a0] sm:$0xff]
        %v593 = vld [vmem:[%s2 + $0x8a8] sm:$0xff]
        %v594 = vld [vmem:[%s2 + $0x8b0] sm:$0xff]
        %v595 = vld [vmem:[%s2 + $0x8b8] sm:$0xff]
        %v596 = vld [vmem:[%s2 + $0x8c0] sm:$0xff]
        %v597 = vld [vmem:[%s2 + $0x8c8] sm:$0xff]
        %v598 = vld [vmem:[%s2 + $0x8d0] sm:$0xff]
        %v599 = vld [vmem:[%s2 + $0x8d8] sm:$0xff]
        %v600 = vld [vmem:[%s2 + $0x8e0] sm:$0xff]
        %v601 = vld [vmem:[%s2 + $0x8e8] sm:$0xff]
        %v602 = vld [vmem:[%s2 + $0x8f0] sm:$0xff]
        %v603 = vld [vmem:[%s2 + $0x8f8] sm:$0xff]
        %v604 = vld [vmem:[%s2 + $0x900] sm:$0xff]
        %v605 = vld [vmem:[%s2 + $0x908] sm:$0xff]
        %v606 = vld [vmem:[%s2 + $0x910] sm:$0xff]
        %v607 = vld [vmem:[%s2 + $0x918] sm:$0xff]
        %v608 = vld [vmem:[%s2 + $0x920] sm:$0xff]
        %v609 = vld [vmem:[%s2 + $0x928] sm:$0xff]
        %v610 = vld [vmem:[%s2 + $0x930] sm:$0xff]
        %v611 = vld [vmem:[%s2 + $0x938] sm:$0xff]
        %v612 = vld [vmem:[%s2 + $0x940] sm:$0xff]
        %v613 = vld [vmem:[%s2 + $0x948] sm:$0xff]
        %v614 = vld [vmem:[%s2 + $0x950] sm:$0xff]
        %v615 = vld [vmem:[%s2 + $0x958] sm:$0xff]
        %v616 = vld [vmem:[%s2 + $0x960] sm:$0xff]
        %v617 = vld [vmem:[%s2 + $0x968] sm:$0xff]
        %v618 = vld [vmem:[%s2 + $0x970] sm:$0xff]
        %v619 = vld [vmem:[%s2 + $0x978] sm:$0xff]
        %v620 = vld [vmem:[%s2 + $0x980] sm:$0xff]
        %v621 = vld [vmem:[%s2 + $0x988] sm:$0xff]
        %v622 = vld [vmem:[%s2 + $0x990] sm:$0xff]
        %v623 = vld [vmem:[%s2 + $0x998] sm:$0xff]
        %v624 = vld [vmem:[%s2 + $0x9a0] sm:$0xff]
        %v625 = vld [vmem:[%s2 + $0x9a8] sm:$0xff]
        %v626 = vld [vmem:[%s2 + $0x9b0] sm:$0xff]
        %v627 = vld [vmem:[%s2 + $0x9b8] sm:$0xff]
        %v628 = vld [vmem:[%s2 + $0x9c0] sm:$0xff]
        %v629 = vld [vmem:[%s2 + $0x9c8] sm:$0xff]
        %v630 = vld [vmem:[%s2 + $0x9d0] sm:$0xff]
        %v631 = vld [vmem:[%s2 + $0x9d8] sm:$0xff]
        %v632 = vld [vmem:[%s2 + $0x9e0] sm:$0xff]
        %v633 = vld [vmem:[%s2 + $0x9e8] sm:$0xff]
        %v634 = vld [vmem:[%s2 + $0x9f0] sm:$0xff]
        %v635 = vld [vmem:[%s2 + $0x9f8] sm:$0xff]
        %v636 = vld [vmem:[%s2 + $0xa00] sm:$0xff]
        %v637 = vld [vmem:[%s2 + $0xa08] sm:$0xff]
        %v638 = vld [vmem:[%s2 + $0xa10] sm:$0xff]
        %v639 = vld [vmem:[%s2 + $0xa18] sm:$0xff]
        %v640 = vld [vmem:[%s2 + $0xa20] sm:$0xff]
        %v641 = vld [vmem:[%s2 + $0xa28] sm:$0xff]
        %v642 = vld [vmem:[%s2 + $0xa30] sm:$0xff]
        %v643 = vld [vmem:[%s2 + $0xa38] sm:$0xff]
        %v644 = vld [vmem:[%s2 + $0xa40] sm:$0xff]
        %v645 = vld [vmem:[%s2 + $0xa48] sm:$0xff]
        %v646 = vld [vmem:[%s2 + $0xa50] sm:$0xff]
        %v647 = vld [vmem:[%s2 + $0xa58] sm:$0xff]
        %v648 = vld [vmem:[%s2 + $0xa60] sm:$0xff]
        %v649 = vld [vmem:[%s2 + $0xa68] sm:$0xff]
        %v650 = vld [vmem:[%s2 + $0xa70] sm:$0xff]
        %v651 = vld [vmem:[%s2 + $0xa78] sm:$0xff]
        %v652 = vld [vmem:[%s2 + $0xa80] sm:$0xff]
        %v653 = vld [vmem:[%s2 + $0xa88] sm:$0xff]
        %v654 = vld [vmem:[%s2 + $0xa90] sm:$0xff]
        %v655 = vld [vmem:[%s2 + $0xa98] sm:$0xff]
        %v656 = vld [vmem:[%s2 + $0xaa0] sm:$0xff]
        %v657 = vld [vmem:[%s2 + $0xaa8] sm:$0xff]
        %v658 = vld [vmem:[%s2 + $0xab0] sm:$0xff]
        %v659 = vld [vmem:[%s2 + $0xab8] sm:$0xff]
        %v660 = vld [vmem:[%s2 + $0xac0] sm:$0xff]
        %v661 = vld [vmem:[%s2 + $0xac8] sm:$0xff]
        %v662 = vld [vmem:[%s2 + $0xad0] sm:$0xff]
        %v663 = vld [vmem:[%s2 + $0xad8] sm:$0xff]
        %v664 = vld [vmem:[%s2 + $0xae0] sm:$0xff]
        %v665 = vld [vmem:[%s2 + $0xae8] sm:$0xff]
        %v666 = vld [vmem:[%s2 + $0xaf0] sm:$0xff]
        %v667 = vld [vmem:[%s2 + $0xaf8] sm:$0xff]
        %v668 = vld [vmem:[%s2 + $0xb00] sm:$0xff]
        %v669 = vld [vmem:[%s2 + $0xb08] sm:$0xff]
        %v670 = vld [vmem:[%s2 + $0xb10] sm:$0xff]
        %v671 = vld [vmem:[%s2 + $0xb18] sm:$0xff]
        %v672 = vld [vmem:[%s2 + $0xb20] sm:$0xff]
        %v673 = vld [vmem:[%s2 + $0xb28] sm:$0xff]
        %v674 = vld [vmem:[%s2 + $0xb30] sm:$0xff]
        %v675 = vld [vmem:[%s2 + $0xb38] sm:$0xff]
        %v676 = vld [vmem:[%s2 + $0xb40] sm:$0xff]
        %v677 = vld [vmem:[%s2 + $0xb48] sm:$0xff]
        %v678 = vld [vmem:[%s2 + $0xb50] sm:$0xff]
        %v679 = vld [vmem:[%s2 + $0xb58] sm:$0xff]
        %v680 = vld [vmem:[%s2 + $0xb60] sm:$0xff]
        %v681 = vld [vmem:[%s2 + $0xb68] sm:$0xff]
        %v682 = vld [vmem:[%s2 + $0xb70] sm:$0xff]
        %v683 = vld [vmem:[%s2 + $0xb78] sm:$0xff]
        %v684 = vld [vmem:[%s2 + $0xb80] sm:$0xff]
        %v685 = vld [vmem:[%s2 + $0xb88] sm:$0xff]
        %v686 = vld [vmem:[%s2 + $0xb90] sm:$0xff]
        %v687 = vld [vmem:[%s2 + $0xb98] sm:$0xff]
        %v688 = vld [vmem:[%s2 + $0xba0] sm:$0xff]
        %v689 = vld [vmem:[%s2 + $0xba8] sm:$0xff]
        %v690 = vld [vmem:[%s2 + $0xbb0] sm:$0xff]
        %v691 = vld [vmem:[%s2 + $0xbb8] sm:$0xff]
        %v692 = vld [vmem:[%s2 + $0xbc0] sm:$0xff]
        %v693 = vld [vmem:[%s2 + $0xbc8] sm:$0xff]
        %v694 = vld [vmem:[%s2 + $0xbd0] sm:$0xff]
        %v695 = vld [vmem:[%s2 + $0xbd8] sm:$0xff]
        %v696 = vld [vmem:[%s2 + $0xbe0] sm:$0xff]
        %v697 = vld [vmem:[%s2 + $0xbe8] sm:$0xff]
        %v698 = vld [vmem:[%s2 + $0xbf0] sm:$0xff]
        %v699 = vld [vmem:[%s2 + $0xbf8] sm:$0xff]
        %v1084 = vunpack.c.l.b16 %v316
        %v1085 = vunpack.c.h.b16 %v316
        %v1086 = vunpack.c.l.b16 %v317
        %v1087 = vunpack.c.h.b16 %v317
        %v1088 = vunpack.c.l.b16 %v318
        %v1089 = vunpack.c.h.b16 %v318
        %v1090 = vunpack.c.l.b16 %v319
        %v1091 = vunpack.c.h.b16 %v319
        %v1092 = vunpack.c.l.b16 %v320
        %v1093 = vunpack.c.h.b16 %v320
        %v1094 = vunpack.c.l.b16 %v321
        %v1095 = vunpack.c.h.b16 %v321
        %v1096 = vunpack.c.l.b16 %v322
        %v1097 = vunpack.c.h.b16 %v322
        %v1098 = vunpack.c.l.b16 %v323
        %v1099 = vunpack.c.h.b16 %v323
        %v1100 = vunpack.c.l.b16 %v324
        %v1101 = vunpack.c.h.b16 %v324
        %v1102 = vunpack.c.l.b16 %v325
        %v1103 = vunpack.c.h.b16 %v325
        %v1104 = vunpack.c.l.b16 %v326
        %v1105 = vunpack.c.h.b16 %v326
        %v1106 = vunpack.c.l.b16 %v327
        %v1107 = vunpack.c.h.b16 %v327
        %v1108 = vunpack.c.l.b16 %v328
        %v1109 = vunpack.c.h.b16 %v328
        %v1110 = vunpack.c.l.b16 %v329
        %v1111 = vunpack.c.h.b16 %v329
        %v1112 = vunpack.c.l.b16 %v330
        %v1113 = vunpack.c.h.b16 %v330
        %v1114 = vunpack.c.l.b16 %v331
        %v1115 = vunpack.c.h.b16 %v331
        %v1116 = vunpack.c.l.b16 %v332
        %v1117 = vunpack.c.h.b16 %v332
        %v1118 = vunpack.c.l.b16 %v333
        %v1119 = vunpack.c.h.b16 %v333
        %v1120 = vunpack.c.l.b16 %v334
        %v1121 = vunpack.c.h.b16 %v334
        %v1122 = vunpack.c.l.b16 %v335
        %v1123 = vunpack.c.h.b16 %v335
        %v1124 = vunpack.c.l.b16 %v336
        %v1125 = vunpack.c.h.b16 %v336
        %v1126 = vunpack.c.l.b16 %v337
        %v1127 = vunpack.c.h.b16 %v337
        %v1128 = vunpack.c.l.b16 %v338
        %v1129 = vunpack.c.h.b16 %v338
        %v1130 = vunpack.c.l.b16 %v339
        %v1131 = vunpack.c.h.b16 %v339
        %v1132 = vunpack.c.l.b16 %v340
        %v1133 = vunpack.c.h.b16 %v340
        %v1134 = vunpack.c.l.b16 %v341
        %v1135 = vunpack.c.h.b16 %v341
        %v1136 = vunpack.c.l.b16 %v342
        %v1137 = vunpack.c.h.b16 %v342
        %v1138 = vunpack.c.l.b16 %v343
        %v1139 = vunpack.c.h.b16 %v343
        %v1140 = vunpack.c.l.b16 %v344
        %v1141 = vunpack.c.h.b16 %v344
        %v1142 = vunpack.c.l.b16 %v345
        %v1143 = vunpack.c.h.b16 %v345
        %v1144 = vunpack.c.l.b16 %v346
        %v1145 = vunpack.c.h.b16 %v346
        %v1146 = vunpack.c.l.b16 %v347
        %v1147 = vunpack.c.h.b16 %v347
        %v1148 = vunpack.c.l.b16 %v348
        %v1149 = vunpack.c.h.b16 %v348
        %v1150 = vunpack.c.l.b16 %v349
        %v1151 = vunpack.c.h.b16 %v349
        %v1152 = vunpack.c.l.b16 %v350
        %v1153 = vunpack.c.h.b16 %v350
        %v1154 = vunpack.c.l.b16 %v351
        %v1155 = vunpack.c.h.b16 %v351
        %v1156 = vunpack.c.l.b16 %v352
        %v1157 = vunpack.c.h.b16 %v352
        %v1158 = vunpack.c.l.b16 %v353
        %v1159 = vunpack.c.h.b16 %v353
        %v1160 = vunpack.c.l.b16 %v354
        %v1161 = vunpack.c.h.b16 %v354
        %v1162 = vunpack.c.l.b16 %v355
        %v1163 = vunpack.c.h.b16 %v355
        %v1164 = vunpack.c.l.b16 %v356
        %v1165 = vunpack.c.h.b16 %v356
        %v1166 = vunpack.c.l.b16 %v357
        %v1167 = vunpack.c.h.b16 %v357
        %v1168 = vunpack.c.l.b16 %v358
        %v1169 = vunpack.c.h.b16 %v358
        %v1170 = vunpack.c.l.b16 %v359
        %v1171 = vunpack.c.h.b16 %v359
        %v1172 = vunpack.c.l.b16 %v360
        %v1173 = vunpack.c.h.b16 %v360
        %v1174 = vunpack.c.l.b16 %v361
        %v1175 = vunpack.c.h.b16 %v361
        %v1176 = vunpack.c.l.b16 %v362
        %v1177 = vunpack.c.h.b16 %v362
        %v1178 = vunpack.c.l.b16 %v363
        %v1179 = vunpack.c.h.b16 %v363
        %v1180 = vunpack.c.l.b16 %v364
        %v1181 = vunpack.c.h.b16 %v364
        %v1182 = vunpack.c.l.b16 %v365
        %v1183 = vunpack.c.h.b16 %v365
        %v1184 = vunpack.c.l.b16 %v366
        %v1185 = vunpack.c.h.b16 %v366
        %v1186 = vunpack.c.l.b16 %v367
        %v1187 = vunpack.c.h.b16 %v367
        %v1188 = vunpack.c.l.b16 %v368
        %v1189 = vunpack.c.h.b16 %v368
        %v1190 = vunpack.c.l.b16 %v369
        %v1191 = vunpack.c.h.b16 %v369
        %v1192 = vunpack.c.l.b16 %v370
        %v1193 = vunpack.c.h.b16 %v370
        %v1194 = vunpack.c.l.b16 %v371
        %v1195 = vunpack.c.h.b16 %v371
        %v1196 = vunpack.c.l.b16 %v372
        %v1197 = vunpack.c.h.b16 %v372
        %v1198 = vunpack.c.l.b16 %v373
        %v1199 = vunpack.c.h.b16 %v373
        %v1200 = vunpack.c.l.b16 %v374
        %v1201 = vunpack.c.h.b16 %v374
        %v1202 = vunpack.c.l.b16 %v375
        %v1203 = vunpack.c.h.b16 %v375
        %v1204 = vunpack.c.l.b16 %v376
        %v1205 = vunpack.c.h.b16 %v376
        %v1206 = vunpack.c.l.b16 %v377
        %v1207 = vunpack.c.h.b16 %v377
        %v1208 = vunpack.c.l.b16 %v378
        %v1209 = vunpack.c.h.b16 %v378
        %v1210 = vunpack.c.l.b16 %v379
        %v1211 = vunpack.c.h.b16 %v379
        %v1212 = vunpack.c.l.b16 %v380
        %v1213 = vunpack.c.h.b16 %v380
        %v1214 = vunpack.c.l.b16 %v381
        %v1215 = vunpack.c.h.b16 %v381
        %v1216 = vunpack.c.l.b16 %v382
        %v1217 = vunpack.c.h.b16 %v382
        %v1218 = vunpack.c.l.b16 %v383
        %v1219 = vunpack.c.h.b16 %v383
        %v1220 = vunpack.c.l.b16 %v384
        %v1221 = vunpack.c.h.b16 %v384
        %v1222 = vunpack.c.l.b16 %v385
        %v1223 = vunpack.c.h.b16 %v385
        %v1224 = vunpack.c.l.b16 %v386
        %v1225 = vunpack.c.h.b16 %v386
        %v1226 = vunpack.c.l.b16 %v387
        %v1227 = vunpack.c.h.b16 %v387
        %v1228 = vunpack.c.l.b16 %v388
        %v1229 = vunpack.c.h.b16 %v388
        %v1230 = vunpack.c.l.b16 %v389
        %v1231 = vunpack.c.h.b16 %v389
        %v1232 = vunpack.c.l.b16 %v390
        %v1233 = vunpack.c.h.b16 %v390
        %v1234 = vunpack.c.l.b16 %v391
        %v1235 = vunpack.c.h.b16 %v391
        %v1236 = vunpack.c.l.b16 %v392
        %v1237 = vunpack.c.h.b16 %v392
        %v1238 = vunpack.c.l.b16 %v393
        %v1239 = vunpack.c.h.b16 %v393
        %v1240 = vunpack.c.l.b16 %v394
        %v1241 = vunpack.c.h.b16 %v394
        %v1242 = vunpack.c.l.b16 %v395
        %v1243 = vunpack.c.h.b16 %v395
        %v1244 = vunpack.c.l.b16 %v396
        %v1245 = vunpack.c.h.b16 %v396
        %v1246 = vunpack.c.l.b16 %v397
        %v1247 = vunpack.c.h.b16 %v397
        %v1248 = vunpack.c.l.b16 %v398
        %v1249 = vunpack.c.h.b16 %v398
        %v1250 = vunpack.c.l.b16 %v399
        %v1251 = vunpack.c.h.b16 %v399
        %v1252 = vunpack.c.l.b16 %v400
        %v1253 = vunpack.c.h.b16 %v400
        %v1254 = vunpack.c.l.b16 %v401
        %v1255 = vunpack.c.h.b16 %v401
        %v1256 = vunpack.c.l.b16 %v402
        %v1257 = vunpack.c.h.b16 %v402
        %v1258 = vunpack.c.l.b16 %v403
        %v1259 = vunpack.c.h.b16 %v403
        %v1260 = vunpack.c.l.b16 %v404
        %v1261 = vunpack.c.h.b16 %v404
        %v1262 = vunpack.c.l.b16 %v405
        %v1263 = vunpack.c.h.b16 %v405
        %v1264 = vunpack.c.l.b16 %v406
        %v1265 = vunpack.c.h.b16 %v406
        %v1266 = vunpack.c.l.b16 %v407
        %v1267 = vunpack.c.h.b16 %v407
        %v1268 = vunpack.c.l.b16 %v408
        %v1269 = vunpack.c.h.b16 %v408
        %v1270 = vunpack.c.l.b16 %v409
        %v1271 = vunpack.c.h.b16 %v409
        %v1272 = vunpack.c.l.b16 %v410
        %v1273 = vunpack.c.h.b16 %v410
        %v1274 = vunpack.c.l.b16 %v411
        %v1275 = vunpack.c.h.b16 %v411
        %v1276 = vunpack.c.l.b16 %v412
        %v1277 = vunpack.c.h.b16 %v412
        %v1278 = vunpack.c.l.b16 %v413
        %v1279 = vunpack.c.h.b16 %v413
        %v1280 = vunpack.c.l.b16 %v414
        %v1281 = vunpack.c.h.b16 %v414
        %v1282 = vunpack.c.l.b16 %v415
        %v1283 = vunpack.c.h.b16 %v415
        %v1284 = vunpack.c.l.b16 %v416
        %v1285 = vunpack.c.h.b16 %v416
        %v1286 = vunpack.c.l.b16 %v417
        %v1287 = vunpack.c.h.b16 %v417
        %v1288 = vunpack.c.l.b16 %v418
        %v1289 = vunpack.c.h.b16 %v418
        %v1290 = vunpack.c.l.b16 %v419
        %v1291 = vunpack.c.h.b16 %v419
        %v1292 = vunpack.c.l.b16 %v420
        %v1293 = vunpack.c.h.b16 %v420
        %v1294 = vunpack.c.l.b16 %v421
        %v1295 = vunpack.c.h.b16 %v421
        %v1296 = vunpack.c.l.b16 %v422
        %v1297 = vunpack.c.h.b16 %v422
        %v1298 = vunpack.c.l.b16 %v423
        %v1299 = vunpack.c.h.b16 %v423
        %v1300 = vunpack.c.l.b16 %v424
        %v1301 = vunpack.c.h.b16 %v424
        %v1302 = vunpack.c.l.b16 %v425
        %v1303 = vunpack.c.h.b16 %v425
        %v1304 = vunpack.c.l.b16 %v426
        %v1305 = vunpack.c.h.b16 %v426
        %v1306 = vunpack.c.l.b16 %v427
        %v1307 = vunpack.c.h.b16 %v427
        %v1308 = vunpack.c.l.b16 %v428
        %v1309 = vunpack.c.h.b16 %v428
        %v1310 = vunpack.c.l.b16 %v429
        %v1311 = vunpack.c.h.b16 %v429
        %v1312 = vunpack.c.l.b16 %v430
        %v1313 = vunpack.c.h.b16 %v430
        %v1314 = vunpack.c.l.b16 %v431
        %v1315 = vunpack.c.h.b16 %v431
        %v1316 = vunpack.c.l.b16 %v432
        %v1317 = vunpack.c.h.b16 %v432
        %v1318 = vunpack.c.l.b16 %v433
        %v1319 = vunpack.c.h.b16 %v433
        %v1320 = vunpack.c.l.b16 %v434
        %v1321 = vunpack.c.h.b16 %v434
        %v1322 = vunpack.c.l.b16 %v435
        %v1323 = vunpack.c.h.b16 %v435
        %v1324 = vunpack.c.l.b16 %v436
        %v1325 = vunpack.c.h.b16 %v436
        %v1326 = vunpack.c.l.b16 %v437
        %v1327 = vunpack.c.h.b16 %v437
        %v1328 = vunpack.c.l.b16 %v438
        %v1329 = vunpack.c.h.b16 %v438
        %v1330 = vunpack.c.l.b16 %v439
        %v1331 = vunpack.c.h.b16 %v439
        %v1332 = vunpack.c.l.b16 %v440
        %v1333 = vunpack.c.h.b16 %v440
        %v1334 = vunpack.c.l.b16 %v441
        %v1335 = vunpack.c.h.b16 %v441
        %v1336 = vunpack.c.l.b16 %v442
        %v1337 = vunpack.c.h.b16 %v442
        %v1338 = vunpack.c.l.b16 %v443
        %v1339 = vunpack.c.h.b16 %v443
        %v1340 = vunpack.c.l.b16 %v444
        %v1341 = vunpack.c.h.b16 %v444
        %v1342 = vunpack.c.l.b16 %v445
        %v1343 = vunpack.c.h.b16 %v445
        %v1344 = vunpack.c.l.b16 %v446
        %v1345 = vunpack.c.h.b16 %v446
        %v1346 = vunpack.c.l.b16 %v447
        %v1347 = vunpack.c.h.b16 %v447
        %v1348 = vunpack.c.l.b16 %v448
        %v1349 = vunpack.c.h.b16 %v448
        %v1350 = vunpack.c.l.b16 %v449
        %v1351 = vunpack.c.h.b16 %v449
        %v1352 = vunpack.c.l.b16 %v450
        %v1353 = vunpack.c.h.b16 %v450
        %v1354 = vunpack.c.l.b16 %v451
        %v1355 = vunpack.c.h.b16 %v451
        %v1356 = vunpack.c.l.b16 %v452
        %v1357 = vunpack.c.h.b16 %v452
        %v1358 = vunpack.c.l.b16 %v453
        %v1359 = vunpack.c.h.b16 %v453
        %v1360 = vunpack.c.l.b16 %v454
        %v1361 = vunpack.c.h.b16 %v454
        %v1362 = vunpack.c.l.b16 %v455
        %v1363 = vunpack.c.h.b16 %v455
        %v1364 = vunpack.c.l.b16 %v456
        %v1365 = vunpack.c.h.b16 %v456
        %v1366 = vunpack.c.l.b16 %v457
        %v1367 = vunpack.c.h.b16 %v457
        %v1368 = vunpack.c.l.b16 %v458
        %v1369 = vunpack.c.h.b16 %v458
        %v1370 = vunpack.c.l.b16 %v459
        %v1371 = vunpack.c.h.b16 %v459
        %v1372 = vunpack.c.l.b16 %v460
        %v1373 = vunpack.c.h.b16 %v460
        %v1374 = vunpack.c.l.b16 %v461
        %v1375 = vunpack.c.h.b16 %v461
        %v1376 = vunpack.c.l.b16 %v462
        %v1377 = vunpack.c.h.b16 %v462
        %v1378 = vunpack.c.l.b16 %v463
        %v1379 = vunpack.c.h.b16 %v463
        %v1380 = vunpack.c.l.b16 %v464
        %v1381 = vunpack.c.h.b16 %v464
        %v1382 = vunpack.c.l.b16 %v465
        %v1383 = vunpack.c.h.b16 %v465
        %v1384 = vunpack.c.l.b16 %v466
        %v1385 = vunpack.c.h.b16 %v466
        %v1386 = vunpack.c.l.b16 %v467
        %v1387 = vunpack.c.h.b16 %v467
        %v1388 = vunpack.c.l.b16 %v468
        %v1389 = vunpack.c.h.b16 %v468
        %v1390 = vunpack.c.l.b16 %v469
        %v1391 = vunpack.c.h.b16 %v469
        %v1392 = vunpack.c.l.b16 %v470
        %v1393 = vunpack.c.h.b16 %v470
        %v1394 = vunpack.c.l.b16 %v471
        %v1395 = vunpack.c.h.b16 %v471
        %v1396 = vunpack.c.l.b16 %v472
        %v1397 = vunpack.c.h.b16 %v472
        %v1398 = vunpack.c.l.b16 %v473
        %v1399 = vunpack.c.h.b16 %v473
        %v1400 = vunpack.c.l.b16 %v474
        %v1401 = vunpack.c.h.b16 %v474
        %v1402 = vunpack.c.l.b16 %v475
        %v1403 = vunpack.c.h.b16 %v475
        %v1404 = vunpack.c.l.b16 %v476
        %v1405 = vunpack.c.h.b16 %v476
        %v1406 = vunpack.c.l.b16 %v477
        %v1407 = vunpack.c.h.b16 %v477
        %v1408 = vunpack.c.l.b16 %v478
        %v1409 = vunpack.c.h.b16 %v478
        %v1410 = vunpack.c.l.b16 %v479
        %v1411 = vunpack.c.h.b16 %v479
        %v1412 = vunpack.c.l.b16 %v480
        %v1413 = vunpack.c.h.b16 %v480
        %v1414 = vunpack.c.l.b16 %v481
        %v1415 = vunpack.c.h.b16 %v481
        %v1416 = vunpack.c.l.b16 %v482
        %v1417 = vunpack.c.h.b16 %v482
        %v1418 = vunpack.c.l.b16 %v483
        %v1419 = vunpack.c.h.b16 %v483
        %v1420 = vunpack.c.l.b16 %v484
        %v1421 = vunpack.c.h.b16 %v484
        %v1422 = vunpack.c.l.b16 %v485
        %v1423 = vunpack.c.h.b16 %v485
        %v1424 = vunpack.c.l.b16 %v486
        %v1425 = vunpack.c.h.b16 %v486
        %v1426 = vunpack.c.l.b16 %v487
        %v1427 = vunpack.c.h.b16 %v487
        %v1428 = vunpack.c.l.b16 %v488
        %v1429 = vunpack.c.h.b16 %v488
        %v1430 = vunpack.c.l.b16 %v489
        %v1431 = vunpack.c.h.b16 %v489
        %v1432 = vunpack.c.l.b16 %v490
        %v1433 = vunpack.c.h.b16 %v490
        %v1434 = vunpack.c.l.b16 %v491
        %v1435 = vunpack.c.h.b16 %v491
        %v1436 = vunpack.c.l.b16 %v492
        %v1437 = vunpack.c.h.b16 %v492
        %v1438 = vunpack.c.l.b16 %v493
        %v1439 = vunpack.c.h.b16 %v493
        %v1440 = vunpack.c.l.b16 %v494
        %v1441 = vunpack.c.h.b16 %v494
        %v1442 = vunpack.c.l.b16 %v495
        %v1443 = vunpack.c.h.b16 %v495
        %v1444 = vunpack.c.l.b16 %v496
        %v1445 = vunpack.c.h.b16 %v496
        %v1446 = vunpack.c.l.b16 %v497
        %v1447 = vunpack.c.h.b16 %v497
        %v1448 = vunpack.c.l.b16 %v498
        %v1449 = vunpack.c.h.b16 %v498
        %v1450 = vunpack.c.l.b16 %v499
        %v1451 = vunpack.c.h.b16 %v499
        %v1452 = vunpack.c.l.b16 %v500
        %v1453 = vunpack.c.h.b16 %v500
        %v1454 = vunpack.c.l.b16 %v501
        %v1455 = vunpack.c.h.b16 %v501
        %v1456 = vunpack.c.l.b16 %v502
        %v1457 = vunpack.c.h.b16 %v502
        %v1458 = vunpack.c.l.b16 %v503
        %v1459 = vunpack.c.h.b16 %v503
        %v1460 = vunpack.c.l.b16 %v504
        %v1461 = vunpack.c.h.b16 %v504
        %v1462 = vunpack.c.l.b16 %v505
        %v1463 = vunpack.c.h.b16 %v505
        %v1464 = vunpack.c.l.b16 %v506
        %v1465 = vunpack.c.h.b16 %v506
        %v1466 = vunpack.c.l.b16 %v507
        %v1467 = vunpack.c.h.b16 %v507
        %v1468 = vunpack.c.l.b16 %v508
        %v1469 = vunpack.c.h.b16 %v508
        %v1470 = vunpack.c.l.b16 %v509
        %v1471 = vunpack.c.h.b16 %v509
        %v1472 = vunpack.c.l.b16 %v510
        %v1473 = vunpack.c.h.b16 %v510
        %v1474 = vunpack.c.l.b16 %v511
        %v1475 = vunpack.c.h.b16 %v511
        %v1476 = vunpack.c.l.b16 %v512
        %v1477 = vunpack.c.h.b16 %v512
        %v1478 = vunpack.c.l.b16 %v513
        %v1479 = vunpack.c.h.b16 %v513
        %v1480 = vunpack.c.l.b16 %v514
        %v1481 = vunpack.c.h.b16 %v514
        %v1482 = vunpack.c.l.b16 %v515
        %v1483 = vunpack.c.h.b16 %v515
        %v1484 = vunpack.c.l.b16 %v516
        %v1485 = vunpack.c.h.b16 %v516
        %v1486 = vunpack.c.l.b16 %v517
        %v1487 = vunpack.c.h.b16 %v517
        %v1488 = vunpack.c.l.b16 %v518
        %v1489 = vunpack.c.h.b16 %v518
        %v1490 = vunpack.c.l.b16 %v519
        %v1491 = vunpack.c.h.b16 %v519
        %v1492 = vunpack.c.l.b16 %v520
        %v1493 = vunpack.c.h.b16 %v520
        %v1494 = vunpack.c.l.b16 %v521
        %v1495 = vunpack.c.h.b16 %v521
        %v1496 = vunpack.c.l.b16 %v522
        %v1497 = vunpack.c.h.b16 %v522
        %v1498 = vunpack.c.l.b16 %v523
        %v1499 = vunpack.c.h.b16 %v523
        %v1500 = vunpack.c.l.b16 %v524
        %v1501 = vunpack.c.h.b16 %v524
        %v1502 = vunpack.c.l.b16 %v525
        %v1503 = vunpack.c.h.b16 %v525
        %v1504 = vunpack.c.l.b16 %v526
        %v1505 = vunpack.c.h.b16 %v526
        %v1506 = vunpack.c.l.b16 %v527
        %v1507 = vunpack.c.h.b16 %v527
        %v1508 = vunpack.c.l.b16 %v528
        %v1509 = vunpack.c.h.b16 %v528
        %v1510 = vunpack.c.l.b16 %v529
        %v1511 = vunpack.c.h.b16 %v529
        %v1512 = vunpack.c.l.b16 %v530
        %v1513 = vunpack.c.h.b16 %v530
        %v1514 = vunpack.c.l.b16 %v531
        %v1515 = vunpack.c.h.b16 %v531
        %v1516 = vunpack.c.l.b16 %v532
        %v1517 = vunpack.c.h.b16 %v532
        %v1518 = vunpack.c.l.b16 %v533
        %v1519 = vunpack.c.h.b16 %v533
        %v1520 = vunpack.c.l.b16 %v534
        %v1521 = vunpack.c.h.b16 %v534
        %v1522 = vunpack.c.l.b16 %v535
        %v1523 = vunpack.c.h.b16 %v535
        %v1524 = vunpack.c.l.b16 %v536
        %v1525 = vunpack.c.h.b16 %v536
        %v1526 = vunpack.c.l.b16 %v537
        %v1527 = vunpack.c.h.b16 %v537
        %v1528 = vunpack.c.l.b16 %v538
        %v1529 = vunpack.c.h.b16 %v538
        %v1530 = vunpack.c.l.b16 %v539
        %v1531 = vunpack.c.h.b16 %v539
        %v1532 = vunpack.c.l.b16 %v540
        %v1533 = vunpack.c.h.b16 %v540
        %v1534 = vunpack.c.l.b16 %v541
        %v1535 = vunpack.c.h.b16 %v541
        %v1536 = vunpack.c.l.b16 %v542
        %v1537 = vunpack.c.h.b16 %v542
        %v1538 = vunpack.c.l.b16 %v543
        %v1539 = vunpack.c.h.b16 %v543
        %v1540 = vunpack.c.l.b16 %v544
        %v1541 = vunpack.c.h.b16 %v544
        %v1542 = vunpack.c.l.b16 %v545
        %v1543 = vunpack.c.h.b16 %v545
        %v1544 = vunpack.c.l.b16 %v546
        %v1545 = vunpack.c.h.b16 %v546
        %v1546 = vunpack.c.l.b16 %v547
        %v1547 = vunpack.c.h.b16 %v547
        %v1548 = vunpack.c.l.b16 %v548
        %v1549 = vunpack.c.h.b16 %v548
        %v1550 = vunpack.c.l.b16 %v549
        %v1551 = vunpack.c.h.b16 %v549
        %v1552 = vunpack.c.l.b16 %v550
        %v1553 = vunpack.c.h.b16 %v550
        %v1554 = vunpack.c.l.b16 %v551
        %v1555 = vunpack.c.h.b16 %v551
        %v1556 = vunpack.c.l.b16 %v552
        %v1557 = vunpack.c.h.b16 %v552
        %v1558 = vunpack.c.l.b16 %v553
        %v1559 = vunpack.c.h.b16 %v553
        %v1560 = vunpack.c.l.b16 %v554
        %v1561 = vunpack.c.h.b16 %v554
        %v1562 = vunpack.c.l.b16 %v555
        %v1563 = vunpack.c.h.b16 %v555
        %v1564 = vunpack.c.l.b16 %v556
        %v1565 = vunpack.c.h.b16 %v556
        %v1566 = vunpack.c.l.b16 %v557
        %v1567 = vunpack.c.h.b16 %v557
        %v1568 = vunpack.c.l.b16 %v558
        %v1569 = vunpack.c.h.b16 %v558
        %v1570 = vunpack.c.l.b16 %v559
        %v1571 = vunpack.c.h.b16 %v559
        %v1572 = vunpack.c.l.b16 %v560
        %v1573 = vunpack.c.h.b16 %v560
        %v1574 = vunpack.c.l.b16 %v561
        %v1575 = vunpack.c.h.b16 %v561
        %v1576 = vunpack.c.l.b16 %v562
        %v1577 = vunpack.c.h.b16 %v562
        %v1578 = vunpack.c.l.b16 %v563
        %v1579 = vunpack.c.h.b16 %v563
        %v1580 = vunpack.c.l.b16 %v564
        %v1581 = vunpack.c.h.b16 %v564
        %v1582 = vunpack.c.l.b16 %v565
        %v1583 = vunpack.c.h.b16 %v565
        %v1584 = vunpack.c.l.b16 %v566
        %v1585 = vunpack.c.h.b16 %v566
        %v1586 = vunpack.c.l.b16 %v567
        %v1587 = vunpack.c.h.b16 %v567
        %v1588 = vunpack.c.l.b16 %v568
        %v1589 = vunpack.c.h.b16 %v568
        %v1590 = vunpack.c.l.b16 %v569
        %v1591 = vunpack.c.h.b16 %v569
        %v1592 = vunpack.c.l.b16 %v570
        %v1593 = vunpack.c.h.b16 %v570
        %v1594 = vunpack.c.l.b16 %v571
        %v1595 = vunpack.c.h.b16 %v571
        %v1596 = vunpack.c.l.b16 %v572
        %v1597 = vunpack.c.h.b16 %v572
        %v1598 = vunpack.c.l.b16 %v573
        %v1599 = vunpack.c.h.b16 %v573
        %v1600 = vunpack.c.l.b16 %v574
        %v1601 = vunpack.c.h.b16 %v574
        %v1602 = vunpack.c.l.b16 %v575
        %v1603 = vunpack.c.h.b16 %v575
        %v1604 = vunpack.c.l.b16 %v576
        %v1605 = vunpack.c.h.b16 %v576
        %v1606 = vunpack.c.l.b16 %v577
        %v1607 = vunpack.c.h.b16 %v577
        %v1608 = vunpack.c.l.b16 %v578
        %v1609 = vunpack.c.h.b16 %v578
        %v1610 = vunpack.c.l.b16 %v579
        %v1611 = vunpack.c.h.b16 %v579
        %v1612 = vunpack.c.l.b16 %v580
        %v1613 = vunpack.c.h.b16 %v580
        %v1614 = vunpack.c.l.b16 %v581
        %v1615 = vunpack.c.h.b16 %v581
        %v1616 = vunpack.c.l.b16 %v582
        %v1617 = vunpack.c.h.b16 %v582
        %v1618 = vunpack.c.l.b16 %v583
        %v1619 = vunpack.c.h.b16 %v583
        %v1620 = vunpack.c.l.b16 %v584
        %v1621 = vunpack.c.h.b16 %v584
        %v1622 = vunpack.c.l.b16 %v585
        %v1623 = vunpack.c.h.b16 %v585
        %v1624 = vunpack.c.l.b16 %v586
        %v1625 = vunpack.c.h.b16 %v586
        %v1626 = vunpack.c.l.b16 %v587
        %v1627 = vunpack.c.h.b16 %v587
        %v1628 = vunpack.c.l.b16 %v588
        %v1629 = vunpack.c.h.b16 %v588
        %v1630 = vunpack.c.l.b16 %v589
        %v1631 = vunpack.c.h.b16 %v589
        %v1632 = vunpack.c.l.b16 %v590
        %v1633 = vunpack.c.h.b16 %v590
        %v1634 = vunpack.c.l.b16 %v591
        %v1635 = vunpack.c.h.b16 %v591
        %v1636 = vunpack.c.l.b16 %v592
        %v1637 = vunpack.c.h.b16 %v592
        %v1638 = vunpack.c.l.b16 %v593
        %v1639 = vunpack.c.h.b16 %v593
        %v1640 = vunpack.c.l.b16 %v594
        %v1641 = vunpack.c.h.b16 %v594
        %v1642 = vunpack.c.l.b16 %v595
        %v1643 = vunpack.c.h.b16 %v595
        %v1644 = vunpack.c.l.b16 %v596
        %v1645 = vunpack.c.h.b16 %v596
        %v1646 = vunpack.c.l.b16 %v597
        %v1647 = vunpack.c.h.b16 %v597
        %v1648 = vunpack.c.l.b16 %v598
        %v1649 = vunpack.c.h.b16 %v598
        %v1650 = vunpack.c.l.b16 %v599
        %v1651 = vunpack.c.h.b16 %v599
        %v1652 = vunpack.c.l.b16 %v600
        %v1653 = vunpack.c.h.b16 %v600
        %v1654 = vunpack.c.l.b16 %v601
        %v1655 = vunpack.c.h.b16 %v601
        %v1656 = vunpack.c.l.b16 %v602
        %v1657 = vunpack.c.h.b16 %v602
        %v1658 = vunpack.c.l.b16 %v603
        %v1659 = vunpack.c.h.b16 %v603
        %v1660 = vunpack.c.l.b16 %v604
        %v1661 = vunpack.c.h.b16 %v604
        %v1662 = vunpack.c.l.b16 %v605
        %v1663 = vunpack.c.h.b16 %v605
        %v1664 = vunpack.c.l.b16 %v606
        %v1665 = vunpack.c.h.b16 %v606
        %v1666 = vunpack.c.l.b16 %v607
        %v1667 = vunpack.c.h.b16 %v607
        %v1668 = vunpack.c.l.b16 %v608
        %v1669 = vunpack.c.h.b16 %v608
        %v1670 = vunpack.c.l.b16 %v609
        %v1671 = vunpack.c.h.b16 %v609
        %v1672 = vunpack.c.l.b16 %v610
        %v1673 = vunpack.c.h.b16 %v610
        %v1674 = vunpack.c.l.b16 %v611
        %v1675 = vunpack.c.h.b16 %v611
        %v1676 = vunpack.c.l.b16 %v612
        %v1677 = vunpack.c.h.b16 %v612
        %v1678 = vunpack.c.l.b16 %v613
        %v1679 = vunpack.c.h.b16 %v613
        %v1680 = vunpack.c.l.b16 %v614
        %v1681 = vunpack.c.h.b16 %v614
        %v1682 = vunpack.c.l.b16 %v615
        %v1683 = vunpack.c.h.b16 %v615
        %v1684 = vunpack.c.l.b16 %v616
        %v1685 = vunpack.c.h.b16 %v616
        %v1686 = vunpack.c.l.b16 %v617
        %v1687 = vunpack.c.h.b16 %v617
        %v1688 = vunpack.c.l.b16 %v618
        %v1689 = vunpack.c.h.b16 %v618
        %v1690 = vunpack.c.l.b16 %v619
        %v1691 = vunpack.c.h.b16 %v619
        %v1692 = vunpack.c.l.b16 %v620
        %v1693 = vunpack.c.h.b16 %v620
        %v1694 = vunpack.c.l.b16 %v621
        %v1695 = vunpack.c.h.b16 %v621
        %v1696 = vunpack.c.l.b16 %v622
        %v1697 = vunpack.c.h.b16 %v622
        %v1698 = vunpack.c.l.b16 %v623
        %v1699 = vunpack.c.h.b16 %v623
        %v1700 = vunpack.c.l.b16 %v624
        %v1701 = vunpack.c.h.b16 %v624
        %v1702 = vunpack.c.l.b16 %v625
        %v1703 = vunpack.c.h.b16 %v625
        %v1704 = vunpack.c.l.b16 %v626
        %v1705 = vunpack.c.h.b16 %v626
        %v1706 = vunpack.c.l.b16 %v627
        %v1707 = vunpack.c.h.b16 %v627
        %v1708 = vunpack.c.l.b16 %v628
        %v1709 = vunpack.c.h.b16 %v628
        %v1710 = vunpack.c.l.b16 %v629
        %v1711 = vunpack.c.h.b16 %v629
        %v1712 = vunpack.c.l.b16 %v630
        %v1713 = vunpack.c.h.b16 %v630
        %v1714 = vunpack.c.l.b16 %v631
        %v1715 = vunpack.c.h.b16 %v631
        %v1716 = vunpack.c.l.b16 %v632
        %v1717 = vunpack.c.h.b16 %v632
        %v1718 = vunpack.c.l.b16 %v633
        %v1719 = vunpack.c.h.b16 %v633
        %v1720 = vunpack.c.l.b16 %v634
        %v1721 = vunpack.c.h.b16 %v634
        %v1722 = vunpack.c.l.b16 %v635
        %v1723 = vunpack.c.h.b16 %v635
        %v1724 = vunpack.c.l.b16 %v636
        %v1725 = vunpack.c.h.b16 %v636
        %v1726 = vunpack.c.l.b16 %v637
        %v1727 = vunpack.c.h.b16 %v637
        %v1728 = vunpack.c.l.b16 %v638
        %v1729 = vunpack.c.h.b16 %v638
        %v1730 = vunpack.c.l.b16 %v639
        %v1731 = vunpack.c.h.b16 %v639
        %v1732 = vunpack.c.l.b16 %v640
        %v1733 = vunpack.c.h.b16 %v640
        %v1734 = vunpack.c.l.b16 %v641
        %v1735 = vunpack.c.h.b16 %v641
        %v1736 = vunpack.c.l.b16 %v642
        %v1737 = vunpack.c.h.b16 %v642
        %v1738 = vunpack.c.l.b16 %v643
        %v1739 = vunpack.c.h.b16 %v643
        %v1740 = vunpack.c.l.b16 %v644
        %v1741 = vunpack.c.h.b16 %v644
        %v1742 = vunpack.c.l.b16 %v645
        %v1743 = vunpack.c.h.b16 %v645
        %v1744 = vunpack.c.l.b16 %v646
        %v1745 = vunpack.c.h.b16 %v646
        %v1746 = vunpack.c.l.b16 %v647
        %v1747 = vunpack.c.h.b16 %v647
        %v1748 = vunpack.c.l.b16 %v648
        %v1749 = vunpack.c.h.b16 %v648
        %v1750 = vunpack.c.l.b16 %v649
        %v1751 = vunpack.c.h.b16 %v649
        %v1752 = vunpack.c.l.b16 %v650
        %v1753 = vunpack.c.h.b16 %v650
        %v1754 = vunpack.c.l.b16 %v651
        %v1755 = vunpack.c.h.b16 %v651
        %v1756 = vunpack.c.l.b16 %v652
        %v1757 = vunpack.c.h.b16 %v652
        %v1758 = vunpack.c.l.b16 %v653
        %v1759 = vunpack.c.h.b16 %v653
        %v1760 = vunpack.c.l.b16 %v654
        %v1761 = vunpack.c.h.b16 %v654
        %v1762 = vunpack.c.l.b16 %v655
        %v1763 = vunpack.c.h.b16 %v655
        %v1764 = vunpack.c.l.b16 %v656
        %v1765 = vunpack.c.h.b16 %v656
        %v1766 = vunpack.c.l.b16 %v657
        %v1767 = vunpack.c.h.b16 %v657
        %v1768 = vunpack.c.l.b16 %v658
        %v1769 = vunpack.c.h.b16 %v658
        %v1770 = vunpack.c.l.b16 %v659
        %v1771 = vunpack.c.h.b16 %v659
        %v1772 = vunpack.c.l.b16 %v660
        %v1773 = vunpack.c.h.b16 %v660
        %v1774 = vunpack.c.l.b16 %v661
        %v1775 = vunpack.c.h.b16 %v661
        %v1776 = vunpack.c.l.b16 %v662
        %v1777 = vunpack.c.h.b16 %v662
        %v1778 = vunpack.c.l.b16 %v663
        %v1779 = vunpack.c.h.b16 %v663
        %v1780 = vunpack.c.l.b16 %v664
        %v1781 = vunpack.c.h.b16 %v664
        %v1782 = vunpack.c.l.b16 %v665
        %v1783 = vunpack.c.h.b16 %v665
        %v1784 = vunpack.c.l.b16 %v666
        %v1785 = vunpack.c.h.b16 %v666
        %v1786 = vunpack.c.l.b16 %v667
        %v1787 = vunpack.c.h.b16 %v667
        %v1788 = vunpack.c.l.b16 %v668
        %v1789 = vunpack.c.h.b16 %v668
        %v1790 = vunpack.c.l.b16 %v669
        %v1791 = vunpack.c.h.b16 %v669
        %v1792 = vunpack.c.l.b16 %v670
        %v1793 = vunpack.c.h.b16 %v670
        %v1794 = vunpack.c.l.b16 %v671
        %v1795 = vunpack.c.h.b16 %v671
        %v1796 = vunpack.c.l.b16 %v672
        %v1797 = vunpack.c.h.b16 %v672
        %v1798 = vunpack.c.l.b16 %v673
        %v1799 = vunpack.c.h.b16 %v673
        %v1800 = vunpack.c.l.b16 %v674
        %v1801 = vunpack.c.h.b16 %v674
        %v1802 = vunpack.c.l.b16 %v675
        %v1803 = vunpack.c.h.b16 %v675
        %v1804 = vunpack.c.l.b16 %v676
        %v1805 = vunpack.c.h.b16 %v676
        %v1806 = vunpack.c.l.b16 %v677
        %v1807 = vunpack.c.h.b16 %v677
        %v1808 = vunpack.c.l.b16 %v678
        %v1809 = vunpack.c.h.b16 %v678
        %v1810 = vunpack.c.l.b16 %v679
        %v1811 = vunpack.c.h.b16 %v679
        %v1812 = vunpack.c.l.b16 %v680
        %v1813 = vunpack.c.h.b16 %v680
        %v1814 = vunpack.c.l.b16 %v681
        %v1815 = vunpack.c.h.b16 %v681
        %v1816 = vunpack.c.l.b16 %v682
        %v1817 = vunpack.c.h.b16 %v682
        %v1818 = vunpack.c.l.b16 %v683
        %v1819 = vunpack.c.h.b16 %v683
        %v1820 = vunpack.c.l.b16 %v684
        %v1821 = vunpack.c.h.b16 %v684
        %v1822 = vunpack.c.l.b16 %v685
        %v1823 = vunpack.c.h.b16 %v685
        %v1824 = vunpack.c.l.b16 %v686
        %v1825 = vunpack.c.h.b16 %v686
        %v1826 = vunpack.c.l.b16 %v687
        %v1827 = vunpack.c.h.b16 %v687
        %v1828 = vunpack.c.l.b16 %v688
        %v1829 = vunpack.c.h.b16 %v688
        %v1830 = vunpack.c.l.b16 %v689
        %v1831 = vunpack.c.h.b16 %v689
        %v1832 = vunpack.c.l.b16 %v690
        %v1833 = vunpack.c.h.b16 %v690
        %v1834 = vunpack.c.l.b16 %v691
        %v1835 = vunpack.c.h.b16 %v691
        %v1836 = vunpack.c.l.b16 %v692
        %v1837 = vunpack.c.h.b16 %v692
        %v1838 = vunpack.c.l.b16 %v693
        %v1839 = vunpack.c.h.b16 %v693
        %v1840 = vunpack.c.l.b16 %v694
        %v1841 = vunpack.c.h.b16 %v694
        %v1842 = vunpack.c.l.b16 %v695
        %v1843 = vunpack.c.h.b16 %v695
        %v1844 = vunpack.c.l.b16 %v696
        %v1845 = vunpack.c.h.b16 %v696
        %v1846 = vunpack.c.l.b16 %v697
        %v1847 = vunpack.c.h.b16 %v697
        %v1848 = vunpack.c.l.b16 %v698
        %v1849 = vunpack.c.h.b16 %v698
        %v1850 = vunpack.c.l.b16 %v699
        %v1851 = vunpack.c.h.b16 %v699
        %v1852 = vpack.c.b16 %v1096, %v1084
        %v1853 = vpack.c.b16 %v1097, %v1085
        %v1854 = vpack.c.b16 %v1098, %v1086
        %v1855 = vpack.c.b16 %v1099, %v1087
        %v1856 = vpack.c.b16 %v1100, %v1088
        %v1857 = vpack.c.b16 %v1101, %v1089
        %v1858 = vpack.c.b16 %v1102, %v1090
        %v1859 = vpack.c.b16 %v1103, %v1091
        %v1860 = vpack.c.b16 %v1104, %v1092
        %v1861 = vpack.c.b16 %v1105, %v1093
        %v1862 = vpack.c.b16 %v1106, %v1094
        %v1863 = vpack.c.b16 %v1107, %v1095
        %v1864 = vpack.c.b16 %v1120, %v1108
        %v1865 = vpack.c.b16 %v1121, %v1109
        %v1866 = vpack.c.b16 %v1122, %v1110
        %v1867 = vpack.c.b16 %v1123, %v1111
        %v1868 = vpack.c.b16 %v1124, %v1112
        %v1869 = vpack.c.b16 %v1125, %v1113
        %v1870 = vpack.c.b16 %v1126, %v1114
        %v1871 = vpack.c.b16 %v1127, %v1115
        %v1872 = vpack.c.b16 %v1128, %v1116
        %v1873 = vpack.c.b16 %v1129, %v1117
        %v1874 = vpack.c.b16 %v1130, %v1118
        %v1875 = vpack.c.b16 %v1131, %v1119
        %v1876 = vpack.c.b16 %v1144, %v1132
        %v1877 = vpack.c.b16 %v1145, %v1133
        %v1878 = vpack.c.b16 %v1146, %v1134
        %v1879 = vpack.c.b16 %v1147, %v1135
        %v1880 = vpack.c.b16 %v1148, %v1136
        %v1881 = vpack.c.b16 %v1149, %v1137
        %v1882 = vpack.c.b16 %v1150, %v1138
        %v1883 = vpack.c.b16 %v1151, %v1139
        %v1884 = vpack.c.b16 %v1152, %v1140
        %v1885 = vpack.c.b16 %v1153, %v1141
        %v1886 = vpack.c.b16 %v1154, %v1142
        %v1887 = vpack.c.b16 %v1155, %v1143
        %v1888 = vpack.c.b16 %v1168, %v1156
        %v1889 = vpack.c.b16 %v1169, %v1157
        %v1890 = vpack.c.b16 %v1170, %v1158
        %v1891 = vpack.c.b16 %v1171, %v1159
        %v1892 = vpack.c.b16 %v1172, %v1160
        %v1893 = vpack.c.b16 %v1173, %v1161
        %v1894 = vpack.c.b16 %v1174, %v1162
        %v1895 = vpack.c.b16 %v1175, %v1163
        %v1896 = vpack.c.b16 %v1176, %v1164
        %v1897 = vpack.c.b16 %v1177, %v1165
        %v1898 = vpack.c.b16 %v1178, %v1166
        %v1899 = vpack.c.b16 %v1179, %v1167
        %v1900 = vpack.c.b16 %v1192, %v1180
        %v1901 = vpack.c.b16 %v1193, %v1181
        %v1902 = vpack.c.b16 %v1194, %v1182
        %v1903 = vpack.c.b16 %v1195, %v1183
        %v1904 = vpack.c.b16 %v1196, %v1184
        %v1905 = vpack.c.b16 %v1197, %v1185
        %v1906 = vpack.c.b16 %v1198, %v1186
        %v1907 = vpack.c.b16 %v1199, %v1187
        %v1908 = vpack.c.b16 %v1200, %v1188
        %v1909 = vpack.c.b16 %v1201, %v1189
        %v1910 = vpack.c.b16 %v1202, %v1190
        %v1911 = vpack.c.b16 %v1203, %v1191
        %v1912 = vpack.c.b16 %v1216, %v1204
        %v1913 = vpack.c.b16 %v1217, %v1205
        %v1914 = vpack.c.b16 %v1218, %v1206
        %v1915 = vpack.c.b16 %v1219, %v1207
        %v1916 = vpack.c.b16 %v1220, %v1208
        %v1917 = vpack.c.b16 %v1221, %v1209
        %v1918 = vpack.c.b16 %v1222, %v1210
        %v1919 = vpack.c.b16 %v1223, %v1211
        %v1920 = vpack.c.b16 %v1224, %v1212
        %v1921 = vpack.c.b16 %v1225, %v1213
        %v1922 = vpack.c.b16 %v1226, %v1214
        %v1923 = vpack.c.b16 %v1227, %v1215
        %v1924 = vpack.c.b16 %v1240, %v1228
        %v1925 = vpack.c.b16 %v1241, %v1229
        %v1926 = vpack.c.b16 %v1242, %v1230
        %v1927 = vpack.c.b16 %v1243, %v1231
        %v1928 = vpack.c.b16 %v1244, %v1232
        %v1929 = vpack.c.b16 %v1245, %v1233
        %v1930 = vpack.c.b16 %v1246, %v1234
        %v1931 = vpack.c.b16 %v1247, %v1235
        %v1932 = vpack.c.b16 %v1248, %v1236
        %v1933 = vpack.c.b16 %v1249, %v1237
        %v1934 = vpack.c.b16 %v1250, %v1238
        %v1935 = vpack.c.b16 %v1251, %v1239
        %v1936 = vpack.c.b16 %v1264, %v1252
        %v1937 = vpack.c.b16 %v1265, %v1253
        %v1938 = vpack.c.b16 %v1266, %v1254
        %v1939 = vpack.c.b16 %v1267, %v1255
        %v1940 = vpack.c.b16 %v1268, %v1256
        %v1941 = vpack.c.b16 %v1269, %v1257
        %v1942 = vpack.c.b16 %v1270, %v1258
        %v1943 = vpack.c.b16 %v1271, %v1259
        %v1944 = vpack.c.b16 %v1272, %v1260
        %v1945 = vpack.c.b16 %v1273, %v1261
        %v1946 = vpack.c.b16 %v1274, %v1262
        %v1947 = vpack.c.b16 %v1275, %v1263
        %v1948 = vpack.c.b16 %v1288, %v1276
        %v1949 = vpack.c.b16 %v1289, %v1277
        %v1950 = vpack.c.b16 %v1290, %v1278
        %v1951 = vpack.c.b16 %v1291, %v1279
        %v1952 = vpack.c.b16 %v1292, %v1280
        %v1953 = vpack.c.b16 %v1293, %v1281
        %v1954 = vpack.c.b16 %v1294, %v1282
        %v1955 = vpack.c.b16 %v1295, %v1283
        %v1956 = vpack.c.b16 %v1296, %v1284
        %v1957 = vpack.c.b16 %v1297, %v1285
        %v1958 = vpack.c.b16 %v1298, %v1286
        %v1959 = vpack.c.b16 %v1299, %v1287
        %v1960 = vpack.c.b16 %v1312, %v1300
        %v1961 = vpack.c.b16 %v1313, %v1301
        %v1962 = vpack.c.b16 %v1314, %v1302
        %v1963 = vpack.c.b16 %v1315, %v1303
        %v1964 = vpack.c.b16 %v1316, %v1304
        %v1965 = vpack.c.b16 %v1317, %v1305
        %v1966 = vpack.c.b16 %v1318, %v1306
        %v1967 = vpack.c.b16 %v1319, %v1307
        %v1968 = vpack.c.b16 %v1320, %v1308
        %v1969 = vpack.c.b16 %v1321, %v1309
        %v1970 = vpack.c.b16 %v1322, %v1310
        %v1971 = vpack.c.b16 %v1323, %v1311
        %v1972 = vpack.c.b16 %v1336, %v1324
        %v1973 = vpack.c.b16 %v1337, %v1325
        %v1974 = vpack.c.b16 %v1338, %v1326
        %v1975 = vpack.c.b16 %v1339, %v1327
        %v1976 = vpack.c.b16 %v1340, %v1328
        %v1977 = vpack.c.b16 %v1341, %v1329
        %v1978 = vpack.c.b16 %v1342, %v1330
        %v1979 = vpack.c.b16 %v1343, %v1331
        %v1980 = vpack.c.b16 %v1344, %v1332
        %v1981 = vpack.c.b16 %v1345, %v1333
        %v1982 = vpack.c.b16 %v1346, %v1334
        %v1983 = vpack.c.b16 %v1347, %v1335
        %v1984 = vpack.c.b16 %v1360, %v1348
        %v1985 = vpack.c.b16 %v1361, %v1349
        %v1986 = vpack.c.b16 %v1362, %v1350
        %v1987 = vpack.c.b16 %v1363, %v1351
        %v1988 = vpack.c.b16 %v1364, %v1352
        %v1989 = vpack.c.b16 %v1365, %v1353
        %v1990 = vpack.c.b16 %v1366, %v1354
        %v1991 = vpack.c.b16 %v1367, %v1355
        %v1992 = vpack.c.b16 %v1368, %v1356
        %v1993 = vpack.c.b16 %v1369, %v1357
        %v1994 = vpack.c.b16 %v1370, %v1358
        %v1995 = vpack.c.b16 %v1371, %v1359
        %v1996 = vpack.c.b16 %v1384, %v1372
        %v1997 = vpack.c.b16 %v1385, %v1373
        %v1998 = vpack.c.b16 %v1386, %v1374
        %v1999 = vpack.c.b16 %v1387, %v1375
        %v2000 = vpack.c.b16 %v1388, %v1376
        %v2001 = vpack.c.b16 %v1389, %v1377
        %v2002 = vpack.c.b16 %v1390, %v1378
        %v2003 = vpack.c.b16 %v1391, %v1379
        %v2004 = vpack.c.b16 %v1392, %v1380
        %v2005 = vpack.c.b16 %v1393, %v1381
        %v2006 = vpack.c.b16 %v1394, %v1382
        %v2007 = vpack.c.b16 %v1395, %v1383
        %v2008 = vpack.c.b16 %v1408, %v1396
        %v2009 = vpack.c.b16 %v1409, %v1397
        %v2010 = vpack.c.b16 %v1410, %v1398
        %v2011 = vpack.c.b16 %v1411, %v1399
        %v2012 = vpack.c.b16 %v1412, %v1400
        %v2013 = vpack.c.b16 %v1413, %v1401
        %v2014 = vpack.c.b16 %v1414, %v1402
        %v2015 = vpack.c.b16 %v1415, %v1403
        %v2016 = vpack.c.b16 %v1416, %v1404
        %v2017 = vpack.c.b16 %v1417, %v1405
        %v2018 = vpack.c.b16 %v1418, %v1406
        %v2019 = vpack.c.b16 %v1419, %v1407
        %v2020 = vpack.c.b16 %v1432, %v1420
        %v2021 = vpack.c.b16 %v1433, %v1421
        %v2022 = vpack.c.b16 %v1434, %v1422
        %v2023 = vpack.c.b16 %v1435, %v1423
        %v2024 = vpack.c.b16 %v1436, %v1424
        %v2025 = vpack.c.b16 %v1437, %v1425
        %v2026 = vpack.c.b16 %v1438, %v1426
        %v2027 = vpack.c.b16 %v1439, %v1427
        %v2028 = vpack.c.b16 %v1440, %v1428
        %v2029 = vpack.c.b16 %v1441, %v1429
        %v2030 = vpack.c.b16 %v1442, %v1430
        %v2031 = vpack.c.b16 %v1443, %v1431
        %v2032 = vpack.c.b16 %v1456, %v1444
        %v2033 = vpack.c.b16 %v1457, %v1445
        %v2034 = vpack.c.b16 %v1458, %v1446
        %v2035 = vpack.c.b16 %v1459, %v1447
        %v2036 = vpack.c.b16 %v1460, %v1448
        %v2037 = vpack.c.b16 %v1461, %v1449
        %v2038 = vpack.c.b16 %v1462, %v1450
        %v2039 = vpack.c.b16 %v1463, %v1451
        %v2040 = vpack.c.b16 %v1464, %v1452
        %v2041 = vpack.c.b16 %v1465, %v1453
        %v2042 = vpack.c.b16 %v1466, %v1454
        %v2043 = vpack.c.b16 %v1467, %v1455
        %v2044 = vpack.c.b16 %v1480, %v1468
        %v2045 = vpack.c.b16 %v1481, %v1469
        %v2046 = vpack.c.b16 %v1482, %v1470
        %v2047 = vpack.c.b16 %v1483, %v1471
        %v2048 = vpack.c.b16 %v1484, %v1472
        %v2049 = vpack.c.b16 %v1485, %v1473
        %v2050 = vpack.c.b16 %v1486, %v1474
        %v2051 = vpack.c.b16 %v1487, %v1475
        %v2052 = vpack.c.b16 %v1488, %v1476
        %v2053 = vpack.c.b16 %v1489, %v1477
        %v2054 = vpack.c.b16 %v1490, %v1478
        %v2055 = vpack.c.b16 %v1491, %v1479
        %v2056 = vpack.c.b16 %v1504, %v1492
        %v2057 = vpack.c.b16 %v1505, %v1493
        %v2058 = vpack.c.b16 %v1506, %v1494
        %v2059 = vpack.c.b16 %v1507, %v1495
        %v2060 = vpack.c.b16 %v1508, %v1496
        %v2061 = vpack.c.b16 %v1509, %v1497
        %v2062 = vpack.c.b16 %v1510, %v1498
        %v2063 = vpack.c.b16 %v1511, %v1499
        %v2064 = vpack.c.b16 %v1512, %v1500
        %v2065 = vpack.c.b16 %v1513, %v1501
        %v2066 = vpack.c.b16 %v1514, %v1502
        %v2067 = vpack.c.b16 %v1515, %v1503
        %v2068 = vpack.c.b16 %v1528, %v1516
        %v2069 = vpack.c.b16 %v1529, %v1517
        %v2070 = vpack.c.b16 %v1530, %v1518
        %v2071 = vpack.c.b16 %v1531, %v1519
        %v2072 = vpack.c.b16 %v1532, %v1520
        %v2073 = vpack.c.b16 %v1533, %v1521
        %v2074 = vpack.c.b16 %v1534, %v1522
        %v2075 = vpack.c.b16 %v1535, %v1523
        %v2076 = vpack.c.b16 %v1536, %v1524
        %v2077 = vpack.c.b16 %v1537, %v1525
        %v2078 = vpack.c.b16 %v1538, %v1526
        %v2079 = vpack.c.b16 %v1539, %v1527
        %v2080 = vpack.c.b16 %v1552, %v1540
        %v2081 = vpack.c.b16 %v1553, %v1541
        %v2082 = vpack.c.b16 %v1554, %v1542
        %v2083 = vpack.c.b16 %v1555, %v1543
        %v2084 = vpack.c.b16 %v1556, %v1544
        %v2085 = vpack.c.b16 %v1557, %v1545
        %v2086 = vpack.c.b16 %v1558, %v1546
        %v2087 = vpack.c.b16 %v1559, %v1547
        %v2088 = vpack.c.b16 %v1560, %v1548
        %v2089 = vpack.c.b16 %v1561, %v1549
        %v2090 = vpack.c.b16 %v1562, %v1550
        %v2091 = vpack.c.b16 %v1563, %v1551
        %v2092 = vpack.c.b16 %v1576, %v1564
        %v2093 = vpack.c.b16 %v1577, %v1565
        %v2094 = vpack.c.b16 %v1578, %v1566
        %v2095 = vpack.c.b16 %v1579, %v1567
        %v2096 = vpack.c.b16 %v1580, %v1568
        %v2097 = vpack.c.b16 %v1581, %v1569
        %v2098 = vpack.c.b16 %v1582, %v1570
        %v2099 = vpack.c.b16 %v1583, %v1571
        %v2100 = vpack.c.b16 %v1584, %v1572
        %v2101 = vpack.c.b16 %v1585, %v1573
        %v2102 = vpack.c.b16 %v1586, %v1574
        %v2103 = vpack.c.b16 %v1587, %v1575
        %v2104 = vpack.c.b16 %v1600, %v1588
        %v2105 = vpack.c.b16 %v1601, %v1589
        %v2106 = vpack.c.b16 %v1602, %v1590
        %v2107 = vpack.c.b16 %v1603, %v1591
        %v2108 = vpack.c.b16 %v1604, %v1592
        %v2109 = vpack.c.b16 %v1605, %v1593
        %v2110 = vpack.c.b16 %v1606, %v1594
        %v2111 = vpack.c.b16 %v1607, %v1595
        %v2112 = vpack.c.b16 %v1608, %v1596
        %v2113 = vpack.c.b16 %v1609, %v1597
        %v2114 = vpack.c.b16 %v1610, %v1598
        %v2115 = vpack.c.b16 %v1611, %v1599
        %v2116 = vpack.c.b16 %v1624, %v1612
        %v2117 = vpack.c.b16 %v1625, %v1613
        %v2118 = vpack.c.b16 %v1626, %v1614
        %v2119 = vpack.c.b16 %v1627, %v1615
        %v2120 = vpack.c.b16 %v1628, %v1616
        %v2121 = vpack.c.b16 %v1629, %v1617
        %v2122 = vpack.c.b16 %v1630, %v1618
        %v2123 = vpack.c.b16 %v1631, %v1619
        %v2124 = vpack.c.b16 %v1632, %v1620
        %v2125 = vpack.c.b16 %v1633, %v1621
        %v2126 = vpack.c.b16 %v1634, %v1622
        %v2127 = vpack.c.b16 %v1635, %v1623
        %v2128 = vpack.c.b16 %v1648, %v1636
        %v2129 = vpack.c.b16 %v1649, %v1637
        %v2130 = vpack.c.b16 %v1650, %v1638
        %v2131 = vpack.c.b16 %v1651, %v1639
        %v2132 = vpack.c.b16 %v1652, %v1640
        %v2133 = vpack.c.b16 %v1653, %v1641
        %v2134 = vpack.c.b16 %v1654, %v1642
        %v2135 = vpack.c.b16 %v1655, %v1643
        %v2136 = vpack.c.b16 %v1656, %v1644
        %v2137 = vpack.c.b16 %v1657, %v1645
        %v2138 = vpack.c.b16 %v1658, %v1646
        %v2139 = vpack.c.b16 %v1659, %v1647
        %v2140 = vpack.c.b16 %v1672, %v1660
        %v2141 = vpack.c.b16 %v1673, %v1661
        %v2142 = vpack.c.b16 %v1674, %v1662
        %v2143 = vpack.c.b16 %v1675, %v1663
        %v2144 = vpack.c.b16 %v1676, %v1664
        %v2145 = vpack.c.b16 %v1677, %v1665
        %v2146 = vpack.c.b16 %v1678, %v1666
        %v2147 = vpack.c.b16 %v1679, %v1667
        %v2148 = vpack.c.b16 %v1680, %v1668
        %v2149 = vpack.c.b16 %v1681, %v1669
        %v2150 = vpack.c.b16 %v1682, %v1670
        %v2151 = vpack.c.b16 %v1683, %v1671
        %v2152 = vpack.c.b16 %v1696, %v1684
        %v2153 = vpack.c.b16 %v1697, %v1685
        %v2154 = vpack.c.b16 %v1698, %v1686
        %v2155 = vpack.c.b16 %v1699, %v1687
        %v2156 = vpack.c.b16 %v1700, %v1688
        %v2157 = vpack.c.b16 %v1701, %v1689
        %v2158 = vpack.c.b16 %v1702, %v1690
        %v2159 = vpack.c.b16 %v1703, %v1691
        %v2160 = vpack.c.b16 %v1704, %v1692
        %v2161 = vpack.c.b16 %v1705, %v1693
        %v2162 = vpack.c.b16 %v1706, %v1694
        %v2163 = vpack.c.b16 %v1707, %v1695
        %v2164 = vpack.c.b16 %v1720, %v1708
        %v2165 = vpack.c.b16 %v1721, %v1709
        %v2166 = vpack.c.b16 %v1722, %v1710
        %v2167 = vpack.c.b16 %v1723, %v1711
        %v2168 = vpack.c.b16 %v1724, %v1712
        %v2169 = vpack.c.b16 %v1725, %v1713
        %v2170 = vpack.c.b16 %v1726, %v1714
        %v2171 = vpack.c.b16 %v1727, %v1715
        %v2172 = vpack.c.b16 %v1728, %v1716
        %v2173 = vpack.c.b16 %v1729, %v1717
        %v2174 = vpack.c.b16 %v1730, %v1718
        %v2175 = vpack.c.b16 %v1731, %v1719
        %v2176 = vpack.c.b16 %v1744, %v1732
        %v2177 = vpack.c.b16 %v1745, %v1733
        %v2178 = vpack.c.b16 %v1746, %v1734
        %v2179 = vpack.c.b16 %v1747, %v1735
        %v2180 = vpack.c.b16 %v1748, %v1736
        %v2181 = vpack.c.b16 %v1749, %v1737
        %v2182 = vpack.c.b16 %v1750, %v1738
        %v2183 = vpack.c.b16 %v1751, %v1739
        %v2184 = vpack.c.b16 %v1752, %v1740
        %v2185 = vpack.c.b16 %v1753, %v1741
        %v2186 = vpack.c.b16 %v1754, %v1742
        %v2187 = vpack.c.b16 %v1755, %v1743
        %v2188 = vpack.c.b16 %v1768, %v1756
        %v2189 = vpack.c.b16 %v1769, %v1757
        %v2190 = vpack.c.b16 %v1770, %v1758
        %v2191 = vpack.c.b16 %v1771, %v1759
        %v2192 = vpack.c.b16 %v1772, %v1760
        %v2193 = vpack.c.b16 %v1773, %v1761
        %v2194 = vpack.c.b16 %v1774, %v1762
        %v2195 = vpack.c.b16 %v1775, %v1763
        %v2196 = vpack.c.b16 %v1776, %v1764
        %v2197 = vpack.c.b16 %v1777, %v1765
        %v2198 = vpack.c.b16 %v1778, %v1766
        %v2199 = vpack.c.b16 %v1779, %v1767
        %v2200 = vpack.c.b16 %v1792, %v1780
        %v2201 = vpack.c.b16 %v1793, %v1781
        %v2202 = vpack.c.b16 %v1794, %v1782
        %v2203 = vpack.c.b16 %v1795, %v1783
        %v2204 = vpack.c.b16 %v1796, %v1784
        %v2205 = vpack.c.b16 %v1797, %v1785
        %v2206 = vpack.c.b16 %v1798, %v1786
        %v2207 = vpack.c.b16 %v1799, %v1787
        %v2208 = vpack.c.b16 %v1800, %v1788
        %v2209 = vpack.c.b16 %v1801, %v1789
        %v2210 = vpack.c.b16 %v1802, %v1790
        %v2211 = vpack.c.b16 %v1803, %v1791
        %v2212 = vpack.c.b16 %v1816, %v1804
        %v2213 = vpack.c.b16 %v1817, %v1805
        %v2214 = vpack.c.b16 %v1818, %v1806
        %v2215 = vpack.c.b16 %v1819, %v1807
        %v2216 = vpack.c.b16 %v1820, %v1808
        %v2217 = vpack.c.b16 %v1821, %v1809
        %v2218 = vpack.c.b16 %v1822, %v1810
        %v2219 = vpack.c.b16 %v1823, %v1811
        %v2220 = vpack.c.b16 %v1824, %v1812
        %v2221 = vpack.c.b16 %v1825, %v1813
        %v2222 = vpack.c.b16 %v1826, %v1814
        %v2223 = vpack.c.b16 %v1827, %v1815
        %v2224 = vpack.c.b16 %v1840, %v1828
        %v2225 = vpack.c.b16 %v1841, %v1829
        %v2226 = vpack.c.b16 %v1842, %v1830
        %v2227 = vpack.c.b16 %v1843, %v1831
        %v2228 = vpack.c.b16 %v1844, %v1832
        %v2229 = vpack.c.b16 %v1845, %v1833
        %v2230 = vpack.c.b16 %v1846, %v1834
        %v2231 = vpack.c.b16 %v1847, %v1835
        %v2232 = vpack.c.b16 %v1848, %v1836
        %v2233 = vpack.c.b16 %v1849, %v1837
        %v2234 = vpack.c.b16 %v1850, %v1838
        %v2235 = vpack.c.b16 %v1851, %v1839
        %2620 = vmatprep.subr.bf16.mxu0 %v1853
        %2621 = vmatpush1.bf16.msra.mxu0 %v1852
        %2622 = vmatprep.subr.bf16.mxu0 %v1865
        %2623 = vmatpush1.bf16.msra.mxu0 %v1864
        %2624 = vmatprep.subr.bf16.mxu0 %v1877
        %2625 = vmatpush1.bf16.msra.mxu0 %v1876
        %2626 = vmatprep.subr.bf16.mxu0 %v1889
        %2627 = vmatpush1.bf16.msra.mxu0 %v1888
        %2628 = vmatprep.subr.bf16.mxu0 %v1901
        %2629 = vmatpush1.bf16.msra.mxu0 %v1900
        %2630 = vmatprep.subr.bf16.mxu0 %v1913
        %2631 = vmatpush1.bf16.msra.mxu0 %v1912
        %2632 = vmatprep.subr.bf16.mxu0 %v1925
        %2633 = vmatpush1.bf16.msra.mxu0 %v1924
        %2634 = vmatprep.subr.bf16.mxu0 %v1937
        %2635 = vmatpush1.bf16.msra.mxu0 %v1936
        %2636 = vmatprep.subr.bf16.mxu0 %v1949
        %2637 = vmatpush1.bf16.msra.mxu0 %v1948
        %2638 = vmatprep.subr.bf16.mxu0 %v1961
        %2639 = vmatpush1.bf16.msra.mxu0 %v1960
        %2640 = vmatprep.subr.bf16.mxu0 %v1973
        %2641 = vmatpush1.bf16.msra.mxu0 %v1972
        %2642 = vmatprep.subr.bf16.mxu0 %v1985
        %2643 = vmatpush1.bf16.msra.mxu0 %v1984
        %2644 = vmatprep.subr.bf16.mxu0 %v1997
        %2645 = vmatpush1.bf16.msra.mxu0 %v1996
        %2646 = vmatprep.subr.bf16.mxu0 %v2009
        %2647 = vmatpush1.bf16.msra.mxu0 %v2008
        %2648 = vmatprep.subr.bf16.mxu0 %v2021
        %2649 = vmatpush1.bf16.msra.mxu0 %v2020
        %2650 = vmatprep.subr.bf16.mxu0 %v2033
        %2651 = vmatpush1.bf16.msra.mxu0 %v2032
        %2652 = vmatprep.mubr.bf16.mxu0 %v313
        %2653 = vmatmul.mubr.bf16.gmra.mrb[0].mxu0 %v312
        %v2654 = vpop.f32.mrb[0].mxu0
        %v2655 = vadd.f32 0.0, %v2654
        %v2656 = vpop.f32.mrb[0].mxu0
        %v2657 = vadd.f32 0.0, %v2656
        %v2658 = vpop.f32.mrb[0].mxu0
        %v2659 = vpop.f32.mrb[0].mxu0
        %2660 = vdwg.mxu0
        %2661 = vmatprep.subr.bf16.mxu0 %v2045
        %2662 = vmatpush1.bf16.msra.mxu0 %v2044
        %2663 = vmatprep.subr.bf16.mxu0 %v2057
        %2664 = vmatpush1.bf16.msra.mxu0 %v2056
        %2665 = vmatprep.subr.bf16.mxu0 %v2069
        %2666 = vmatpush1.bf16.msra.mxu0 %v2068
        %2667 = vmatprep.subr.bf16.mxu0 %v2081
        %2668 = vmatpush1.bf16.msra.mxu0 %v2080
        %2669 = vmatprep.subr.bf16.mxu0 %v2093
        %2670 = vmatpush1.bf16.msra.mxu0 %v2092
        %2671 = vmatprep.subr.bf16.mxu0 %v2105
        %2672 = vmatpush1.bf16.msra.mxu0 %v2104
        %2673 = vmatprep.subr.bf16.mxu0 %v2117
        %2674 = vmatpush1.bf16.msra.mxu0 %v2116
        %2675 = vmatprep.subr.bf16.mxu0 %v2129
        %2676 = vmatpush1.bf16.msra.mxu0 %v2128
        %2677 = vmatprep.subr.bf16.mxu0 %v2141
        %2678 = vmatpush1.bf16.msra.mxu0 %v2140
        %2679 = vmatprep.subr.bf16.mxu0 %v2153
        %2680 = vmatpush1.bf16.msra.mxu0 %v2152
        %2681 = vmatprep.subr.bf16.mxu0 %v2165
        %2682 = vmatpush1.bf16.msra.mxu0 %v2164
        %2683 = vmatprep.subr.bf16.mxu0 %v2177
        %2684 = vmatpush1.bf16.msra.mxu0 %v2176
        %2685 = vmatprep.subr.bf16.mxu0 %v2189
        %2686 = vmatpush1.bf16.msra.mxu0 %v2188
        %2687 = vmatprep.subr.bf16.mxu0 %v2201
        %2688 = vmatpush1.bf16.msra.mxu0 %v2200
        %2689 = vmatprep.subr.bf16.mxu0 %v2213
        %2690 = vmatpush1.bf16.msra.mxu0 %v2212
        %2691 = vmatprep.subr.bf16.mxu0 %v2225
        %2692 = vmatpush1.bf16.msra.mxu0 %v2224
        %2693 = vmatprep.mubr.bf16.mxu0 %v315
        %2694 = vmatmul.mubr.bf16.gmra.mrb[0].mxu0 %v314
        %v2695 = vpop.f32.mrb[0].mxu0
        %v2696 = vadd.f32 %v2655, %v2695
        %v2697 = vpop.f32.mrb[0].mxu0
        %v2698 = vadd.f32 %v2657, %v2697
        %v2699 = vpop.f32.mrb[0].mxu0
        %v2700 = vpop.f32.mrb[0].mxu0
        %2701 = vdwg.mxu0
        %2702 = vmatprep.subr.bf16.mxu0 %v1855
        %2703 = vmatpush1.bf16.msra.mxu0 %v1854
        %2704 = vmatprep.subr.bf16.mxu0 %v1867
        %2705 = vmatpush1.bf16.msra.mxu0 %v1866
        %2706 = vmatprep.subr.bf16.mxu0 %v1879
        %2707 = vmatpush1.bf16.msra.mxu0 %v1878
        %2708 = vmatprep.subr.bf16.mxu0 %v1891
        %2709 = vmatpush1.bf16.msra.mxu0 %v1890
        %2710 = vmatprep.subr.bf16.mxu0 %v1903
        %2711 = vmatpush1.bf16.msra.mxu0 %v1902
        %2712 = vmatprep.subr.bf16.mxu0 %v1915
        %2713 = vmatpush1.bf16.msra.mxu0 %v1914
        %2714 = vmatprep.subr.bf16.mxu0 %v1927
        %2715 = vmatpush1.bf16.msra.mxu0 %v1926
        %2716 = vmatprep.subr.bf16.mxu0 %v1939
        %2717 = vmatpush1.bf16.msra.mxu0 %v1938
        %2718 = vmatprep.subr.bf16.mxu0 %v1951
        %2719 = vmatpush1.bf16.msra.mxu0 %v1950
        %2720 = vmatprep.subr.bf16.mxu0 %v1963
        %2721 = vmatpush1.bf16.msra.mxu0 %v1962
        %2722 = vmatprep.subr.bf16.mxu0 %v1975
        %2723 = vmatpush1.bf16.msra.mxu0 %v1974
        %2724 = vmatprep.subr.bf16.mxu0 %v1987
        %2725 = vmatpush1.bf16.msra.mxu0 %v1986
        %2726 = vmatprep.subr.bf16.mxu0 %v1999
        %2727 = vmatpush1.bf16.msra.mxu0 %v1998
        %2728 = vmatprep.subr.bf16.mxu0 %v2011
        %2729 = vmatpush1.bf16.msra.mxu0 %v2010
        %2730 = vmatprep.subr.bf16.mxu0 %v2023
        %2731 = vmatpush1.bf16.msra.mxu0 %v2022
        %2732 = vmatprep.subr.bf16.mxu0 %v2035
        %2733 = vmatpush1.bf16.msra.mxu0 %v2034
        %2734 = vmatprep.mubr.bf16.mxu0 %v313
        %2735 = vmatmul.mubr.bf16.gmra.mrb[0].mxu0 %v312
        %v2736 = vpop.f32.mrb[0].mxu0
        %v2737 = vadd.f32 0.0, %v2736
        %v2738 = vpop.f32.mrb[0].mxu0
        %v2739 = vadd.f32 0.0, %v2738
        %v2740 = vpop.f32.mrb[0].mxu0
        %v2741 = vpop.f32.mrb[0].mxu0
        %2742 = vdwg.mxu0
        %2743 = vmatprep.subr.bf16.mxu0 %v2047
        %2744 = vmatpush1.bf16.msra.mxu0 %v2046
        %2745 = vmatprep.subr.bf16.mxu0 %v2059
        %2746 = vmatpush1.bf16.msra.mxu0 %v2058
        %2747 = vmatprep.subr.bf16.mxu0 %v2071
        %2748 = vmatpush1.bf16.msra.mxu0 %v2070
        %2749 = vmatprep.subr.bf16.mxu0 %v2083
        %2750 = vmatpush1.bf16.msra.mxu0 %v2082
        %2751 = vmatprep.subr.bf16.mxu0 %v2095
        %2752 = vmatpush1.bf16.msra.mxu0 %v2094
        %2753 = vmatprep.subr.bf16.mxu0 %v2107
        %2754 = vmatpush1.bf16.msra.mxu0 %v2106
        %2755 = vmatprep.subr.bf16.mxu0 %v2119
        %2756 = vmatpush1.bf16.msra.mxu0 %v2118
        %2757 = vmatprep.subr.bf16.mxu0 %v2131
        %2758 = vmatpush1.bf16.msra.mxu0 %v2130
        %2759 = vmatprep.subr.bf16.mxu0 %v2143
        %2760 = vmatpush1.bf16.msra.mxu0 %v2142
        %2761 = vmatprep.subr.bf16.mxu0 %v2155
        %2762 = vmatpush1.bf16.msra.mxu0 %v2154
        %2763 = vmatprep.subr.bf16.mxu0 %v2167
        %2764 = vmatpush1.bf16.msra.mxu0 %v2166
        %2765 = vmatprep.subr.bf16.mxu0 %v2179
        %2766 = vmatpush1.bf16.msra.mxu0 %v2178
        %2767 = vmatprep.subr.bf16.mxu0 %v2191
        %2768 = vmatpush1.bf16.msra.mxu0 %v2190
        %2769 = vmatprep.subr.bf16.mxu0 %v2203
        %2770 = vmatpush1.bf16.msra.mxu0 %v2202
        %2771 = vmatprep.subr.bf16.mxu0 %v2215
        %2772 = vmatpush1.bf16.msra.mxu0 %v2214
        %2773 = vmatprep.subr.bf16.mxu0 %v2227
        %2774 = vmatpush1.bf16.msra.mxu0 %v2226
        %2775 = vmatprep.mubr.bf16.mxu0 %v315
        %2776 = vmatmul.mubr.bf16.gmra.mrb[0].mxu0 %v314
        %v2777 = vpop.f32.mrb[0].mxu0
        %v2778 = vadd.f32 %v2737, %v2777
        %v2779 = vpop.f32.mrb[0].mxu0
        %v2780 = vadd.f32 %v2739, %v2779
        %v2781 = vpop.f32.mrb[0].mxu0
        %v2782 = vpop.f32.mrb[0].mxu0
        %2783 = vdwg.mxu0
        %2784 = vmatprep.subr.bf16.mxu0 %v1857
        %2785 = vmatpush1.bf16.msra.mxu0 %v1856
        %2786 = vmatprep.subr.bf16.mxu0 %v1869
        %2787 = vmatpush1.bf16.msra.mxu0 %v1868
        %2788 = vmatprep.subr.bf16.mxu0 %v1881
        %2789 = vmatpush1.bf16.msra.mxu0 %v1880
        %2790 = vmatprep.subr.bf16.mxu0 %v1893
        %2791 = vmatpush1.bf16.msra.mxu0 %v1892
        %2792 = vmatprep.subr.bf16.mxu0 %v1905
        %2793 = vmatpush1.bf16.msra.mxu0 %v1904
        %2794 = vmatprep.subr.bf16.mxu0 %v1917
        %2795 = vmatpush1.bf16.msra.mxu0 %v1916
        %2796 = vmatprep.subr.bf16.mxu0 %v1929
        %2797 = vmatpush1.bf16.msra.mxu0 %v1928
        %2798 = vmatprep.subr.bf16.mxu0 %v1941
        %2799 = vmatpush1.bf16.msra.mxu0 %v1940
        %2800 = vmatprep.subr.bf16.mxu0 %v1953
        %2801 = vmatpush1.bf16.msra.mxu0 %v1952
        %2802 = vmatprep.subr.bf16.mxu0 %v1965
        %2803 = vmatpush1.bf16.msra.mxu0 %v1964
        %2804 = vmatprep.subr.bf16.mxu0 %v1977
        %2805 = vmatpush1.bf16.msra.mxu0 %v1976
        %2806 = vmatprep.subr.bf16.mxu0 %v1989
        %2807 = vmatpush1.bf16.msra.mxu0 %v1988
        %2808 = vmatprep.subr.bf16.mxu0 %v2001
        %2809 = vmatpush1.bf16.msra.mxu0 %v2000
        %2810 = vmatprep.subr.bf16.mxu0 %v2013
        %2811 = vmatpush1.bf16.msra.mxu0 %v2012
        %2812 = vmatprep.subr.bf16.mxu0 %v2025
        %2813 = vmatpush1.bf16.msra.mxu0 %v2024
        %2814 = vmatprep.subr.bf16.mxu0 %v2037
        %2815 = vmatpush1.bf16.msra.mxu0 %v2036
        %2816 = vmatprep.mubr.bf16.mxu0 %v313
        %2817 = vmatmul.mubr.bf16.gmra.mrb[0].mxu0 %v312
        %v2818 = vpop.f32.mrb[0].mxu0
        %v2819 = vadd.f32 0.0, %v2818
        %v2820 = vpop.f32.mrb[0].mxu0
        %v2821 = vadd.f32 0.0, %v2820
        %v2822 = vpop.f32.mrb[0].mxu0
        %v2823 = vpop.f32.mrb[0].mxu0
        %2824 = vdwg.mxu0
        %2825 = vmatprep.subr.bf16.mxu0 %v2049
        %2826 = vmatpush1.bf16.msra.mxu0 %v2048
        %2827 = vmatprep.subr.bf16.mxu0 %v2061
        %2828 = vmatpush1.bf16.msra.mxu0 %v2060
        %2829 = vmatprep.subr.bf16.mxu0 %v2073
        %2830 = vmatpush1.bf16.msra.mxu0 %v2072
        %2831 = vmatprep.subr.bf16.mxu0 %v2085
        %2832 = vmatpush1.bf16.msra.mxu0 %v2084
        %2833 = vmatprep.subr.bf16.mxu0 %v2097
        %2834 = vmatpush1.bf16.msra.mxu0 %v2096
        %2835 = vmatprep.subr.bf16.mxu0 %v2109
        %2836 = vmatpush1.bf16.msra.mxu0 %v2108
        %2837 = vmatprep.subr.bf16.mxu0 %v2121
        %2838 = vmatpush1.bf16.msra.mxu0 %v2120
        %2839 = vmatprep.subr.bf16.mxu0 %v2133
        %2840 = vmatpush1.bf16.msra.mxu0 %v2132
        %2841 = vmatprep.subr.bf16.mxu0 %v2145
        %2842 = vmatpush1.bf16.msra.mxu0 %v2144
        %2843 = vmatprep.subr.bf16.mxu0 %v2157
        %2844 = vmatpush1.bf16.msra.mxu0 %v2156
        %2845 = vmatprep.subr.bf16.mxu0 %v2169
        %2846 = vmatpush1.bf16.msra.mxu0 %v2168
        %2847 = vmatprep.subr.bf16.mxu0 %v2181
        %2848 = vmatpush1.bf16.msra.mxu0 %v2180
        %2849 = vmatprep.subr.bf16.mxu0 %v2193
        %2850 = vmatpush1.bf16.msra.mxu0 %v2192
        %2851 = vmatprep.subr.bf16.mxu0 %v2205
        %2852 = vmatpush1.bf16.msra.mxu0 %v2204
        %2853 = vmatprep.subr.bf16.mxu0 %v2217
        %2854 = vmatpush1.bf16.msra.mxu0 %v2216
        %2855 = vmatprep.subr.bf16.mxu0 %v2229
        %2856 = vmatpush1.bf16.msra.mxu0 %v2228
        %2857 = vmatprep.mubr.bf16.mxu0 %v315
        %2858 = vmatmul.mubr.bf16.gmra.mrb[0].mxu0 %v314
        %v2859 = vpop.f32.mrb[0].mxu0
        %v2860 = vadd.f32 %v2819, %v2859
        %v2861 = vpop.f32.mrb[0].mxu0
        %v2862 = vadd.f32 %v2821, %v2861
        %v2863 = vpop.f32.mrb[0].mxu0
        %v2864 = vpop.f32.mrb[0].mxu0
        %2865 = vdwg.mxu0
        %2866 = vmatprep.subr.bf16.mxu0 %v1859
        %2867 = vmatpush1.bf16.msra.mxu0 %v1858
        %2868 = vmatprep.subr.bf16.mxu0 %v1871
        %2869 = vmatpush1.bf16.msra.mxu0 %v1870
        %2870 = vmatprep.subr.bf16.mxu0 %v1883
        %2871 = vmatpush1.bf16.msra.mxu0 %v1882
        %2872 = vmatprep.subr.bf16.mxu0 %v1895
        %2873 = vmatpush1.bf16.msra.mxu0 %v1894
        %2874 = vmatprep.subr.bf16.mxu0 %v1907
        %2875 = vmatpush1.bf16.msra.mxu0 %v1906
        %2876 = vmatprep.subr.bf16.mxu0 %v1919
        %2877 = vmatpush1.bf16.msra.mxu0 %v1918
        %2878 = vmatprep.subr.bf16.mxu0 %v1931
        %2879 = vmatpush1.bf16.msra.mxu0 %v1930
        %2880 = vmatprep.subr.bf16.mxu0 %v1943
        %2881 = vmatpush1.bf16.msra.mxu0 %v1942
        %2882 = vmatprep.subr.bf16.mxu0 %v1955
        %2883 = vmatpush1.bf16.msra.mxu0 %v1954
        %2884 = vmatprep.subr.bf16.mxu0 %v1967
        %2885 = vmatpush1.bf16.msra.mxu0 %v1966
        %2886 = vmatprep.subr.bf16.mxu0 %v1979
        %2887 = vmatpush1.bf16.msra.mxu0 %v1978
        %2888 = vmatprep.subr.bf16.mxu0 %v1991
        %2889 = vmatpush1.bf16.msra.mxu0 %v1990
        %2890 = vmatprep.subr.bf16.mxu0 %v2003
        %2891 = vmatpush1.bf16.msra.mxu0 %v2002
        %2892 = vmatprep.subr.bf16.mxu0 %v2015
        %2893 = vmatpush1.bf16.msra.mxu0 %v2014
        %2894 = vmatprep.subr.bf16.mxu0 %v2027
        %2895 = vmatpush1.bf16.msra.mxu0 %v2026
        %2896 = vmatprep.subr.bf16.mxu0 %v2039
        %2897 = vmatpush1.bf16.msra.mxu0 %v2038
        %2898 = vmatprep.mubr.bf16.mxu0 %v313
        %2899 = vmatmul.mubr.bf16.gmra.mrb[0].mxu0 %v312
        %v2900 = vpop.f32.mrb[0].mxu0
        %v2901 = vadd.f32 0.0, %v2900
        %v2902 = vpop.f32.mrb[0].mxu0
        %v2903 = vadd.f32 0.0, %v2902
        %v2904 = vpop.f32.mrb[0].mxu0
        %v2905 = vpop.f32.mrb[0].mxu0
        %2906 = vdwg.mxu0
        %2907 = vmatprep.subr.bf16.mxu0 %v2051
        %2908 = vmatpush1.bf16.msra.mxu0 %v2050
        %2909 = vmatprep.subr.bf16.mxu0 %v2063
        %2910 = vmatpush1.bf16.msra.mxu0 %v2062
        %2911 = vmatprep.subr.bf16.mxu0 %v2075
        %2912 = vmatpush1.bf16.msra.mxu0 %v2074
        %2913 = vmatprep.subr.bf16.mxu0 %v2087
        %2914 = vmatpush1.bf16.msra.mxu0 %v2086
        %2915 = vmatprep.subr.bf16.mxu0 %v2099
        %2916 = vmatpush1.bf16.msra.mxu0 %v2098
        %2917 = vmatprep.subr.bf16.mxu0 %v2111
        %2918 = vmatpush1.bf16.msra.mxu0 %v2110
        %2919 = vmatprep.subr.bf16.mxu0 %v2123
        %2920 = vmatpush1.bf16.msra.mxu0 %v2122
        %2921 = vmatprep.subr.bf16.mxu0 %v2135
        %2922 = vmatpush1.bf16.msra.mxu0 %v2134
        %2923 = vmatprep.subr.bf16.mxu0 %v2147
        %2924 = vmatpush1.bf16.msra.mxu0 %v2146
        %2925 = vmatprep.subr.bf16.mxu0 %v2159
        %2926 = vmatpush1.bf16.msra.mxu0 %v2158
        %2927 = vmatprep.subr.bf16.mxu0 %v2171
        %2928 = vmatpush1.bf16.msra.mxu0 %v2170
        %2929 = vmatprep.subr.bf16.mxu0 %v2183
        %2930 = vmatpush1.bf16.msra.mxu0 %v2182
        %2931 = vmatprep.subr.bf16.mxu0 %v2195
        %2932 = vmatpush1.bf16.msra.mxu0 %v2194
        %2933 = vmatprep.subr.bf16.mxu0 %v2207
        %2934 = vmatpush1.bf16.msra.mxu0 %v2206
        %2935 = vmatprep.subr.bf16.mxu0 %v2219
        %2936 = vmatpush1.bf16.msra.mxu0 %v2218
        %2937 = vmatprep.subr.bf16.mxu0 %v2231
        %2938 = vmatpush1.bf16.msra.mxu0 %v2230
        %2939 = vmatprep.mubr.bf16.mxu0 %v315
        %2940 = vmatmul.mubr.bf16.gmra.mrb[0].mxu0 %v314
        %v2941 = vpop.f32.mrb[0].mxu0
        %v2942 = vadd.f32 %v2901, %v2941
        %v2943 = vpop.f32.mrb[0].mxu0
        %v2944 = vadd.f32 %v2903, %v2943
        %v2945 = vpop.f32.mrb[0].mxu0
        %v2946 = vpop.f32.mrb[0].mxu0
        %2947 = vdwg.mxu0
        %2948 = vmatprep.subr.bf16.mxu0 %v1861
        %2949 = vmatpush1.bf16.msra.mxu0 %v1860
        %2950 = vmatprep.subr.bf16.mxu0 %v1873
        %2951 = vmatpush1.bf16.msra.mxu0 %v1872
        %2952 = vmatprep.subr.bf16.mxu0 %v1885
        %2953 = vmatpush1.bf16.msra.mxu0 %v1884
        %2954 = vmatprep.subr.bf16.mxu0 %v1897
        %2955 = vmatpush1.bf16.msra.mxu0 %v1896
        %2956 = vmatprep.subr.bf16.mxu0 %v1909
        %2957 = vmatpush1.bf16.msra.mxu0 %v1908
        %2958 = vmatprep.subr.bf16.mxu0 %v1921
        %2959 = vmatpush1.bf16.msra.mxu0 %v1920
        %2960 = vmatprep.subr.bf16.mxu0 %v1933
        %2961 = vmatpush1.bf16.msra.mxu0 %v1932
        %2962 = vmatprep.subr.bf16.mxu0 %v1945
        %2963 = vmatpush1.bf16.msra.mxu0 %v1944
        %2964 = vmatprep.subr.bf16.mxu0 %v1957
        %2965 = vmatpush1.bf16.msra.mxu0 %v1956
        %2966 = vmatprep.subr.bf16.mxu0 %v1969
        %2967 = vmatpush1.bf16.msra.mxu0 %v1968
        %2968 = vmatprep.subr.bf16.mxu0 %v1981
        %2969 = vmatpush1.bf16.msra.mxu0 %v1980
        %2970 = vmatprep.subr.bf16.mxu0 %v1993
        %2971 = vmatpush1.bf16.msra.mxu0 %v1992
        %2972 = vmatprep.subr.bf16.mxu0 %v2005
        %2973 = vmatpush1.bf16.msra.mxu0 %v2004
        %2974 = vmatprep.subr.bf16.mxu0 %v2017
        %2975 = vmatpush1.bf16.msra.mxu0 %v2016
        %2976 = vmatprep.subr.bf16.mxu0 %v2029
        %2977 = vmatpush1.bf16.msra.mxu0 %v2028
        %2978 = vmatprep.subr.bf16.mxu0 %v2041
        %2979 = vmatpush1.bf16.msra.mxu0 %v2040
        %2980 = vmatprep.mubr.bf16.mxu0 %v313
        %2981 = vmatmul.mubr.bf16.gmra.mrb[0].mxu0 %v312
        %v2982 = vpop.f32.mrb[0].mxu0
        %v2983 = vadd.f32 0.0, %v2982
        %v2984 = vpop.f32.mrb[0].mxu0
        %v2985 = vadd.f32 0.0, %v2984
        %v2986 = vpop.f32.mrb[0].mxu0
        %v2987 = vpop.f32.mrb[0].mxu0
        %2988 = vdwg.mxu0
        %2989 = vmatprep.subr.bf16.mxu0 %v2053
        %2990 = vmatpush1.bf16.msra.mxu0 %v2052
        %2991 = vmatprep.subr.bf16.mxu0 %v2065
        %2992 = vmatpush1.bf16.msra.mxu0 %v2064
        %2993 = vmatprep.subr.bf16.mxu0 %v2077
        %2994 = vmatpush1.bf16.msra.mxu0 %v2076
        %2995 = vmatprep.subr.bf16.mxu0 %v2089
        %2996 = vmatpush1.bf16.msra.mxu0 %v2088
        %2997 = vmatprep.subr.bf16.mxu0 %v2101
        %2998 = vmatpush1.bf16.msra.mxu0 %v2100
        %2999 = vmatprep.subr.bf16.mxu0 %v2113
        %3000 = vmatpush1.bf16.msra.mxu0 %v2112
        %3001 = vmatprep.subr.bf16.mxu0 %v2125
        %3002 = vmatpush1.bf16.msra.mxu0 %v2124
        %3003 = vmatprep.subr.bf16.mxu0 %v2137
        %3004 = vmatpush1.bf16.msra.mxu0 %v2136
        %3005 = vmatprep.subr.bf16.mxu0 %v2149
        %3006 = vmatpush1.bf16.msra.mxu0 %v2148
        %3007 = vmatprep.subr.bf16.mxu0 %v2161
        %3008 = vmatpush1.bf16.msra.mxu0 %v2160
        %3009 = vmatprep.subr.bf16.mxu0 %v2173
        %3010 = vmatpush1.bf16.msra.mxu0 %v2172
        %3011 = vmatprep.subr.bf16.mxu0 %v2185
        %3012 = vmatpush1.bf16.msra.mxu0 %v2184
        %3013 = vmatprep.subr.bf16.mxu0 %v2197
        %3014 = vmatpush1.bf16.msra.mxu0 %v2196
        %3015 = vmatprep.subr.bf16.mxu0 %v2209
        %3016 = vmatpush1.bf16.msra.mxu0 %v2208
        %3017 = vmatprep.subr.bf16.mxu0 %v2221
        %3018 = vmatpush1.bf16.msra.mxu0 %v2220
        %3019 = vmatprep.subr.bf16.mxu0 %v2233
        %3020 = vmatpush1.bf16.msra.mxu0 %v2232
        %3021 = vmatprep.mubr.bf16.mxu0 %v315
        %3022 = vmatmul.mubr.bf16.gmra.mrb[0].mxu0 %v314
        %v3023 = vpop.f32.mrb[0].mxu0
        %v3024 = vadd.f32 %v2983, %v3023
        %v3025 = vpop.f32.mrb[0].mxu0
        %v3026 = vadd.f32 %v2985, %v3025
        %v3027 = vpop.f32.mrb[0].mxu0
        %v3028 = vpop.f32.mrb[0].mxu0
        %3029 = vdwg.mxu0
        %3030 = vmatprep.subr.bf16.mxu0 %v1863
        %3031 = vmatpush1.bf16.msra.mxu0 %v1862
        %3032 = vmatprep.subr.bf16.mxu0 %v1875
        %3033 = vmatpush1.bf16.msra.mxu0 %v1874
        %3034 = vmatprep.subr.bf16.mxu0 %v1887
        %3035 = vmatpush1.bf16.msra.mxu0 %v1886
        %3036 = vmatprep.subr.bf16.mxu0 %v1899
        %3037 = vmatpush1.bf16.msra.mxu0 %v1898
        %3038 = vmatprep.subr.bf16.mxu0 %v1911
        %3039 = vmatpush1.bf16.msra.mxu0 %v1910
        %3040 = vmatprep.subr.bf16.mxu0 %v1923
        %3041 = vmatpush1.bf16.msra.mxu0 %v1922
        %3042 = vmatprep.subr.bf16.mxu0 %v1935
        %3043 = vmatpush1.bf16.msra.mxu0 %v1934
        %3044 = vmatprep.subr.bf16.mxu0 %v1947
        %3045 = vmatpush1.bf16.msra.mxu0 %v1946
        %3046 = vmatprep.subr.bf16.mxu0 %v1959
        %3047 = vmatpush1.bf16.msra.mxu0 %v1958
        %3048 = vmatprep.subr.bf16.mxu0 %v1971
        %3049 = vmatpush1.bf16.msra.mxu0 %v1970
        %3050 = vmatprep.subr.bf16.mxu0 %v1983
        %3051 = vmatpush1.bf16.msra.mxu0 %v1982
        %3052 = vmatprep.subr.bf16.mxu0 %v1995
        %3053 = vmatpush1.bf16.msra.mxu0 %v1994
        %3054 = vmatprep.subr.bf16.mxu0 %v2007
        %3055 = vmatpush1.bf16.msra.mxu0 %v2006
        %3056 = vmatprep.subr.bf16.mxu0 %v2019
        %3057 = vmatpush1.bf16.msra.mxu0 %v2018
        %3058 = vmatprep.subr.bf16.mxu0 %v2031
        %3059 = vmatpush1.bf16.msra.mxu0 %v2030
        %3060 = vmatprep.subr.bf16.mxu0 %v2043
        %3061 = vmatpush1.bf16.msra.mxu0 %v2042
        %3062 = vmatprep.mubr.bf16.mxu0 %v313
        %3063 = vmatmul.mubr.bf16.gmra.mrb[0].mxu0 %v312
        %v3064 = vpop.f32.mrb[0].mxu0
        %v3065 = vadd.f32 0.0, %v3064
        %v3066 = vpop.f32.mrb[0].mxu0
        %v3067 = vadd.f32 0.0, %v3066
        %v3068 = vpop.f32.mrb[0].mxu0
        %v3069 = vpop.f32.mrb[0].mxu0
        %3070 = vdwg.mxu0
        %3071 = vmatprep.subr.bf16.mxu0 %v2055
        %3072 = vmatpush1.bf16.msra.mxu0 %v2054
        %3073 = vmatprep.subr.bf16.mxu0 %v2067
        %3074 = vmatpush1.bf16.msra.mxu0 %v2066
        %3075 = vmatprep.subr.bf16.mxu0 %v2079
        %3076 = vmatpush1.bf16.msra.mxu0 %v2078
        %3077 = vmatprep.subr.bf16.mxu0 %v2091
        %3078 = vmatpush1.bf16.msra.mxu0 %v2090
        %3079 = vmatprep.subr.bf16.mxu0 %v2103
        %3080 = vmatpush1.bf16.msra.mxu0 %v2102
        %3081 = vmatprep.subr.bf16.mxu0 %v2115
        %3082 = vmatpush1.bf16.msra.mxu0 %v2114
        %3083 = vmatprep.subr.bf16.mxu0 %v2127
        %3084 = vmatpush1.bf16.msra.mxu0 %v2126
        %3085 = vmatprep.subr.bf16.mxu0 %v2139
        %3086 = vmatpush1.bf16.msra.mxu0 %v2138
        %3087 = vmatprep.subr.bf16.mxu0 %v2151
        %3088 = vmatpush1.bf16.msra.mxu0 %v2150
        %3089 = vmatprep.subr.bf16.mxu0 %v2163
        %3090 = vmatpush1.bf16.msra.mxu0 %v2162
        %3091 = vmatprep.subr.bf16.mxu0 %v2175
        %3092 = vmatpush1.bf16.msra.mxu0 %v2174
        %3093 = vmatprep.subr.bf16.mxu0 %v2187
        %3094 = vmatpush1.bf16.msra.mxu0 %v2186
        %3095 = vmatprep.subr.bf16.mxu0 %v2199
        %3096 = vmatpush1.bf16.msra.mxu0 %v2198
        %3097 = vmatprep.subr.bf16.mxu0 %v2211
        %3098 = vmatpush1.bf16.msra.mxu0 %v2210
        %3099 = vmatprep.subr.bf16.mxu0 %v2223
        %3100 = vmatpush1.bf16.msra.mxu0 %v2222
        %3101 = vmatprep.subr.bf16.mxu0 %v2235
        %3102 = vmatpush1.bf16.msra.mxu0 %v2234
        %3103 = vmatprep.mubr.bf16.mxu0 %v315
        %3104 = vmatmul.mubr.bf16.gmra.mrb[0].mxu0 %v314
        %v3105 = vpop.f32.mrb[0].mxu0
        %v3106 = vadd.f32 %v3065, %v3105
        %v3107 = vpop.f32.mrb[0].mxu0
        %v3108 = vadd.f32 %v3067, %v3107
        %v3109 = vpop.f32.mrb[0].mxu0
        %v3110 = vpop.f32.mrb[0].mxu0
        %3111 = vdwg.mxu0
        %v3112 = vpack.c.bf16 %v2696, %v2696
        %v3113 = vpack.c.bf16 %v2698, %v2698
        %v3114 = vpack.c.bf16 %v2778, %v2778
        %v3115 = vpack.c.bf16 %v2780, %v2780
        %v3116 = vpack.c.bf16 %v2860, %v2860
        %v3117 = vpack.c.bf16 %v2862, %v2862
        %v3118 = vpack.c.bf16 %v2942, %v2942
        %v3119 = vpack.c.bf16 %v2944, %v2944
        %v3120 = vpack.c.bf16 %v3024, %v3024
        %v3121 = vpack.c.bf16 %v3026, %v3026
        %v3122 = vpack.c.bf16 %v3106, %v3106
        %v3123 = vpack.c.bf16 %v3108, %v3108
        %vm3124 = vcmask 523264
        %v3126 = vsel %vm3124, %v3112, 0
        %v3129 = vsel %vm3124, %v3116, 0
        %3131 = vmatprep.subr.bf16.mxu0 0
        %3132 = vmatpush1.bf16.xpose.msra.mxu0 %v3129
        %3133 = vmatprep.subr.bf16.mxu0 0
        %3134 = vmatpush1.bf16.xpose.msra.mxu0 0
        %3135 = vmatprep.subr.bf16.mxu0 0
        %3136 = vmatpush1.bf16.xpose.msra.mxu0 0
        %3137 = vmatprep.subr.bf16.mxu0 0
        %3138 = vmatpush1.bf16.xpose.msra.mxu0 0
        %3139 = vmatprep.subr.bf16.mxu0 0
        %3140 = vmatpush1.bf16.xpose.msra.mxu0 0
        %3141 = vmatprep.subr.bf16.mxu0 0
        %3142 = vmatpush1.bf16.xpose.msra.mxu0 0
        %3143 = vmatprep.subr.bf16.mxu0 0
        %3144 = vmatpush1.bf16.xpose.msra.mxu0 0
        %3145 = vmatprep.subr.bf16.mxu0 0
        %3146 = vmatpush1.bf16.xpose.msra.mxu0 0
        %3147 = vmatprep.subr.bf16.mxu0 0
        %3148 = vmatpush1.bf16.xpose.msra.mxu0 0
        %3149 = vmatprep.subr.bf16.mxu0 0
        %3150 = vmatpush1.bf16.xpose.msra.mxu0 0
        %3151 = vmatprep.subr.bf16.mxu0 0
        %3152 = vmatpush1.bf16.xpose.msra.mxu0 0
        %3153 = vmatprep.subr.bf16.mxu0 0
        %3154 = vmatpush1.bf16.xpose.msra.mxu0 0
        %3155 = vmatprep.subr.bf16.mxu0 0
        %3156 = vmatpush1.bf16.xpose.msra.mxu0 0
        %3157 = vmatprep.subr.bf16.mxu0 0
        %3158 = vmatpush1.bf16.xpose.msra.mxu0 0
        %3159 = vmatprep.subr.bf16.mxu0 0
        %3160 = vmatpush1.bf16.xpose.msra.mxu0 0
        %3161 = vmatprep.subr.bf16.mxu0 0
        %3162 = vmatpush1.bf16.xpose.msra.mxu0 0
        %3163 = vmatprep.mubr.bf16.mxu0 0
        %3164 = vmatmul.mubr.bf16.gmra.mrb[0].mxu0 %v3126
        %v3165 = vpop.f32.mrb[0].mxu0
        %v3166 = vadd.f32 0.0, %v3165
        %v3167 = vpop.f32.mrb[0].mxu0
        %v3168 = vpop.f32.mrb[0].mxu0
        %v3169 = vpop.f32.mrb[0].mxu0
        %3170 = vdwg.mxu0
        %v3171 = vmul.f32 %v3166, 0.125
        %v3172 = vsel %vm311, -1e+09, %v3171
        %vm3173 = vcmask 64512
        %v3174 = vsel %vm3173, %v3172, -inf
        %3175 = vmax.xlane.f32.xlu0 %v3174
        %v3176 = vpop.xlane.xlu0 %3175
        %v3177 = vsub.f32 %v3172, %v3176
        %v3178 = vmul.f32 %v3177, 1.442695
        %v3179 = vpow.pop %v3178
        %v3180 = vsel %vm3173, %v3179, 0.0
        %3181 = vadd.xlane.f32.xlu0 %v3180
        %v3182 = vpop.xlane.xlu0 %3181
        %v3183 = vrcp.pop %v3182
        %v3184 = vmul.f32 %v3179, %v3183
        %3185 = vst.msk [vmem:[%s295] sm:$0xff] %vm3173, %v3184
        %v3186 = vpack.c.bf16 %v3184, %v3184
        %v3188 = vsel %vm3173, %v3186, 0
        %vm3190 = vcmask 1043456
        %v3192 = vsel %vm3190, %v3120, 0
        %3194 = vmatprep.subr.bf16.mxu0 0
        %3195 = vmatpush1.bf16.msra.mxu0 %v3192
        %3196 = vmatprep.subr.bf16.mxu0 0
        %3197 = vmatpush1.bf16.msra.mxu0 0
        %3198 = vmatprep.subr.bf16.mxu0 0
        %3199 = vmatpush1.bf16.msra.mxu0 0
        %3200 = vmatprep.subr.bf16.mxu0 0
        %3201 = vmatpush1.bf16.msra.mxu0 0
        %3202 = vmatprep.subr.bf16.mxu0 0
        %3203 = vmatpush1.bf16.msra.mxu0 0
        %3204 = vmatprep.subr.bf16.mxu0 0
        %3205 = vmatpush1.bf16.msra.mxu0 0
        %3206 = vmatprep.subr.bf16.mxu0 0
        %3207 = vmatpush1.bf16.msra.mxu0 0
        %3208 = vmatprep.subr.bf16.mxu0 0
        %3209 = vmatpush1.bf16.msra.mxu0 0
        %3210 = vmatprep.subr.bf16.mxu0 0
        %3211 = vmatpush1.bf16.msra.mxu0 0
        %3212 = vmatprep.subr.bf16.mxu0 0
        %3213 = vmatpush1.bf16.msra.mxu0 0
        %3214 = vmatprep.subr.bf16.mxu0 0
        %3215 = vmatpush1.bf16.msra.mxu0 0
        %3216 = vmatprep.subr.bf16.mxu0 0
        %3217 = vmatpush1.bf16.msra.mxu0 0
        %3218 = vmatprep.subr.bf16.mxu0 0
        %3219 = vmatpush1.bf16.msra.mxu0 0
        %3220 = vmatprep.subr.bf16.mxu0 0
        %3221 = vmatpush1.bf16.msra.mxu0 0
        %3222 = vmatprep.subr.bf16.mxu0 0
        %3223 = vmatpush1.bf16.msra.mxu0 0
        %3224 = vmatprep.subr.bf16.mxu0 0
        %3225 = vmatpush1.bf16.msra.mxu0 0
        %3226 = vmatprep.mubr.bf16.mxu0 0
        %3227 = vmatmul.mubr.bf16.gmra.mrb[0].mxu0 %v3188
        %v3228 = vpop.f32.mrb[0].mxu0
        %v3229 = vadd.f32 0.0, %v3228
        %v3230 = vpop.f32.mrb[0].mxu0
        %v3231 = vpop.f32.mrb[0].mxu0
        %v3232 = vpop.f32.mrb[0].mxu0
        %3233 = vdwg.mxu0
        %3234 = vst.msk [vmem:[#allocation2] sm:$0xff] %vm3124, %v3229
        %3236 = vrot.lane.b32.xlu0 %v3112, 64
        %v3237 = vpop.permute.xlu0 %3236
        %3239 = vrot.lane.b32.xlu0 %v3116, 64
        %v3240 = vpop.permute.xlu0 %3239
        %v3242 = vsel %vm3124, %v3237, 0
        %v3245 = vsel %vm3124, %v3240, 0
        %3247 = vmatprep.subr.bf16.mxu0 0
        %3248 = vmatpush1.bf16.xpose.msra.mxu0 %v3245
        %3249 = vmatprep.subr.bf16.mxu0 0
        %3250 = vmatpush1.bf16.xpose.msra.mxu0 0
        %3251 = vmatprep.subr.bf16.mxu0 0
        %3252 = vmatpush1.bf16.xpose.msra.mxu0 0
        %3253 = vmatprep.subr.bf16.mxu0 0
        %3254 = vmatpush1.bf16.xpose.msra.mxu0 0
        %3255 = vmatprep.subr.bf16.mxu0 0
        %3256 = vmatpush1.bf16.xpose.msra.mxu0 0
        %3257 = vmatprep.subr.bf16.mxu0 0
        %3258 = vmatpush1.bf16.xpose.msra.mxu0 0
        %3259 = vmatprep.subr.bf16.mxu0 0
        %3260 = vmatpush1.bf16.xpose.msra.mxu0 0
        %3261 = vmatprep.subr.bf16.mxu0 0
        %3262 = vmatpush1.bf16.xpose.msra.mxu0 0
        %3263 = vmatprep.subr.bf16.mxu0 0
        %3264 = vmatpush1.bf16.xpose.msra.mxu0 0
        %3265 = vmatprep.subr.bf16.mxu0 0
        %3266 = vmatpush1.bf16.xpose.msra.mxu0 0
        %3267 = vmatprep.subr.bf16.mxu0 0
        %3268 = vmatpush1.bf16.xpose.msra.mxu0 0
        %3269 = vmatprep.subr.bf16.mxu0 0
        %3270 = vmatpush1.bf16.xpose.msra.mxu0 0
        %3271 = vmatprep.subr.bf16.mxu0 0
        %3272 = vmatpush1.bf16.xpose.msra.mxu0 0
        %3273 = vmatprep.subr.bf16.mxu0 0
        %3274 = vmatpush1.bf16.xpose.msra.mxu0 0
        %3275 = vmatprep.subr.bf16.mxu0 0
        %3276 = vmatpush1.bf16.xpose.msra.mxu0 0
        %3277 = vmatprep.subr.bf16.mxu0 0
        %3278 = vmatpush1.bf16.xpose.msra.mxu0 0
        %3279 = vmatprep.mubr.bf16.mxu0 0
        %3280 = vmatmul.mubr.bf16.gmra.mrb[0].mxu0 %v3242
        %v3281 = vpop.f32.mrb[0].mxu0
        %v3282 = vadd.f32 0.0, %v3281
        %v3283 = vpop.f32.mrb[0].mxu0
        %v3284 = vpop.f32.mrb[0].mxu0
        %v3285 = vpop.f32.mrb[0].mxu0
        %3286 = vdwg.mxu0
        %v3287 = vmul.f32 %v3282, 0.125
        %v3288 = vsel %vm311, -1e+09, %v3287
        %v3289 = vsel %vm3173, %v3288, -inf
        %3290 = vmax.xlane.f32.xlu0 %v3289
        %v3291 = vpop.xlane.xlu0 %3290
        %v3292 = vsub.f32 %v3288, %v3291
        %v3293 = vmul.f32 %v3292, 1.442695
        %v3294 = vpow.pop %v3293
        %v3295 = vsel %vm3173, %v3294, 0.0
        %3296 = vadd.xlane.f32.xlu0 %v3295
        %v3297 = vpop.xlane.xlu0 %3296
        %v3298 = vrcp.pop %v3297
        %v3299 = vmul.f32 %v3294, %v3298
        %s3300 = scalar_lea.vmem %s295, 8 [#allocation5]
        %3301 = vst.msk [vmem:[%s3300] sm:$0xff] %vm3173, %v3299
        %v3302 = vpack.c.bf16 %v3299, %v3299
        %3304 = vrot.lane.b32.xlu0 %v3120, 64
        %v3305 = vpop.permute.xlu0 %3304
        %v3307 = vsel %vm3173, %v3302, 0
        %v3310 = vsel %vm3190, %v3305, 0
        %3312 = vmatprep.subr.bf16.mxu0 0
        %3313 = vmatpush1.bf16.msra.mxu0 %v3310
        %3314 = vmatprep.subr.bf16.mxu0 0
        %3315 = vmatpush1.bf16.msra.mxu0 0
        %3316 = vmatprep.subr.bf16.mxu0 0
        %3317 = vmatpush1.bf16.msra.mxu0 0
        %3318 = vmatprep.subr.bf16.mxu0 0
        %3319 = vmatpush1.bf16.msra.mxu0 0
        %3320 = vmatprep.subr.bf16.mxu0 0
        %3321 = vmatpush1.bf16.msra.mxu0 0
        %3322 = vmatprep.subr.bf16.mxu0 0
        %3323 = vmatpush1.bf16.msra.mxu0 0
        %3324 = vmatprep.subr.bf16.mxu0 0
        %3325 = vmatpush1.bf16.msra.mxu0 0
        %3326 = vmatprep.subr.bf16.mxu0 0
        %3327 = vmatpush1.bf16.msra.mxu0 0
        %3328 = vmatprep.subr.bf16.mxu0 0
        %3329 = vmatpush1.bf16.msra.mxu0 0
        %3330 = vmatprep.subr.bf16.mxu0 0
        %3331 = vmatpush1.bf16.msra.mxu0 0
        %3332 = vmatprep.subr.bf16.mxu0 0
        %3333 = vmatpush1.bf16.msra.mxu0 0
        %3334 = vmatprep.subr.bf16.mxu0 0
        %3335 = vmatpush1.bf16.msra.mxu0 0
        %3336 = vmatprep.subr.bf16.mxu0 0
        %3337 = vmatpush1.bf16.msra.mxu0 0
        %3338 = vmatprep.subr.bf16.mxu0 0
        %3339 = vmatpush1.bf16.msra.mxu0 0
        %3340 = vmatprep.subr.bf16.mxu0 0
        %3341 = vmatpush1.bf16.msra.mxu0 0
        %3342 = vmatprep.subr.bf16.mxu0 0
        %3343 = vmatpush1.bf16.msra.mxu0 0
        %3344 = vmatprep.mubr.bf16.mxu0 0
        %3345 = vmatmul.mubr.bf16.gmra.mrb[0].mxu0 %v3307
        %v3346 = vpop.f32.mrb[0].mxu0
        %v3347 = vadd.f32 0.0, %v3346
        %v3348 = vpop.f32.mrb[0].mxu0
        %v3349 = vpop.f32.mrb[0].mxu0
        %v3350 = vpop.f32.mrb[0].mxu0
        %3351 = vdwg.mxu0
        %3353 = vrot.lane.b32.xlu0 %v3347, 64
        %v3354 = vpop.permute.xlu0 %3353
        %vm3356 = vcmask 1048064
        %3357 = vst.msk [vmem:[#allocation2] sm:$0xff] %vm3356, %v3354
        %v3359 = vsel %vm3124, %v3113, 0
        %v3362 = vsel %vm3124, %v3117, 0
        %3364 = vmatprep.subr.bf16.mxu0 0
        %3365 = vmatpush1.bf16.xpose.msra.mxu0 %v3362
        %3366 = vmatprep.subr.bf16.mxu0 0
        %3367 = vmatpush1.bf16.xpose.msra.mxu0 0
        %3368 = vmatprep.subr.bf16.mxu0 0
        %3369 = vmatpush1.bf16.xpose.msra.mxu0 0
        %3370 = vmatprep.subr.bf16.mxu0 0
        %3371 = vmatpush1.bf16.xpose.msra.mxu0 0
        %3372 = vmatprep.subr.bf16.mxu0 0
        %3373 = vmatpush1.bf16.xpose.msra.mxu0 0
        %3374 = vmatprep.subr.bf16.mxu0 0
        %3375 = vmatpush1.bf16.xpose.msra.mxu0 0
        %3376 = vmatprep.subr.bf16.mxu0 0
        %3377 = vmatpush1.bf16.xpose.msra.mxu0 0
        %3378 = vmatprep.subr.bf16.mxu0 0
        %3379 = vmatpush1.bf16.xpose.msra.mxu0 0
        %3380 = vmatprep.subr.bf16.mxu0 0
        %3381 = vmatpush1.bf16.xpose.msra.mxu0 0
        %3382 = vmatprep.subr.bf16.mxu0 0
        %3383 = vmatpush1.bf16.xpose.msra.mxu0 0
        %3384 = vmatprep.subr.bf16.mxu0 0
        %3385 = vmatpush1.bf16.xpose.msra.mxu0 0
        %3386 = vmatprep.subr.bf16.mxu0 0
        %3387 = vmatpush1.bf16.xpose.msra.mxu0 0
        %3388 = vmatprep.subr.bf16.mxu0 0
        %3389 = vmatpush1.bf16.xpose.msra.mxu0 0
        %3390 = vmatprep.subr.bf16.mxu0 0
        %3391 = vmatpush1.bf16.xpose.msra.mxu0 0
        %3392 = vmatprep.subr.bf16.mxu0 0
        %3393 = vmatpush1.bf16.xpose.msra.mxu0 0
        %3394 = vmatprep.subr.bf16.mxu0 0
        %3395 = vmatpush1.bf16.xpose.msra.mxu0 0
        %3396 = vmatprep.mubr.bf16.mxu0 0
        %3397 = vmatmul.mubr.bf16.gmra.mrb[0].mxu0 %v3359
        %v3398 = vpop.f32.mrb[0].mxu0
        %v3399 = vadd.f32 0.0, %v3398
        %v3400 = vpop.f32.mrb[0].mxu0
        %v3401 = vpop.f32.mrb[0].mxu0
        %v3402 = vpop.f32.mrb[0].mxu0
        %3403 = vdwg.mxu0
        %v3404 = vmul.f32 %v3399, 0.125
        %v3405 = vsel %vm311, -1e+09, %v3404
        %v3406 = vsel %vm3173, %v3405, -inf
        %3407 = vmax.xlane.f32.xlu0 %v3406
        %v3408 = vpop.xlane.xlu0 %3407
        %v3409 = vsub.f32 %v3405, %v3408
        %v3410 = vmul.f32 %v3409, 1.442695
        %v3411 = vpow.pop %v3410
        %v3412 = vsel %vm3173, %v3411, 0.0
        %3413 = vadd.xlane.f32.xlu0 %v3412
        %v3414 = vpop.xlane.xlu0 %3413
        %v3415 = vrcp.pop %v3414
        %v3416 = vmul.f32 %v3411, %v3415
        %s3417 = scalar_lea.vmem %s295, 16 [#allocation5]
        %3418 = vst.msk [vmem:[%s3417] sm:$0xff] %vm3173, %v3416
        %v3419 = vpack.c.bf16 %v3416, %v3416
        %v3421 = vsel %vm3173, %v3419, 0
        %v3424 = vsel %vm3190, %v3121, 0
        %3426 = vmatprep.subr.bf16.mxu0 0
        %3427 = vmatpush1.bf16.msra.mxu0 %v3424
        %3428 = vmatprep.subr.bf16.mxu0 0
        %3429 = vmatpush1.bf16.msra.mxu0 0
        %3430 = vmatprep.subr.bf16.mxu0 0
        %3431 = vmatpush1.bf16.msra.mxu0 0
        %3432 = vmatprep.subr.bf16.mxu0 0
        %3433 = vmatpush1.bf16.msra.mxu0 0
        %3434 = vmatprep.subr.bf16.mxu0 0
        %3435 = vmatpush1.bf16.msra.mxu0 0
        %3436 = vmatprep.subr.bf16.mxu0 0
        %3437 = vmatpush1.bf16.msra.mxu0 0
        %3438 = vmatprep.subr.bf16.mxu0 0
        %3439 = vmatpush1.bf16.msra.mxu0 0
        %3440 = vmatprep.subr.bf16.mxu0 0
        %3441 = vmatpush1.bf16.msra.mxu0 0
        %3442 = vmatprep.subr.bf16.mxu0 0
        %3443 = vmatpush1.bf16.msra.mxu0 0
        %3444 = vmatprep.subr.bf16.mxu0 0
        %3445 = vmatpush1.bf16.msra.mxu0 0
        %3446 = vmatprep.subr.bf16.mxu0 0
        %3447 = vmatpush1.bf16.msra.mxu0 0
        %3448 = vmatprep.subr.bf16.mxu0 0
        %3449 = vmatpush1.bf16.msra.mxu0 0
        %3450 = vmatprep.subr.bf16.mxu0 0
        %3451 = vmatpush1.bf16.msra.mxu0 0
        %3452 = vmatprep.subr.bf16.mxu0 0
        %3453 = vmatpush1.bf16.msra.mxu0 0
        %3454 = vmatprep.subr.bf16.mxu0 0
        %3455 = vmatpush1.bf16.msra.mxu0 0
        %3456 = vmatprep.subr.bf16.mxu0 0
        %3457 = vmatpush1.bf16.msra.mxu0 0
        %3458 = vmatprep.mubr.bf16.mxu0 0
        %3459 = vmatmul.mubr.bf16.gmra.mrb[0].mxu0 %v3421
        %v3460 = vpop.f32.mrb[0].mxu0
        %v3461 = vadd.f32 0.0, %v3460
        %v3462 = vpop.f32.mrb[0].mxu0
        %v3463 = vpop.f32.mrb[0].mxu0
        %v3464 = vpop.f32.mrb[0].mxu0
        %3465 = vdwg.mxu0
        %3466 = vst.msk [vmem:[#allocation2 + $0x8] sm:$0xff] %vm3124, %v3461
        %3468 = vrot.lane.b32.xlu0 %v3113, 64
        %v3469 = vpop.permute.xlu0 %3468
        %3471 = vrot.lane.b32.xlu0 %v3117, 64
        %v3472 = vpop.permute.xlu0 %3471
        %v3474 = vsel %vm3124, %v3469, 0
        %v3477 = vsel %vm3124, %v3472, 0
        %3479 = vmatprep.subr.bf16.mxu0 0
        %3480 = vmatpush1.bf16.xpose.msra.mxu0 %v3477
        %3481 = vmatprep.subr.bf16.mxu0 0
        %3482 = vmatpush1.bf16.xpose.msra.mxu0 0
        %3483 = vmatprep.subr.bf16.mxu0 0
        %3484 = vmatpush1.bf16.xpose.msra.mxu0 0
        %3485 = vmatprep.subr.bf16.mxu0 0
        %3486 = vmatpush1.bf16.xpose.msra.mxu0 0
        %3487 = vmatprep.subr.bf16.mxu0 0
        %3488 = vmatpush1.bf16.xpose.msra.mxu0 0
        %3489 = vmatprep.subr.bf16.mxu0 0
        %3490 = vmatpush1.bf16.xpose.msra.mxu0 0
        %3491 = vmatprep.subr.bf16.mxu0 0
        %3492 = vmatpush1.bf16.xpose.msra.mxu0 0
        %3493 = vmatprep.subr.bf16.mxu0 0
        %3494 = vmatpush1.bf16.xpose.msra.mxu0 0
        %3495 = vmatprep.subr.bf16.mxu0 0
        %3496 = vmatpush1.bf16.xpose.msra.mxu0 0
        %3497 = vmatprep.subr.bf16.mxu0 0
        %3498 = vmatpush1.bf16.xpose.msra.mxu0 0
        %3499 = vmatprep.subr.bf16.mxu0 0
        %3500 = vmatpush1.bf16.xpose.msra.mxu0 0
        %3501 = vmatprep.subr.bf16.mxu0 0
        %3502 = vmatpush1.bf16.xpose.msra.mxu0 0
        %3503 = vmatprep.subr.bf16.mxu0 0
        %3504 = vmatpush1.bf16.xpose.msra.mxu0 0
        %3505 = vmatprep.subr.bf16.mxu0 0
        %3506 = vmatpush1.bf16.xpose.msra.mxu0 0
        %3507 = vmatprep.subr.bf16.mxu0 0
        %3508 = vmatpush1.bf16.xpose.msra.mxu0 0
        %3509 = vmatprep.subr.bf16.mxu0 0
        %3510 = vmatpush1.bf16.xpose.msra.mxu0 0
        %3511 = vmatprep.mubr.bf16.mxu0 0
        %3512 = vmatmul.mubr.bf16.gmra.mrb[0].mxu0 %v3474
        %v3513 = vpop.f32.mrb[0].mxu0
        %v3514 = vadd.f32 0.0, %v3513
        %v3515 = vpop.f32.mrb[0].mxu0
        %v3516 = vpop.f32.mrb[0].mxu0
        %v3517 = vpop.f32.mrb[0].mxu0
        %3518 = vdwg.mxu0
        %v3519 = vmul.f32 %v3514, 0.125
        %v3520 = vsel %vm311, -1e+09, %v3519
        %v3521 = vsel %vm3173, %v3520, -inf
        %3522 = vmax.xlane.f32.xlu0 %v3521
        %v3523 = vpop.xlane.xlu0 %3522
        %v3524 = vsub.f32 %v3520, %v3523
        %v3525 = vmul.f32 %v3524, 1.442695
        %v3526 = vpow.pop %v3525
        %v3527 = vsel %vm3173, %v3526, 0.0
        %3528 = vadd.xlane.f32.xlu0 %v3527
        %v3529 = vpop.xlane.xlu0 %3528
        %v3530 = vrcp.pop %v3529
        %v3531 = vmul.f32 %v3526, %v3530
        %s3532 = scalar_lea.vmem %s295, 24 [#allocation5]
        %3533 = vst.msk [vmem:[%s3532] sm:$0xff] %vm3173, %v3531
        %v3534 = vpack.c.bf16 %v3531, %v3531
        %3536 = vrot.lane.b32.xlu0 %v3121, 64
        %v3537 = vpop.permute.xlu0 %3536
        %v3539 = vsel %vm3173, %v3534, 0
        %v3542 = vsel %vm3190, %v3537, 0
        %3544 = vmatprep.subr.bf16.mxu0 0
        %3545 = vmatpush1.bf16.msra.mxu0 %v3542
        %3546 = vmatprep.subr.bf16.mxu0 0
        %3547 = vmatpush1.bf16.msra.mxu0 0
        %3548 = vmatprep.subr.bf16.mxu0 0
        %3549 = vmatpush1.bf16.msra.mxu0 0
        %3550 = vmatprep.subr.bf16.mxu0 0
        %3551 = vmatpush1.bf16.msra.mxu0 0
        %3552 = vmatprep.subr.bf16.mxu0 0
        %3553 = vmatpush1.bf16.msra.mxu0 0
        %3554 = vmatprep.subr.bf16.mxu0 0
        %3555 = vmatpush1.bf16.msra.mxu0 0
        %3556 = vmatprep.subr.bf16.mxu0 0
        %3557 = vmatpush1.bf16.msra.mxu0 0
        %3558 = vmatprep.subr.bf16.mxu0 0
        %3559 = vmatpush1.bf16.msra.mxu0 0
        %3560 = vmatprep.subr.bf16.mxu0 0
        %3561 = vmatpush1.bf16.msra.mxu0 0
        %3562 = vmatprep.subr.bf16.mxu0 0
        %3563 = vmatpush1.bf16.msra.mxu0 0
        %3564 = vmatprep.subr.bf16.mxu0 0
        %3565 = vmatpush1.bf16.msra.mxu0 0
        %3566 = vmatprep.subr.bf16.mxu0 0
        %3567 = vmatpush1.bf16.msra.mxu0 0
        %3568 = vmatprep.subr.bf16.mxu0 0
        %3569 = vmatpush1.bf16.msra.mxu0 0
        %3570 = vmatprep.subr.bf16.mxu0 0
        %3571 = vmatpush1.bf16.msra.mxu0 0
        %3572 = vmatprep.subr.bf16.mxu0 0
        %3573 = vmatpush1.bf16.msra.mxu0 0
        %3574 = vmatprep.subr.bf16.mxu0 0
        %3575 = vmatpush1.bf16.msra.mxu0 0
        %3576 = vmatprep.mubr.bf16.mxu0 0
        %3577 = vmatmul.mubr.bf16.gmra.mrb[0].mxu0 %v3539
        %v3578 = vpop.f32.mrb[0].mxu0
        %v3579 = vadd.f32 0.0, %v3578
        %v3580 = vpop.f32.mrb[0].mxu0
        %v3581 = vpop.f32.mrb[0].mxu0
        %v3582 = vpop.f32.mrb[0].mxu0
        %3583 = vdwg.mxu0
        %3585 = vrot.lane.b32.xlu0 %v3579, 64
        %v3586 = vpop.permute.xlu0 %3585
        %3588 = vst.msk [vmem:[#allocation2 + $0x8] sm:$0xff] %vm3356, %v3586
        %v3590 = vsel %vm3124, %v3114, 0
        %v3593 = vsel %vm3124, %v3118, 0
        %3595 = vmatprep.subr.bf16.mxu0 0
        %3596 = vmatpush1.bf16.xpose.msra.mxu0 %v3593
        %3597 = vmatprep.subr.bf16.mxu0 0
        %3598 = vmatpush1.bf16.xpose.msra.mxu0 0
        %3599 = vmatprep.subr.bf16.mxu0 0
        %3600 = vmatpush1.bf16.xpose.msra.mxu0 0
        %3601 = vmatprep.subr.bf16.mxu0 0
        %3602 = vmatpush1.bf16.xpose.msra.mxu0 0
        %3603 = vmatprep.subr.bf16.mxu0 0
        %3604 = vmatpush1.bf16.xpose.msra.mxu0 0
        %3605 = vmatprep.subr.bf16.mxu0 0
        %3606 = vmatpush1.bf16.xpose.msra.mxu0 0
        %3607 = vmatprep.subr.bf16.mxu0 0
        %3608 = vmatpush1.bf16.xpose.msra.mxu0 0
        %3609 = vmatprep.subr.bf16.mxu0 0
        %3610 = vmatpush1.bf16.xpose.msra.mxu0 0
        %3611 = vmatprep.subr.bf16.mxu0 0
        %3612 = vmatpush1.bf16.xpose.msra.mxu0 0
        %3613 = vmatprep.subr.bf16.mxu0 0
        %3614 = vmatpush1.bf16.xpose.msra.mxu0 0
        %3615 = vmatprep.subr.bf16.mxu0 0
        %3616 = vmatpush1.bf16.xpose.msra.mxu0 0
        %3617 = vmatprep.subr.bf16.mxu0 0
        %3618 = vmatpush1.bf16.xpose.msra.mxu0 0
        %3619 = vmatprep.subr.bf16.mxu0 0
        %3620 = vmatpush1.bf16.xpose.msra.mxu0 0
        %3621 = vmatprep.subr.bf16.mxu0 0
        %3622 = vmatpush1.bf16.xpose.msra.mxu0 0
        %3623 = vmatprep.subr.bf16.mxu0 0
        %3624 = vmatpush1.bf16.xpose.msra.mxu0 0
        %3625 = vmatprep.subr.bf16.mxu0 0
        %3626 = vmatpush1.bf16.xpose.msra.mxu0 0
        %3627 = vmatprep.mubr.bf16.mxu0 0
        %3628 = vmatmul.mubr.bf16.gmra.mrb[0].mxu0 %v3590
        %v3629 = vpop.f32.mrb[0].mxu0
        %v3630 = vadd.f32 0.0, %v3629
        %v3631 = vpop.f32.mrb[0].mxu0
        %v3632 = vpop.f32.mrb[0].mxu0
        %v3633 = vpop.f32.mrb[0].mxu0
        %3634 = vdwg.mxu0
        %v3635 = vmul.f32 %v3630, 0.125
        %v3636 = vsel %vm311, -1e+09, %v3635
        %v3637 = vsel %vm3173, %v3636, -inf
        %3638 = vmax.xlane.f32.xlu0 %v3637
        %v3639 = vpop.xlane.xlu0 %3638
        %v3640 = vsub.f32 %v3636, %v3639
        %v3641 = vmul.f32 %v3640, 1.442695
        %v3642 = vpow.pop %v3641
        %v3643 = vsel %vm3173, %v3642, 0.0
        %3644 = vadd.xlane.f32.xlu0 %v3643
        %v3645 = vpop.xlane.xlu0 %3644
        %v3646 = vrcp.pop %v3645
        %v3647 = vmul.f32 %v3642, %v3646
        %s3648 = scalar_lea.vmem %s295, 32 [#allocation5]
        %3649 = vst.msk [vmem:[%s3648] sm:$0xff] %vm3173, %v3647
        %v3650 = vpack.c.bf16 %v3647, %v3647
        %v3652 = vsel %vm3173, %v3650, 0
        %v3655 = vsel %vm3190, %v3122, 0
        %3657 = vmatprep.subr.bf16.mxu0 0
        %3658 = vmatpush1.bf16.msra.mxu0 %v3655
        %3659 = vmatprep.subr.bf16.mxu0 0
        %3660 = vmatpush1.bf16.msra.mxu0 0
        %3661 = vmatprep.subr.bf16.mxu0 0
        %3662 = vmatpush1.bf16.msra.mxu0 0
        %3663 = vmatprep.subr.bf16.mxu0 0
        %3664 = vmatpush1.bf16.msra.mxu0 0
        %3665 = vmatprep.subr.bf16.mxu0 0
        %3666 = vmatpush1.bf16.msra.mxu0 0
        %3667 = vmatprep.subr.bf16.mxu0 0
        %3668 = vmatpush1.bf16.msra.mxu0 0
        %3669 = vmatprep.subr.bf16.mxu0 0
        %3670 = vmatpush1.bf16.msra.mxu0 0
        %3671 = vmatprep.subr.bf16.mxu0 0
        %3672 = vmatpush1.bf16.msra.mxu0 0
        %3673 = vmatprep.subr.bf16.mxu0 0
        %3674 = vmatpush1.bf16.msra.mxu0 0
        %3675 = vmatprep.subr.bf16.mxu0 0
        %3676 = vmatpush1.bf16.msra.mxu0 0
        %3677 = vmatprep.subr.bf16.mxu0 0
        %3678 = vmatpush1.bf16.msra.mxu0 0
        %3679 = vmatprep.subr.bf16.mxu0 0
        %3680 = vmatpush1.bf16.msra.mxu0 0
        %3681 = vmatprep.subr.bf16.mxu0 0
        %3682 = vmatpush1.bf16.msra.mxu0 0
        %3683 = vmatprep.subr.bf16.mxu0 0
        %3684 = vmatpush1.bf16.msra.mxu0 0
        %3685 = vmatprep.subr.bf16.mxu0 0
        %3686 = vmatpush1.bf16.msra.mxu0 0
        %3687 = vmatprep.subr.bf16.mxu0 0
        %3688 = vmatpush1.bf16.msra.mxu0 0
        %3689 = vmatprep.mubr.bf16.mxu0 0
        %3690 = vmatmul.mubr.bf16.gmra.mrb[0].mxu0 %v3652
        %v3691 = vpop.f32.mrb[0].mxu0
        %v3692 = vadd.f32 0.0, %v3691
        %v3693 = vpop.f32.mrb[0].mxu0
        %v3694 = vpop.f32.mrb[0].mxu0
        %v3695 = vpop.f32.mrb[0].mxu0
        %3696 = vdwg.mxu0
        %3697 = vst.msk [vmem:[#allocation2 + $0x10] sm:$0xff] %vm3124, %v3692
        %3699 = vrot.lane.b32.xlu0 %v3114, 64
        %v3700 = vpop.permute.xlu0 %3699
        %3702 = vrot.lane.b32.xlu0 %v3118, 64
        %v3703 = vpop.permute.xlu0 %3702
        %v3705 = vsel %vm3124, %v3700, 0
        %v3708 = vsel %vm3124, %v3703, 0
        %3710 = vmatprep.subr.bf16.mxu0 0
        %3711 = vmatpush1.bf16.xpose.msra.mxu0 %v3708
        %3712 = vmatprep.subr.bf16.mxu0 0
        %3713 = vmatpush1.bf16.xpose.msra.mxu0 0
        %3714 = vmatprep.subr.bf16.mxu0 0
        %3715 = vmatpush1.bf16.xpose.msra.mxu0 0
        %3716 = vmatprep.subr.bf16.mxu0 0
        %3717 = vmatpush1.bf16.xpose.msra.mxu0 0
        %3718 = vmatprep.subr.bf16.mxu0 0
        %3719 = vmatpush1.bf16.xpose.msra.mxu0 0
        %3720 = vmatprep.subr.bf16.mxu0 0
        %3721 = vmatpush1.bf16.xpose.msra.mxu0 0
        %3722 = vmatprep.subr.bf16.mxu0 0
        %3723 = vmatpush1.bf16.xpose.msra.mxu0 0
        %3724 = vmatprep.subr.bf16.mxu0 0
        %3725 = vmatpush1.bf16.xpose.msra.mxu0 0
        %3726 = vmatprep.subr.bf16.mxu0 0
        %3727 = vmatpush1.bf16.xpose.msra.mxu0 0
        %3728 = vmatprep.subr.bf16.mxu0 0
        %3729 = vmatpush1.bf16.xpose.msra.mxu0 0
        %3730 = vmatprep.subr.bf16.mxu0 0
        %3731 = vmatpush1.bf16.xpose.msra.mxu0 0
        %3732 = vmatprep.subr.bf16.mxu0 0
        %3733 = vmatpush1.bf16.xpose.msra.mxu0 0
        %3734 = vmatprep.subr.bf16.mxu0 0
        %3735 = vmatpush1.bf16.xpose.msra.mxu0 0
        %3736 = vmatprep.subr.bf16.mxu0 0
        %3737 = vmatpush1.bf16.xpose.msra.mxu0 0
        %3738 = vmatprep.subr.bf16.mxu0 0
        %3739 = vmatpush1.bf16.xpose.msra.mxu0 0
        %3740 = vmatprep.subr.bf16.mxu0 0
        %3741 = vmatpush1.bf16.xpose.msra.mxu0 0
        %3742 = vmatprep.mubr.bf16.mxu0 0
        %3743 = vmatmul.mubr.bf16.gmra.mrb[0].mxu0 %v3705
        %v3744 = vpop.f32.mrb[0].mxu0
        %v3745 = vadd.f32 0.0, %v3744
        %v3746 = vpop.f32.mrb[0].mxu0
        %v3747 = vpop.f32.mrb[0].mxu0
        %v3748 = vpop.f32.mrb[0].mxu0
        %3749 = vdwg.mxu0
        %v3750 = vmul.f32 %v3745, 0.125
        %v3751 = vsel %vm311, -1e+09, %v3750
        %v3752 = vsel %vm3173, %v3751, -inf
        %3753 = vmax.xlane.f32.xlu0 %v3752
        %v3754 = vpop.xlane.xlu0 %3753
        %v3755 = vsub.f32 %v3751, %v3754
        %v3756 = vmul.f32 %v3755, 1.442695
        %v3757 = vpow.pop %v3756
        %v3758 = vsel %vm3173, %v3757, 0.0
        %3759 = vadd.xlane.f32.xlu0 %v3758
        %v3760 = vpop.xlane.xlu0 %3759
        %v3761 = vrcp.pop %v3760
        %v3762 = vmul.f32 %v3757, %v3761
        %s3763 = scalar_lea.vmem %s295, 40 [#allocation5]
        %3764 = vst.msk [vmem:[%s3763] sm:$0xff] %vm3173, %v3762
        %v3765 = vpack.c.bf16 %v3762, %v3762
        %3767 = vrot.lane.b32.xlu0 %v3122, 64
        %v3768 = vpop.permute.xlu0 %3767
        %v3770 = vsel %vm3173, %v3765, 0
        %v3773 = vsel %vm3190, %v3768, 0
        %3775 = vmatprep.subr.bf16.mxu0 0
        %3776 = vmatpush1.bf16.msra.mxu0 %v3773
        %3777 = vmatprep.subr.bf16.mxu0 0
        %3778 = vmatpush1.bf16.msra.mxu0 0
        %3779 = vmatprep.subr.bf16.mxu0 0
        %3780 = vmatpush1.bf16.msra.mxu0 0
        %3781 = vmatprep.subr.bf16.mxu0 0
        %3782 = vmatpush1.bf16.msra.mxu0 0
        %3783 = vmatprep.subr.bf16.mxu0 0
        %3784 = vmatpush1.bf16.msra.mxu0 0
        %3785 = vmatprep.subr.bf16.mxu0 0
        %3786 = vmatpush1.bf16.msra.mxu0 0
        %3787 = vmatprep.subr.bf16.mxu0 0
        %3788 = vmatpush1.bf16.msra.mxu0 0
        %3789 = vmatprep.subr.bf16.mxu0 0
        %3790 = vmatpush1.bf16.msra.mxu0 0
        %3791 = vmatprep.subr.bf16.mxu0 0
        %3792 = vmatpush1.bf16.msra.mxu0 0
        %3793 = vmatprep.subr.bf16.mxu0 0
        %3794 = vmatpush1.bf16.msra.mxu0 0
        %3795 = vmatprep.subr.bf16.mxu0 0
        %3796 = vmatpush1.bf16.msra.mxu0 0
        %3797 = vmatprep.subr.bf16.mxu0 0
        %3798 = vmatpush1.bf16.msra.mxu0 0
        %3799 = vmatprep.subr.bf16.mxu0 0
        %3800 = vmatpush1.bf16.msra.mxu0 0
        %3801 = vmatprep.subr.bf16.mxu0 0
        %3802 = vmatpush1.bf16.msra.mxu0 0
        %3803 = vmatprep.subr.bf16.mxu0 0
        %3804 = vmatpush1.bf16.msra.mxu0 0
        %3805 = vmatprep.subr.bf16.mxu0 0
        %3806 = vmatpush1.bf16.msra.mxu0 0
        %3807 = vmatprep.mubr.bf16.mxu0 0
        %3808 = vmatmul.mubr.bf16.gmra.mrb[0].mxu0 %v3770
        %v3809 = vpop.f32.mrb[0].mxu0
        %v3810 = vadd.f32 0.0, %v3809
        %v3811 = vpop.f32.mrb[0].mxu0
        %v3812 = vpop.f32.mrb[0].mxu0
        %v3813 = vpop.f32.mrb[0].mxu0
        %3814 = vdwg.mxu0
        %3816 = vrot.lane.b32.xlu0 %v3810, 64
        %v3817 = vpop.permute.xlu0 %3816
        %3819 = vst.msk [vmem:[#allocation2 + $0x10] sm:$0xff] %vm3356, %v3817
        %v3821 = vsel %vm3124, %v3115, 0
        %v3824 = vsel %vm3124, %v3119, 0
        %3826 = vmatprep.subr.bf16.mxu0 0
        %3827 = vmatpush1.bf16.xpose.msra.mxu0 %v3824
        %3828 = vmatprep.subr.bf16.mxu0 0
        %3829 = vmatpush1.bf16.xpose.msra.mxu0 0
        %3830 = vmatprep.subr.bf16.mxu0 0
        %3831 = vmatpush1.bf16.xpose.msra.mxu0 0
        %3832 = vmatprep.subr.bf16.mxu0 0
        %3833 = vmatpush1.bf16.xpose.msra.mxu0 0
        %3834 = vmatprep.subr.bf16.mxu0 0
        %3835 = vmatpush1.bf16.xpose.msra.mxu0 0
        %3836 = vmatprep.subr.bf16.mxu0 0
        %3837 = vmatpush1.bf16.xpose.msra.mxu0 0
        %3838 = vmatprep.subr.bf16.mxu0 0
        %3839 = vmatpush1.bf16.xpose.msra.mxu0 0
        %3840 = vmatprep.subr.bf16.mxu0 0
        %3841 = vmatpush1.bf16.xpose.msra.mxu0 0
        %3842 = vmatprep.subr.bf16.mxu0 0
        %3843 = vmatpush1.bf16.xpose.msra.mxu0 0
        %3844 = vmatprep.subr.bf16.mxu0 0
        %3845 = vmatpush1.bf16.xpose.msra.mxu0 0
        %3846 = vmatprep.subr.bf16.mxu0 0
        %3847 = vmatpush1.bf16.xpose.msra.mxu0 0
        %3848 = vmatprep.subr.bf16.mxu0 0
        %3849 = vmatpush1.bf16.xpose.msra.mxu0 0
        %3850 = vmatprep.subr.bf16.mxu0 0
        %3851 = vmatpush1.bf16.xpose.msra.mxu0 0
        %3852 = vmatprep.subr.bf16.mxu0 0
        %3853 = vmatpush1.bf16.xpose.msra.mxu0 0
        %3854 = vmatprep.subr.bf16.mxu0 0
        %3855 = vmatpush1.bf16.xpose.msra.mxu0 0
        %3856 = vmatprep.subr.bf16.mxu0 0
        %3857 = vmatpush1.bf16.xpose.msra.mxu0 0
        %3858 = vmatprep.mubr.bf16.mxu0 0
        %3859 = vmatmul.mubr.bf16.gmra.mrb[0].mxu0 %v3821
        %v3860 = vpop.f32.mrb[0].mxu0
        %v3861 = vadd.f32 0.0, %v3860
        %v3862 = vpop.f32.mrb[0].mxu0
        %v3863 = vpop.f32.mrb[0].mxu0
        %v3864 = vpop.f32.mrb[0].mxu0
        %3865 = vdwg.mxu0
        %v3866 = vmul.f32 %v3861, 0.125
        %v3867 = vsel %vm311, -1e+09, %v3866
        %v3868 = vsel %vm3173, %v3867, -inf
        %3869 = vmax.xlane.f32.xlu0 %v3868
        %v3870 = vpop.xlane.xlu0 %3869
        %v3871 = vsub.f32 %v3867, %v3870
        %v3872 = vmul.f32 %v3871, 1.442695
        %v3873 = vpow.pop %v3872
        %v3874 = vsel %vm3173, %v3873, 0.0
        %3875 = vadd.xlane.f32.xlu0 %v3874
        %v3876 = vpop.xlane.xlu0 %3875
        %v3877 = vrcp.pop %v3876
        %v3878 = vmul.f32 %v3873, %v3877
        %s3879 = scalar_lea.vmem %s295, 48 [#allocation5]
        %3880 = vst.msk [vmem:[%s3879] sm:$0xff] %vm3173, %v3878
        %v3881 = vpack.c.bf16 %v3878, %v3878
        %v3883 = vsel %vm3173, %v3881, 0
        %v3886 = vsel %vm3190, %v3123, 0
        %3888 = vmatprep.subr.bf16.mxu0 0
        %3889 = vmatpush1.bf16.msra.mxu0 %v3886
        %3890 = vmatprep.subr.bf16.mxu0 0
        %3891 = vmatpush1.bf16.msra.mxu0 0
        %3892 = vmatprep.subr.bf16.mxu0 0
        %3893 = vmatpush1.bf16.msra.mxu0 0
        %3894 = vmatprep.subr.bf16.mxu0 0
        %3895 = vmatpush1.bf16.msra.mxu0 0
        %3896 = vmatprep.subr.bf16.mxu0 0
        %3897 = vmatpush1.bf16.msra.mxu0 0
        %3898 = vmatprep.subr.bf16.mxu0 0
        %3899 = vmatpush1.bf16.msra.mxu0 0
        %3900 = vmatprep.subr.bf16.mxu0 0
        %3901 = vmatpush1.bf16.msra.mxu0 0
        %3902 = vmatprep.subr.bf16.mxu0 0
        %3903 = vmatpush1.bf16.msra.mxu0 0
        %3904 = vmatprep.subr.bf16.mxu0 0
        %3905 = vmatpush1.bf16.msra.mxu0 0
        %3906 = vmatprep.subr.bf16.mxu0 0
        %3907 = vmatpush1.bf16.msra.mxu0 0
        %3908 = vmatprep.subr.bf16.mxu0 0
        %3909 = vmatpush1.bf16.msra.mxu0 0
        %3910 = vmatprep.subr.bf16.mxu0 0
        %3911 = vmatpush1.bf16.msra.mxu0 0
        %3912 = vmatprep.subr.bf16.mxu0 0
        %3913 = vmatpush1.bf16.msra.mxu0 0
        %3914 = vmatprep.subr.bf16.mxu0 0
        %3915 = vmatpush1.bf16.msra.mxu0 0
        %3916 = vmatprep.subr.bf16.mxu0 0
        %3917 = vmatpush1.bf16.msra.mxu0 0
        %3918 = vmatprep.subr.bf16.mxu0 0
        %3919 = vmatpush1.bf16.msra.mxu0 0
        %3920 = vmatprep.mubr.bf16.mxu0 0
        %3921 = vmatmul.mubr.bf16.gmra.mrb[0].mxu0 %v3883
        %v3922 = vpop.f32.mrb[0].mxu0
        %v3923 = vadd.f32 0.0, %v3922
        %v3924 = vpop.f32.mrb[0].mxu0
        %v3925 = vpop.f32.mrb[0].mxu0
        %v3926 = vpop.f32.mrb[0].mxu0
        %3927 = vdwg.mxu0
        %3928 = vst.msk [vmem:[#allocation2 + $0x18] sm:$0xff] %vm3124, %v3923
        %3930 = vrot.lane.b32.xlu0 %v3115, 64
        %v3931 = vpop.permute.xlu0 %3930
        %3933 = vrot.lane.b32.xlu0 %v3119, 64
        %v3934 = vpop.permute.xlu0 %3933
        %v3936 = vsel %vm3124, %v3931, 0
        %v3939 = vsel %vm3124, %v3934, 0
        %3941 = vmatprep.subr.bf16.mxu0 0
        %3942 = vmatpush1.bf16.xpose.msra.mxu0 %v3939
        %3943 = vmatprep.subr.bf16.mxu0 0
        %3944 = vmatpush1.bf16.xpose.msra.mxu0 0
        %3945 = vmatprep.subr.bf16.mxu0 0
        %3946 = vmatpush1.bf16.xpose.msra.mxu0 0
        %3947 = vmatprep.subr.bf16.mxu0 0
        %3948 = vmatpush1.bf16.xpose.msra.mxu0 0
        %3949 = vmatprep.subr.bf16.mxu0 0
        %3950 = vmatpush1.bf16.xpose.msra.mxu0 0
        %3951 = vmatprep.subr.bf16.mxu0 0
        %3952 = vmatpush1.bf16.xpose.msra.mxu0 0
        %3953 = vmatprep.subr.bf16.mxu0 0
        %3954 = vmatpush1.bf16.xpose.msra.mxu0 0
        %3955 = vmatprep.subr.bf16.mxu0 0
        %3956 = vmatpush1.bf16.xpose.msra.mxu0 0
        %3957 = vmatprep.subr.bf16.mxu0 0
        %3958 = vmatpush1.bf16.xpose.msra.mxu0 0
        %3959 = vmatprep.subr.bf16.mxu0 0
        %3960 = vmatpush1.bf16.xpose.msra.mxu0 0
        %3961 = vmatprep.subr.bf16.mxu0 0
        %3962 = vmatpush1.bf16.xpose.msra.mxu0 0
        %3963 = vmatprep.subr.bf16.mxu0 0
        %3964 = vmatpush1.bf16.xpose.msra.mxu0 0
        %3965 = vmatprep.subr.bf16.mxu0 0
        %3966 = vmatpush1.bf16.xpose.msra.mxu0 0
        %3967 = vmatprep.subr.bf16.mxu0 0
        %3968 = vmatpush1.bf16.xpose.msra.mxu0 0
        %3969 = vmatprep.subr.bf16.mxu0 0
        %3970 = vmatpush1.bf16.xpose.msra.mxu0 0
        %3971 = vmatprep.subr.bf16.mxu0 0
        %3972 = vmatpush1.bf16.xpose.msra.mxu0 0
        %3973 = vmatprep.mubr.bf16.mxu0 0
        %3974 = vmatmul.mubr.bf16.gmra.mrb[0].mxu0 %v3936
        %v3975 = vpop.f32.mrb[0].mxu0
        %v3976 = vadd.f32 0.0, %v3975
        %v3977 = vpop.f32.mrb[0].mxu0
        %v3978 = vpop.f32.mrb[0].mxu0
        %v3979 = vpop.f32.mrb[0].mxu0
        %3980 = vdwg.mxu0
        %v3981 = vmul.f32 %v3976, 0.125
        %v3982 = vsel %vm311, -1e+09, %v3981
        %v3983 = vsel %vm3173, %v3982, -inf
        %3984 = vmax.xlane.f32.xlu0 %v3983
        %v3985 = vpop.xlane.xlu0 %3984
        %v3986 = vsub.f32 %v3982, %v3985
        %v3987 = vmul.f32 %v3986, 1.442695
        %v3988 = vpow.pop %v3987
        %v3989 = vsel %vm3173, %v3988, 0.0
        %3990 = vadd.xlane.f32.xlu0 %v3989
        %v3991 = vpop.xlane.xlu0 %3990
        %v3992 = vrcp.pop %v3991
        %v3993 = vmul.f32 %v3988, %v3992
        %s3994 = scalar_lea.vmem %s295, 56 [#allocation5]
        %3995 = vst.msk [vmem:[%s3994] sm:$0xff] %vm3173, %v3993
        %v3996 = vpack.c.bf16 %v3993, %v3993
        %3998 = vrot.lane.b32.xlu0 %v3123, 64
        %v3999 = vpop.permute.xlu0 %3998
        %v4001 = vsel %vm3173, %v3996, 0
        %v4004 = vsel %vm3190, %v3999, 0
        %4006 = vmatprep.subr.bf16.mxu0 0
        %4007 = vmatpush1.bf16.msra.mxu0 %v4004
        %4008 = vmatprep.subr.bf16.mxu0 0
        %4009 = vmatpush1.bf16.msra.mxu0 0
        %4010 = vmatprep.subr.bf16.mxu0 0
        %4011 = vmatpush1.bf16.msra.mxu0 0
        %4012 = vmatprep.subr.bf16.mxu0 0
        %4013 = vmatpush1.bf16.msra.mxu0 0
        %4014 = vmatprep.subr.bf16.mxu0 0
        %4015 = vmatpush1.bf16.msra.mxu0 0
        %4016 = vmatprep.subr.bf16.mxu0 0
        %4017 = vmatpush1.bf16.msra.mxu0 0
        %4018 = vmatprep.subr.bf16.mxu0 0
        %4019 = vmatpush1.bf16.msra.mxu0 0
        %4020 = vmatprep.subr.bf16.mxu0 0
        %4021 = vmatpush1.bf16.msra.mxu0 0
        %4022 = vmatprep.subr.bf16.mxu0 0
        %4023 = vmatpush1.bf16.msra.mxu0 0
        %4024 = vmatprep.subr.bf16.mxu0 0
        %4025 = vmatpush1.bf16.msra.mxu0 0
        %4026 = vmatprep.subr.bf16.mxu0 0
        %4027 = vmatpush1.bf16.msra.mxu0 0
        %4028 = vmatprep.subr.bf16.mxu0 0
        %4029 = vmatpush1.bf16.msra.mxu0 0
        %4030 = vmatprep.subr.bf16.mxu0 0
        %4031 = vmatpush1.bf16.msra.mxu0 0
        %4032 = vmatprep.subr.bf16.mxu0 0
        %4033 = vmatpush1.bf16.msra.mxu0 0
        %4034 = vmatprep.subr.bf16.mxu0 0
        %4035 = vmatpush1.bf16.msra.mxu0 0
        %4036 = vmatprep.subr.bf16.mxu0 0
        %4037 = vmatpush1.bf16.msra.mxu0 0
        %4038 = vmatprep.mubr.bf16.mxu0 0
        %4039 = vmatmul.mubr.bf16.gmra.mrb[0].mxu0 %v4001
        %v4040 = vpop.f32.mrb[0].mxu0
        %v4041 = vadd.f32 0.0, %v4040
        %v4042 = vpop.f32.mrb[0].mxu0
        %v4043 = vpop.f32.mrb[0].mxu0
        %v4044 = vpop.f32.mrb[0].mxu0
        %4045 = vdwg.mxu0
        %4047 = vrot.lane.b32.xlu0 %v4041, 64
        %v4048 = vpop.permute.xlu0 %4047
        %4050 = vst.msk [vmem:[#allocation2 + $0x18] sm:$0xff] %vm3356, %v4048
        %v4051 = vld [vmem:[#allocation2] sm:$0xff]
        %v4052 = vld [vmem:[#allocation2 + $0x8] sm:$0xff]
        %v4053 = vld [vmem:[#allocation2 + $0x10] sm:$0xff]
        %v4054 = vld [vmem:[#allocation2 + $0x18] sm:$0xff]
        %v4055 = vpack.c.bf16 %v4051, %v4051
        %v4056 = vpack.c.bf16 %v4052, %v4052
        %v4057 = vpack.c.bf16 %v4053, %v4053
        %v4058 = vpack.c.bf16 %v4054, %v4054
        %v4059 = vld [vmem:[%s3] sm:$0xff]
        %v4060 = vld [vmem:[%s3 + $0x8] sm:$0xff]
        %v4061 = vld [vmem:[%s3 + $0x10] sm:$0xff]
        %v4062 = vld [vmem:[%s3 + $0x18] sm:$0xff]
        %v4063 = vld [vmem:[%s3 + $0x20] sm:$0xff]
        %v4064 = vld [vmem:[%s3 + $0x28] sm:$0xff]
        %v4065 = vld [vmem:[%s3 + $0x30] sm:$0xff]
        %v4066 = vld [vmem:[%s3 + $0x38] sm:$0xff]
        %v4067 = vld [vmem:[%s3 + $0x40] sm:$0xff]
        %v4068 = vld [vmem:[%s3 + $0x48] sm:$0xff]
        %v4069 = vld [vmem:[%s3 + $0x50] sm:$0xff]
        %v4070 = vld [vmem:[%s3 + $0x58] sm:$0xff]
        %v4071 = vld [vmem:[%s3 + $0x60] sm:$0xff]
        %v4072 = vld [vmem:[%s3 + $0x68] sm:$0xff]
        %v4073 = vld [vmem:[%s3 + $0x70] sm:$0xff]
        %v4074 = vld [vmem:[%s3 + $0x78] sm:$0xff]
        %v4075 = vld [vmem:[%s3 + $0x80] sm:$0xff]
        %v4076 = vld [vmem:[%s3 + $0x88] sm:$0xff]
        %v4077 = vld [vmem:[%s3 + $0x90] sm:$0xff]
        %v4078 = vld [vmem:[%s3 + $0x98] sm:$0xff]
        %v4079 = vld [vmem:[%s3 + $0xa0] sm:$0xff]
        %v4080 = vld [vmem:[%s3 + $0xa8] sm:$0xff]
        %v4081 = vld [vmem:[%s3 + $0xb0] sm:$0xff]
        %v4082 = vld [vmem:[%s3 + $0xb8] sm:$0xff]
        %v4083 = vld [vmem:[%s3 + $0xc0] sm:$0xff]
        %v4084 = vld [vmem:[%s3 + $0xc8] sm:$0xff]
        %v4085 = vld [vmem:[%s3 + $0xd0] sm:$0xff]
        %v4086 = vld [vmem:[%s3 + $0xd8] sm:$0xff]
        %v4087 = vld [vmem:[%s3 + $0xe0] sm:$0xff]
        %v4088 = vld [vmem:[%s3 + $0xe8] sm:$0xff]
        %v4089 = vld [vmem:[%s3 + $0xf0] sm:$0xff]
        %v4090 = vld [vmem:[%s3 + $0xf8] sm:$0xff]
        %v4091 = vld [vmem:[%s3 + $0x100] sm:$0xff]
        %v4092 = vld [vmem:[%s3 + $0x108] sm:$0xff]
        %v4093 = vld [vmem:[%s3 + $0x110] sm:$0xff]
        %v4094 = vld [vmem:[%s3 + $0x118] sm:$0xff]
        %v4095 = vld [vmem:[%s3 + $0x120] sm:$0xff]
        %v4096 = vld [vmem:[%s3 + $0x128] sm:$0xff]
        %v4097 = vld [vmem:[%s3 + $0x130] sm:$0xff]
        %v4098 = vld [vmem:[%s3 + $0x138] sm:$0xff]
        %v4099 = vld [vmem:[%s3 + $0x140] sm:$0xff]
        %v4100 = vld [vmem:[%s3 + $0x148] sm:$0xff]
        %v4101 = vld [vmem:[%s3 + $0x150] sm:$0xff]
        %v4102 = vld [vmem:[%s3 + $0x158] sm:$0xff]
        %v4103 = vld [vmem:[%s3 + $0x160] sm:$0xff]
        %v4104 = vld [vmem:[%s3 + $0x168] sm:$0xff]
        %v4105 = vld [vmem:[%s3 + $0x170] sm:$0xff]
        %v4106 = vld [vmem:[%s3 + $0x178] sm:$0xff]
        %v4107 = vld [vmem:[%s3 + $0x180] sm:$0xff]
        %v4108 = vld [vmem:[%s3 + $0x188] sm:$0xff]
        %v4109 = vld [vmem:[%s3 + $0x190] sm:$0xff]
        %v4110 = vld [vmem:[%s3 + $0x198] sm:$0xff]
        %v4111 = vld [vmem:[%s3 + $0x1a0] sm:$0xff]
        %v4112 = vld [vmem:[%s3 + $0x1a8] sm:$0xff]
        %v4113 = vld [vmem:[%s3 + $0x1b0] sm:$0xff]
        %v4114 = vld [vmem:[%s3 + $0x1b8] sm:$0xff]
        %v4115 = vld [vmem:[%s3 + $0x1c0] sm:$0xff]
        %v4116 = vld [vmem:[%s3 + $0x1c8] sm:$0xff]
        %v4117 = vld [vmem:[%s3 + $0x1d0] sm:$0xff]
        %v4118 = vld [vmem:[%s3 + $0x1d8] sm:$0xff]
        %v4119 = vld [vmem:[%s3 + $0x1e0] sm:$0xff]
        %v4120 = vld [vmem:[%s3 + $0x1e8] sm:$0xff]
        %v4121 = vld [vmem:[%s3 + $0x1f0] sm:$0xff]
        %v4122 = vld [vmem:[%s3 + $0x1f8] sm:$0xff]
        %v4123 = vld [vmem:[%s3 + $0x200] sm:$0xff]
        %v4124 = vld [vmem:[%s3 + $0x208] sm:$0xff]
        %v4125 = vld [vmem:[%s3 + $0x210] sm:$0xff]
        %v4126 = vld [vmem:[%s3 + $0x218] sm:$0xff]
        %v4127 = vld [vmem:[%s3 + $0x220] sm:$0xff]
        %v4128 = vld [vmem:[%s3 + $0x228] sm:$0xff]
        %v4129 = vld [vmem:[%s3 + $0x230] sm:$0xff]
        %v4130 = vld [vmem:[%s3 + $0x238] sm:$0xff]
        %v4131 = vld [vmem:[%s3 + $0x240] sm:$0xff]
        %v4132 = vld [vmem:[%s3 + $0x248] sm:$0xff]
        %v4133 = vld [vmem:[%s3 + $0x250] sm:$0xff]
        %v4134 = vld [vmem:[%s3 + $0x258] sm:$0xff]
        %v4135 = vld [vmem:[%s3 + $0x260] sm:$0xff]
        %v4136 = vld [vmem:[%s3 + $0x268] sm:$0xff]
        %v4137 = vld [vmem:[%s3 + $0x270] sm:$0xff]
        %v4138 = vld [vmem:[%s3 + $0x278] sm:$0xff]
        %v4139 = vld [vmem:[%s3 + $0x280] sm:$0xff]
        %v4140 = vld [vmem:[%s3 + $0x288] sm:$0xff]
        %v4141 = vld [vmem:[%s3 + $0x290] sm:$0xff]
        %v4142 = vld [vmem:[%s3 + $0x298] sm:$0xff]
        %v4143 = vld [vmem:[%s3 + $0x2a0] sm:$0xff]
        %v4144 = vld [vmem:[%s3 + $0x2a8] sm:$0xff]
        %v4145 = vld [vmem:[%s3 + $0x2b0] sm:$0xff]
        %v4146 = vld [vmem:[%s3 + $0x2b8] sm:$0xff]
        %v4147 = vld [vmem:[%s3 + $0x2c0] sm:$0xff]
        %v4148 = vld [vmem:[%s3 + $0x2c8] sm:$0xff]
        %v4149 = vld [vmem:[%s3 + $0x2d0] sm:$0xff]
        %v4150 = vld [vmem:[%s3 + $0x2d8] sm:$0xff]
        %v4151 = vld [vmem:[%s3 + $0x2e0] sm:$0xff]
        %v4152 = vld [vmem:[%s3 + $0x2e8] sm:$0xff]
        %v4153 = vld [vmem:[%s3 + $0x2f0] sm:$0xff]
        %v4154 = vld [vmem:[%s3 + $0x2f8] sm:$0xff]
        %v4155 = vld [vmem:[%s3 + $0x300] sm:$0xff]
        %v4156 = vld [vmem:[%s3 + $0x308] sm:$0xff]
        %v4157 = vld [vmem:[%s3 + $0x310] sm:$0xff]
        %v4158 = vld [vmem:[%s3 + $0x318] sm:$0xff]
        %v4159 = vld [vmem:[%s3 + $0x320] sm:$0xff]
        %v4160 = vld [vmem:[%s3 + $0x328] sm:$0xff]
        %v4161 = vld [vmem:[%s3 + $0x330] sm:$0xff]
        %v4162 = vld [vmem:[%s3 + $0x338] sm:$0xff]
        %v4163 = vld [vmem:[%s3 + $0x340] sm:$0xff]
        %v4164 = vld [vmem:[%s3 + $0x348] sm:$0xff]
        %v4165 = vld [vmem:[%s3 + $0x350] sm:$0xff]
        %v4166 = vld [vmem:[%s3 + $0x358] sm:$0xff]
        %v4167 = vld [vmem:[%s3 + $0x360] sm:$0xff]
        %v4168 = vld [vmem:[%s3 + $0x368] sm:$0xff]
        %v4169 = vld [vmem:[%s3 + $0x370] sm:$0xff]
        %v4170 = vld [vmem:[%s3 + $0x378] sm:$0xff]
        %v4171 = vld [vmem:[%s3 + $0x380] sm:$0xff]
        %v4172 = vld [vmem:[%s3 + $0x388] sm:$0xff]
        %v4173 = vld [vmem:[%s3 + $0x390] sm:$0xff]
        %v4174 = vld [vmem:[%s3 + $0x398] sm:$0xff]
        %v4175 = vld [vmem:[%s3 + $0x3a0] sm:$0xff]
        %v4176 = vld [vmem:[%s3 + $0x3a8] sm:$0xff]
        %v4177 = vld [vmem:[%s3 + $0x3b0] sm:$0xff]
        %v4178 = vld [vmem:[%s3 + $0x3b8] sm:$0xff]
        %v4179 = vld [vmem:[%s3 + $0x3c0] sm:$0xff]
        %v4180 = vld [vmem:[%s3 + $0x3c8] sm:$0xff]
        %v4181 = vld [vmem:[%s3 + $0x3d0] sm:$0xff]
        %v4182 = vld [vmem:[%s3 + $0x3d8] sm:$0xff]
        %v4183 = vld [vmem:[%s3 + $0x3e0] sm:$0xff]
        %v4184 = vld [vmem:[%s3 + $0x3e8] sm:$0xff]
        %v4185 = vld [vmem:[%s3 + $0x3f0] sm:$0xff]
        %v4186 = vld [vmem:[%s3 + $0x3f8] sm:$0xff]
        %v4315 = vunpack.c.l.b16 %v4059
        %v4316 = vunpack.c.h.b16 %v4059
        %v4317 = vunpack.c.l.b16 %v4060
        %v4318 = vunpack.c.h.b16 %v4060
        %v4319 = vunpack.c.l.b16 %v4061
        %v4320 = vunpack.c.h.b16 %v4061
        %v4321 = vunpack.c.l.b16 %v4062
        %v4322 = vunpack.c.h.b16 %v4062
        %v4323 = vunpack.c.l.b16 %v4063
        %v4324 = vunpack.c.h.b16 %v4063
        %v4325 = vunpack.c.l.b16 %v4064
        %v4326 = vunpack.c.h.b16 %v4064
        %v4327 = vunpack.c.l.b16 %v4065
        %v4328 = vunpack.c.h.b16 %v4065
        %v4329 = vunpack.c.l.b16 %v4066
        %v4330 = vunpack.c.h.b16 %v4066
        %v4331 = vunpack.c.l.b16 %v4067
        %v4332 = vunpack.c.h.b16 %v4067
        %v4333 = vunpack.c.l.b16 %v4068
        %v4334 = vunpack.c.h.b16 %v4068
        %v4335 = vunpack.c.l.b16 %v4069
        %v4336 = vunpack.c.h.b16 %v4069
        %v4337 = vunpack.c.l.b16 %v4070
        %v4338 = vunpack.c.h.b16 %v4070
        %v4339 = vunpack.c.l.b16 %v4071
        %v4340 = vunpack.c.h.b16 %v4071
        %v4341 = vunpack.c.l.b16 %v4072
        %v4342 = vunpack.c.h.b16 %v4072
        %v4343 = vunpack.c.l.b16 %v4073
        %v4344 = vunpack.c.h.b16 %v4073
        %v4345 = vunpack.c.l.b16 %v4074
        %v4346 = vunpack.c.h.b16 %v4074
        %v4347 = vunpack.c.l.b16 %v4075
        %v4348 = vunpack.c.h.b16 %v4075
        %v4349 = vunpack.c.l.b16 %v4076
        %v4350 = vunpack.c.h.b16 %v4076
        %v4351 = vunpack.c.l.b16 %v4077
        %v4352 = vunpack.c.h.b16 %v4077
        %v4353 = vunpack.c.l.b16 %v4078
        %v4354 = vunpack.c.h.b16 %v4078
        %v4355 = vunpack.c.l.b16 %v4079
        %v4356 = vunpack.c.h.b16 %v4079
        %v4357 = vunpack.c.l.b16 %v4080
        %v4358 = vunpack.c.h.b16 %v4080
        %v4359 = vunpack.c.l.b16 %v4081
        %v4360 = vunpack.c.h.b16 %v4081
        %v4361 = vunpack.c.l.b16 %v4082
        %v4362 = vunpack.c.h.b16 %v4082
        %v4363 = vunpack.c.l.b16 %v4083
        %v4364 = vunpack.c.h.b16 %v4083
        %v4365 = vunpack.c.l.b16 %v4084
        %v4366 = vunpack.c.h.b16 %v4084
        %v4367 = vunpack.c.l.b16 %v4085
        %v4368 = vunpack.c.h.b16 %v4085
        %v4369 = vunpack.c.l.b16 %v4086
        %v4370 = vunpack.c.h.b16 %v4086
        %v4371 = vunpack.c.l.b16 %v4087
        %v4372 = vunpack.c.h.b16 %v4087
        %v4373 = vunpack.c.l.b16 %v4088
        %v4374 = vunpack.c.h.b16 %v4088
        %v4375 = vunpack.c.l.b16 %v4089
        %v4376 = vunpack.c.h.b16 %v4089
        %v4377 = vunpack.c.l.b16 %v4090
        %v4378 = vunpack.c.h.b16 %v4090
        %v4379 = vunpack.c.l.b16 %v4091
        %v4380 = vunpack.c.h.b16 %v4091
        %v4381 = vunpack.c.l.b16 %v4092
        %v4382 = vunpack.c.h.b16 %v4092
        %v4383 = vunpack.c.l.b16 %v4093
        %v4384 = vunpack.c.h.b16 %v4093
        %v4385 = vunpack.c.l.b16 %v4094
        %v4386 = vunpack.c.h.b16 %v4094
        %v4387 = vunpack.c.l.b16 %v4095
        %v4388 = vunpack.c.h.b16 %v4095
        %v4389 = vunpack.c.l.b16 %v4096
        %v4390 = vunpack.c.h.b16 %v4096
        %v4391 = vunpack.c.l.b16 %v4097
        %v4392 = vunpack.c.h.b16 %v4097
        %v4393 = vunpack.c.l.b16 %v4098
        %v4394 = vunpack.c.h.b16 %v4098
        %v4395 = vunpack.c.l.b16 %v4099
        %v4396 = vunpack.c.h.b16 %v4099
        %v4397 = vunpack.c.l.b16 %v4100
        %v4398 = vunpack.c.h.b16 %v4100
        %v4399 = vunpack.c.l.b16 %v4101
        %v4400 = vunpack.c.h.b16 %v4101
        %v4401 = vunpack.c.l.b16 %v4102
        %v4402 = vunpack.c.h.b16 %v4102
        %v4403 = vunpack.c.l.b16 %v4103
        %v4404 = vunpack.c.h.b16 %v4103
        %v4405 = vunpack.c.l.b16 %v4104
        %v4406 = vunpack.c.h.b16 %v4104
        %v4407 = vunpack.c.l.b16 %v4105
        %v4408 = vunpack.c.h.b16 %v4105
        %v4409 = vunpack.c.l.b16 %v4106
        %v4410 = vunpack.c.h.b16 %v4106
        %v4411 = vunpack.c.l.b16 %v4107
        %v4412 = vunpack.c.h.b16 %v4107
        %v4413 = vunpack.c.l.b16 %v4108
        %v4414 = vunpack.c.h.b16 %v4108
        %v4415 = vunpack.c.l.b16 %v4109
        %v4416 = vunpack.c.h.b16 %v4109
        %v4417 = vunpack.c.l.b16 %v4110
        %v4418 = vunpack.c.h.b16 %v4110
        %v4419 = vunpack.c.l.b16 %v4111
        %v4420 = vunpack.c.h.b16 %v4111
        %v4421 = vunpack.c.l.b16 %v4112
        %v4422 = vunpack.c.h.b16 %v4112
        %v4423 = vunpack.c.l.b16 %v4113
        %v4424 = vunpack.c.h.b16 %v4113
        %v4425 = vunpack.c.l.b16 %v4114
        %v4426 = vunpack.c.h.b16 %v4114
        %v4427 = vunpack.c.l.b16 %v4115
        %v4428 = vunpack.c.h.b16 %v4115
        %v4429 = vunpack.c.l.b16 %v4116
        %v4430 = vunpack.c.h.b16 %v4116
        %v4431 = vunpack.c.l.b16 %v4117
        %v4432 = vunpack.c.h.b16 %v4117
        %v4433 = vunpack.c.l.b16 %v4118
        %v4434 = vunpack.c.h.b16 %v4118
        %v4435 = vunpack.c.l.b16 %v4119
        %v4436 = vunpack.c.h.b16 %v4119
        %v4437 = vunpack.c.l.b16 %v4120
        %v4438 = vunpack.c.h.b16 %v4120
        %v4439 = vunpack.c.l.b16 %v4121
        %v4440 = vunpack.c.h.b16 %v4121
        %v4441 = vunpack.c.l.b16 %v4122
        %v4442 = vunpack.c.h.b16 %v4122
        %v4443 = vunpack.c.l.b16 %v4123
        %v4444 = vunpack.c.h.b16 %v4123
        %v4445 = vunpack.c.l.b16 %v4124
        %v4446 = vunpack.c.h.b16 %v4124
        %v4447 = vunpack.c.l.b16 %v4125
        %v4448 = vunpack.c.h.b16 %v4125
        %v4449 = vunpack.c.l.b16 %v4126
        %v4450 = vunpack.c.h.b16 %v4126
        %v4451 = vunpack.c.l.b16 %v4127
        %v4452 = vunpack.c.h.b16 %v4127
        %v4453 = vunpack.c.l.b16 %v4128
        %v4454 = vunpack.c.h.b16 %v4128
        %v4455 = vunpack.c.l.b16 %v4129
        %v4456 = vunpack.c.h.b16 %v4129
        %v4457 = vunpack.c.l.b16 %v4130
        %v4458 = vunpack.c.h.b16 %v4130
        %v4459 = vunpack.c.l.b16 %v4131
        %v4460 = vunpack.c.h.b16 %v4131
        %v4461 = vunpack.c.l.b16 %v4132
        %v4462 = vunpack.c.h.b16 %v4132
        %v4463 = vunpack.c.l.b16 %v4133
        %v4464 = vunpack.c.h.b16 %v4133
        %v4465 = vunpack.c.l.b16 %v4134
        %v4466 = vunpack.c.h.b16 %v4134
        %v4467 = vunpack.c.l.b16 %v4135
        %v4468 = vunpack.c.h.b16 %v4135
        %v4469 = vunpack.c.l.b16 %v4136
        %v4470 = vunpack.c.h.b16 %v4136
        %v4471 = vunpack.c.l.b16 %v4137
        %v4472 = vunpack.c.h.b16 %v4137
        %v4473 = vunpack.c.l.b16 %v4138
        %v4474 = vunpack.c.h.b16 %v4138
        %v4475 = vunpack.c.l.b16 %v4139
        %v4476 = vunpack.c.h.b16 %v4139
        %v4477 = vunpack.c.l.b16 %v4140
        %v4478 = vunpack.c.h.b16 %v4140
        %v4479 = vunpack.c.l.b16 %v4141
        %v4480 = vunpack.c.h.b16 %v4141
        %v4481 = vunpack.c.l.b16 %v4142
        %v4482 = vunpack.c.h.b16 %v4142
        %v4483 = vunpack.c.l.b16 %v4143
        %v4484 = vunpack.c.h.b16 %v4143
        %v4485 = vunpack.c.l.b16 %v4144
        %v4486 = vunpack.c.h.b16 %v4144
        %v4487 = vunpack.c.l.b16 %v4145
        %v4488 = vunpack.c.h.b16 %v4145
        %v4489 = vunpack.c.l.b16 %v4146
        %v4490 = vunpack.c.h.b16 %v4146
        %v4491 = vunpack.c.l.b16 %v4147
        %v4492 = vunpack.c.h.b16 %v4147
        %v4493 = vunpack.c.l.b16 %v4148
        %v4494 = vunpack.c.h.b16 %v4148
        %v4495 = vunpack.c.l.b16 %v4149
        %v4496 = vunpack.c.h.b16 %v4149
        %v4497 = vunpack.c.l.b16 %v4150
        %v4498 = vunpack.c.h.b16 %v4150
        %v4499 = vunpack.c.l.b16 %v4151
        %v4500 = vunpack.c.h.b16 %v4151
        %v4501 = vunpack.c.l.b16 %v4152
        %v4502 = vunpack.c.h.b16 %v4152
        %v4503 = vunpack.c.l.b16 %v4153
        %v4504 = vunpack.c.h.b16 %v4153
        %v4505 = vunpack.c.l.b16 %v4154
        %v4506 = vunpack.c.h.b16 %v4154
        %v4507 = vunpack.c.l.b16 %v4155
        %v4508 = vunpack.c.h.b16 %v4155
        %v4509 = vunpack.c.l.b16 %v4156
        %v4510 = vunpack.c.h.b16 %v4156
        %v4511 = vunpack.c.l.b16 %v4157
        %v4512 = vunpack.c.h.b16 %v4157
        %v4513 = vunpack.c.l.b16 %v4158
        %v4514 = vunpack.c.h.b16 %v4158
        %v4515 = vunpack.c.l.b16 %v4159
        %v4516 = vunpack.c.h.b16 %v4159
        %v4517 = vunpack.c.l.b16 %v4160
        %v4518 = vunpack.c.h.b16 %v4160
        %v4519 = vunpack.c.l.b16 %v4161
        %v4520 = vunpack.c.h.b16 %v4161
        %v4521 = vunpack.c.l.b16 %v4162
        %v4522 = vunpack.c.h.b16 %v4162
        %v4523 = vunpack.c.l.b16 %v4163
        %v4524 = vunpack.c.h.b16 %v4163
        %v4525 = vunpack.c.l.b16 %v4164
        %v4526 = vunpack.c.h.b16 %v4164
        %v4527 = vunpack.c.l.b16 %v4165
        %v4528 = vunpack.c.h.b16 %v4165
        %v4529 = vunpack.c.l.b16 %v4166
        %v4530 = vunpack.c.h.b16 %v4166
        %v4531 = vunpack.c.l.b16 %v4167
        %v4532 = vunpack.c.h.b16 %v4167
        %v4533 = vunpack.c.l.b16 %v4168
        %v4534 = vunpack.c.h.b16 %v4168
        %v4535 = vunpack.c.l.b16 %v4169
        %v4536 = vunpack.c.h.b16 %v4169
        %v4537 = vunpack.c.l.b16 %v4170
        %v4538 = vunpack.c.h.b16 %v4170
        %v4539 = vunpack.c.l.b16 %v4171
        %v4540 = vunpack.c.h.b16 %v4171
        %v4541 = vunpack.c.l.b16 %v4172
        %v4542 = vunpack.c.h.b16 %v4172
        %v4543 = vunpack.c.l.b16 %v4173
        %v4544 = vunpack.c.h.b16 %v4173
        %v4545 = vunpack.c.l.b16 %v4174
        %v4546 = vunpack.c.h.b16 %v4174
        %v4547 = vunpack.c.l.b16 %v4175
        %v4548 = vunpack.c.h.b16 %v4175
        %v4549 = vunpack.c.l.b16 %v4176
        %v4550 = vunpack.c.h.b16 %v4176
        %v4551 = vunpack.c.l.b16 %v4177
        %v4552 = vunpack.c.h.b16 %v4177
        %v4553 = vunpack.c.l.b16 %v4178
        %v4554 = vunpack.c.h.b16 %v4178
        %v4555 = vunpack.c.l.b16 %v4179
        %v4556 = vunpack.c.h.b16 %v4179
        %v4557 = vunpack.c.l.b16 %v4180
        %v4558 = vunpack.c.h.b16 %v4180
        %v4559 = vunpack.c.l.b16 %v4181
        %v4560 = vunpack.c.h.b16 %v4181
        %v4561 = vunpack.c.l.b16 %v4182
        %v4562 = vunpack.c.h.b16 %v4182
        %v4563 = vunpack.c.l.b16 %v4183
        %v4564 = vunpack.c.h.b16 %v4183
        %v4565 = vunpack.c.l.b16 %v4184
        %v4566 = vunpack.c.h.b16 %v4184
        %v4567 = vunpack.c.l.b16 %v4185
        %v4568 = vunpack.c.h.b16 %v4185
        %v4569 = vunpack.c.l.b16 %v4186
        %v4570 = vunpack.c.h.b16 %v4186
        %v4571 = vpack.c.b16 %v4319, %v4315
        %v4572 = vpack.c.b16 %v4320, %v4316
        %v4573 = vpack.c.b16 %v4321, %v4317
        %v4574 = vpack.c.b16 %v4322, %v4318
        %v4575 = vpack.c.b16 %v4327, %v4323
        %v4576 = vpack.c.b16 %v4328, %v4324
        %v4577 = vpack.c.b16 %v4329, %v4325
        %v4578 = vpack.c.b16 %v4330, %v4326
        %v4579 = vpack.c.b16 %v4335, %v4331
        %v4580 = vpack.c.b16 %v4336, %v4332
        %v4581 = vpack.c.b16 %v4337, %v4333
        %v4582 = vpack.c.b16 %v4338, %v4334
        %v4583 = vpack.c.b16 %v4343, %v4339
        %v4584 = vpack.c.b16 %v4344, %v4340
        %v4585 = vpack.c.b16 %v4345, %v4341
        %v4586 = vpack.c.b16 %v4346, %v4342
        %v4587 = vpack.c.b16 %v4351, %v4347
        %v4588 = vpack.c.b16 %v4352, %v4348
        %v4589 = vpack.c.b16 %v4353, %v4349
        %v4590 = vpack.c.b16 %v4354, %v4350
        %v4591 = vpack.c.b16 %v4359, %v4355
        %v4592 = vpack.c.b16 %v4360, %v4356
        %v4593 = vpack.c.b16 %v4361, %v4357
        %v4594 = vpack.c.b16 %v4362, %v4358
        %v4595 = vpack.c.b16 %v4367, %v4363
        %v4596 = vpack.c.b16 %v4368, %v4364
        %v4597 = vpack.c.b16 %v4369, %v4365
        %v4598 = vpack.c.b16 %v4370, %v4366
        %v4599 = vpack.c.b16 %v4375, %v4371
        %v4600 = vpack.c.b16 %v4376, %v4372
        %v4601 = vpack.c.b16 %v4377, %v4373
        %v4602 = vpack.c.b16 %v4378, %v4374
        %v4603 = vpack.c.b16 %v4383, %v4379
        %v4604 = vpack.c.b16 %v4384, %v4380
        %v4605 = vpack.c.b16 %v4385, %v4381
        %v4606 = vpack.c.b16 %v4386, %v4382
        %v4607 = vpack.c.b16 %v4391, %v4387
        %v4608 = vpack.c.b16 %v4392, %v4388
        %v4609 = vpack.c.b16 %v4393, %v4389
        %v4610 = vpack.c.b16 %v4394, %v4390
        %v4611 = vpack.c.b16 %v4399, %v4395
        %v4612 = vpack.c.b16 %v4400, %v4396
        %v4613 = vpack.c.b16 %v4401, %v4397
        %v4614 = vpack.c.b16 %v4402, %v4398
        %v4615 = vpack.c.b16 %v4407, %v4403
        %v4616 = vpack.c.b16 %v4408, %v4404
        %v4617 = vpack.c.b16 %v4409, %v4405
        %v4618 = vpack.c.b16 %v4410, %v4406
        %v4619 = vpack.c.b16 %v4415, %v4411
        %v4620 = vpack.c.b16 %v4416, %v4412
        %v4621 = vpack.c.b16 %v4417, %v4413
        %v4622 = vpack.c.b16 %v4418, %v4414
        %v4623 = vpack.c.b16 %v4423, %v4419
        %v4624 = vpack.c.b16 %v4424, %v4420
        %v4625 = vpack.c.b16 %v4425, %v4421
        %v4626 = vpack.c.b16 %v4426, %v4422
        %v4627 = vpack.c.b16 %v4431, %v4427
        %v4628 = vpack.c.b16 %v4432, %v4428
        %v4629 = vpack.c.b16 %v4433, %v4429
        %v4630 = vpack.c.b16 %v4434, %v4430
        %v4631 = vpack.c.b16 %v4439, %v4435
        %v4632 = vpack.c.b16 %v4440, %v4436
        %v4633 = vpack.c.b16 %v4441, %v4437
        %v4634 = vpack.c.b16 %v4442, %v4438
        %v4635 = vpack.c.b16 %v4447, %v4443
        %v4636 = vpack.c.b16 %v4448, %v4444
        %v4637 = vpack.c.b16 %v4449, %v4445
        %v4638 = vpack.c.b16 %v4450, %v4446
        %v4639 = vpack.c.b16 %v4455, %v4451
        %v4640 = vpack.c.b16 %v4456, %v4452
        %v4641 = vpack.c.b16 %v4457, %v4453
        %v4642 = vpack.c.b16 %v4458, %v4454
        %v4643 = vpack.c.b16 %v4463, %v4459
        %v4644 = vpack.c.b16 %v4464, %v4460
        %v4645 = vpack.c.b16 %v4465, %v4461
        %v4646 = vpack.c.b16 %v4466, %v4462
        %v4647 = vpack.c.b16 %v4471, %v4467
        %v4648 = vpack.c.b16 %v4472, %v4468
        %v4649 = vpack.c.b16 %v4473, %v4469
        %v4650 = vpack.c.b16 %v4474, %v4470
        %v4651 = vpack.c.b16 %v4479, %v4475
        %v4652 = vpack.c.b16 %v4480, %v4476
        %v4653 = vpack.c.b16 %v4481, %v4477
        %v4654 = vpack.c.b16 %v4482, %v4478
        %v4655 = vpack.c.b16 %v4487, %v4483
        %v4656 = vpack.c.b16 %v4488, %v4484
        %v4657 = vpack.c.b16 %v4489, %v4485
        %v4658 = vpack.c.b16 %v4490, %v4486
        %v4659 = vpack.c.b16 %v4495, %v4491
        %v4660 = vpack.c.b16 %v4496, %v4492
        %v4661 = vpack.c.b16 %v4497, %v4493
        %v4662 = vpack.c.b16 %v4498, %v4494
        %v4663 = vpack.c.b16 %v4503, %v4499
        %v4664 = vpack.c.b16 %v4504, %v4500
        %v4665 = vpack.c.b16 %v4505, %v4501
        %v4666 = vpack.c.b16 %v4506, %v4502
        %v4667 = vpack.c.b16 %v4511, %v4507
        %v4668 = vpack.c.b16 %v4512, %v4508
        %v4669 = vpack.c.b16 %v4513, %v4509
        %v4670 = vpack.c.b16 %v4514, %v4510
        %v4671 = vpack.c.b16 %v4519, %v4515
        %v4672 = vpack.c.b16 %v4520, %v4516
        %v4673 = vpack.c.b16 %v4521, %v4517
        %v4674 = vpack.c.b16 %v4522, %v4518
        %v4675 = vpack.c.b16 %v4527, %v4523
        %v4676 = vpack.c.b16 %v4528, %v4524
        %v4677 = vpack.c.b16 %v4529, %v4525
        %v4678 = vpack.c.b16 %v4530, %v4526
        %v4679 = vpack.c.b16 %v4535, %v4531
        %v4680 = vpack.c.b16 %v4536, %v4532
        %v4681 = vpack.c.b16 %v4537, %v4533
        %v4682 = vpack.c.b16 %v4538, %v4534
        %v4683 = vpack.c.b16 %v4543, %v4539
        %v4684 = vpack.c.b16 %v4544, %v4540
        %v4685 = vpack.c.b16 %v4545, %v4541
        %v4686 = vpack.c.b16 %v4546, %v4542
        %v4687 = vpack.c.b16 %v4551, %v4547
        %v4688 = vpack.c.b16 %v4552, %v4548
        %v4689 = vpack.c.b16 %v4553, %v4549
        %v4690 = vpack.c.b16 %v4554, %v4550
        %v4691 = vpack.c.b16 %v4559, %v4555
        %v4692 = vpack.c.b16 %v4560, %v4556
        %v4693 = vpack.c.b16 %v4561, %v4557
        %v4694 = vpack.c.b16 %v4562, %v4558
        %v4695 = vpack.c.b16 %v4567, %v4563
        %v4696 = vpack.c.b16 %v4568, %v4564
        %v4697 = vpack.c.b16 %v4569, %v4565
        %v4698 = vpack.c.b16 %v4570, %v4566
        %4827 = vmatprep.subr.bf16.mxu0 %v4572
        %4828 = vmatpush1.bf16.msra.mxu0 %v4571
        %4829 = vmatprep.subr.bf16.mxu0 %v4576
        %4830 = vmatpush1.bf16.msra.mxu0 %v4575
        %4831 = vmatprep.subr.bf16.mxu0 %v4580
        %4832 = vmatpush1.bf16.msra.mxu0 %v4579
        %4833 = vmatprep.subr.bf16.mxu0 %v4584
        %4834 = vmatpush1.bf16.msra.mxu0 %v4583
        %4835 = vmatprep.subr.bf16.mxu0 %v4588
        %4836 = vmatpush1.bf16.msra.mxu0 %v4587
        %4837 = vmatprep.subr.bf16.mxu0 %v4592
        %4838 = vmatpush1.bf16.msra.mxu0 %v4591
        %4839 = vmatprep.subr.bf16.mxu0 %v4596
        %4840 = vmatpush1.bf16.msra.mxu0 %v4595
        %4841 = vmatprep.subr.bf16.mxu0 %v4600
        %4842 = vmatpush1.bf16.msra.mxu0 %v4599
        %4843 = vmatprep.subr.bf16.mxu0 %v4604
        %4844 = vmatpush1.bf16.msra.mxu0 %v4603
        %4845 = vmatprep.subr.bf16.mxu0 %v4608
        %4846 = vmatpush1.bf16.msra.mxu0 %v4607
        %4847 = vmatprep.subr.bf16.mxu0 %v4612
        %4848 = vmatpush1.bf16.msra.mxu0 %v4611
        %4849 = vmatprep.subr.bf16.mxu0 %v4616
        %4850 = vmatpush1.bf16.msra.mxu0 %v4615
        %4851 = vmatprep.subr.bf16.mxu0 %v4620
        %4852 = vmatpush1.bf16.msra.mxu0 %v4619
        %4853 = vmatprep.subr.bf16.mxu0 %v4624
        %4854 = vmatpush1.bf16.msra.mxu0 %v4623
        %4855 = vmatprep.subr.bf16.mxu0 %v4628
        %4856 = vmatpush1.bf16.msra.mxu0 %v4627
        %4857 = vmatprep.subr.bf16.mxu0 %v4632
        %4858 = vmatpush1.bf16.msra.mxu0 %v4631
        %4859 = vmatprep.mubr.bf16.mxu0 %v4056
        %4860 = vmatmul.mubr.bf16.gmra.mrb[0].mxu0 %v4055
        %v4861 = vpop.f32.mrb[0].mxu0
        %v4862 = vadd.f32 %v306, %v4861
        %v4863 = vpop.f32.mrb[0].mxu0
        %v4864 = vadd.f32 %v307, %v4863
        %v4865 = vpop.f32.mrb[0].mxu0
        %v4866 = vpop.f32.mrb[0].mxu0
        %4867 = vdwg.mxu0
        %4868 = vmatprep.subr.bf16.mxu0 %v4636
        %4869 = vmatpush1.bf16.msra.mxu0 %v4635
        %4870 = vmatprep.subr.bf16.mxu0 %v4640
        %4871 = vmatpush1.bf16.msra.mxu0 %v4639
        %4872 = vmatprep.subr.bf16.mxu0 %v4644
        %4873 = vmatpush1.bf16.msra.mxu0 %v4643
        %4874 = vmatprep.subr.bf16.mxu0 %v4648
        %4875 = vmatpush1.bf16.msra.mxu0 %v4647
        %4876 = vmatprep.subr.bf16.mxu0 %v4652
        %4877 = vmatpush1.bf16.msra.mxu0 %v4651
        %4878 = vmatprep.subr.bf16.mxu0 %v4656
        %4879 = vmatpush1.bf16.msra.mxu0 %v4655
        %4880 = vmatprep.subr.bf16.mxu0 %v4660
        %4881 = vmatpush1.bf16.msra.mxu0 %v4659
        %4882 = vmatprep.subr.bf16.mxu0 %v4664
        %4883 = vmatpush1.bf16.msra.mxu0 %v4663
        %4884 = vmatprep.subr.bf16.mxu0 %v4668
        %4885 = vmatpush1.bf16.msra.mxu0 %v4667
        %4886 = vmatprep.subr.bf16.mxu0 %v4672
        %4887 = vmatpush1.bf16.msra.mxu0 %v4671
        %4888 = vmatprep.subr.bf16.mxu0 %v4676
        %4889 = vmatpush1.bf16.msra.mxu0 %v4675
        %4890 = vmatprep.subr.bf16.mxu0 %v4680
        %4891 = vmatpush1.bf16.msra.mxu0 %v4679
        %4892 = vmatprep.subr.bf16.mxu0 %v4684
        %4893 = vmatpush1.bf16.msra.mxu0 %v4683
        %4894 = vmatprep.subr.bf16.mxu0 %v4688
        %4895 = vmatpush1.bf16.msra.mxu0 %v4687
        %4896 = vmatprep.subr.bf16.mxu0 %v4692
        %4897 = vmatpush1.bf16.msra.mxu0 %v4691
        %4898 = vmatprep.subr.bf16.mxu0 %v4696
        %4899 = vmatpush1.bf16.msra.mxu0 %v4695
        %4900 = vmatprep.mubr.bf16.mxu0 %v4058
        %4901 = vmatmul.mubr.bf16.gmra.mrb[0].mxu0 %v4057
        %v4902 = vpop.f32.mrb[0].mxu0
        %v4903 = vadd.f32 %v4862, %v4902
        %v4904 = vpop.f32.mrb[0].mxu0
        %v4905 = vadd.f32 %v4864, %v4904
        %v4906 = vpop.f32.mrb[0].mxu0
        %v4907 = vpop.f32.mrb[0].mxu0
        %4908 = vdwg.mxu0
        %4909 = vmatprep.subr.bf16.mxu0 %v4574
        %4910 = vmatpush1.bf16.msra.mxu0 %v4573
        %4911 = vmatprep.subr.bf16.mxu0 %v4578
        %4912 = vmatpush1.bf16.msra.mxu0 %v4577
        %4913 = vmatprep.subr.bf16.mxu0 %v4582
        %4914 = vmatpush1.bf16.msra.mxu0 %v4581
        %4915 = vmatprep.subr.bf16.mxu0 %v4586
        %4916 = vmatpush1.bf16.msra.mxu0 %v4585
        %4917 = vmatprep.subr.bf16.mxu0 %v4590
        %4918 = vmatpush1.bf16.msra.mxu0 %v4589
        %4919 = vmatprep.subr.bf16.mxu0 %v4594
        %4920 = vmatpush1.bf16.msra.mxu0 %v4593
        %4921 = vmatprep.subr.bf16.mxu0 %v4598
        %4922 = vmatpush1.bf16.msra.mxu0 %v4597
        %4923 = vmatprep.subr.bf16.mxu0 %v4602
        %4924 = vmatpush1.bf16.msra.mxu0 %v4601
        %4925 = vmatprep.subr.bf16.mxu0 %v4606
        %4926 = vmatpush1.bf16.msra.mxu0 %v4605
        %4927 = vmatprep.subr.bf16.mxu0 %v4610
        %4928 = vmatpush1.bf16.msra.mxu0 %v4609
        %4929 = vmatprep.subr.bf16.mxu0 %v4614
        %4930 = vmatpush1.bf16.msra.mxu0 %v4613
        %4931 = vmatprep.subr.bf16.mxu0 %v4618
        %4932 = vmatpush1.bf16.msra.mxu0 %v4617
        %4933 = vmatprep.subr.bf16.mxu0 %v4622
        %4934 = vmatpush1.bf16.msra.mxu0 %v4621
        %4935 = vmatprep.subr.bf16.mxu0 %v4626
        %4936 = vmatpush1.bf16.msra.mxu0 %v4625
        %4937 = vmatprep.subr.bf16.mxu0 %v4630
        %4938 = vmatpush1.bf16.msra.mxu0 %v4629
        %4939 = vmatprep.subr.bf16.mxu0 %v4634
        %4940 = vmatpush1.bf16.msra.mxu0 %v4633
        %4941 = vmatprep.mubr.bf16.mxu0 %v4056
        %4942 = vmatmul.mubr.bf16.gmra.mrb[0].mxu0 %v4055
        %v4943 = vpop.f32.mrb[0].mxu0
        %v4944 = vadd.f32 %v308, %v4943
        %v4945 = vpop.f32.mrb[0].mxu0
        %v4946 = vadd.f32 %v309, %v4945
        %v4947 = vpop.f32.mrb[0].mxu0
        %v4948 = vpop.f32.mrb[0].mxu0
        %4949 = vdwg.mxu0
        %4950 = vmatprep.subr.bf16.mxu0 %v4638
        %4951 = vmatpush1.bf16.msra.mxu0 %v4637
        %4952 = vmatprep.subr.bf16.mxu0 %v4642
        %4953 = vmatpush1.bf16.msra.mxu0 %v4641
        %4954 = vmatprep.subr.bf16.mxu0 %v4646
        %4955 = vmatpush1.bf16.msra.mxu0 %v4645
        %4956 = vmatprep.subr.bf16.mxu0 %v4650
        %4957 = vmatpush1.bf16.msra.mxu0 %v4649
        %4958 = vmatprep.subr.bf16.mxu0 %v4654
        %4959 = vmatpush1.bf16.msra.mxu0 %v4653
        %4960 = vmatprep.subr.bf16.mxu0 %v4658
        %4961 = vmatpush1.bf16.msra.mxu0 %v4657
        %4962 = vmatprep.subr.bf16.mxu0 %v4662
        %4963 = vmatpush1.bf16.msra.mxu0 %v4661
        %4964 = vmatprep.subr.bf16.mxu0 %v4666
        %4965 = vmatpush1.bf16.msra.mxu0 %v4665
        %4966 = vmatprep.subr.bf16.mxu0 %v4670
        %4967 = vmatpush1.bf16.msra.mxu0 %v4669
        %4968 = vmatprep.subr.bf16.mxu0 %v4674
        %4969 = vmatpush1.bf16.msra.mxu0 %v4673
        %4970 = vmatprep.subr.bf16.mxu0 %v4678
        %4971 = vmatpush1.bf16.msra.mxu0 %v4677
        %4972 = vmatprep.subr.bf16.mxu0 %v4682
        %4973 = vmatpush1.bf16.msra.mxu0 %v4681
        %4974 = vmatprep.subr.bf16.mxu0 %v4686
        %4975 = vmatpush1.bf16.msra.mxu0 %v4685
        %4976 = vmatprep.subr.bf16.mxu0 %v4690
        %4977 = vmatpush1.bf16.msra.mxu0 %v4689
        %4978 = vmatprep.subr.bf16.mxu0 %v4694
        %4979 = vmatpush1.bf16.msra.mxu0 %v4693
        %4980 = vmatprep.subr.bf16.mxu0 %v4698
        %4981 = vmatpush1.bf16.msra.mxu0 %v4697
        %4982 = vmatprep.mubr.bf16.mxu0 %v4058
        %4983 = vmatmul.mubr.bf16.gmra.mrb[0].mxu0 %v4057
        %v4984 = vpop.f32.mrb[0].mxu0
        %v4985 = vadd.f32 %v4944, %v4984
        %v4986 = vpop.f32.mrb[0].mxu0
        %v4987 = vadd.f32 %v4946, %v4986
        %v4988 = vpop.f32.mrb[0].mxu0
        %v4989 = vpop.f32.mrb[0].mxu0
        %4990 = vdwg.mxu0
        %v4991 = vadd.f32 %v4903, %v4905
        %v4992 = vadd.f32 %v4991, %v4985
        %v4993 = vadd.f32 %v4992, %v4987
        %4994 = vadd.xlane.f32.xlu0 %v4993
        %v4995 = vpop.xlane.xlu0 %4994
        %v4996 = vrcp.pop 512.0
        %v4997 = vmul.f32 %v4995, %v4996
        %v4998 = vsub.f32 %v4903, %v4997
        %v4999 = vsub.f32 %v4905, %v4997
        %v5000 = vsub.f32 %v4985, %v4997
        %v5001 = vsub.f32 %v4987, %v4997
        %v5002 = vmul.f32 %v4998, %v4998
        %v5003 = vmul.f32 %v4999, %v4999
        %v5004 = vmul.f32 %v5000, %v5000
        %v5005 = vmul.f32 %v5001, %v5001
        %v5006 = vadd.f32 %v5002, %v5003
        %v5007 = vadd.f32 %v5006, %v5004
        %v5008 = vadd.f32 %v5007, %v5005
        %5009 = vadd.xlane.f32.xlu0 %v5008
        %v5010 = vpop.xlane.xlu0 %5009
        %v5011 = vmul.f32 %v5010, %v4996
        %v5012 = vadd.f32 %v5011, 1e-05
        %v5013 = vrsqrt.pop %v5012
        %v5014 = vmul.f32 %v4998, %v5013
        %v5015 = vmul.f32 %v4999, %v5013
        %v5016 = vmul.f32 %v5000, %v5013
        %v5017 = vmul.f32 %v5001, %v5013
        %v5018 = vpack.c.bf16 %v5014, %v5014
        %v5019 = vpack.c.bf16 %v5015, %v5015
        %v5020 = vpack.c.bf16 %v5016, %v5016
        %v5021 = vpack.c.bf16 %v5017, %v5017
        %v5022 = vld [vmem:[%s4] sm:$0xff]
        %v5023 = vld [vmem:[%s4 + $0x8] sm:$0xff]
        %v5024 = vld [vmem:[%s4 + $0x10] sm:$0xff]
        %v5025 = vld [vmem:[%s4 + $0x18] sm:$0xff]
        %v5026 = vld [vmem:[%s4 + $0x20] sm:$0xff]
        %v5027 = vld [vmem:[%s4 + $0x28] sm:$0xff]
        %v5028 = vld [vmem:[%s4 + $0x30] sm:$0xff]
        %v5029 = vld [vmem:[%s4 + $0x38] sm:$0xff]
        %v5030 = vld [vmem:[%s4 + $0x40] sm:$0xff]
        %v5031 = vld [vmem:[%s4 + $0x48] sm:$0xff]
        %v5032 = vld [vmem:[%s4 + $0x50] sm:$0xff]
        %v5033 = vld [vmem:[%s4 + $0x58] sm:$0xff]
        %v5034 = vld [vmem:[%s4 + $0x60] sm:$0xff]
        %v5035 = vld [vmem:[%s4 + $0x68] sm:$0xff]
        %v5036 = vld [vmem:[%s4 + $0x70] sm:$0xff]
        %v5037 = vld [vmem:[%s4 + $0x78] sm:$0xff]
        %v5038 = vld [vmem:[%s4 + $0x80] sm:$0xff]
        %v5039 = vld [vmem:[%s4 + $0x88] sm:$0xff]
        %v5040 = vld [vmem:[%s4 + $0x90] sm:$0xff]
        %v5041 = vld [vmem:[%s4 + $0x98] sm:$0xff]
        %v5042 = vld [vmem:[%s4 + $0xa0] sm:$0xff]
        %v5043 = vld [vmem:[%s4 + $0xa8] sm:$0xff]
        %v5044 = vld [vmem:[%s4 + $0xb0] sm:$0xff]
        %v5045 = vld [vmem:[%s4 + $0xb8] sm:$0xff]
        %v5046 = vld [vmem:[%s4 + $0xc0] sm:$0xff]
        %v5047 = vld [vmem:[%s4 + $0xc8] sm:$0xff]
        %v5048 = vld [vmem:[%s4 + $0xd0] sm:$0xff]
        %v5049 = vld [vmem:[%s4 + $0xd8] sm:$0xff]
        %v5050 = vld [vmem:[%s4 + $0xe0] sm:$0xff]
        %v5051 = vld [vmem:[%s4 + $0xe8] sm:$0xff]
        %v5052 = vld [vmem:[%s4 + $0xf0] sm:$0xff]
        %v5053 = vld [vmem:[%s4 + $0xf8] sm:$0xff]
        %v5054 = vld [vmem:[%s4 + $0x100] sm:$0xff]
        %v5055 = vld [vmem:[%s4 + $0x108] sm:$0xff]
        %v5056 = vld [vmem:[%s4 + $0x110] sm:$0xff]
        %v5057 = vld [vmem:[%s4 + $0x118] sm:$0xff]
        %v5058 = vld [vmem:[%s4 + $0x120] sm:$0xff]
        %v5059 = vld [vmem:[%s4 + $0x128] sm:$0xff]
        %v5060 = vld [vmem:[%s4 + $0x130] sm:$0xff]
        %v5061 = vld [vmem:[%s4 + $0x138] sm:$0xff]
        %v5062 = vld [vmem:[%s4 + $0x140] sm:$0xff]
        %v5063 = vld [vmem:[%s4 + $0x148] sm:$0xff]
        %v5064 = vld [vmem:[%s4 + $0x150] sm:$0xff]
        %v5065 = vld [vmem:[%s4 + $0x158] sm:$0xff]
        %v5066 = vld [vmem:[%s4 + $0x160] sm:$0xff]
        %v5067 = vld [vmem:[%s4 + $0x168] sm:$0xff]
        %v5068 = vld [vmem:[%s4 + $0x170] sm:$0xff]
        %v5069 = vld [vmem:[%s4 + $0x178] sm:$0xff]
        %v5070 = vld [vmem:[%s4 + $0x180] sm:$0xff]
        %v5071 = vld [vmem:[%s4 + $0x188] sm:$0xff]
        %v5072 = vld [vmem:[%s4 + $0x190] sm:$0xff]
        %v5073 = vld [vmem:[%s4 + $0x198] sm:$0xff]
        %v5074 = vld [vmem:[%s4 + $0x1a0] sm:$0xff]
        %v5075 = vld [vmem:[%s4 + $0x1a8] sm:$0xff]
        %v5076 = vld [vmem:[%s4 + $0x1b0] sm:$0xff]
        %v5077 = vld [vmem:[%s4 + $0x1b8] sm:$0xff]
        %v5078 = vld [vmem:[%s4 + $0x1c0] sm:$0xff]
        %v5079 = vld [vmem:[%s4 + $0x1c8] sm:$0xff]
        %v5080 = vld [vmem:[%s4 + $0x1d0] sm:$0xff]
        %v5081 = vld [vmem:[%s4 + $0x1d8] sm:$0xff]
        %v5082 = vld [vmem:[%s4 + $0x1e0] sm:$0xff]
        %v5083 = vld [vmem:[%s4 + $0x1e8] sm:$0xff]
        %v5084 = vld [vmem:[%s4 + $0x1f0] sm:$0xff]
        %v5085 = vld [vmem:[%s4 + $0x1f8] sm:$0xff]
        %v5086 = vld [vmem:[%s4 + $0x200] sm:$0xff]
        %v5087 = vld [vmem:[%s4 + $0x208] sm:$0xff]
        %v5088 = vld [vmem:[%s4 + $0x210] sm:$0xff]
        %v5089 = vld [vmem:[%s4 + $0x218] sm:$0xff]
        %v5090 = vld [vmem:[%s4 + $0x220] sm:$0xff]
        %v5091 = vld [vmem:[%s4 + $0x228] sm:$0xff]
        %v5092 = vld [vmem:[%s4 + $0x230] sm:$0xff]
        %v5093 = vld [vmem:[%s4 + $0x238] sm:$0xff]
        %v5094 = vld [vmem:[%s4 + $0x240] sm:$0xff]
        %v5095 = vld [vmem:[%s4 + $0x248] sm:$0xff]
        %v5096 = vld [vmem:[%s4 + $0x250] sm:$0xff]
        %v5097 = vld [vmem:[%s4 + $0x258] sm:$0xff]
        %v5098 = vld [vmem:[%s4 + $0x260] sm:$0xff]
        %v5099 = vld [vmem:[%s4 + $0x268] sm:$0xff]
        %v5100 = vld [vmem:[%s4 + $0x270] sm:$0xff]
        %v5101 = vld [vmem:[%s4 + $0x278] sm:$0xff]
        %v5102 = vld [vmem:[%s4 + $0x280] sm:$0xff]
        %v5103 = vld [vmem:[%s4 + $0x288] sm:$0xff]
        %v5104 = vld [vmem:[%s4 + $0x290] sm:$0xff]
        %v5105 = vld [vmem:[%s4 + $0x298] sm:$0xff]
        %v5106 = vld [vmem:[%s4 + $0x2a0] sm:$0xff]
        %v5107 = vld [vmem:[%s4 + $0x2a8] sm:$0xff]
        %v5108 = vld [vmem:[%s4 + $0x2b0] sm:$0xff]
        %v5109 = vld [vmem:[%s4 + $0x2b8] sm:$0xff]
        %v5110 = vld [vmem:[%s4 + $0x2c0] sm:$0xff]
        %v5111 = vld [vmem:[%s4 + $0x2c8] sm:$0xff]
        %v5112 = vld [vmem:[%s4 + $0x2d0] sm:$0xff]
        %v5113 = vld [vmem:[%s4 + $0x2d8] sm:$0xff]
        %v5114 = vld [vmem:[%s4 + $0x2e0] sm:$0xff]
        %v5115 = vld [vmem:[%s4 + $0x2e8] sm:$0xff]
        %v5116 = vld [vmem:[%s4 + $0x2f0] sm:$0xff]
        %v5117 = vld [vmem:[%s4 + $0x2f8] sm:$0xff]
        %v5118 = vld [vmem:[%s4 + $0x300] sm:$0xff]
        %v5119 = vld [vmem:[%s4 + $0x308] sm:$0xff]
        %v5120 = vld [vmem:[%s4 + $0x310] sm:$0xff]
        %v5121 = vld [vmem:[%s4 + $0x318] sm:$0xff]
        %v5122 = vld [vmem:[%s4 + $0x320] sm:$0xff]
        %v5123 = vld [vmem:[%s4 + $0x328] sm:$0xff]
        %v5124 = vld [vmem:[%s4 + $0x330] sm:$0xff]
        %v5125 = vld [vmem:[%s4 + $0x338] sm:$0xff]
        %v5126 = vld [vmem:[%s4 + $0x340] sm:$0xff]
        %v5127 = vld [vmem:[%s4 + $0x348] sm:$0xff]
        %v5128 = vld [vmem:[%s4 + $0x350] sm:$0xff]
        %v5129 = vld [vmem:[%s4 + $0x358] sm:$0xff]
        %v5130 = vld [vmem:[%s4 + $0x360] sm:$0xff]
        %v5131 = vld [vmem:[%s4 + $0x368] sm:$0xff]
        %v5132 = vld [vmem:[%s4 + $0x370] sm:$0xff]
        %v5133 = vld [vmem:[%s4 + $0x378] sm:$0xff]
        %v5134 = vld [vmem:[%s4 + $0x380] sm:$0xff]
        %v5135 = vld [vmem:[%s4 + $0x388] sm:$0xff]
        %v5136 = vld [vmem:[%s4 + $0x390] sm:$0xff]
        %v5137 = vld [vmem:[%s4 + $0x398] sm:$0xff]
        %v5138 = vld [vmem:[%s4 + $0x3a0] sm:$0xff]
        %v5139 = vld [vmem:[%s4 + $0x3a8] sm:$0xff]
        %v5140 = vld [vmem:[%s4 + $0x3b0] sm:$0xff]
        %v5141 = vld [vmem:[%s4 + $0x3b8] sm:$0xff]
        %v5142 = vld [vmem:[%s4 + $0x3c0] sm:$0xff]
        %v5143 = vld [vmem:[%s4 + $0x3c8] sm:$0xff]
        %v5144 = vld [vmem:[%s4 + $0x3d0] sm:$0xff]
        %v5145 = vld [vmem:[%s4 + $0x3d8] sm:$0xff]
        %v5146 = vld [vmem:[%s4 + $0x3e0] sm:$0xff]
        %v5147 = vld [vmem:[%s4 + $0x3e8] sm:$0xff]
        %v5148 = vld [vmem:[%s4 + $0x3f0] sm:$0xff]
        %v5149 = vld [vmem:[%s4 + $0x3f8] sm:$0xff]
        %v5150 = vld [vmem:[%s4 + $0x400] sm:$0xff]
        %v5151 = vld [vmem:[%s4 + $0x408] sm:$0xff]
        %v5152 = vld [vmem:[%s4 + $0x410] sm:$0xff]
        %v5153 = vld [vmem:[%s4 + $0x418] sm:$0xff]
        %v5154 = vld [vmem:[%s4 + $0x420] sm:$0xff]
        %v5155 = vld [vmem:[%s4 + $0x428] sm:$0xff]
        %v5156 = vld [vmem:[%s4 + $0x430] sm:$0xff]
        %v5157 = vld [vmem:[%s4 + $0x438] sm:$0xff]
        %v5158 = vld [vmem:[%s4 + $0x440] sm:$0xff]
        %v5159 = vld [vmem:[%s4 + $0x448] sm:$0xff]
        %v5160 = vld [vmem:[%s4 + $0x450] sm:$0xff]
        %v5161 = vld [vmem:[%s4 + $0x458] sm:$0xff]
        %v5162 = vld [vmem:[%s4 + $0x460] sm:$0xff]
        %v5163 = vld [vmem:[%s4 + $0x468] sm:$0xff]
        %v5164 = vld [vmem:[%s4 + $0x470] sm:$0xff]
        %v5165 = vld [vmem:[%s4 + $0x478] sm:$0xff]
        %v5166 = vld [vmem:[%s4 + $0x480] sm:$0xff]
        %v5167 = vld [vmem:[%s4 + $0x488] sm:$0xff]
        %v5168 = vld [vmem:[%s4 + $0x490] sm:$0xff]
        %v5169 = vld [vmem:[%s4 + $0x498] sm:$0xff]
        %v5170 = vld [vmem:[%s4 + $0x4a0] sm:$0xff]
        %v5171 = vld [vmem:[%s4 + $0x4a8] sm:$0xff]
        %v5172 = vld [vmem:[%s4 + $0x4b0] sm:$0xff]
        %v5173 = vld [vmem:[%s4 + $0x4b8] sm:$0xff]
        %v5174 = vld [vmem:[%s4 + $0x4c0] sm:$0xff]
        %v5175 = vld [vmem:[%s4 + $0x4c8] sm:$0xff]
        %v5176 = vld [vmem:[%s4 + $0x4d0] sm:$0xff]
        %v5177 = vld [vmem:[%s4 + $0x4d8] sm:$0xff]
        %v5178 = vld [vmem:[%s4 + $0x4e0] sm:$0xff]
        %v5179 = vld [vmem:[%s4 + $0x4e8] sm:$0xff]
        %v5180 = vld [vmem:[%s4 + $0x4f0] sm:$0xff]
        %v5181 = vld [vmem:[%s4 + $0x4f8] sm:$0xff]
        %v5182 = vld [vmem:[%s4 + $0x500] sm:$0xff]
        %v5183 = vld [vmem:[%s4 + $0x508] sm:$0xff]
        %v5184 = vld [vmem:[%s4 + $0x510] sm:$0xff]
        %v5185 = vld [vmem:[%s4 + $0x518] sm:$0xff]
        %v5186 = vld [vmem:[%s4 + $0x520] sm:$0xff]
        %v5187 = vld [vmem:[%s4 + $0x528] sm:$0xff]
        %v5188 = vld [vmem:[%s4 + $0x530] sm:$0xff]
        %v5189 = vld [vmem:[%s4 + $0x538] sm:$0xff]
        %v5190 = vld [vmem:[%s4 + $0x540] sm:$0xff]
        %v5191 = vld [vmem:[%s4 + $0x548] sm:$0xff]
        %v5192 = vld [vmem:[%s4 + $0x550] sm:$0xff]
        %v5193 = vld [vmem:[%s4 + $0x558] sm:$0xff]
        %v5194 = vld [vmem:[%s4 + $0x560] sm:$0xff]
        %v5195 = vld [vmem:[%s4 + $0x568] sm:$0xff]
        %v5196 = vld [vmem:[%s4 + $0x570] sm:$0xff]
        %v5197 = vld [vmem:[%s4 + $0x578] sm:$0xff]
        %v5198 = vld [vmem:[%s4 + $0x580] sm:$0xff]
        %v5199 = vld [vmem:[%s4 + $0x588] sm:$0xff]
        %v5200 = vld [vmem:[%s4 + $0x590] sm:$0xff]
        %v5201 = vld [vmem:[%s4 + $0x598] sm:$0xff]
        %v5202 = vld [vmem:[%s4 + $0x5a0] sm:$0xff]
        %v5203 = vld [vmem:[%s4 + $0x5a8] sm:$0xff]
        %v5204 = vld [vmem:[%s4 + $0x5b0] sm:$0xff]
        %v5205 = vld [vmem:[%s4 + $0x5b8] sm:$0xff]
        %v5206 = vld [vmem:[%s4 + $0x5c0] sm:$0xff]
        %v5207 = vld [vmem:[%s4 + $0x5c8] sm:$0xff]
        %v5208 = vld [vmem:[%s4 + $0x5d0] sm:$0xff]
        %v5209 = vld [vmem:[%s4 + $0x5d8] sm:$0xff]
        %v5210 = vld [vmem:[%s4 + $0x5e0] sm:$0xff]
        %v5211 = vld [vmem:[%s4 + $0x5e8] sm:$0xff]
        %v5212 = vld [vmem:[%s4 + $0x5f0] sm:$0xff]
        %v5213 = vld [vmem:[%s4 + $0x5f8] sm:$0xff]
        %v5214 = vld [vmem:[%s4 + $0x600] sm:$0xff]
        %v5215 = vld [vmem:[%s4 + $0x608] sm:$0xff]
        %v5216 = vld [vmem:[%s4 + $0x610] sm:$0xff]
        %v5217 = vld [vmem:[%s4 + $0x618] sm:$0xff]
        %v5218 = vld [vmem:[%s4 + $0x620] sm:$0xff]
        %v5219 = vld [vmem:[%s4 + $0x628] sm:$0xff]
        %v5220 = vld [vmem:[%s4 + $0x630] sm:$0xff]
        %v5221 = vld [vmem:[%s4 + $0x638] sm:$0xff]
        %v5222 = vld [vmem:[%s4 + $0x640] sm:$0xff]
        %v5223 = vld [vmem:[%s4 + $0x648] sm:$0xff]
        %v5224 = vld [vmem:[%s4 + $0x650] sm:$0xff]
        %v5225 = vld [vmem:[%s4 + $0x658] sm:$0xff]
        %v5226 = vld [vmem:[%s4 + $0x660] sm:$0xff]
        %v5227 = vld [vmem:[%s4 + $0x668] sm:$0xff]
        %v5228 = vld [vmem:[%s4 + $0x670] sm:$0xff]
        %v5229 = vld [vmem:[%s4 + $0x678] sm:$0xff]
        %v5230 = vld [vmem:[%s4 + $0x680] sm:$0xff]
        %v5231 = vld [vmem:[%s4 + $0x688] sm:$0xff]
        %v5232 = vld [vmem:[%s4 + $0x690] sm:$0xff]
        %v5233 = vld [vmem:[%s4 + $0x698] sm:$0xff]
        %v5234 = vld [vmem:[%s4 + $0x6a0] sm:$0xff]
        %v5235 = vld [vmem:[%s4 + $0x6a8] sm:$0xff]
        %v5236 = vld [vmem:[%s4 + $0x6b0] sm:$0xff]
        %v5237 = vld [vmem:[%s4 + $0x6b8] sm:$0xff]
        %v5238 = vld [vmem:[%s4 + $0x6c0] sm:$0xff]
        %v5239 = vld [vmem:[%s4 + $0x6c8] sm:$0xff]
        %v5240 = vld [vmem:[%s4 + $0x6d0] sm:$0xff]
        %v5241 = vld [vmem:[%s4 + $0x6d8] sm:$0xff]
        %v5242 = vld [vmem:[%s4 + $0x6e0] sm:$0xff]
        %v5243 = vld [vmem:[%s4 + $0x6e8] sm:$0xff]
        %v5244 = vld [vmem:[%s4 + $0x6f0] sm:$0xff]
        %v5245 = vld [vmem:[%s4 + $0x6f8] sm:$0xff]
        %v5246 = vld [vmem:[%s4 + $0x700] sm:$0xff]
        %v5247 = vld [vmem:[%s4 + $0x708] sm:$0xff]
        %v5248 = vld [vmem:[%s4 + $0x710] sm:$0xff]
        %v5249 = vld [vmem:[%s4 + $0x718] sm:$0xff]
        %v5250 = vld [vmem:[%s4 + $0x720] sm:$0xff]
        %v5251 = vld [vmem:[%s4 + $0x728] sm:$0xff]
        %v5252 = vld [vmem:[%s4 + $0x730] sm:$0xff]
        %v5253 = vld [vmem:[%s4 + $0x738] sm:$0xff]
        %v5254 = vld [vmem:[%s4 + $0x740] sm:$0xff]
        %v5255 = vld [vmem:[%s4 + $0x748] sm:$0xff]
        %v5256 = vld [vmem:[%s4 + $0x750] sm:$0xff]
        %v5257 = vld [vmem:[%s4 + $0x758] sm:$0xff]
        %v5258 = vld [vmem:[%s4 + $0x760] sm:$0xff]
        %v5259 = vld [vmem:[%s4 + $0x768] sm:$0xff]
        %v5260 = vld [vmem:[%s4 + $0x770] sm:$0xff]
        %v5261 = vld [vmem:[%s4 + $0x778] sm:$0xff]
        %v5262 = vld [vmem:[%s4 + $0x780] sm:$0xff]
        %v5263 = vld [vmem:[%s4 + $0x788] sm:$0xff]
        %v5264 = vld [vmem:[%s4 + $0x790] sm:$0xff]
        %v5265 = vld [vmem:[%s4 + $0x798] sm:$0xff]
        %v5266 = vld [vmem:[%s4 + $0x7a0] sm:$0xff]
        %v5267 = vld [vmem:[%s4 + $0x7a8] sm:$0xff]
        %v5268 = vld [vmem:[%s4 + $0x7b0] sm:$0xff]
        %v5269 = vld [vmem:[%s4 + $0x7b8] sm:$0xff]
        %v5270 = vld [vmem:[%s4 + $0x7c0] sm:$0xff]
        %v5271 = vld [vmem:[%s4 + $0x7c8] sm:$0xff]
        %v5272 = vld [vmem:[%s4 + $0x7d0] sm:$0xff]
        %v5273 = vld [vmem:[%s4 + $0x7d8] sm:$0xff]
        %v5274 = vld [vmem:[%s4 + $0x7e0] sm:$0xff]
        %v5275 = vld [vmem:[%s4 + $0x7e8] sm:$0xff]
        %v5276 = vld [vmem:[%s4 + $0x7f0] sm:$0xff]
        %v5277 = vld [vmem:[%s4 + $0x7f8] sm:$0xff]
        %v5278 = vld [vmem:[%s4 + $0x800] sm:$0xff]
        %v5279 = vld [vmem:[%s4 + $0x808] sm:$0xff]
        %v5280 = vld [vmem:[%s4 + $0x810] sm:$0xff]
        %v5281 = vld [vmem:[%s4 + $0x818] sm:$0xff]
        %v5282 = vld [vmem:[%s4 + $0x820] sm:$0xff]
        %v5283 = vld [vmem:[%s4 + $0x828] sm:$0xff]
        %v5284 = vld [vmem:[%s4 + $0x830] sm:$0xff]
        %v5285 = vld [vmem:[%s4 + $0x838] sm:$0xff]
        %v5286 = vld [vmem:[%s4 + $0x840] sm:$0xff]
        %v5287 = vld [vmem:[%s4 + $0x848] sm:$0xff]
        %v5288 = vld [vmem:[%s4 + $0x850] sm:$0xff]
        %v5289 = vld [vmem:[%s4 + $0x858] sm:$0xff]
        %v5290 = vld [vmem:[%s4 + $0x860] sm:$0xff]
        %v5291 = vld [vmem:[%s4 + $0x868] sm:$0xff]
        %v5292 = vld [vmem:[%s4 + $0x870] sm:$0xff]
        %v5293 = vld [vmem:[%s4 + $0x878] sm:$0xff]
        %v5294 = vld [vmem:[%s4 + $0x880] sm:$0xff]
        %v5295 = vld [vmem:[%s4 + $0x888] sm:$0xff]
        %v5296 = vld [vmem:[%s4 + $0x890] sm:$0xff]
        %v5297 = vld [vmem:[%s4 + $0x898] sm:$0xff]
        %v5298 = vld [vmem:[%s4 + $0x8a0] sm:$0xff]
        %v5299 = vld [vmem:[%s4 + $0x8a8] sm:$0xff]
        %v5300 = vld [vmem:[%s4 + $0x8b0] sm:$0xff]
        %v5301 = vld [vmem:[%s4 + $0x8b8] sm:$0xff]
        %v5302 = vld [vmem:[%s4 + $0x8c0] sm:$0xff]
        %v5303 = vld [vmem:[%s4 + $0x8c8] sm:$0xff]
        %v5304 = vld [vmem:[%s4 + $0x8d0] sm:$0xff]
        %v5305 = vld [vmem:[%s4 + $0x8d8] sm:$0xff]
        %v5306 = vld [vmem:[%s4 + $0x8e0] sm:$0xff]
        %v5307 = vld [vmem:[%s4 + $0x8e8] sm:$0xff]
        %v5308 = vld [vmem:[%s4 + $0x8f0] sm:$0xff]
        %v5309 = vld [vmem:[%s4 + $0x8f8] sm:$0xff]
        %v5310 = vld [vmem:[%s4 + $0x900] sm:$0xff]
        %v5311 = vld [vmem:[%s4 + $0x908] sm:$0xff]
        %v5312 = vld [vmem:[%s4 + $0x910] sm:$0xff]
        %v5313 = vld [vmem:[%s4 + $0x918] sm:$0xff]
        %v5314 = vld [vmem:[%s4 + $0x920] sm:$0xff]
        %v5315 = vld [vmem:[%s4 + $0x928] sm:$0xff]
        %v5316 = vld [vmem:[%s4 + $0x930] sm:$0xff]
        %v5317 = vld [vmem:[%s4 + $0x938] sm:$0xff]
        %v5318 = vld [vmem:[%s4 + $0x940] sm:$0xff]
        %v5319 = vld [vmem:[%s4 + $0x948] sm:$0xff]
        %v5320 = vld [vmem:[%s4 + $0x950] sm:$0xff]
        %v5321 = vld [vmem:[%s4 + $0x958] sm:$0xff]
        %v5322 = vld [vmem:[%s4 + $0x960] sm:$0xff]
        %v5323 = vld [vmem:[%s4 + $0x968] sm:$0xff]
        %v5324 = vld [vmem:[%s4 + $0x970] sm:$0xff]
        %v5325 = vld [vmem:[%s4 + $0x978] sm:$0xff]
        %v5326 = vld [vmem:[%s4 + $0x980] sm:$0xff]
        %v5327 = vld [vmem:[%s4 + $0x988] sm:$0xff]
        %v5328 = vld [vmem:[%s4 + $0x990] sm:$0xff]
        %v5329 = vld [vmem:[%s4 + $0x998] sm:$0xff]
        %v5330 = vld [vmem:[%s4 + $0x9a0] sm:$0xff]
        %v5331 = vld [vmem:[%s4 + $0x9a8] sm:$0xff]
        %v5332 = vld [vmem:[%s4 + $0x9b0] sm:$0xff]
        %v5333 = vld [vmem:[%s4 + $0x9b8] sm:$0xff]
        %v5334 = vld [vmem:[%s4 + $0x9c0] sm:$0xff]
        %v5335 = vld [vmem:[%s4 + $0x9c8] sm:$0xff]
        %v5336 = vld [vmem:[%s4 + $0x9d0] sm:$0xff]
        %v5337 = vld [vmem:[%s4 + $0x9d8] sm:$0xff]
        %v5338 = vld [vmem:[%s4 + $0x9e0] sm:$0xff]
        %v5339 = vld [vmem:[%s4 + $0x9e8] sm:$0xff]
        %v5340 = vld [vmem:[%s4 + $0x9f0] sm:$0xff]
        %v5341 = vld [vmem:[%s4 + $0x9f8] sm:$0xff]
        %v5342 = vld [vmem:[%s4 + $0xa00] sm:$0xff]
        %v5343 = vld [vmem:[%s4 + $0xa08] sm:$0xff]
        %v5344 = vld [vmem:[%s4 + $0xa10] sm:$0xff]
        %v5345 = vld [vmem:[%s4 + $0xa18] sm:$0xff]
        %v5346 = vld [vmem:[%s4 + $0xa20] sm:$0xff]
        %v5347 = vld [vmem:[%s4 + $0xa28] sm:$0xff]
        %v5348 = vld [vmem:[%s4 + $0xa30] sm:$0xff]
        %v5349 = vld [vmem:[%s4 + $0xa38] sm:$0xff]
        %v5350 = vld [vmem:[%s4 + $0xa40] sm:$0xff]
        %v5351 = vld [vmem:[%s4 + $0xa48] sm:$0xff]
        %v5352 = vld [vmem:[%s4 + $0xa50] sm:$0xff]
        %v5353 = vld [vmem:[%s4 + $0xa58] sm:$0xff]
        %v5354 = vld [vmem:[%s4 + $0xa60] sm:$0xff]
        %v5355 = vld [vmem:[%s4 + $0xa68] sm:$0xff]
        %v5356 = vld [vmem:[%s4 + $0xa70] sm:$0xff]
        %v5357 = vld [vmem:[%s4 + $0xa78] sm:$0xff]
        %v5358 = vld [vmem:[%s4 + $0xa80] sm:$0xff]
        %v5359 = vld [vmem:[%s4 + $0xa88] sm:$0xff]
        %v5360 = vld [vmem:[%s4 + $0xa90] sm:$0xff]
        %v5361 = vld [vmem:[%s4 + $0xa98] sm:$0xff]
        %v5362 = vld [vmem:[%s4 + $0xaa0] sm:$0xff]
        %v5363 = vld [vmem:[%s4 + $0xaa8] sm:$0xff]
        %v5364 = vld [vmem:[%s4 + $0xab0] sm:$0xff]
        %v5365 = vld [vmem:[%s4 + $0xab8] sm:$0xff]
        %v5366 = vld [vmem:[%s4 + $0xac0] sm:$0xff]
        %v5367 = vld [vmem:[%s4 + $0xac8] sm:$0xff]
        %v5368 = vld [vmem:[%s4 + $0xad0] sm:$0xff]
        %v5369 = vld [vmem:[%s4 + $0xad8] sm:$0xff]
        %v5370 = vld [vmem:[%s4 + $0xae0] sm:$0xff]
        %v5371 = vld [vmem:[%s4 + $0xae8] sm:$0xff]
        %v5372 = vld [vmem:[%s4 + $0xaf0] sm:$0xff]
        %v5373 = vld [vmem:[%s4 + $0xaf8] sm:$0xff]
        %v5374 = vld [vmem:[%s4 + $0xb00] sm:$0xff]
        %v5375 = vld [vmem:[%s4 + $0xb08] sm:$0xff]
        %v5376 = vld [vmem:[%s4 + $0xb10] sm:$0xff]
        %v5377 = vld [vmem:[%s4 + $0xb18] sm:$0xff]
        %v5378 = vld [vmem:[%s4 + $0xb20] sm:$0xff]
        %v5379 = vld [vmem:[%s4 + $0xb28] sm:$0xff]
        %v5380 = vld [vmem:[%s4 + $0xb30] sm:$0xff]
        %v5381 = vld [vmem:[%s4 + $0xb38] sm:$0xff]
        %v5382 = vld [vmem:[%s4 + $0xb40] sm:$0xff]
        %v5383 = vld [vmem:[%s4 + $0xb48] sm:$0xff]
        %v5384 = vld [vmem:[%s4 + $0xb50] sm:$0xff]
        %v5385 = vld [vmem:[%s4 + $0xb58] sm:$0xff]
        %v5386 = vld [vmem:[%s4 + $0xb60] sm:$0xff]
        %v5387 = vld [vmem:[%s4 + $0xb68] sm:$0xff]
        %v5388 = vld [vmem:[%s4 + $0xb70] sm:$0xff]
        %v5389 = vld [vmem:[%s4 + $0xb78] sm:$0xff]
        %v5390 = vld [vmem:[%s4 + $0xb80] sm:$0xff]
        %v5391 = vld [vmem:[%s4 + $0xb88] sm:$0xff]
        %v5392 = vld [vmem:[%s4 + $0xb90] sm:$0xff]
        %v5393 = vld [vmem:[%s4 + $0xb98] sm:$0xff]
        %v5394 = vld [vmem:[%s4 + $0xba0] sm:$0xff]
        %v5395 = vld [vmem:[%s4 + $0xba8] sm:$0xff]
        %v5396 = vld [vmem:[%s4 + $0xbb0] sm:$0xff]
        %v5397 = vld [vmem:[%s4 + $0xbb8] sm:$0xff]
        %v5398 = vld [vmem:[%s4 + $0xbc0] sm:$0xff]
        %v5399 = vld [vmem:[%s4 + $0xbc8] sm:$0xff]
        %v5400 = vld [vmem:[%s4 + $0xbd0] sm:$0xff]
        %v5401 = vld [vmem:[%s4 + $0xbd8] sm:$0xff]
        %v5402 = vld [vmem:[%s4 + $0xbe0] sm:$0xff]
        %v5403 = vld [vmem:[%s4 + $0xbe8] sm:$0xff]
        %v5404 = vld [vmem:[%s4 + $0xbf0] sm:$0xff]
        %v5405 = vld [vmem:[%s4 + $0xbf8] sm:$0xff]
        %v5406 = vld [vmem:[%s4 + $0xc00] sm:$0xff]
        %v5407 = vld [vmem:[%s4 + $0xc08] sm:$0xff]
        %v5408 = vld [vmem:[%s4 + $0xc10] sm:$0xff]
        %v5409 = vld [vmem:[%s4 + $0xc18] sm:$0xff]
        %v5410 = vld [vmem:[%s4 + $0xc20] sm:$0xff]
        %v5411 = vld [vmem:[%s4 + $0xc28] sm:$0xff]
        %v5412 = vld [vmem:[%s4 + $0xc30] sm:$0xff]
        %v5413 = vld [vmem:[%s4 + $0xc38] sm:$0xff]
        %v5414 = vld [vmem:[%s4 + $0xc40] sm:$0xff]
        %v5415 = vld [vmem:[%s4 + $0xc48] sm:$0xff]
        %v5416 = vld [vmem:[%s4 + $0xc50] sm:$0xff]
        %v5417 = vld [vmem:[%s4 + $0xc58] sm:$0xff]
        %v5418 = vld [vmem:[%s4 + $0xc60] sm:$0xff]
        %v5419 = vld [vmem:[%s4 + $0xc68] sm:$0xff]
        %v5420 = vld [vmem:[%s4 + $0xc70] sm:$0xff]
        %v5421 = vld [vmem:[%s4 + $0xc78] sm:$0xff]
        %v5422 = vld [vmem:[%s4 + $0xc80] sm:$0xff]
        %v5423 = vld [vmem:[%s4 + $0xc88] sm:$0xff]
        %v5424 = vld [vmem:[%s4 + $0xc90] sm:$0xff]
        %v5425 = vld [vmem:[%s4 + $0xc98] sm:$0xff]
        %v5426 = vld [vmem:[%s4 + $0xca0] sm:$0xff]
        %v5427 = vld [vmem:[%s4 + $0xca8] sm:$0xff]
        %v5428 = vld [vmem:[%s4 + $0xcb0] sm:$0xff]
        %v5429 = vld [vmem:[%s4 + $0xcb8] sm:$0xff]
        %v5430 = vld [vmem:[%s4 + $0xcc0] sm:$0xff]
        %v5431 = vld [vmem:[%s4 + $0xcc8] sm:$0xff]
        %v5432 = vld [vmem:[%s4 + $0xcd0] sm:$0xff]
        %v5433 = vld [vmem:[%s4 + $0xcd8] sm:$0xff]
        %v5434 = vld [vmem:[%s4 + $0xce0] sm:$0xff]
        %v5435 = vld [vmem:[%s4 + $0xce8] sm:$0xff]
        %v5436 = vld [vmem:[%s4 + $0xcf0] sm:$0xff]
        %v5437 = vld [vmem:[%s4 + $0xcf8] sm:$0xff]
        %v5438 = vld [vmem:[%s4 + $0xd00] sm:$0xff]
        %v5439 = vld [vmem:[%s4 + $0xd08] sm:$0xff]
        %v5440 = vld [vmem:[%s4 + $0xd10] sm:$0xff]
        %v5441 = vld [vmem:[%s4 + $0xd18] sm:$0xff]
        %v5442 = vld [vmem:[%s4 + $0xd20] sm:$0xff]
        %v5443 = vld [vmem:[%s4 + $0xd28] sm:$0xff]
        %v5444 = vld [vmem:[%s4 + $0xd30] sm:$0xff]
        %v5445 = vld [vmem:[%s4 + $0xd38] sm:$0xff]
        %v5446 = vld [vmem:[%s4 + $0xd40] sm:$0xff]
        %v5447 = vld [vmem:[%s4 + $0xd48] sm:$0xff]
        %v5448 = vld [vmem:[%s4 + $0xd50] sm:$0xff]
        %v5449 = vld [vmem:[%s4 + $0xd58] sm:$0xff]
        %v5450 = vld [vmem:[%s4 + $0xd60] sm:$0xff]
        %v5451 = vld [vmem:[%s4 + $0xd68] sm:$0xff]
        %v5452 = vld [vmem:[%s4 + $0xd70] sm:$0xff]
        %v5453 = vld [vmem:[%s4 + $0xd78] sm:$0xff]
        %v5454 = vld [vmem:[%s4 + $0xd80] sm:$0xff]
        %v5455 = vld [vmem:[%s4 + $0xd88] sm:$0xff]
        %v5456 = vld [vmem:[%s4 + $0xd90] sm:$0xff]
        %v5457 = vld [vmem:[%s4 + $0xd98] sm:$0xff]
        %v5458 = vld [vmem:[%s4 + $0xda0] sm:$0xff]
        %v5459 = vld [vmem:[%s4 + $0xda8] sm:$0xff]
        %v5460 = vld [vmem:[%s4 + $0xdb0] sm:$0xff]
        %v5461 = vld [vmem:[%s4 + $0xdb8] sm:$0xff]
        %v5462 = vld [vmem:[%s4 + $0xdc0] sm:$0xff]
        %v5463 = vld [vmem:[%s4 + $0xdc8] sm:$0xff]
        %v5464 = vld [vmem:[%s4 + $0xdd0] sm:$0xff]
        %v5465 = vld [vmem:[%s4 + $0xdd8] sm:$0xff]
        %v5466 = vld [vmem:[%s4 + $0xde0] sm:$0xff]
        %v5467 = vld [vmem:[%s4 + $0xde8] sm:$0xff]
        %v5468 = vld [vmem:[%s4 + $0xdf0] sm:$0xff]
        %v5469 = vld [vmem:[%s4 + $0xdf8] sm:$0xff]
        %v5470 = vld [vmem:[%s4 + $0xe00] sm:$0xff]
        %v5471 = vld [vmem:[%s4 + $0xe08] sm:$0xff]
        %v5472 = vld [vmem:[%s4 + $0xe10] sm:$0xff]
        %v5473 = vld [vmem:[%s4 + $0xe18] sm:$0xff]
        %v5474 = vld [vmem:[%s4 + $0xe20] sm:$0xff]
        %v5475 = vld [vmem:[%s4 + $0xe28] sm:$0xff]
        %v5476 = vld [vmem:[%s4 + $0xe30] sm:$0xff]
        %v5477 = vld [vmem:[%s4 + $0xe38] sm:$0xff]
        %v5478 = vld [vmem:[%s4 + $0xe40] sm:$0xff]
        %v5479 = vld [vmem:[%s4 + $0xe48] sm:$0xff]
        %v5480 = vld [vmem:[%s4 + $0xe50] sm:$0xff]
        %v5481 = vld [vmem:[%s4 + $0xe58] sm:$0xff]
        %v5482 = vld [vmem:[%s4 + $0xe60] sm:$0xff]
        %v5483 = vld [vmem:[%s4 + $0xe68] sm:$0xff]
        %v5484 = vld [vmem:[%s4 + $0xe70] sm:$0xff]
        %v5485 = vld [vmem:[%s4 + $0xe78] sm:$0xff]
        %v5486 = vld [vmem:[%s4 + $0xe80] sm:$0xff]
        %v5487 = vld [vmem:[%s4 + $0xe88] sm:$0xff]
        %v5488 = vld [vmem:[%s4 + $0xe90] sm:$0xff]
        %v5489 = vld [vmem:[%s4 + $0xe98] sm:$0xff]
        %v5490 = vld [vmem:[%s4 + $0xea0] sm:$0xff]
        %v5491 = vld [vmem:[%s4 + $0xea8] sm:$0xff]
        %v5492 = vld [vmem:[%s4 + $0xeb0] sm:$0xff]
        %v5493 = vld [vmem:[%s4 + $0xeb8] sm:$0xff]
        %v5494 = vld [vmem:[%s4 + $0xec0] sm:$0xff]
        %v5495 = vld [vmem:[%s4 + $0xec8] sm:$0xff]
        %v5496 = vld [vmem:[%s4 + $0xed0] sm:$0xff]
        %v5497 = vld [vmem:[%s4 + $0xed8] sm:$0xff]
        %v5498 = vld [vmem:[%s4 + $0xee0] sm:$0xff]
        %v5499 = vld [vmem:[%s4 + $0xee8] sm:$0xff]
        %v5500 = vld [vmem:[%s4 + $0xef0] sm:$0xff]
        %v5501 = vld [vmem:[%s4 + $0xef8] sm:$0xff]
        %v5502 = vld [vmem:[%s4 + $0xf00] sm:$0xff]
        %v5503 = vld [vmem:[%s4 + $0xf08] sm:$0xff]
        %v5504 = vld [vmem:[%s4 + $0xf10] sm:$0xff]
        %v5505 = vld [vmem:[%s4 + $0xf18] sm:$0xff]
        %v5506 = vld [vmem:[%s4 + $0xf20] sm:$0xff]
        %v5507 = vld [vmem:[%s4 + $0xf28] sm:$0xff]
        %v5508 = vld [vmem:[%s4 + $0xf30] sm:$0xff]
        %v5509 = vld [vmem:[%s4 + $0xf38] sm:$0xff]
        %v5510 = vld [vmem:[%s4 + $0xf40] sm:$0xff]
        %v5511 = vld [vmem:[%s4 + $0xf48] sm:$0xff]
        %v5512 = vld [vmem:[%s4 + $0xf50] sm:$0xff]
        %v5513 = vld [vmem:[%s4 + $0xf58] sm:$0xff]
        %v5514 = vld [vmem:[%s4 + $0xf60] sm:$0xff]
        %v5515 = vld [vmem:[%s4 + $0xf68] sm:$0xff]
        %v5516 = vld [vmem:[%s4 + $0xf70] sm:$0xff]
        %v5517 = vld [vmem:[%s4 + $0xf78] sm:$0xff]
        %v5518 = vld [vmem:[%s4 + $0xf80] sm:$0xff]
        %v5519 = vld [vmem:[%s4 + $0xf88] sm:$0xff]
        %v5520 = vld [vmem:[%s4 + $0xf90] sm:$0xff]
        %v5521 = vld [vmem:[%s4 + $0xf98] sm:$0xff]
        %v5522 = vld [vmem:[%s4 + $0xfa0] sm:$0xff]
        %v5523 = vld [vmem:[%s4 + $0xfa8] sm:$0xff]
        %v5524 = vld [vmem:[%s4 + $0xfb0] sm:$0xff]
        %v5525 = vld [vmem:[%s4 + $0xfb8] sm:$0xff]
        %v5526 = vld [vmem:[%s4 + $0xfc0] sm:$0xff]
        %v5527 = vld [vmem:[%s4 + $0xfc8] sm:$0xff]
        %v5528 = vld [vmem:[%s4 + $0xfd0] sm:$0xff]
        %v5529 = vld [vmem:[%s4 + $0xfd8] sm:$0xff]
        %v5530 = vld [vmem:[%s4 + $0xfe0] sm:$0xff]
        %v5531 = vld [vmem:[%s4 + $0xfe8] sm:$0xff]
        %v5532 = vld [vmem:[%s4 + $0xff0] sm:$0xff]
        %v5533 = vld [vmem:[%s4 + $0xff8] sm:$0xff]
        %v6046 = vunpack.c.l.b16 %v5022
        %v6047 = vunpack.c.h.b16 %v5022
        %v6048 = vunpack.c.l.b16 %v5023
        %v6049 = vunpack.c.h.b16 %v5023
        %v6050 = vunpack.c.l.b16 %v5024
        %v6051 = vunpack.c.h.b16 %v5024
        %v6052 = vunpack.c.l.b16 %v5025
        %v6053 = vunpack.c.h.b16 %v5025
        %v6054 = vunpack.c.l.b16 %v5026
        %v6055 = vunpack.c.h.b16 %v5026
        %v6056 = vunpack.c.l.b16 %v5027
        %v6057 = vunpack.c.h.b16 %v5027
        %v6058 = vunpack.c.l.b16 %v5028
        %v6059 = vunpack.c.h.b16 %v5028
        %v6060 = vunpack.c.l.b16 %v5029
        %v6061 = vunpack.c.h.b16 %v5029
        %v6062 = vunpack.c.l.b16 %v5030
        %v6063 = vunpack.c.h.b16 %v5030
        %v6064 = vunpack.c.l.b16 %v5031
        %v6065 = vunpack.c.h.b16 %v5031
        %v6066 = vunpack.c.l.b16 %v5032
        %v6067 = vunpack.c.h.b16 %v5032
        %v6068 = vunpack.c.l.b16 %v5033
        %v6069 = vunpack.c.h.b16 %v5033
        %v6070 = vunpack.c.l.b16 %v5034
        %v6071 = vunpack.c.h.b16 %v5034
        %v6072 = vunpack.c.l.b16 %v5035
        %v6073 = vunpack.c.h.b16 %v5035
        %v6074 = vunpack.c.l.b16 %v5036
        %v6075 = vunpack.c.h.b16 %v5036
        %v6076 = vunpack.c.l.b16 %v5037
        %v6077 = vunpack.c.h.b16 %v5037
        %v6078 = vunpack.c.l.b16 %v5038
        %v6079 = vunpack.c.h.b16 %v5038
        %v6080 = vunpack.c.l.b16 %v5039
        %v6081 = vunpack.c.h.b16 %v5039
        %v6082 = vunpack.c.l.b16 %v5040
        %v6083 = vunpack.c.h.b16 %v5040
        %v6084 = vunpack.c.l.b16 %v5041
        %v6085 = vunpack.c.h.b16 %v5041
        %v6086 = vunpack.c.l.b16 %v5042
        %v6087 = vunpack.c.h.b16 %v5042
        %v6088 = vunpack.c.l.b16 %v5043
        %v6089 = vunpack.c.h.b16 %v5043
        %v6090 = vunpack.c.l.b16 %v5044
        %v6091 = vunpack.c.h.b16 %v5044
        %v6092 = vunpack.c.l.b16 %v5045
        %v6093 = vunpack.c.h.b16 %v5045
        %v6094 = vunpack.c.l.b16 %v5046
        %v6095 = vunpack.c.h.b16 %v5046
        %v6096 = vunpack.c.l.b16 %v5047
        %v6097 = vunpack.c.h.b16 %v5047
        %v6098 = vunpack.c.l.b16 %v5048
        %v6099 = vunpack.c.h.b16 %v5048
        %v6100 = vunpack.c.l.b16 %v5049
        %v6101 = vunpack.c.h.b16 %v5049
        %v6102 = vunpack.c.l.b16 %v5050
        %v6103 = vunpack.c.h.b16 %v5050
        %v6104 = vunpack.c.l.b16 %v5051
        %v6105 = vunpack.c.h.b16 %v5051
        %v6106 = vunpack.c.l.b16 %v5052
        %v6107 = vunpack.c.h.b16 %v5052
        %v6108 = vunpack.c.l.b16 %v5053
        %v6109 = vunpack.c.h.b16 %v5053
        %v6110 = vunpack.c.l.b16 %v5054
        %v6111 = vunpack.c.h.b16 %v5054
        %v6112 = vunpack.c.l.b16 %v5055
        %v6113 = vunpack.c.h.b16 %v5055
        %v6114 = vunpack.c.l.b16 %v5056
        %v6115 = vunpack.c.h.b16 %v5056
        %v6116 = vunpack.c.l.b16 %v5057
        %v6117 = vunpack.c.h.b16 %v5057
        %v6118 = vunpack.c.l.b16 %v5058
        %v6119 = vunpack.c.h.b16 %v5058
        %v6120 = vunpack.c.l.b16 %v5059
        %v6121 = vunpack.c.h.b16 %v5059
        %v6122 = vunpack.c.l.b16 %v5060
        %v6123 = vunpack.c.h.b16 %v5060
        %v6124 = vunpack.c.l.b16 %v5061
        %v6125 = vunpack.c.h.b16 %v5061
        %v6126 = vunpack.c.l.b16 %v5062
        %v6127 = vunpack.c.h.b16 %v5062
        %v6128 = vunpack.c.l.b16 %v5063
        %v6129 = vunpack.c.h.b16 %v5063
        %v6130 = vunpack.c.l.b16 %v5064
        %v6131 = vunpack.c.h.b16 %v5064
        %v6132 = vunpack.c.l.b16 %v5065
        %v6133 = vunpack.c.h.b16 %v5065
        %v6134 = vunpack.c.l.b16 %v5066
        %v6135 = vunpack.c.h.b16 %v5066
        %v6136 = vunpack.c.l.b16 %v5067
        %v6137 = vunpack.c.h.b16 %v5067
        %v6138 = vunpack.c.l.b16 %v5068
        %v6139 = vunpack.c.h.b16 %v5068
        %v6140 = vunpack.c.l.b16 %v5069
        %v6141 = vunpack.c.h.b16 %v5069
        %v6142 = vunpack.c.l.b16 %v5070
        %v6143 = vunpack.c.h.b16 %v5070
        %v6144 = vunpack.c.l.b16 %v5071
        %v6145 = vunpack.c.h.b16 %v5071
        %v6146 = vunpack.c.l.b16 %v5072
        %v6147 = vunpack.c.h.b16 %v5072
        %v6148 = vunpack.c.l.b16 %v5073
        %v6149 = vunpack.c.h.b16 %v5073
        %v6150 = vunpack.c.l.b16 %v5074
        %v6151 = vunpack.c.h.b16 %v5074
        %v6152 = vunpack.c.l.b16 %v5075
        %v6153 = vunpack.c.h.b16 %v5075
        %v6154 = vunpack.c.l.b16 %v5076
        %v6155 = vunpack.c.h.b16 %v5076
        %v6156 = vunpack.c.l.b16 %v5077
        %v6157 = vunpack.c.h.b16 %v5077
        %v6158 = vunpack.c.l.b16 %v5078
        %v6159 = vunpack.c.h.b16 %v5078
        %v6160 = vunpack.c.l.b16 %v5079
        %v6161 = vunpack.c.h.b16 %v5079
        %v6162 = vunpack.c.l.b16 %v5080
        %v6163 = vunpack.c.h.b16 %v5080
        %v6164 = vunpack.c.l.b16 %v5081
        %v6165 = vunpack.c.h.b16 %v5081
        %v6166 = vunpack.c.l.b16 %v5082
        %v6167 = vunpack.c.h.b16 %v5082
        %v6168 = vunpack.c.l.b16 %v5083
        %v6169 = vunpack.c.h.b16 %v5083
        %v6170 = vunpack.c.l.b16 %v5084
        %v6171 = vunpack.c.h.b16 %v5084
        %v6172 = vunpack.c.l.b16 %v5085
        %v6173 = vunpack.c.h.b16 %v5085
        %v6174 = vunpack.c.l.b16 %v5086
        %v6175 = vunpack.c.h.b16 %v5086
        %v6176 = vunpack.c.l.b16 %v5087
        %v6177 = vunpack.c.h.b16 %v5087
        %v6178 = vunpack.c.l.b16 %v5088
        %v6179 = vunpack.c.h.b16 %v5088
        %v6180 = vunpack.c.l.b16 %v5089
        %v6181 = vunpack.c.h.b16 %v5089
        %v6182 = vunpack.c.l.b16 %v5090
        %v6183 = vunpack.c.h.b16 %v5090
        %v6184 = vunpack.c.l.b16 %v5091
        %v6185 = vunpack.c.h.b16 %v5091
        %v6186 = vunpack.c.l.b16 %v5092
        %v6187 = vunpack.c.h.b16 %v5092
        %v6188 = vunpack.c.l.b16 %v5093
        %v6189 = vunpack.c.h.b16 %v5093
        %v6190 = vunpack.c.l.b16 %v5094
        %v6191 = vunpack.c.h.b16 %v5094
        %v6192 = vunpack.c.l.b16 %v5095
        %v6193 = vunpack.c.h.b16 %v5095
        %v6194 = vunpack.c.l.b16 %v5096
        %v6195 = vunpack.c.h.b16 %v5096
        %v6196 = vunpack.c.l.b16 %v5097
        %v6197 = vunpack.c.h.b16 %v5097
        %v6198 = vunpack.c.l.b16 %v5098
        %v6199 = vunpack.c.h.b16 %v5098
        %v6200 = vunpack.c.l.b16 %v5099
        %v6201 = vunpack.c.h.b16 %v5099
        %v6202 = vunpack.c.l.b16 %v5100
        %v6203 = vunpack.c.h.b16 %v5100
        %v6204 = vunpack.c.l.b16 %v5101
        %v6205 = vunpack.c.h.b16 %v5101
        %v6206 = vunpack.c.l.b16 %v5102
        %v6207 = vunpack.c.h.b16 %v5102
        %v6208 = vunpack.c.l.b16 %v5103
        %v6209 = vunpack.c.h.b16 %v5103
        %v6210 = vunpack.c.l.b16 %v5104
        %v6211 = vunpack.c.h.b16 %v5104
        %v6212 = vunpack.c.l.b16 %v5105
        %v6213 = vunpack.c.h.b16 %v5105
        %v6214 = vunpack.c.l.b16 %v5106
        %v6215 = vunpack.c.h.b16 %v5106
        %v6216 = vunpack.c.l.b16 %v5107
        %v6217 = vunpack.c.h.b16 %v5107
        %v6218 = vunpack.c.l.b16 %v5108
        %v6219 = vunpack.c.h.b16 %v5108
        %v6220 = vunpack.c.l.b16 %v5109
        %v6221 = vunpack.c.h.b16 %v5109
        %v6222 = vunpack.c.l.b16 %v5110
        %v6223 = vunpack.c.h.b16 %v5110
        %v6224 = vunpack.c.l.b16 %v5111
        %v6225 = vunpack.c.h.b16 %v5111
        %v6226 = vunpack.c.l.b16 %v5112
        %v6227 = vunpack.c.h.b16 %v5112
        %v6228 = vunpack.c.l.b16 %v5113
        %v6229 = vunpack.c.h.b16 %v5113
        %v6230 = vunpack.c.l.b16 %v5114
        %v6231 = vunpack.c.h.b16 %v5114
        %v6232 = vunpack.c.l.b16 %v5115
        %v6233 = vunpack.c.h.b16 %v5115
        %v6234 = vunpack.c.l.b16 %v5116
        %v6235 = vunpack.c.h.b16 %v5116
        %v6236 = vunpack.c.l.b16 %v5117
        %v6237 = vunpack.c.h.b16 %v5117
        %v6238 = vunpack.c.l.b16 %v5118
        %v6239 = vunpack.c.h.b16 %v5118
        %v6240 = vunpack.c.l.b16 %v5119
        %v6241 = vunpack.c.h.b16 %v5119
        %v6242 = vunpack.c.l.b16 %v5120
        %v6243 = vunpack.c.h.b16 %v5120
        %v6244 = vunpack.c.l.b16 %v5121
        %v6245 = vunpack.c.h.b16 %v5121
        %v6246 = vunpack.c.l.b16 %v5122
        %v6247 = vunpack.c.h.b16 %v5122
        %v6248 = vunpack.c.l.b16 %v5123
        %v6249 = vunpack.c.h.b16 %v5123
        %v6250 = vunpack.c.l.b16 %v5124
        %v6251 = vunpack.c.h.b16 %v5124
        %v6252 = vunpack.c.l.b16 %v5125
        %v6253 = vunpack.c.h.b16 %v5125
        %v6254 = vunpack.c.l.b16 %v5126
        %v6255 = vunpack.c.h.b16 %v5126
        %v6256 = vunpack.c.l.b16 %v5127
        %v6257 = vunpack.c.h.b16 %v5127
        %v6258 = vunpack.c.l.b16 %v5128
        %v6259 = vunpack.c.h.b16 %v5128
        %v6260 = vunpack.c.l.b16 %v5129
        %v6261 = vunpack.c.h.b16 %v5129
        %v6262 = vunpack.c.l.b16 %v5130
        %v6263 = vunpack.c.h.b16 %v5130
        %v6264 = vunpack.c.l.b16 %v5131
        %v6265 = vunpack.c.h.b16 %v5131
        %v6266 = vunpack.c.l.b16 %v5132
        %v6267 = vunpack.c.h.b16 %v5132
        %v6268 = vunpack.c.l.b16 %v5133
        %v6269 = vunpack.c.h.b16 %v5133
        %v6270 = vunpack.c.l.b16 %v5134
        %v6271 = vunpack.c.h.b16 %v5134
        %v6272 = vunpack.c.l.b16 %v5135
        %v6273 = vunpack.c.h.b16 %v5135
        %v6274 = vunpack.c.l.b16 %v5136
        %v6275 = vunpack.c.h.b16 %v5136
        %v6276 = vunpack.c.l.b16 %v5137
        %v6277 = vunpack.c.h.b16 %v5137
        %v6278 = vunpack.c.l.b16 %v5138
        %v6279 = vunpack.c.h.b16 %v5138
        %v6280 = vunpack.c.l.b16 %v5139
        %v6281 = vunpack.c.h.b16 %v5139
        %v6282 = vunpack.c.l.b16 %v5140
        %v6283 = vunpack.c.h.b16 %v5140
        %v6284 = vunpack.c.l.b16 %v5141
        %v6285 = vunpack.c.h.b16 %v5141
        %v6286 = vunpack.c.l.b16 %v5142
        %v6287 = vunpack.c.h.b16 %v5142
        %v6288 = vunpack.c.l.b16 %v5143
        %v6289 = vunpack.c.h.b16 %v5143
        %v6290 = vunpack.c.l.b16 %v5144
        %v6291 = vunpack.c.h.b16 %v5144
        %v6292 = vunpack.c.l.b16 %v5145
        %v6293 = vunpack.c.h.b16 %v5145
        %v6294 = vunpack.c.l.b16 %v5146
        %v6295 = vunpack.c.h.b16 %v5146
        %v6296 = vunpack.c.l.b16 %v5147
        %v6297 = vunpack.c.h.b16 %v5147
        %v6298 = vunpack.c.l.b16 %v5148
        %v6299 = vunpack.c.h.b16 %v5148
        %v6300 = vunpack.c.l.b16 %v5149
        %v6301 = vunpack.c.h.b16 %v5149
        %v6302 = vunpack.c.l.b16 %v5150
        %v6303 = vunpack.c.h.b16 %v5150
        %v6304 = vunpack.c.l.b16 %v5151
        %v6305 = vunpack.c.h.b16 %v5151
        %v6306 = vunpack.c.l.b16 %v5152
        %v6307 = vunpack.c.h.b16 %v5152
        %v6308 = vunpack.c.l.b16 %v5153
        %v6309 = vunpack.c.h.b16 %v5153
        %v6310 = vunpack.c.l.b16 %v5154
        %v6311 = vunpack.c.h.b16 %v5154
        %v6312 = vunpack.c.l.b16 %v5155
        %v6313 = vunpack.c.h.b16 %v5155
        %v6314 = vunpack.c.l.b16 %v5156
        %v6315 = vunpack.c.h.b16 %v5156
        %v6316 = vunpack.c.l.b16 %v5157
        %v6317 = vunpack.c.h.b16 %v5157
        %v6318 = vunpack.c.l.b16 %v5158
        %v6319 = vunpack.c.h.b16 %v5158
        %v6320 = vunpack.c.l.b16 %v5159
        %v6321 = vunpack.c.h.b16 %v5159
        %v6322 = vunpack.c.l.b16 %v5160
        %v6323 = vunpack.c.h.b16 %v5160
        %v6324 = vunpack.c.l.b16 %v5161
        %v6325 = vunpack.c.h.b16 %v5161
        %v6326 = vunpack.c.l.b16 %v5162
        %v6327 = vunpack.c.h.b16 %v5162
        %v6328 = vunpack.c.l.b16 %v5163
        %v6329 = vunpack.c.h.b16 %v5163
        %v6330 = vunpack.c.l.b16 %v5164
        %v6331 = vunpack.c.h.b16 %v5164
        %v6332 = vunpack.c.l.b16 %v5165
        %v6333 = vunpack.c.h.b16 %v5165
        %v6334 = vunpack.c.l.b16 %v5166
        %v6335 = vunpack.c.h.b16 %v5166
        %v6336 = vunpack.c.l.b16 %v5167
        %v6337 = vunpack.c.h.b16 %v5167
        %v6338 = vunpack.c.l.b16 %v5168
        %v6339 = vunpack.c.h.b16 %v5168
        %v6340 = vunpack.c.l.b16 %v5169
        %v6341 = vunpack.c.h.b16 %v5169
        %v6342 = vunpack.c.l.b16 %v5170
        %v6343 = vunpack.c.h.b16 %v5170
        %v6344 = vunpack.c.l.b16 %v5171
        %v6345 = vunpack.c.h.b16 %v5171
        %v6346 = vunpack.c.l.b16 %v5172
        %v6347 = vunpack.c.h.b16 %v5172
        %v6348 = vunpack.c.l.b16 %v5173
        %v6349 = vunpack.c.h.b16 %v5173
        %v6350 = vunpack.c.l.b16 %v5174
        %v6351 = vunpack.c.h.b16 %v5174
        %v6352 = vunpack.c.l.b16 %v5175
        %v6353 = vunpack.c.h.b16 %v5175
        %v6354 = vunpack.c.l.b16 %v5176
        %v6355 = vunpack.c.h.b16 %v5176
        %v6356 = vunpack.c.l.b16 %v5177
        %v6357 = vunpack.c.h.b16 %v5177
        %v6358 = vunpack.c.l.b16 %v5178
        %v6359 = vunpack.c.h.b16 %v5178
        %v6360 = vunpack.c.l.b16 %v5179
        %v6361 = vunpack.c.h.b16 %v5179
        %v6362 = vunpack.c.l.b16 %v5180
        %v6363 = vunpack.c.h.b16 %v5180
        %v6364 = vunpack.c.l.b16 %v5181
        %v6365 = vunpack.c.h.b16 %v5181
        %v6366 = vunpack.c.l.b16 %v5182
        %v6367 = vunpack.c.h.b16 %v5182
        %v6368 = vunpack.c.l.b16 %v5183
        %v6369 = vunpack.c.h.b16 %v5183
        %v6370 = vunpack.c.l.b16 %v5184
        %v6371 = vunpack.c.h.b16 %v5184
        %v6372 = vunpack.c.l.b16 %v5185
        %v6373 = vunpack.c.h.b16 %v5185
        %v6374 = vunpack.c.l.b16 %v5186
        %v6375 = vunpack.c.h.b16 %v5186
        %v6376 = vunpack.c.l.b16 %v5187
        %v6377 = vunpack.c.h.b16 %v5187
        %v6378 = vunpack.c.l.b16 %v5188
        %v6379 = vunpack.c.h.b16 %v5188
        %v6380 = vunpack.c.l.b16 %v5189
        %v6381 = vunpack.c.h.b16 %v5189
        %v6382 = vunpack.c.l.b16 %v5190
        %v6383 = vunpack.c.h.b16 %v5190
        %v6384 = vunpack.c.l.b16 %v5191
        %v6385 = vunpack.c.h.b16 %v5191
        %v6386 = vunpack.c.l.b16 %v5192
        %v6387 = vunpack.c.h.b16 %v5192
        %v6388 = vunpack.c.l.b16 %v5193
        %v6389 = vunpack.c.h.b16 %v5193
        %v6390 = vunpack.c.l.b16 %v5194
        %v6391 = vunpack.c.h.b16 %v5194
        %v6392 = vunpack.c.l.b16 %v5195
        %v6393 = vunpack.c.h.b16 %v5195
        %v6394 = vunpack.c.l.b16 %v5196
        %v6395 = vunpack.c.h.b16 %v5196
        %v6396 = vunpack.c.l.b16 %v5197
        %v6397 = vunpack.c.h.b16 %v5197
        %v6398 = vunpack.c.l.b16 %v5198
        %v6399 = vunpack.c.h.b16 %v5198
        %v6400 = vunpack.c.l.b16 %v5199
        %v6401 = vunpack.c.h.b16 %v5199
        %v6402 = vunpack.c.l.b16 %v5200
        %v6403 = vunpack.c.h.b16 %v5200
        %v6404 = vunpack.c.l.b16 %v5201
        %v6405 = vunpack.c.h.b16 %v5201
        %v6406 = vunpack.c.l.b16 %v5202
        %v6407 = vunpack.c.h.b16 %v5202
        %v6408 = vunpack.c.l.b16 %v5203
        %v6409 = vunpack.c.h.b16 %v5203
        %v6410 = vunpack.c.l.b16 %v5204
        %v6411 = vunpack.c.h.b16 %v5204
        %v6412 = vunpack.c.l.b16 %v5205
        %v6413 = vunpack.c.h.b16 %v5205
        %v6414 = vunpack.c.l.b16 %v5206
        %v6415 = vunpack.c.h.b16 %v5206
        %v6416 = vunpack.c.l.b16 %v5207
        %v6417 = vunpack.c.h.b16 %v5207
        %v6418 = vunpack.c.l.b16 %v5208
        %v6419 = vunpack.c.h.b16 %v5208
        %v6420 = vunpack.c.l.b16 %v5209
        %v6421 = vunpack.c.h.b16 %v5209
        %v6422 = vunpack.c.l.b16 %v5210
        %v6423 = vunpack.c.h.b16 %v5210
        %v6424 = vunpack.c.l.b16 %v5211
        %v6425 = vunpack.c.h.b16 %v5211
        %v6426 = vunpack.c.l.b16 %v5212
        %v6427 = vunpack.c.h.b16 %v5212
        %v6428 = vunpack.c.l.b16 %v5213
        %v6429 = vunpack.c.h.b16 %v5213
        %v6430 = vunpack.c.l.b16 %v5214
        %v6431 = vunpack.c.h.b16 %v5214
        %v6432 = vunpack.c.l.b16 %v5215
        %v6433 = vunpack.c.h.b16 %v5215
        %v6434 = vunpack.c.l.b16 %v5216
        %v6435 = vunpack.c.h.b16 %v5216
        %v6436 = vunpack.c.l.b16 %v5217
        %v6437 = vunpack.c.h.b16 %v5217
        %v6438 = vunpack.c.l.b16 %v5218
        %v6439 = vunpack.c.h.b16 %v5218
        %v6440 = vunpack.c.l.b16 %v5219
        %v6441 = vunpack.c.h.b16 %v5219
        %v6442 = vunpack.c.l.b16 %v5220
        %v6443 = vunpack.c.h.b16 %v5220
        %v6444 = vunpack.c.l.b16 %v5221
        %v6445 = vunpack.c.h.b16 %v5221
        %v6446 = vunpack.c.l.b16 %v5222
        %v6447 = vunpack.c.h.b16 %v5222
        %v6448 = vunpack.c.l.b16 %v5223
        %v6449 = vunpack.c.h.b16 %v5223
        %v6450 = vunpack.c.l.b16 %v5224
        %v6451 = vunpack.c.h.b16 %v5224
        %v6452 = vunpack.c.l.b16 %v5225
        %v6453 = vunpack.c.h.b16 %v5225
        %v6454 = vunpack.c.l.b16 %v5226
        %v6455 = vunpack.c.h.b16 %v5226
        %v6456 = vunpack.c.l.b16 %v5227
        %v6457 = vunpack.c.h.b16 %v5227
        %v6458 = vunpack.c.l.b16 %v5228
        %v6459 = vunpack.c.h.b16 %v5228
        %v6460 = vunpack.c.l.b16 %v5229
        %v6461 = vunpack.c.h.b16 %v5229
        %v6462 = vunpack.c.l.b16 %v5230
        %v6463 = vunpack.c.h.b16 %v5230
        %v6464 = vunpack.c.l.b16 %v5231
        %v6465 = vunpack.c.h.b16 %v5231
        %v6466 = vunpack.c.l.b16 %v5232
        %v6467 = vunpack.c.h.b16 %v5232
        %v6468 = vunpack.c.l.b16 %v5233
        %v6469 = vunpack.c.h.b16 %v5233
        %v6470 = vunpack.c.l.b16 %v5234
        %v6471 = vunpack.c.h.b16 %v5234
        %v6472 = vunpack.c.l.b16 %v5235
        %v6473 = vunpack.c.h.b16 %v5235
        %v6474 = vunpack.c.l.b16 %v5236
        %v6475 = vunpack.c.h.b16 %v5236
        %v6476 = vunpack.c.l.b16 %v5237
        %v6477 = vunpack.c.h.b16 %v5237
        %v6478 = vunpack.c.l.b16 %v5238
        %v6479 = vunpack.c.h.b16 %v5238
        %v6480 = vunpack.c.l.b16 %v5239
        %v6481 = vunpack.c.h.b16 %v5239
        %v6482 = vunpack.c.l.b16 %v5240
        %v6483 = vunpack.c.h.b16 %v5240
        %v6484 = vunpack.c.l.b16 %v5241
        %v6485 = vunpack.c.h.b16 %v5241
        %v6486 = vunpack.c.l.b16 %v5242
        %v6487 = vunpack.c.h.b16 %v5242
        %v6488 = vunpack.c.l.b16 %v5243
        %v6489 = vunpack.c.h.b16 %v5243
        %v6490 = vunpack.c.l.b16 %v5244
        %v6491 = vunpack.c.h.b16 %v5244
        %v6492 = vunpack.c.l.b16 %v5245
        %v6493 = vunpack.c.h.b16 %v5245
        %v6494 = vunpack.c.l.b16 %v5246
        %v6495 = vunpack.c.h.b16 %v5246
        %v6496 = vunpack.c.l.b16 %v5247
        %v6497 = vunpack.c.h.b16 %v5247
        %v6498 = vunpack.c.l.b16 %v5248
        %v6499 = vunpack.c.h.b16 %v5248
        %v6500 = vunpack.c.l.b16 %v5249
        %v6501 = vunpack.c.h.b16 %v5249
        %v6502 = vunpack.c.l.b16 %v5250
        %v6503 = vunpack.c.h.b16 %v5250
        %v6504 = vunpack.c.l.b16 %v5251
        %v6505 = vunpack.c.h.b16 %v5251
        %v6506 = vunpack.c.l.b16 %v5252
        %v6507 = vunpack.c.h.b16 %v5252
        %v6508 = vunpack.c.l.b16 %v5253
        %v6509 = vunpack.c.h.b16 %v5253
        %v6510 = vunpack.c.l.b16 %v5254
        %v6511 = vunpack.c.h.b16 %v5254
        %v6512 = vunpack.c.l.b16 %v5255
        %v6513 = vunpack.c.h.b16 %v5255
        %v6514 = vunpack.c.l.b16 %v5256
        %v6515 = vunpack.c.h.b16 %v5256
        %v6516 = vunpack.c.l.b16 %v5257
        %v6517 = vunpack.c.h.b16 %v5257
        %v6518 = vunpack.c.l.b16 %v5258
        %v6519 = vunpack.c.h.b16 %v5258
        %v6520 = vunpack.c.l.b16 %v5259
        %v6521 = vunpack.c.h.b16 %v5259
        %v6522 = vunpack.c.l.b16 %v5260
        %v6523 = vunpack.c.h.b16 %v5260
        %v6524 = vunpack.c.l.b16 %v5261
        %v6525 = vunpack.c.h.b16 %v5261
        %v6526 = vunpack.c.l.b16 %v5262
        %v6527 = vunpack.c.h.b16 %v5262
        %v6528 = vunpack.c.l.b16 %v5263
        %v6529 = vunpack.c.h.b16 %v5263
        %v6530 = vunpack.c.l.b16 %v5264
        %v6531 = vunpack.c.h.b16 %v5264
        %v6532 = vunpack.c.l.b16 %v5265
        %v6533 = vunpack.c.h.b16 %v5265
        %v6534 = vunpack.c.l.b16 %v5266
        %v6535 = vunpack.c.h.b16 %v5266
        %v6536 = vunpack.c.l.b16 %v5267
        %v6537 = vunpack.c.h.b16 %v5267
        %v6538 = vunpack.c.l.b16 %v5268
        %v6539 = vunpack.c.h.b16 %v5268
        %v6540 = vunpack.c.l.b16 %v5269
        %v6541 = vunpack.c.h.b16 %v5269
        %v6542 = vunpack.c.l.b16 %v5270
        %v6543 = vunpack.c.h.b16 %v5270
        %v6544 = vunpack.c.l.b16 %v5271
        %v6545 = vunpack.c.h.b16 %v5271
        %v6546 = vunpack.c.l.b16 %v5272
        %v6547 = vunpack.c.h.b16 %v5272
        %v6548 = vunpack.c.l.b16 %v5273
        %v6549 = vunpack.c.h.b16 %v5273
        %v6550 = vunpack.c.l.b16 %v5274
        %v6551 = vunpack.c.h.b16 %v5274
        %v6552 = vunpack.c.l.b16 %v5275
        %v6553 = vunpack.c.h.b16 %v5275
        %v6554 = vunpack.c.l.b16 %v5276
        %v6555 = vunpack.c.h.b16 %v5276
        %v6556 = vunpack.c.l.b16 %v5277
        %v6557 = vunpack.c.h.b16 %v5277
        %v6558 = vunpack.c.l.b16 %v5278
        %v6559 = vunpack.c.h.b16 %v5278
        %v6560 = vunpack.c.l.b16 %v5279
        %v6561 = vunpack.c.h.b16 %v5279
        %v6562 = vunpack.c.l.b16 %v5280
        %v6563 = vunpack.c.h.b16 %v5280
        %v6564 = vunpack.c.l.b16 %v5281
        %v6565 = vunpack.c.h.b16 %v5281
        %v6566 = vunpack.c.l.b16 %v5282
        %v6567 = vunpack.c.h.b16 %v5282
        %v6568 = vunpack.c.l.b16 %v5283
        %v6569 = vunpack.c.h.b16 %v5283
        %v6570 = vunpack.c.l.b16 %v5284
        %v6571 = vunpack.c.h.b16 %v5284
        %v6572 = vunpack.c.l.b16 %v5285
        %v6573 = vunpack.c.h.b16 %v5285
        %v6574 = vunpack.c.l.b16 %v5286
        %v6575 = vunpack.c.h.b16 %v5286
        %v6576 = vunpack.c.l.b16 %v5287
        %v6577 = vunpack.c.h.b16 %v5287
        %v6578 = vunpack.c.l.b16 %v5288
        %v6579 = vunpack.c.h.b16 %v5288
        %v6580 = vunpack.c.l.b16 %v5289
        %v6581 = vunpack.c.h.b16 %v5289
        %v6582 = vunpack.c.l.b16 %v5290
        %v6583 = vunpack.c.h.b16 %v5290
        %v6584 = vunpack.c.l.b16 %v5291
        %v6585 = vunpack.c.h.b16 %v5291
        %v6586 = vunpack.c.l.b16 %v5292
        %v6587 = vunpack.c.h.b16 %v5292
        %v6588 = vunpack.c.l.b16 %v5293
        %v6589 = vunpack.c.h.b16 %v5293
        %v6590 = vunpack.c.l.b16 %v5294
        %v6591 = vunpack.c.h.b16 %v5294
        %v6592 = vunpack.c.l.b16 %v5295
        %v6593 = vunpack.c.h.b16 %v5295
        %v6594 = vunpack.c.l.b16 %v5296
        %v6595 = vunpack.c.h.b16 %v5296
        %v6596 = vunpack.c.l.b16 %v5297
        %v6597 = vunpack.c.h.b16 %v5297
        %v6598 = vunpack.c.l.b16 %v5298
        %v6599 = vunpack.c.h.b16 %v5298
        %v6600 = vunpack.c.l.b16 %v5299
        %v6601 = vunpack.c.h.b16 %v5299
        %v6602 = vunpack.c.l.b16 %v5300
        %v6603 = vunpack.c.h.b16 %v5300
        %v6604 = vunpack.c.l.b16 %v5301
        %v6605 = vunpack.c.h.b16 %v5301
        %v6606 = vunpack.c.l.b16 %v5302
        %v6607 = vunpack.c.h.b16 %v5302
        %v6608 = vunpack.c.l.b16 %v5303
        %v6609 = vunpack.c.h.b16 %v5303
        %v6610 = vunpack.c.l.b16 %v5304
        %v6611 = vunpack.c.h.b16 %v5304
        %v6612 = vunpack.c.l.b16 %v5305
        %v6613 = vunpack.c.h.b16 %v5305
        %v6614 = vunpack.c.l.b16 %v5306
        %v6615 = vunpack.c.h.b16 %v5306
        %v6616 = vunpack.c.l.b16 %v5307
        %v6617 = vunpack.c.h.b16 %v5307
        %v6618 = vunpack.c.l.b16 %v5308
        %v6619 = vunpack.c.h.b16 %v5308
        %v6620 = vunpack.c.l.b16 %v5309
        %v6621 = vunpack.c.h.b16 %v5309
        %v6622 = vunpack.c.l.b16 %v5310
        %v6623 = vunpack.c.h.b16 %v5310
        %v6624 = vunpack.c.l.b16 %v5311
        %v6625 = vunpack.c.h.b16 %v5311
        %v6626 = vunpack.c.l.b16 %v5312
        %v6627 = vunpack.c.h.b16 %v5312
        %v6628 = vunpack.c.l.b16 %v5313
        %v6629 = vunpack.c.h.b16 %v5313
        %v6630 = vunpack.c.l.b16 %v5314
        %v6631 = vunpack.c.h.b16 %v5314
        %v6632 = vunpack.c.l.b16 %v5315
        %v6633 = vunpack.c.h.b16 %v5315
        %v6634 = vunpack.c.l.b16 %v5316
        %v6635 = vunpack.c.h.b16 %v5316
        %v6636 = vunpack.c.l.b16 %v5317
        %v6637 = vunpack.c.h.b16 %v5317
        %v6638 = vunpack.c.l.b16 %v5318
        %v6639 = vunpack.c.h.b16 %v5318
        %v6640 = vunpack.c.l.b16 %v5319
        %v6641 = vunpack.c.h.b16 %v5319
        %v6642 = vunpack.c.l.b16 %v5320
        %v6643 = vunpack.c.h.b16 %v5320
        %v6644 = vunpack.c.l.b16 %v5321
        %v6645 = vunpack.c.h.b16 %v5321
        %v6646 = vunpack.c.l.b16 %v5322
        %v6647 = vunpack.c.h.b16 %v5322
        %v6648 = vunpack.c.l.b16 %v5323
        %v6649 = vunpack.c.h.b16 %v5323
        %v6650 = vunpack.c.l.b16 %v5324
        %v6651 = vunpack.c.h.b16 %v5324
        %v6652 = vunpack.c.l.b16 %v5325
        %v6653 = vunpack.c.h.b16 %v5325
        %v6654 = vunpack.c.l.b16 %v5326
        %v6655 = vunpack.c.h.b16 %v5326
        %v6656 = vunpack.c.l.b16 %v5327
        %v6657 = vunpack.c.h.b16 %v5327
        %v6658 = vunpack.c.l.b16 %v5328
        %v6659 = vunpack.c.h.b16 %v5328
        %v6660 = vunpack.c.l.b16 %v5329
        %v6661 = vunpack.c.h.b16 %v5329
        %v6662 = vunpack.c.l.b16 %v5330
        %v6663 = vunpack.c.h.b16 %v5330
        %v6664 = vunpack.c.l.b16 %v5331
        %v6665 = vunpack.c.h.b16 %v5331
        %v6666 = vunpack.c.l.b16 %v5332
        %v6667 = vunpack.c.h.b16 %v5332
        %v6668 = vunpack.c.l.b16 %v5333
        %v6669 = vunpack.c.h.b16 %v5333
        %v6670 = vunpack.c.l.b16 %v5334
        %v6671 = vunpack.c.h.b16 %v5334
        %v6672 = vunpack.c.l.b16 %v5335
        %v6673 = vunpack.c.h.b16 %v5335
        %v6674 = vunpack.c.l.b16 %v5336
        %v6675 = vunpack.c.h.b16 %v5336
        %v6676 = vunpack.c.l.b16 %v5337
        %v6677 = vunpack.c.h.b16 %v5337
        %v6678 = vunpack.c.l.b16 %v5338
        %v6679 = vunpack.c.h.b16 %v5338
        %v6680 = vunpack.c.l.b16 %v5339
        %v6681 = vunpack.c.h.b16 %v5339
        %v6682 = vunpack.c.l.b16 %v5340
        %v6683 = vunpack.c.h.b16 %v5340
        %v6684 = vunpack.c.l.b16 %v5341
        %v6685 = vunpack.c.h.b16 %v5341
        %v6686 = vunpack.c.l.b16 %v5342
        %v6687 = vunpack.c.h.b16 %v5342
        %v6688 = vunpack.c.l.b16 %v5343
        %v6689 = vunpack.c.h.b16 %v5343
        %v6690 = vunpack.c.l.b16 %v5344
        %v6691 = vunpack.c.h.b16 %v5344
        %v6692 = vunpack.c.l.b16 %v5345
        %v6693 = vunpack.c.h.b16 %v5345
        %v6694 = vunpack.c.l.b16 %v5346
        %v6695 = vunpack.c.h.b16 %v5346
        %v6696 = vunpack.c.l.b16 %v5347
        %v6697 = vunpack.c.h.b16 %v5347
        %v6698 = vunpack.c.l.b16 %v5348
        %v6699 = vunpack.c.h.b16 %v5348
        %v6700 = vunpack.c.l.b16 %v5349
        %v6701 = vunpack.c.h.b16 %v5349
        %v6702 = vunpack.c.l.b16 %v5350
        %v6703 = vunpack.c.h.b16 %v5350
        %v6704 = vunpack.c.l.b16 %v5351
        %v6705 = vunpack.c.h.b16 %v5351
        %v6706 = vunpack.c.l.b16 %v5352
        %v6707 = vunpack.c.h.b16 %v5352
        %v6708 = vunpack.c.l.b16 %v5353
        %v6709 = vunpack.c.h.b16 %v5353
        %v6710 = vunpack.c.l.b16 %v5354
        %v6711 = vunpack.c.h.b16 %v5354
        %v6712 = vunpack.c.l.b16 %v5355
        %v6713 = vunpack.c.h.b16 %v5355
        %v6714 = vunpack.c.l.b16 %v5356
        %v6715 = vunpack.c.h.b16 %v5356
        %v6716 = vunpack.c.l.b16 %v5357
        %v6717 = vunpack.c.h.b16 %v5357
        %v6718 = vunpack.c.l.b16 %v5358
        %v6719 = vunpack.c.h.b16 %v5358
        %v6720 = vunpack.c.l.b16 %v5359
        %v6721 = vunpack.c.h.b16 %v5359
        %v6722 = vunpack.c.l.b16 %v5360
        %v6723 = vunpack.c.h.b16 %v5360
        %v6724 = vunpack.c.l.b16 %v5361
        %v6725 = vunpack.c.h.b16 %v5361
        %v6726 = vunpack.c.l.b16 %v5362
        %v6727 = vunpack.c.h.b16 %v5362
        %v6728 = vunpack.c.l.b16 %v5363
        %v6729 = vunpack.c.h.b16 %v5363
        %v6730 = vunpack.c.l.b16 %v5364
        %v6731 = vunpack.c.h.b16 %v5364
        %v6732 = vunpack.c.l.b16 %v5365
        %v6733 = vunpack.c.h.b16 %v5365
        %v6734 = vunpack.c.l.b16 %v5366
        %v6735 = vunpack.c.h.b16 %v5366
        %v6736 = vunpack.c.l.b16 %v5367
        %v6737 = vunpack.c.h.b16 %v5367
        %v6738 = vunpack.c.l.b16 %v5368
        %v6739 = vunpack.c.h.b16 %v5368
        %v6740 = vunpack.c.l.b16 %v5369
        %v6741 = vunpack.c.h.b16 %v5369
        %v6742 = vunpack.c.l.b16 %v5370
        %v6743 = vunpack.c.h.b16 %v5370
        %v6744 = vunpack.c.l.b16 %v5371
        %v6745 = vunpack.c.h.b16 %v5371
        %v6746 = vunpack.c.l.b16 %v5372
        %v6747 = vunpack.c.h.b16 %v5372
        %v6748 = vunpack.c.l.b16 %v5373
        %v6749 = vunpack.c.h.b16 %v5373
        %v6750 = vunpack.c.l.b16 %v5374
        %v6751 = vunpack.c.h.b16 %v5374
        %v6752 = vunpack.c.l.b16 %v5375
        %v6753 = vunpack.c.h.b16 %v5375
        %v6754 = vunpack.c.l.b16 %v5376
        %v6755 = vunpack.c.h.b16 %v5376
        %v6756 = vunpack.c.l.b16 %v5377
        %v6757 = vunpack.c.h.b16 %v5377
        %v6758 = vunpack.c.l.b16 %v5378
        %v6759 = vunpack.c.h.b16 %v5378
        %v6760 = vunpack.c.l.b16 %v5379
        %v6761 = vunpack.c.h.b16 %v5379
        %v6762 = vunpack.c.l.b16 %v5380
        %v6763 = vunpack.c.h.b16 %v5380
        %v6764 = vunpack.c.l.b16 %v5381
        %v6765 = vunpack.c.h.b16 %v5381
        %v6766 = vunpack.c.l.b16 %v5382
        %v6767 = vunpack.c.h.b16 %v5382
        %v6768 = vunpack.c.l.b16 %v5383
        %v6769 = vunpack.c.h.b16 %v5383
        %v6770 = vunpack.c.l.b16 %v5384
        %v6771 = vunpack.c.h.b16 %v5384
        %v6772 = vunpack.c.l.b16 %v5385
        %v6773 = vunpack.c.h.b16 %v5385
        %v6774 = vunpack.c.l.b16 %v5386
        %v6775 = vunpack.c.h.b16 %v5386
        %v6776 = vunpack.c.l.b16 %v5387
        %v6777 = vunpack.c.h.b16 %v5387
        %v6778 = vunpack.c.l.b16 %v5388
        %v6779 = vunpack.c.h.b16 %v5388
        %v6780 = vunpack.c.l.b16 %v5389
        %v6781 = vunpack.c.h.b16 %v5389
        %v6782 = vunpack.c.l.b16 %v5390
        %v6783 = vunpack.c.h.b16 %v5390
        %v6784 = vunpack.c.l.b16 %v5391
        %v6785 = vunpack.c.h.b16 %v5391
        %v6786 = vunpack.c.l.b16 %v5392
        %v6787 = vunpack.c.h.b16 %v5392
        %v6788 = vunpack.c.l.b16 %v5393
        %v6789 = vunpack.c.h.b16 %v5393
        %v6790 = vunpack.c.l.b16 %v5394
        %v6791 = vunpack.c.h.b16 %v5394
        %v6792 = vunpack.c.l.b16 %v5395
        %v6793 = vunpack.c.h.b16 %v5395
        %v6794 = vunpack.c.l.b16 %v5396
        %v6795 = vunpack.c.h.b16 %v5396
        %v6796 = vunpack.c.l.b16 %v5397
        %v6797 = vunpack.c.h.b16 %v5397
        %v6798 = vunpack.c.l.b16 %v5398
        %v6799 = vunpack.c.h.b16 %v5398
        %v6800 = vunpack.c.l.b16 %v5399
        %v6801 = vunpack.c.h.b16 %v5399
        %v6802 = vunpack.c.l.b16 %v5400
        %v6803 = vunpack.c.h.b16 %v5400
        %v6804 = vunpack.c.l.b16 %v5401
        %v6805 = vunpack.c.h.b16 %v5401
        %v6806 = vunpack.c.l.b16 %v5402
        %v6807 = vunpack.c.h.b16 %v5402
        %v6808 = vunpack.c.l.b16 %v5403
        %v6809 = vunpack.c.h.b16 %v5403
        %v6810 = vunpack.c.l.b16 %v5404
        %v6811 = vunpack.c.h.b16 %v5404
        %v6812 = vunpack.c.l.b16 %v5405
        %v6813 = vunpack.c.h.b16 %v5405
        %v6814 = vunpack.c.l.b16 %v5406
        %v6815 = vunpack.c.h.b16 %v5406
        %v6816 = vunpack.c.l.b16 %v5407
        %v6817 = vunpack.c.h.b16 %v5407
        %v6818 = vunpack.c.l.b16 %v5408
        %v6819 = vunpack.c.h.b16 %v5408
        %v6820 = vunpack.c.l.b16 %v5409
        %v6821 = vunpack.c.h.b16 %v5409
        %v6822 = vunpack.c.l.b16 %v5410
        %v6823 = vunpack.c.h.b16 %v5410
        %v6824 = vunpack.c.l.b16 %v5411
        %v6825 = vunpack.c.h.b16 %v5411
        %v6826 = vunpack.c.l.b16 %v5412
        %v6827 = vunpack.c.h.b16 %v5412
        %v6828 = vunpack.c.l.b16 %v5413
        %v6829 = vunpack.c.h.b16 %v5413
        %v6830 = vunpack.c.l.b16 %v5414
        %v6831 = vunpack.c.h.b16 %v5414
        %v6832 = vunpack.c.l.b16 %v5415
        %v6833 = vunpack.c.h.b16 %v5415
        %v6834 = vunpack.c.l.b16 %v5416
        %v6835 = vunpack.c.h.b16 %v5416
        %v6836 = vunpack.c.l.b16 %v5417
        %v6837 = vunpack.c.h.b16 %v5417
        %v6838 = vunpack.c.l.b16 %v5418
        %v6839 = vunpack.c.h.b16 %v5418
        %v6840 = vunpack.c.l.b16 %v5419
        %v6841 = vunpack.c.h.b16 %v5419
        %v6842 = vunpack.c.l.b16 %v5420
        %v6843 = vunpack.c.h.b16 %v5420
        %v6844 = vunpack.c.l.b16 %v5421
        %v6845 = vunpack.c.h.b16 %v5421
        %v6846 = vunpack.c.l.b16 %v5422
        %v6847 = vunpack.c.h.b16 %v5422
        %v6848 = vunpack.c.l.b16 %v5423
        %v6849 = vunpack.c.h.b16 %v5423
        %v6850 = vunpack.c.l.b16 %v5424
        %v6851 = vunpack.c.h.b16 %v5424
        %v6852 = vunpack.c.l.b16 %v5425
        %v6853 = vunpack.c.h.b16 %v5425
        %v6854 = vunpack.c.l.b16 %v5426
        %v6855 = vunpack.c.h.b16 %v5426
        %v6856 = vunpack.c.l.b16 %v5427
        %v6857 = vunpack.c.h.b16 %v5427
        %v6858 = vunpack.c.l.b16 %v5428
        %v6859 = vunpack.c.h.b16 %v5428
        %v6860 = vunpack.c.l.b16 %v5429
        %v6861 = vunpack.c.h.b16 %v5429
        %v6862 = vunpack.c.l.b16 %v5430
        %v6863 = vunpack.c.h.b16 %v5430
        %v6864 = vunpack.c.l.b16 %v5431
        %v6865 = vunpack.c.h.b16 %v5431
        %v6866 = vunpack.c.l.b16 %v5432
        %v6867 = vunpack.c.h.b16 %v5432
        %v6868 = vunpack.c.l.b16 %v5433
        %v6869 = vunpack.c.h.b16 %v5433
        %v6870 = vunpack.c.l.b16 %v5434
        %v6871 = vunpack.c.h.b16 %v5434
        %v6872 = vunpack.c.l.b16 %v5435
        %v6873 = vunpack.c.h.b16 %v5435
        %v6874 = vunpack.c.l.b16 %v5436
        %v6875 = vunpack.c.h.b16 %v5436
        %v6876 = vunpack.c.l.b16 %v5437
        %v6877 = vunpack.c.h.b16 %v5437
        %v6878 = vunpack.c.l.b16 %v5438
        %v6879 = vunpack.c.h.b16 %v5438
        %v6880 = vunpack.c.l.b16 %v5439
        %v6881 = vunpack.c.h.b16 %v5439
        %v6882 = vunpack.c.l.b16 %v5440
        %v6883 = vunpack.c.h.b16 %v5440
        %v6884 = vunpack.c.l.b16 %v5441
        %v6885 = vunpack.c.h.b16 %v5441
        %v6886 = vunpack.c.l.b16 %v5442
        %v6887 = vunpack.c.h.b16 %v5442
        %v6888 = vunpack.c.l.b16 %v5443
        %v6889 = vunpack.c.h.b16 %v5443
        %v6890 = vunpack.c.l.b16 %v5444
        %v6891 = vunpack.c.h.b16 %v5444
        %v6892 = vunpack.c.l.b16 %v5445
        %v6893 = vunpack.c.h.b16 %v5445
        %v6894 = vunpack.c.l.b16 %v5446
        %v6895 = vunpack.c.h.b16 %v5446
        %v6896 = vunpack.c.l.b16 %v5447
        %v6897 = vunpack.c.h.b16 %v5447
        %v6898 = vunpack.c.l.b16 %v5448
        %v6899 = vunpack.c.h.b16 %v5448
        %v6900 = vunpack.c.l.b16 %v5449
        %v6901 = vunpack.c.h.b16 %v5449
        %v6902 = vunpack.c.l.b16 %v5450
        %v6903 = vunpack.c.h.b16 %v5450
        %v6904 = vunpack.c.l.b16 %v5451
        %v6905 = vunpack.c.h.b16 %v5451
        %v6906 = vunpack.c.l.b16 %v5452
        %v6907 = vunpack.c.h.b16 %v5452
        %v6908 = vunpack.c.l.b16 %v5453
        %v6909 = vunpack.c.h.b16 %v5453
        %v6910 = vunpack.c.l.b16 %v5454
        %v6911 = vunpack.c.h.b16 %v5454
        %v6912 = vunpack.c.l.b16 %v5455
        %v6913 = vunpack.c.h.b16 %v5455
        %v6914 = vunpack.c.l.b16 %v5456
        %v6915 = vunpack.c.h.b16 %v5456
        %v6916 = vunpack.c.l.b16 %v5457
        %v6917 = vunpack.c.h.b16 %v5457
        %v6918 = vunpack.c.l.b16 %v5458
        %v6919 = vunpack.c.h.b16 %v5458
        %v6920 = vunpack.c.l.b16 %v5459
        %v6921 = vunpack.c.h.b16 %v5459
        %v6922 = vunpack.c.l.b16 %v5460
        %v6923 = vunpack.c.h.b16 %v5460
        %v6924 = vunpack.c.l.b16 %v5461
        %v6925 = vunpack.c.h.b16 %v5461
        %v6926 = vunpack.c.l.b16 %v5462
        %v6927 = vunpack.c.h.b16 %v5462
        %v6928 = vunpack.c.l.b16 %v5463
        %v6929 = vunpack.c.h.b16 %v5463
        %v6930 = vunpack.c.l.b16 %v5464
        %v6931 = vunpack.c.h.b16 %v5464
        %v6932 = vunpack.c.l.b16 %v5465
        %v6933 = vunpack.c.h.b16 %v5465
        %v6934 = vunpack.c.l.b16 %v5466
        %v6935 = vunpack.c.h.b16 %v5466
        %v6936 = vunpack.c.l.b16 %v5467
        %v6937 = vunpack.c.h.b16 %v5467
        %v6938 = vunpack.c.l.b16 %v5468
        %v6939 = vunpack.c.h.b16 %v5468
        %v6940 = vunpack.c.l.b16 %v5469
        %v6941 = vunpack.c.h.b16 %v5469
        %v6942 = vunpack.c.l.b16 %v5470
        %v6943 = vunpack.c.h.b16 %v5470
        %v6944 = vunpack.c.l.b16 %v5471
        %v6945 = vunpack.c.h.b16 %v5471
        %v6946 = vunpack.c.l.b16 %v5472
        %v6947 = vunpack.c.h.b16 %v5472
        %v6948 = vunpack.c.l.b16 %v5473
        %v6949 = vunpack.c.h.b16 %v5473
        %v6950 = vunpack.c.l.b16 %v5474
        %v6951 = vunpack.c.h.b16 %v5474
        %v6952 = vunpack.c.l.b16 %v5475
        %v6953 = vunpack.c.h.b16 %v5475
        %v6954 = vunpack.c.l.b16 %v5476
        %v6955 = vunpack.c.h.b16 %v5476
        %v6956 = vunpack.c.l.b16 %v5477
        %v6957 = vunpack.c.h.b16 %v5477
        %v6958 = vunpack.c.l.b16 %v5478
        %v6959 = vunpack.c.h.b16 %v5478
        %v6960 = vunpack.c.l.b16 %v5479
        %v6961 = vunpack.c.h.b16 %v5479
        %v6962 = vunpack.c.l.b16 %v5480
        %v6963 = vunpack.c.h.b16 %v5480
        %v6964 = vunpack.c.l.b16 %v5481
        %v6965 = vunpack.c.h.b16 %v5481
        %v6966 = vunpack.c.l.b16 %v5482
        %v6967 = vunpack.c.h.b16 %v5482
        %v6968 = vunpack.c.l.b16 %v5483
        %v6969 = vunpack.c.h.b16 %v5483
        %v6970 = vunpack.c.l.b16 %v5484
        %v6971 = vunpack.c.h.b16 %v5484
        %v6972 = vunpack.c.l.b16 %v5485
        %v6973 = vunpack.c.h.b16 %v5485
        %v6974 = vunpack.c.l.b16 %v5486
        %v6975 = vunpack.c.h.b16 %v5486
        %v6976 = vunpack.c.l.b16 %v5487
        %v6977 = vunpack.c.h.b16 %v5487
        %v6978 = vunpack.c.l.b16 %v5488
        %v6979 = vunpack.c.h.b16 %v5488
        %v6980 = vunpack.c.l.b16 %v5489
        %v6981 = vunpack.c.h.b16 %v5489
        %v6982 = vunpack.c.l.b16 %v5490
        %v6983 = vunpack.c.h.b16 %v5490
        %v6984 = vunpack.c.l.b16 %v5491
        %v6985 = vunpack.c.h.b16 %v5491
        %v6986 = vunpack.c.l.b16 %v5492
        %v6987 = vunpack.c.h.b16 %v5492
        %v6988 = vunpack.c.l.b16 %v5493
        %v6989 = vunpack.c.h.b16 %v5493
        %v6990 = vunpack.c.l.b16 %v5494
        %v6991 = vunpack.c.h.b16 %v5494
        %v6992 = vunpack.c.l.b16 %v5495
        %v6993 = vunpack.c.h.b16 %v5495
        %v6994 = vunpack.c.l.b16 %v5496
        %v6995 = vunpack.c.h.b16 %v5496
        %v6996 = vunpack.c.l.b16 %v5497
        %v6997 = vunpack.c.h.b16 %v5497
        %v6998 = vunpack.c.l.b16 %v5498
        %v6999 = vunpack.c.h.b16 %v5498
        %v7000 = vunpack.c.l.b16 %v5499
        %v7001 = vunpack.c.h.b16 %v5499
        %v7002 = vunpack.c.l.b16 %v5500
        %v7003 = vunpack.c.h.b16 %v5500
        %v7004 = vunpack.c.l.b16 %v5501
        %v7005 = vunpack.c.h.b16 %v5501
        %v7006 = vunpack.c.l.b16 %v5502
        %v7007 = vunpack.c.h.b16 %v5502
        %v7008 = vunpack.c.l.b16 %v5503
        %v7009 = vunpack.c.h.b16 %v5503
        %v7010 = vunpack.c.l.b16 %v5504
        %v7011 = vunpack.c.h.b16 %v5504
        %v7012 = vunpack.c.l.b16 %v5505
        %v7013 = vunpack.c.h.b16 %v5505
        %v7014 = vunpack.c.l.b16 %v5506
        %v7015 = vunpack.c.h.b16 %v5506
        %v7016 = vunpack.c.l.b16 %v5507
        %v7017 = vunpack.c.h.b16 %v5507
        %v7018 = vunpack.c.l.b16 %v5508
        %v7019 = vunpack.c.h.b16 %v5508
        %v7020 = vunpack.c.l.b16 %v5509
        %v7021 = vunpack.c.h.b16 %v5509
        %v7022 = vunpack.c.l.b16 %v5510
        %v7023 = vunpack.c.h.b16 %v5510
        %v7024 = vunpack.c.l.b16 %v5511
        %v7025 = vunpack.c.h.b16 %v5511
        %v7026 = vunpack.c.l.b16 %v5512
        %v7027 = vunpack.c.h.b16 %v5512
        %v7028 = vunpack.c.l.b16 %v5513
        %v7029 = vunpack.c.h.b16 %v5513
        %v7030 = vunpack.c.l.b16 %v5514
        %v7031 = vunpack.c.h.b16 %v5514
        %v7032 = vunpack.c.l.b16 %v5515
        %v7033 = vunpack.c.h.b16 %v5515
        %v7034 = vunpack.c.l.b16 %v5516
        %v7035 = vunpack.c.h.b16 %v5516
        %v7036 = vunpack.c.l.b16 %v5517
        %v7037 = vunpack.c.h.b16 %v5517
        %v7038 = vunpack.c.l.b16 %v5518
        %v7039 = vunpack.c.h.b16 %v5518
        %v7040 = vunpack.c.l.b16 %v5519
        %v7041 = vunpack.c.h.b16 %v5519
        %v7042 = vunpack.c.l.b16 %v5520
        %v7043 = vunpack.c.h.b16 %v5520
        %v7044 = vunpack.c.l.b16 %v5521
        %v7045 = vunpack.c.h.b16 %v5521
        %v7046 = vunpack.c.l.b16 %v5522
        %v7047 = vunpack.c.h.b16 %v5522
        %v7048 = vunpack.c.l.b16 %v5523
        %v7049 = vunpack.c.h.b16 %v5523
        %v7050 = vunpack.c.l.b16 %v5524
        %v7051 = vunpack.c.h.b16 %v5524
        %v7052 = vunpack.c.l.b16 %v5525
        %v7053 = vunpack.c.h.b16 %v5525
        %v7054 = vunpack.c.l.b16 %v5526
        %v7055 = vunpack.c.h.b16 %v5526
        %v7056 = vunpack.c.l.b16 %v5527
        %v7057 = vunpack.c.h.b16 %v5527
        %v7058 = vunpack.c.l.b16 %v5528
        %v7059 = vunpack.c.h.b16 %v5528
        %v7060 = vunpack.c.l.b16 %v5529
        %v7061 = vunpack.c.h.b16 %v5529
        %v7062 = vunpack.c.l.b16 %v5530
        %v7063 = vunpack.c.h.b16 %v5530
        %v7064 = vunpack.c.l.b16 %v5531
        %v7065 = vunpack.c.h.b16 %v5531
        %v7066 = vunpack.c.l.b16 %v5532
        %v7067 = vunpack.c.h.b16 %v5532
        %v7068 = vunpack.c.l.b16 %v5533
        %v7069 = vunpack.c.h.b16 %v5533
        %v7070 = vpack.c.b16 %v6062, %v6046
        %v7071 = vpack.c.b16 %v6063, %v6047
        %v7072 = vpack.c.b16 %v6064, %v6048
        %v7073 = vpack.c.b16 %v6065, %v6049
        %v7074 = vpack.c.b16 %v6066, %v6050
        %v7075 = vpack.c.b16 %v6067, %v6051
        %v7076 = vpack.c.b16 %v6068, %v6052
        %v7077 = vpack.c.b16 %v6069, %v6053
        %v7078 = vpack.c.b16 %v6070, %v6054
        %v7079 = vpack.c.b16 %v6071, %v6055
        %v7080 = vpack.c.b16 %v6072, %v6056
        %v7081 = vpack.c.b16 %v6073, %v6057
        %v7082 = vpack.c.b16 %v6074, %v6058
        %v7083 = vpack.c.b16 %v6075, %v6059
        %v7084 = vpack.c.b16 %v6076, %v6060
        %v7085 = vpack.c.b16 %v6077, %v6061
        %v7086 = vpack.c.b16 %v6094, %v6078
        %v7087 = vpack.c.b16 %v6095, %v6079
        %v7088 = vpack.c.b16 %v6096, %v6080
        %v7089 = vpack.c.b16 %v6097, %v6081
        %v7090 = vpack.c.b16 %v6098, %v6082
        %v7091 = vpack.c.b16 %v6099, %v6083
        %v7092 = vpack.c.b16 %v6100, %v6084
        %v7093 = vpack.c.b16 %v6101, %v6085
        %v7094 = vpack.c.b16 %v6102, %v6086
        %v7095 = vpack.c.b16 %v6103, %v6087
        %v7096 = vpack.c.b16 %v6104, %v6088
        %v7097 = vpack.c.b16 %v6105, %v6089
        %v7098 = vpack.c.b16 %v6106, %v6090
        %v7099 = vpack.c.b16 %v6107, %v6091
        %v7100 = vpack.c.b16 %v6108, %v6092
        %v7101 = vpack.c.b16 %v6109, %v6093
        %v7102 = vpack.c.b16 %v6126, %v6110
        %v7103 = vpack.c.b16 %v6127, %v6111
        %v7104 = vpack.c.b16 %v6128, %v6112
        %v7105 = vpack.c.b16 %v6129, %v6113
        %v7106 = vpack.c.b16 %v6130, %v6114
        %v7107 = vpack.c.b16 %v6131, %v6115
        %v7108 = vpack.c.b16 %v6132, %v6116
        %v7109 = vpack.c.b16 %v6133, %v6117
        %v7110 = vpack.c.b16 %v6134, %v6118
        %v7111 = vpack.c.b16 %v6135, %v6119
        %v7112 = vpack.c.b16 %v6136, %v6120
        %v7113 = vpack.c.b16 %v6137, %v6121
        %v7114 = vpack.c.b16 %v6138, %v6122
        %v7115 = vpack.c.b16 %v6139, %v6123
        %v7116 = vpack.c.b16 %v6140, %v6124
        %v7117 = vpack.c.b16 %v6141, %v6125
        %v7118 = vpack.c.b16 %v6158, %v6142
        %v7119 = vpack.c.b16 %v6159, %v6143
        %v7120 = vpack.c.b16 %v6160, %v6144
        %v7121 = vpack.c.b16 %v6161, %v6145
        %v7122 = vpack.c.b16 %v6162, %v6146
        %v7123 = vpack.c.b16 %v6163, %v6147
        %v7124 = vpack.c.b16 %v6164, %v6148
        %v7125 = vpack.c.b16 %v6165, %v6149
        %v7126 = vpack.c.b16 %v6166, %v6150
        %v7127 = vpack.c.b16 %v6167, %v6151
        %v7128 = vpack.c.b16 %v6168, %v6152
        %v7129 = vpack.c.b16 %v6169, %v6153
        %v7130 = vpack.c.b16 %v6170, %v6154
        %v7131 = vpack.c.b16 %v6171, %v6155
        %v7132 = vpack.c.b16 %v6172, %v6156
        %v7133 = vpack.c.b16 %v6173, %v6157
        %v7134 = vpack.c.b16 %v6190, %v6174
        %v7135 = vpack.c.b16 %v6191, %v6175
        %v7136 = vpack.c.b16 %v6192, %v6176
        %v7137 = vpack.c.b16 %v6193, %v6177
        %v7138 = vpack.c.b16 %v6194, %v6178
        %v7139 = vpack.c.b16 %v6195, %v6179
        %v7140 = vpack.c.b16 %v6196, %v6180
        %v7141 = vpack.c.b16 %v6197, %v6181
        %v7142 = vpack.c.b16 %v6198, %v6182
        %v7143 = vpack.c.b16 %v6199, %v6183
        %v7144 = vpack.c.b16 %v6200, %v6184
        %v7145 = vpack.c.b16 %v6201, %v6185
        %v7146 = vpack.c.b16 %v6202, %v6186
        %v7147 = vpack.c.b16 %v6203, %v6187
        %v7148 = vpack.c.b16 %v6204, %v6188
        %v7149 = vpack.c.b16 %v6205, %v6189
        %v7150 = vpack.c.b16 %v6222, %v6206
        %v7151 = vpack.c.b16 %v6223, %v6207
        %v7152 = vpack.c.b16 %v6224, %v6208
        %v7153 = vpack.c.b16 %v6225, %v6209
        %v7154 = vpack.c.b16 %v6226, %v6210
        %v7155 = vpack.c.b16 %v6227, %v6211
        %v7156 = vpack.c.b16 %v6228, %v6212
        %v7157 = vpack.c.b16 %v6229, %v6213
        %v7158 = vpack.c.b16 %v6230, %v6214
        %v7159 = vpack.c.b16 %v6231, %v6215
        %v7160 = vpack.c.b16 %v6232, %v6216
        %v7161 = vpack.c.b16 %v6233, %v6217
        %v7162 = vpack.c.b16 %v6234, %v6218
        %v7163 = vpack.c.b16 %v6235, %v6219
        %v7164 = vpack.c.b16 %v6236, %v6220
        %v7165 = vpack.c.b16 %v6237, %v6221
        %v7166 = vpack.c.b16 %v6254, %v6238
        %v7167 = vpack.c.b16 %v6255, %v6239
        %v7168 = vpack.c.b16 %v6256, %v6240
        %v7169 = vpack.c.b16 %v6257, %v6241
        %v7170 = vpack.c.b16 %v6258, %v6242
        %v7171 = vpack.c.b16 %v6259, %v6243
        %v7172 = vpack.c.b16 %v6260, %v6244
        %v7173 = vpack.c.b16 %v6261, %v6245
        %v7174 = vpack.c.b16 %v6262, %v6246
        %v7175 = vpack.c.b16 %v6263, %v6247
        %v7176 = vpack.c.b16 %v6264, %v6248
        %v7177 = vpack.c.b16 %v6265, %v6249
        %v7178 = vpack.c.b16 %v6266, %v6250
        %v7179 = vpack.c.b16 %v6267, %v6251
        %v7180 = vpack.c.b16 %v6268, %v6252
        %v7181 = vpack.c.b16 %v6269, %v6253
        %v7182 = vpack.c.b16 %v6286, %v6270
        %v7183 = vpack.c.b16 %v6287, %v6271
        %v7184 = vpack.c.b16 %v6288, %v6272
        %v7185 = vpack.c.b16 %v6289, %v6273
        %v7186 = vpack.c.b16 %v6290, %v6274
        %v7187 = vpack.c.b16 %v6291, %v6275
        %v7188 = vpack.c.b16 %v6292, %v6276
        %v7189 = vpack.c.b16 %v6293, %v6277
        %v7190 = vpack.c.b16 %v6294, %v6278
        %v7191 = vpack.c.b16 %v6295, %v6279
        %v7192 = vpack.c.b16 %v6296, %v6280
        %v7193 = vpack.c.b16 %v6297, %v6281
        %v7194 = vpack.c.b16 %v6298, %v6282
        %v7195 = vpack.c.b16 %v6299, %v6283
        %v7196 = vpack.c.b16 %v6300, %v6284
        %v7197 = vpack.c.b16 %v6301, %v6285
        %v7198 = vpack.c.b16 %v6318, %v6302
        %v7199 = vpack.c.b16 %v6319, %v6303
        %v7200 = vpack.c.b16 %v6320, %v6304
        %v7201 = vpack.c.b16 %v6321, %v6305
        %v7202 = vpack.c.b16 %v6322, %v6306
        %v7203 = vpack.c.b16 %v6323, %v6307
        %v7204 = vpack.c.b16 %v6324, %v6308
        %v7205 = vpack.c.b16 %v6325, %v6309
        %v7206 = vpack.c.b16 %v6326, %v6310
        %v7207 = vpack.c.b16 %v6327, %v6311
        %v7208 = vpack.c.b16 %v6328, %v6312
        %v7209 = vpack.c.b16 %v6329, %v6313
        %v7210 = vpack.c.b16 %v6330, %v6314
        %v7211 = vpack.c.b16 %v6331, %v6315
        %v7212 = vpack.c.b16 %v6332, %v6316
        %v7213 = vpack.c.b16 %v6333, %v6317
        %v7214 = vpack.c.b16 %v6350, %v6334
        %v7215 = vpack.c.b16 %v6351, %v6335
        %v7216 = vpack.c.b16 %v6352, %v6336
        %v7217 = vpack.c.b16 %v6353, %v6337
        %v7218 = vpack.c.b16 %v6354, %v6338
        %v7219 = vpack.c.b16 %v6355, %v6339
        %v7220 = vpack.c.b16 %v6356, %v6340
        %v7221 = vpack.c.b16 %v6357, %v6341
        %v7222 = vpack.c.b16 %v6358, %v6342
        %v7223 = vpack.c.b16 %v6359, %v6343
        %v7224 = vpack.c.b16 %v6360, %v6344
        %v7225 = vpack.c.b16 %v6361, %v6345
        %v7226 = vpack.c.b16 %v6362, %v6346
        %v7227 = vpack.c.b16 %v6363, %v6347
        %v7228 = vpack.c.b16 %v6364, %v6348
        %v7229 = vpack.c.b16 %v6365, %v6349
        %v7230 = vpack.c.b16 %v6382, %v6366
        %v7231 = vpack.c.b16 %v6383, %v6367
        %v7232 = vpack.c.b16 %v6384, %v6368
        %v7233 = vpack.c.b16 %v6385, %v6369
        %v7234 = vpack.c.b16 %v6386, %v6370
        %v7235 = vpack.c.b16 %v6387, %v6371
        %v7236 = vpack.c.b16 %v6388, %v6372
        %v7237 = vpack.c.b16 %v6389, %v6373
        %v7238 = vpack.c.b16 %v6390, %v6374
        %v7239 = vpack.c.b16 %v6391, %v6375
        %v7240 = vpack.c.b16 %v6392, %v6376
        %v7241 = vpack.c.b16 %v6393, %v6377
        %v7242 = vpack.c.b16 %v6394, %v6378
        %v7243 = vpack.c.b16 %v6395, %v6379
        %v7244 = vpack.c.b16 %v6396, %v6380
        %v7245 = vpack.c.b16 %v6397, %v6381
        %v7246 = vpack.c.b16 %v6414, %v6398
        %v7247 = vpack.c.b16 %v6415, %v6399
        %v7248 = vpack.c.b16 %v6416, %v6400
        %v7249 = vpack.c.b16 %v6417, %v6401
        %v7250 = vpack.c.b16 %v6418, %v6402
        %v7251 = vpack.c.b16 %v6419, %v6403
        %v7252 = vpack.c.b16 %v6420, %v6404
        %v7253 = vpack.c.b16 %v6421, %v6405
        %v7254 = vpack.c.b16 %v6422, %v6406
        %v7255 = vpack.c.b16 %v6423, %v6407
        %v7256 = vpack.c.b16 %v6424, %v6408
        %v7257 = vpack.c.b16 %v6425, %v6409
        %v7258 = vpack.c.b16 %v6426, %v6410
        %v7259 = vpack.c.b16 %v6427, %v6411
        %v7260 = vpack.c.b16 %v6428, %v6412
        %v7261 = vpack.c.b16 %v6429, %v6413
        %v7262 = vpack.c.b16 %v6446, %v6430
        %v7263 = vpack.c.b16 %v6447, %v6431
        %v7264 = vpack.c.b16 %v6448, %v6432
        %v7265 = vpack.c.b16 %v6449, %v6433
        %v7266 = vpack.c.b16 %v6450, %v6434
        %v7267 = vpack.c.b16 %v6451, %v6435
        %v7268 = vpack.c.b16 %v6452, %v6436
        %v7269 = vpack.c.b16 %v6453, %v6437
        %v7270 = vpack.c.b16 %v6454, %v6438
        %v7271 = vpack.c.b16 %v6455, %v6439
        %v7272 = vpack.c.b16 %v6456, %v6440
        %v7273 = vpack.c.b16 %v6457, %v6441
        %v7274 = vpack.c.b16 %v6458, %v6442
        %v7275 = vpack.c.b16 %v6459, %v6443
        %v7276 = vpack.c.b16 %v6460, %v6444
        %v7277 = vpack.c.b16 %v6461, %v6445
        %v7278 = vpack.c.b16 %v6478, %v6462
        %v7279 = vpack.c.b16 %v6479, %v6463
        %v7280 = vpack.c.b16 %v6480, %v6464
        %v7281 = vpack.c.b16 %v6481, %v6465
        %v7282 = vpack.c.b16 %v6482, %v6466
        %v7283 = vpack.c.b16 %v6483, %v6467
        %v7284 = vpack.c.b16 %v6484, %v6468
        %v7285 = vpack.c.b16 %v6485, %v6469
        %v7286 = vpack.c.b16 %v6486, %v6470
        %v7287 = vpack.c.b16 %v6487, %v6471
        %v7288 = vpack.c.b16 %v6488, %v6472
        %v7289 = vpack.c.b16 %v6489, %v6473
        %v7290 = vpack.c.b16 %v6490, %v6474
        %v7291 = vpack.c.b16 %v6491, %v6475
        %v7292 = vpack.c.b16 %v6492, %v6476
        %v7293 = vpack.c.b16 %v6493, %v6477
        %v7294 = vpack.c.b16 %v6510, %v6494
        %v7295 = vpack.c.b16 %v6511, %v6495
        %v7296 = vpack.c.b16 %v6512, %v6496
        %v7297 = vpack.c.b16 %v6513, %v6497
        %v7298 = vpack.c.b16 %v6514, %v6498
        %v7299 = vpack.c.b16 %v6515, %v6499
        %v7300 = vpack.c.b16 %v6516, %v6500
        %v7301 = vpack.c.b16 %v6517, %v6501
        %v7302 = vpack.c.b16 %v6518, %v6502
        %v7303 = vpack.c.b16 %v6519, %v6503
        %v7304 = vpack.c.b16 %v6520, %v6504
        %v7305 = vpack.c.b16 %v6521, %v6505
        %v7306 = vpack.c.b16 %v6522, %v6506
        %v7307 = vpack.c.b16 %v6523, %v6507
        %v7308 = vpack.c.b16 %v6524, %v6508
        %v7309 = vpack.c.b16 %v6525, %v6509
        %v7310 = vpack.c.b16 %v6542, %v6526
        %v7311 = vpack.c.b16 %v6543, %v6527
        %v7312 = vpack.c.b16 %v6544, %v6528
        %v7313 = vpack.c.b16 %v6545, %v6529
        %v7314 = vpack.c.b16 %v6546, %v6530
        %v7315 = vpack.c.b16 %v6547, %v6531
        %v7316 = vpack.c.b16 %v6548, %v6532
        %v7317 = vpack.c.b16 %v6549, %v6533
        %v7318 = vpack.c.b16 %v6550, %v6534
        %v7319 = vpack.c.b16 %v6551, %v6535
        %v7320 = vpack.c.b16 %v6552, %v6536
        %v7321 = vpack.c.b16 %v6553, %v6537
        %v7322 = vpack.c.b16 %v6554, %v6538
        %v7323 = vpack.c.b16 %v6555, %v6539
        %v7324 = vpack.c.b16 %v6556, %v6540
        %v7325 = vpack.c.b16 %v6557, %v6541
        %v7326 = vpack.c.b16 %v6574, %v6558
        %v7327 = vpack.c.b16 %v6575, %v6559
        %v7328 = vpack.c.b16 %v6576, %v6560
        %v7329 = vpack.c.b16 %v6577, %v6561
        %v7330 = vpack.c.b16 %v6578, %v6562
        %v7331 = vpack.c.b16 %v6579, %v6563
        %v7332 = vpack.c.b16 %v6580, %v6564
        %v7333 = vpack.c.b16 %v6581, %v6565
        %v7334 = vpack.c.b16 %v6582, %v6566
        %v7335 = vpack.c.b16 %v6583, %v6567
        %v7336 = vpack.c.b16 %v6584, %v6568
        %v7337 = vpack.c.b16 %v6585, %v6569
        %v7338 = vpack.c.b16 %v6586, %v6570
        %v7339 = vpack.c.b16 %v6587, %v6571
        %v7340 = vpack.c.b16 %v6588, %v6572
        %v7341 = vpack.c.b16 %v6589, %v6573
        %v7342 = vpack.c.b16 %v6606, %v6590
        %v7343 = vpack.c.b16 %v6607, %v6591
        %v7344 = vpack.c.b16 %v6608, %v6592
        %v7345 = vpack.c.b16 %v6609, %v6593
        %v7346 = vpack.c.b16 %v6610, %v6594
        %v7347 = vpack.c.b16 %v6611, %v6595
        %v7348 = vpack.c.b16 %v6612, %v6596
        %v7349 = vpack.c.b16 %v6613, %v6597
        %v7350 = vpack.c.b16 %v6614, %v6598
        %v7351 = vpack.c.b16 %v6615, %v6599
        %v7352 = vpack.c.b16 %v6616, %v6600
        %v7353 = vpack.c.b16 %v6617, %v6601
        %v7354 = vpack.c.b16 %v6618, %v6602
        %v7355 = vpack.c.b16 %v6619, %v6603
        %v7356 = vpack.c.b16 %v6620, %v6604
        %v7357 = vpack.c.b16 %v6621, %v6605
        %v7358 = vpack.c.b16 %v6638, %v6622
        %v7359 = vpack.c.b16 %v6639, %v6623
        %v7360 = vpack.c.b16 %v6640, %v6624
        %v7361 = vpack.c.b16 %v6641, %v6625
        %v7362 = vpack.c.b16 %v6642, %v6626
        %v7363 = vpack.c.b16 %v6643, %v6627
        %v7364 = vpack.c.b16 %v6644, %v6628
        %v7365 = vpack.c.b16 %v6645, %v6629
        %v7366 = vpack.c.b16 %v6646, %v6630
        %v7367 = vpack.c.b16 %v6647, %v6631
        %v7368 = vpack.c.b16 %v6648, %v6632
        %v7369 = vpack.c.b16 %v6649, %v6633
        %v7370 = vpack.c.b16 %v6650, %v6634
        %v7371 = vpack.c.b16 %v6651, %v6635
        %v7372 = vpack.c.b16 %v6652, %v6636
        %v7373 = vpack.c.b16 %v6653, %v6637
        %v7374 = vpack.c.b16 %v6670, %v6654
        %v7375 = vpack.c.b16 %v6671, %v6655
        %v7376 = vpack.c.b16 %v6672, %v6656
        %v7377 = vpack.c.b16 %v6673, %v6657
        %v7378 = vpack.c.b16 %v6674, %v6658
        %v7379 = vpack.c.b16 %v6675, %v6659
        %v7380 = vpack.c.b16 %v6676, %v6660
        %v7381 = vpack.c.b16 %v6677, %v6661
        %v7382 = vpack.c.b16 %v6678, %v6662
        %v7383 = vpack.c.b16 %v6679, %v6663
        %v7384 = vpack.c.b16 %v6680, %v6664
        %v7385 = vpack.c.b16 %v6681, %v6665
        %v7386 = vpack.c.b16 %v6682, %v6666
        %v7387 = vpack.c.b16 %v6683, %v6667
        %v7388 = vpack.c.b16 %v6684, %v6668
        %v7389 = vpack.c.b16 %v6685, %v6669
        %v7390 = vpack.c.b16 %v6702, %v6686
        %v7391 = vpack.c.b16 %v6703, %v6687
        %v7392 = vpack.c.b16 %v6704, %v6688
        %v7393 = vpack.c.b16 %v6705, %v6689
        %v7394 = vpack.c.b16 %v6706, %v6690
        %v7395 = vpack.c.b16 %v6707, %v6691
        %v7396 = vpack.c.b16 %v6708, %v6692
        %v7397 = vpack.c.b16 %v6709, %v6693
        %v7398 = vpack.c.b16 %v6710, %v6694
        %v7399 = vpack.c.b16 %v6711, %v6695
        %v7400 = vpack.c.b16 %v6712, %v6696
        %v7401 = vpack.c.b16 %v6713, %v6697
        %v7402 = vpack.c.b16 %v6714, %v6698
        %v7403 = vpack.c.b16 %v6715, %v6699
        %v7404 = vpack.c.b16 %v6716, %v6700
        %v7405 = vpack.c.b16 %v6717, %v6701
        %v7406 = vpack.c.b16 %v6734, %v6718
        %v7407 = vpack.c.b16 %v6735, %v6719
        %v7408 = vpack.c.b16 %v6736, %v6720
        %v7409 = vpack.c.b16 %v6737, %v6721
        %v7410 = vpack.c.b16 %v6738, %v6722
        %v7411 = vpack.c.b16 %v6739, %v6723
        %v7412 = vpack.c.b16 %v6740, %v6724
        %v7413 = vpack.c.b16 %v6741, %v6725
        %v7414 = vpack.c.b16 %v6742, %v6726
        %v7415 = vpack.c.b16 %v6743, %v6727
        %v7416 = vpack.c.b16 %v6744, %v6728
        %v7417 = vpack.c.b16 %v6745, %v6729
        %v7418 = vpack.c.b16 %v6746, %v6730
        %v7419 = vpack.c.b16 %v6747, %v6731
        %v7420 = vpack.c.b16 %v6748, %v6732
        %v7421 = vpack.c.b16 %v6749, %v6733
        %v7422 = vpack.c.b16 %v6766, %v6750
        %v7423 = vpack.c.b16 %v6767, %v6751
        %v7424 = vpack.c.b16 %v6768, %v6752
        %v7425 = vpack.c.b16 %v6769, %v6753
        %v7426 = vpack.c.b16 %v6770, %v6754
        %v7427 = vpack.c.b16 %v6771, %v6755
        %v7428 = vpack.c.b16 %v6772, %v6756
        %v7429 = vpack.c.b16 %v6773, %v6757
        %v7430 = vpack.c.b16 %v6774, %v6758
        %v7431 = vpack.c.b16 %v6775, %v6759
        %v7432 = vpack.c.b16 %v6776, %v6760
        %v7433 = vpack.c.b16 %v6777, %v6761
        %v7434 = vpack.c.b16 %v6778, %v6762
        %v7435 = vpack.c.b16 %v6779, %v6763
        %v7436 = vpack.c.b16 %v6780, %v6764
        %v7437 = vpack.c.b16 %v6781, %v6765
        %v7438 = vpack.c.b16 %v6798, %v6782
        %v7439 = vpack.c.b16 %v6799, %v6783
        %v7440 = vpack.c.b16 %v6800, %v6784
        %v7441 = vpack.c.b16 %v6801, %v6785
        %v7442 = vpack.c.b16 %v6802, %v6786
        %v7443 = vpack.c.b16 %v6803, %v6787
        %v7444 = vpack.c.b16 %v6804, %v6788
        %v7445 = vpack.c.b16 %v6805, %v6789
        %v7446 = vpack.c.b16 %v6806, %v6790
        %v7447 = vpack.c.b16 %v6807, %v6791
        %v7448 = vpack.c.b16 %v6808, %v6792
        %v7449 = vpack.c.b16 %v6809, %v6793
        %v7450 = vpack.c.b16 %v6810, %v6794
        %v7451 = vpack.c.b16 %v6811, %v6795
        %v7452 = vpack.c.b16 %v6812, %v6796
        %v7453 = vpack.c.b16 %v6813, %v6797
        %v7454 = vpack.c.b16 %v6830, %v6814
        %v7455 = vpack.c.b16 %v6831, %v6815
        %v7456 = vpack.c.b16 %v6832, %v6816
        %v7457 = vpack.c.b16 %v6833, %v6817
        %v7458 = vpack.c.b16 %v6834, %v6818
        %v7459 = vpack.c.b16 %v6835, %v6819
        %v7460 = vpack.c.b16 %v6836, %v6820
        %v7461 = vpack.c.b16 %v6837, %v6821
        %v7462 = vpack.c.b16 %v6838, %v6822
        %v7463 = vpack.c.b16 %v6839, %v6823
        %v7464 = vpack.c.b16 %v6840, %v6824
        %v7465 = vpack.c.b16 %v6841, %v6825
        %v7466 = vpack.c.b16 %v6842, %v6826
        %v7467 = vpack.c.b16 %v6843, %v6827
        %v7468 = vpack.c.b16 %v6844, %v6828
        %v7469 = vpack.c.b16 %v6845, %v6829
        %v7470 = vpack.c.b16 %v6862, %v6846
        %v7471 = vpack.c.b16 %v6863, %v6847
        %v7472 = vpack.c.b16 %v6864, %v6848
        %v7473 = vpack.c.b16 %v6865, %v6849
        %v7474 = vpack.c.b16 %v6866, %v6850
        %v7475 = vpack.c.b16 %v6867, %v6851
        %v7476 = vpack.c.b16 %v6868, %v6852
        %v7477 = vpack.c.b16 %v6869, %v6853
        %v7478 = vpack.c.b16 %v6870, %v6854
        %v7479 = vpack.c.b16 %v6871, %v6855
        %v7480 = vpack.c.b16 %v6872, %v6856
        %v7481 = vpack.c.b16 %v6873, %v6857
        %v7482 = vpack.c.b16 %v6874, %v6858
        %v7483 = vpack.c.b16 %v6875, %v6859
        %v7484 = vpack.c.b16 %v6876, %v6860
        %v7485 = vpack.c.b16 %v6877, %v6861
        %v7486 = vpack.c.b16 %v6894, %v6878
        %v7487 = vpack.c.b16 %v6895, %v6879
        %v7488 = vpack.c.b16 %v6896, %v6880
        %v7489 = vpack.c.b16 %v6897, %v6881
        %v7490 = vpack.c.b16 %v6898, %v6882
        %v7491 = vpack.c.b16 %v6899, %v6883
        %v7492 = vpack.c.b16 %v6900, %v6884
        %v7493 = vpack.c.b16 %v6901, %v6885
        %v7494 = vpack.c.b16 %v6902, %v6886
        %v7495 = vpack.c.b16 %v6903, %v6887
        %v7496 = vpack.c.b16 %v6904, %v6888
        %v7497 = vpack.c.b16 %v6905, %v6889
        %v7498 = vpack.c.b16 %v6906, %v6890
        %v7499 = vpack.c.b16 %v6907, %v6891
        %v7500 = vpack.c.b16 %v6908, %v6892
        %v7501 = vpack.c.b16 %v6909, %v6893
        %v7502 = vpack.c.b16 %v6926, %v6910
        %v7503 = vpack.c.b16 %v6927, %v6911
        %v7504 = vpack.c.b16 %v6928, %v6912
        %v7505 = vpack.c.b16 %v6929, %v6913
        %v7506 = vpack.c.b16 %v6930, %v6914
        %v7507 = vpack.c.b16 %v6931, %v6915
        %v7508 = vpack.c.b16 %v6932, %v6916
        %v7509 = vpack.c.b16 %v6933, %v6917
        %v7510 = vpack.c.b16 %v6934, %v6918
        %v7511 = vpack.c.b16 %v6935, %v6919
        %v7512 = vpack.c.b16 %v6936, %v6920
        %v7513 = vpack.c.b16 %v6937, %v6921
        %v7514 = vpack.c.b16 %v6938, %v6922
        %v7515 = vpack.c.b16 %v6939, %v6923
        %v7516 = vpack.c.b16 %v6940, %v6924
        %v7517 = vpack.c.b16 %v6941, %v6925
        %v7518 = vpack.c.b16 %v6958, %v6942
        %v7519 = vpack.c.b16 %v6959, %v6943
        %v7520 = vpack.c.b16 %v6960, %v6944
        %v7521 = vpack.c.b16 %v6961, %v6945
        %v7522 = vpack.c.b16 %v6962, %v6946
        %v7523 = vpack.c.b16 %v6963, %v6947
        %v7524 = vpack.c.b16 %v6964, %v6948
        %v7525 = vpack.c.b16 %v6965, %v6949
        %v7526 = vpack.c.b16 %v6966, %v6950
        %v7527 = vpack.c.b16 %v6967, %v6951
        %v7528 = vpack.c.b16 %v6968, %v6952
        %v7529 = vpack.c.b16 %v6969, %v6953
        %v7530 = vpack.c.b16 %v6970, %v6954
        %v7531 = vpack.c.b16 %v6971, %v6955
        %v7532 = vpack.c.b16 %v6972, %v6956
        %v7533 = vpack.c.b16 %v6973, %v6957
        %v7534 = vpack.c.b16 %v6990, %v6974
        %v7535 = vpack.c.b16 %v6991, %v6975
        %v7536 = vpack.c.b16 %v6992, %v6976
        %v7537 = vpack.c.b16 %v6993, %v6977
        %v7538 = vpack.c.b16 %v6994, %v6978
        %v7539 = vpack.c.b16 %v6995, %v6979
        %v7540 = vpack.c.b16 %v6996, %v6980
        %v7541 = vpack.c.b16 %v6997, %v6981
        %v7542 = vpack.c.b16 %v6998, %v6982
        %v7543 = vpack.c.b16 %v6999, %v6983
        %v7544 = vpack.c.b16 %v7000, %v6984
        %v7545 = vpack.c.b16 %v7001, %v6985
        %v7546 = vpack.c.b16 %v7002, %v6986
        %v7547 = vpack.c.b16 %v7003, %v6987
        %v7548 = vpack.c.b16 %v7004, %v6988
        %v7549 = vpack.c.b16 %v7005, %v6989
        %v7550 = vpack.c.b16 %v7022, %v7006
        %v7551 = vpack.c.b16 %v7023, %v7007
        %v7552 = vpack.c.b16 %v7024, %v7008
        %v7553 = vpack.c.b16 %v7025, %v7009
        %v7554 = vpack.c.b16 %v7026, %v7010
        %v7555 = vpack.c.b16 %v7027, %v7011
        %v7556 = vpack.c.b16 %v7028, %v7012
        %v7557 = vpack.c.b16 %v7029, %v7013
        %v7558 = vpack.c.b16 %v7030, %v7014
        %v7559 = vpack.c.b16 %v7031, %v7015
        %v7560 = vpack.c.b16 %v7032, %v7016
        %v7561 = vpack.c.b16 %v7033, %v7017
        %v7562 = vpack.c.b16 %v7034, %v7018
        %v7563 = vpack.c.b16 %v7035, %v7019
        %v7564 = vpack.c.b16 %v7036, %v7020
        %v7565 = vpack.c.b16 %v7037, %v7021
        %v7566 = vpack.c.b16 %v7054, %v7038
        %v7567 = vpack.c.b16 %v7055, %v7039
        %v7568 = vpack.c.b16 %v7056, %v7040
        %v7569 = vpack.c.b16 %v7057, %v7041
        %v7570 = vpack.c.b16 %v7058, %v7042
        %v7571 = vpack.c.b16 %v7059, %v7043
        %v7572 = vpack.c.b16 %v7060, %v7044
        %v7573 = vpack.c.b16 %v7061, %v7045
        %v7574 = vpack.c.b16 %v7062, %v7046
        %v7575 = vpack.c.b16 %v7063, %v7047
        %v7576 = vpack.c.b16 %v7064, %v7048
        %v7577 = vpack.c.b16 %v7065, %v7049
        %v7578 = vpack.c.b16 %v7066, %v7050
        %v7579 = vpack.c.b16 %v7067, %v7051
        %v7580 = vpack.c.b16 %v7068, %v7052
        %v7581 = vpack.c.b16 %v7069, %v7053
        %8094 = vmatprep.subr.bf16.mxu0 %v7071
        %8095 = vmatpush1.bf16.msra.mxu0 %v7070
        %8096 = vmatprep.subr.bf16.mxu0 %v7087
        %8097 = vmatpush1.bf16.msra.mxu0 %v7086
        %8098 = vmatprep.subr.bf16.mxu0 %v7103
        %8099 = vmatpush1.bf16.msra.mxu0 %v7102
        %8100 = vmatprep.subr.bf16.mxu0 %v7119
        %8101 = vmatpush1.bf16.msra.mxu0 %v7118
        %8102 = vmatprep.subr.bf16.mxu0 %v7135
        %8103 = vmatpush1.bf16.msra.mxu0 %v7134
        %8104 = vmatprep.subr.bf16.mxu0 %v7151
        %8105 = vmatpush1.bf16.msra.mxu0 %v7150
        %8106 = vmatprep.subr.bf16.mxu0 %v7167
        %8107 = vmatpush1.bf16.msra.mxu0 %v7166
        %8108 = vmatprep.subr.bf16.mxu0 %v7183
        %8109 = vmatpush1.bf16.msra.mxu0 %v7182
        %8110 = vmatprep.subr.bf16.mxu0 %v7199
        %8111 = vmatpush1.bf16.msra.mxu0 %v7198
        %8112 = vmatprep.subr.bf16.mxu0 %v7215
        %8113 = vmatpush1.bf16.msra.mxu0 %v7214
        %8114 = vmatprep.subr.bf16.mxu0 %v7231
        %8115 = vmatpush1.bf16.msra.mxu0 %v7230
        %8116 = vmatprep.subr.bf16.mxu0 %v7247
        %8117 = vmatpush1.bf16.msra.mxu0 %v7246
        %8118 = vmatprep.subr.bf16.mxu0 %v7263
        %8119 = vmatpush1.bf16.msra.mxu0 %v7262
        %8120 = vmatprep.subr.bf16.mxu0 %v7279
        %8121 = vmatpush1.bf16.msra.mxu0 %v7278
        %8122 = vmatprep.subr.bf16.mxu0 %v7295
        %8123 = vmatpush1.bf16.msra.mxu0 %v7294
        %8124 = vmatprep.subr.bf16.mxu0 %v7311
        %8125 = vmatpush1.bf16.msra.mxu0 %v7310
        %8126 = vmatprep.mubr.bf16.mxu0 %v5019
        %8127 = vmatmul.mubr.bf16.gmra.mrb[0].mxu0 %v5018
        %v8128 = vpop.f32.mrb[0].mxu0
        %v8129 = vadd.f32 0.0, %v8128
        %v8130 = vpop.f32.mrb[0].mxu0
        %v8131 = vadd.f32 0.0, %v8130
        %v8132 = vpop.f32.mrb[0].mxu0
        %v8133 = vpop.f32.mrb[0].mxu0
        %8134 = vdwg.mxu0
        %8135 = vmatprep.subr.bf16.mxu0 %v7327
        %8136 = vmatpush1.bf16.msra.mxu0 %v7326
        %8137 = vmatprep.subr.bf16.mxu0 %v7343
        %8138 = vmatpush1.bf16.msra.mxu0 %v7342
        %8139 = vmatprep.subr.bf16.mxu0 %v7359
        %8140 = vmatpush1.bf16.msra.mxu0 %v7358
        %8141 = vmatprep.subr.bf16.mxu0 %v7375
        %8142 = vmatpush1.bf16.msra.mxu0 %v7374
        %8143 = vmatprep.subr.bf16.mxu0 %v7391
        %8144 = vmatpush1.bf16.msra.mxu0 %v7390
        %8145 = vmatprep.subr.bf16.mxu0 %v7407
        %8146 = vmatpush1.bf16.msra.mxu0 %v7406
        %8147 = vmatprep.subr.bf16.mxu0 %v7423
        %8148 = vmatpush1.bf16.msra.mxu0 %v7422
        %8149 = vmatprep.subr.bf16.mxu0 %v7439
        %8150 = vmatpush1.bf16.msra.mxu0 %v7438
        %8151 = vmatprep.subr.bf16.mxu0 %v7455
        %8152 = vmatpush1.bf16.msra.mxu0 %v7454
        %8153 = vmatprep.subr.bf16.mxu0 %v7471
        %8154 = vmatpush1.bf16.msra.mxu0 %v7470
        %8155 = vmatprep.subr.bf16.mxu0 %v7487
        %8156 = vmatpush1.bf16.msra.mxu0 %v7486
        %8157 = vmatprep.subr.bf16.mxu0 %v7503
        %8158 = vmatpush1.bf16.msra.mxu0 %v7502
        %8159 = vmatprep.subr.bf16.mxu0 %v7519
        %8160 = vmatpush1.bf16.msra.mxu0 %v7518
        %8161 = vmatprep.subr.bf16.mxu0 %v7535
        %8162 = vmatpush1.bf16.msra.mxu0 %v7534
        %8163 = vmatprep.subr.bf16.mxu0 %v7551
        %8164 = vmatpush1.bf16.msra.mxu0 %v7550
        %8165 = vmatprep.subr.bf16.mxu0 %v7567
        %8166 = vmatpush1.bf16.msra.mxu0 %v7566
        %8167 = vmatprep.mubr.bf16.mxu0 %v5021
        %8168 = vmatmul.mubr.bf16.gmra.mrb[0].mxu0 %v5020
        %v8169 = vpop.f32.mrb[0].mxu0
        %v8170 = vadd.f32 %v8129, %v8169
        %v8171 = vpop.f32.mrb[0].mxu0
        %v8172 = vadd.f32 %v8131, %v8171
        %v8173 = vpop.f32.mrb[0].mxu0
        %v8174 = vpop.f32.mrb[0].mxu0
        %8175 = vdwg.mxu0
        %8176 = vmatprep.subr.bf16.mxu0 %v7073
        %8177 = vmatpush1.bf16.msra.mxu0 %v7072
        %8178 = vmatprep.subr.bf16.mxu0 %v7089
        %8179 = vmatpush1.bf16.msra.mxu0 %v7088
        %8180 = vmatprep.subr.bf16.mxu0 %v7105
        %8181 = vmatpush1.bf16.msra.mxu0 %v7104
        %8182 = vmatprep.subr.bf16.mxu0 %v7121
        %8183 = vmatpush1.bf16.msra.mxu0 %v7120
        %8184 = vmatprep.subr.bf16.mxu0 %v7137
        %8185 = vmatpush1.bf16.msra.mxu0 %v7136
        %8186 = vmatprep.subr.bf16.mxu0 %v7153
        %8187 = vmatpush1.bf16.msra.mxu0 %v7152
        %8188 = vmatprep.subr.bf16.mxu0 %v7169
        %8189 = vmatpush1.bf16.msra.mxu0 %v7168
        %8190 = vmatprep.subr.bf16.mxu0 %v7185
        %8191 = vmatpush1.bf16.msra.mxu0 %v7184
        %8192 = vmatprep.subr.bf16.mxu0 %v7201
        %8193 = vmatpush1.bf16.msra.mxu0 %v7200
        %8194 = vmatprep.subr.bf16.mxu0 %v7217
        %8195 = vmatpush1.bf16.msra.mxu0 %v7216
        %8196 = vmatprep.subr.bf16.mxu0 %v7233
        %8197 = vmatpush1.bf16.msra.mxu0 %v7232
        %8198 = vmatprep.subr.bf16.mxu0 %v7249
        %8199 = vmatpush1.bf16.msra.mxu0 %v7248
        %8200 = vmatprep.subr.bf16.mxu0 %v7265
        %8201 = vmatpush1.bf16.msra.mxu0 %v7264
        %8202 = vmatprep.subr.bf16.mxu0 %v7281
        %8203 = vmatpush1.bf16.msra.mxu0 %v7280
        %8204 = vmatprep.subr.bf16.mxu0 %v7297
        %8205 = vmatpush1.bf16.msra.mxu0 %v7296
        %8206 = vmatprep.subr.bf16.mxu0 %v7313
        %8207 = vmatpush1.bf16.msra.mxu0 %v7312
        %8208 = vmatprep.mubr.bf16.mxu0 %v5019
        %8209 = vmatmul.mubr.bf16.gmra.mrb[0].mxu0 %v5018
        %v8210 = vpop.f32.mrb[0].mxu0
        %v8211 = vadd.f32 0.0, %v8210
        %v8212 = vpop.f32.mrb[0].mxu0
        %v8213 = vadd.f32 0.0, %v8212
        %v8214 = vpop.f32.mrb[0].mxu0
        %v8215 = vpop.f32.mrb[0].mxu0
        %8216 = vdwg.mxu0
        %8217 = vmatprep.subr.bf16.mxu0 %v7329
        %8218 = vmatpush1.bf16.msra.mxu0 %v7328
        %8219 = vmatprep.subr.bf16.mxu0 %v7345
        %8220 = vmatpush1.bf16.msra.mxu0 %v7344
        %8221 = vmatprep.subr.bf16.mxu0 %v7361
        %8222 = vmatpush1.bf16.msra.mxu0 %v7360
        %8223 = vmatprep.subr.bf16.mxu0 %v7377
        %8224 = vmatpush1.bf16.msra.mxu0 %v7376
        %8225 = vmatprep.subr.bf16.mxu0 %v7393
        %8226 = vmatpush1.bf16.msra.mxu0 %v7392
        %8227 = vmatprep.subr.bf16.mxu0 %v7409
        %8228 = vmatpush1.bf16.msra.mxu0 %v7408
        %8229 = vmatprep.subr.bf16.mxu0 %v7425
        %8230 = vmatpush1.bf16.msra.mxu0 %v7424
        %8231 = vmatprep.subr.bf16.mxu0 %v7441
        %8232 = vmatpush1.bf16.msra.mxu0 %v7440
        %8233 = vmatprep.subr.bf16.mxu0 %v7457
        %8234 = vmatpush1.bf16.msra.mxu0 %v7456
        %8235 = vmatprep.subr.bf16.mxu0 %v7473
        %8236 = vmatpush1.bf16.msra.mxu0 %v7472
        %8237 = vmatprep.subr.bf16.mxu0 %v7489
        %8238 = vmatpush1.bf16.msra.mxu0 %v7488
        %8239 = vmatprep.subr.bf16.mxu0 %v7505
        %8240 = vmatpush1.bf16.msra.mxu0 %v7504
        %8241 = vmatprep.subr.bf16.mxu0 %v7521
        %8242 = vmatpush1.bf16.msra.mxu0 %v7520
        %8243 = vmatprep.subr.bf16.mxu0 %v7537
        %8244 = vmatpush1.bf16.msra.mxu0 %v7536
        %8245 = vmatprep.subr.bf16.mxu0 %v7553
        %8246 = vmatpush1.bf16.msra.mxu0 %v7552
        %8247 = vmatprep.subr.bf16.mxu0 %v7569
        %8248 = vmatpush1.bf16.msra.mxu0 %v7568
        %8249 = vmatprep.mubr.bf16.mxu0 %v5021
        %8250 = vmatmul.mubr.bf16.gmra.mrb[0].mxu0 %v5020
        %v8251 = vpop.f32.mrb[0].mxu0
        %v8252 = vadd.f32 %v8211, %v8251
        %v8253 = vpop.f32.mrb[0].mxu0
        %v8254 = vadd.f32 %v8213, %v8253
        %v8255 = vpop.f32.mrb[0].mxu0
        %v8256 = vpop.f32.mrb[0].mxu0
        %8257 = vdwg.mxu0
        %8258 = vmatprep.subr.bf16.mxu0 %v7075
        %8259 = vmatpush1.bf16.msra.mxu0 %v7074
        %8260 = vmatprep.subr.bf16.mxu0 %v7091
        %8261 = vmatpush1.bf16.msra.mxu0 %v7090
        %8262 = vmatprep.subr.bf16.mxu0 %v7107
        %8263 = vmatpush1.bf16.msra.mxu0 %v7106
        %8264 = vmatprep.subr.bf16.mxu0 %v7123
        %8265 = vmatpush1.bf16.msra.mxu0 %v7122
        %8266 = vmatprep.subr.bf16.mxu0 %v7139
        %8267 = vmatpush1.bf16.msra.mxu0 %v7138
        %8268 = vmatprep.subr.bf16.mxu0 %v7155
        %8269 = vmatpush1.bf16.msra.mxu0 %v7154
        %8270 = vmatprep.subr.bf16.mxu0 %v7171
        %8271 = vmatpush1.bf16.msra.mxu0 %v7170
        %8272 = vmatprep.subr.bf16.mxu0 %v7187
        %8273 = vmatpush1.bf16.msra.mxu0 %v7186
        %8274 = vmatprep.subr.bf16.mxu0 %v7203
        %8275 = vmatpush1.bf16.msra.mxu0 %v7202
        %8276 = vmatprep.subr.bf16.mxu0 %v7219
        %8277 = vmatpush1.bf16.msra.mxu0 %v7218
        %8278 = vmatprep.subr.bf16.mxu0 %v7235
        %8279 = vmatpush1.bf16.msra.mxu0 %v7234
        %8280 = vmatprep.subr.bf16.mxu0 %v7251
        %8281 = vmatpush1.bf16.msra.mxu0 %v7250
        %8282 = vmatprep.subr.bf16.mxu0 %v7267
        %8283 = vmatpush1.bf16.msra.mxu0 %v7266
        %8284 = vmatprep.subr.bf16.mxu0 %v7283
        %8285 = vmatpush1.bf16.msra.mxu0 %v7282
        %8286 = vmatprep.subr.bf16.mxu0 %v7299
        %8287 = vmatpush1.bf16.msra.mxu0 %v7298
        %8288 = vmatprep.subr.bf16.mxu0 %v7315
        %8289 = vmatpush1.bf16.msra.mxu0 %v7314
        %8290 = vmatprep.mubr.bf16.mxu0 %v5019
        %8291 = vmatmul.mubr.bf16.gmra.mrb[0].mxu0 %v5018
        %v8292 = vpop.f32.mrb[0].mxu0
        %v8293 = vadd.f32 0.0, %v8292
        %v8294 = vpop.f32.mrb[0].mxu0
        %v8295 = vadd.f32 0.0, %v8294
        %v8296 = vpop.f32.mrb[0].mxu0
        %v8297 = vpop.f32.mrb[0].mxu0
        %8298 = vdwg.mxu0
        %8299 = vmatprep.subr.bf16.mxu0 %v7331
        %8300 = vmatpush1.bf16.msra.mxu0 %v7330
        %8301 = vmatprep.subr.bf16.mxu0 %v7347
        %8302 = vmatpush1.bf16.msra.mxu0 %v7346
        %8303 = vmatprep.subr.bf16.mxu0 %v7363
        %8304 = vmatpush1.bf16.msra.mxu0 %v7362
        %8305 = vmatprep.subr.bf16.mxu0 %v7379
        %8306 = vmatpush1.bf16.msra.mxu0 %v7378
        %8307 = vmatprep.subr.bf16.mxu0 %v7395
        %8308 = vmatpush1.bf16.msra.mxu0 %v7394
        %8309 = vmatprep.subr.bf16.mxu0 %v7411
        %8310 = vmatpush1.bf16.msra.mxu0 %v7410
        %8311 = vmatprep.subr.bf16.mxu0 %v7427
        %8312 = vmatpush1.bf16.msra.mxu0 %v7426
        %8313 = vmatprep.subr.bf16.mxu0 %v7443
        %8314 = vmatpush1.bf16.msra.mxu0 %v7442
        %8315 = vmatprep.subr.bf16.mxu0 %v7459
        %8316 = vmatpush1.bf16.msra.mxu0 %v7458
        %8317 = vmatprep.subr.bf16.mxu0 %v7475
        %8318 = vmatpush1.bf16.msra.mxu0 %v7474
        %8319 = vmatprep.subr.bf16.mxu0 %v7491
        %8320 = vmatpush1.bf16.msra.mxu0 %v7490
        %8321 = vmatprep.subr.bf16.mxu0 %v7507
        %8322 = vmatpush1.bf16.msra.mxu0 %v7506
        %8323 = vmatprep.subr.bf16.mxu0 %v7523
        %8324 = vmatpush1.bf16.msra.mxu0 %v7522
        %8325 = vmatprep.subr.bf16.mxu0 %v7539
        %8326 = vmatpush1.bf16.msra.mxu0 %v7538
        %8327 = vmatprep.subr.bf16.mxu0 %v7555
        %8328 = vmatpush1.bf16.msra.mxu0 %v7554
        %8329 = vmatprep.subr.bf16.mxu0 %v7571
        %8330 = vmatpush1.bf16.msra.mxu0 %v7570
        %8331 = vmatprep.mubr.bf16.mxu0 %v5021
        %8332 = vmatmul.mubr.bf16.gmra.mrb[0].mxu0 %v5020
        %v8333 = vpop.f32.mrb[0].mxu0
        %v8334 = vadd.f32 %v8293, %v8333
        %v8335 = vpop.f32.mrb[0].mxu0
        %v8336 = vadd.f32 %v8295, %v8335
        %v8337 = vpop.f32.mrb[0].mxu0
        %v8338 = vpop.f32.mrb[0].mxu0
        %8339 = vdwg.mxu0
        %8340 = vmatprep.subr.bf16.mxu0 %v7077
        %8341 = vmatpush1.bf16.msra.mxu0 %v7076
        %8342 = vmatprep.subr.bf16.mxu0 %v7093
        %8343 = vmatpush1.bf16.msra.mxu0 %v7092
        %8344 = vmatprep.subr.bf16.mxu0 %v7109
        %8345 = vmatpush1.bf16.msra.mxu0 %v7108
        %8346 = vmatprep.subr.bf16.mxu0 %v7125
        %8347 = vmatpush1.bf16.msra.mxu0 %v7124
        %8348 = vmatprep.subr.bf16.mxu0 %v7141
        %8349 = vmatpush1.bf16.msra.mxu0 %v7140
        %8350 = vmatprep.subr.bf16.mxu0 %v7157
        %8351 = vmatpush1.bf16.msra.mxu0 %v7156
        %8352 = vmatprep.subr.bf16.mxu0 %v7173
        %8353 = vmatpush1.bf16.msra.mxu0 %v7172
        %8354 = vmatprep.subr.bf16.mxu0 %v7189
        %8355 = vmatpush1.bf16.msra.mxu0 %v7188
        %8356 = vmatprep.subr.bf16.mxu0 %v7205
        %8357 = vmatpush1.bf16.msra.mxu0 %v7204
        %8358 = vmatprep.subr.bf16.mxu0 %v7221
        %8359 = vmatpush1.bf16.msra.mxu0 %v7220
        %8360 = vmatprep.subr.bf16.mxu0 %v7237
        %8361 = vmatpush1.bf16.msra.mxu0 %v7236
        %8362 = vmatprep.subr.bf16.mxu0 %v7253
        %8363 = vmatpush1.bf16.msra.mxu0 %v7252
        %8364 = vmatprep.subr.bf16.mxu0 %v7269
        %8365 = vmatpush1.bf16.msra.mxu0 %v7268
        %8366 = vmatprep.subr.bf16.mxu0 %v7285
        %8367 = vmatpush1.bf16.msra.mxu0 %v7284
        %8368 = vmatprep.subr.bf16.mxu0 %v7301
        %8369 = vmatpush1.bf16.msra.mxu0 %v7300
        %8370 = vmatprep.subr.bf16.mxu0 %v7317
        %8371 = vmatpush1.bf16.msra.mxu0 %v7316
        %8372 = vmatprep.mubr.bf16.mxu0 %v5019
        %8373 = vmatmul.mubr.bf16.gmra.mrb[0].mxu0 %v5018
        %v8374 = vpop.f32.mrb[0].mxu0
        %v8375 = vadd.f32 0.0, %v8374
        %v8376 = vpop.f32.mrb[0].mxu0
        %v8377 = vadd.f32 0.0, %v8376
        %v8378 = vpop.f32.mrb[0].mxu0
        %v8379 = vpop.f32.mrb[0].mxu0
        %8380 = vdwg.mxu0
        %8381 = vmatprep.subr.bf16.mxu0 %v7333
        %8382 = vmatpush1.bf16.msra.mxu0 %v7332
        %8383 = vmatprep.subr.bf16.mxu0 %v7349
        %8384 = vmatpush1.bf16.msra.mxu0 %v7348
        %8385 = vmatprep.subr.bf16.mxu0 %v7365
        %8386 = vmatpush1.bf16.msra.mxu0 %v7364
        %8387 = vmatprep.subr.bf16.mxu0 %v7381
        %8388 = vmatpush1.bf16.msra.mxu0 %v7380
        %8389 = vmatprep.subr.bf16.mxu0 %v7397
        %8390 = vmatpush1.bf16.msra.mxu0 %v7396
        %8391 = vmatprep.subr.bf16.mxu0 %v7413
        %8392 = vmatpush1.bf16.msra.mxu0 %v7412
        %8393 = vmatprep.subr.bf16.mxu0 %v7429
        %8394 = vmatpush1.bf16.msra.mxu0 %v7428
        %8395 = vmatprep.subr.bf16.mxu0 %v7445
        %8396 = vmatpush1.bf16.msra.mxu0 %v7444
        %8397 = vmatprep.subr.bf16.mxu0 %v7461
        %8398 = vmatpush1.bf16.msra.mxu0 %v7460
        %8399 = vmatprep.subr.bf16.mxu0 %v7477
        %8400 = vmatpush1.bf16.msra.mxu0 %v7476
        %8401 = vmatprep.subr.bf16.mxu0 %v7493
        %8402 = vmatpush1.bf16.msra.mxu0 %v7492
        %8403 = vmatprep.subr.bf16.mxu0 %v7509
        %8404 = vmatpush1.bf16.msra.mxu0 %v7508
        %8405 = vmatprep.subr.bf16.mxu0 %v7525
        %8406 = vmatpush1.bf16.msra.mxu0 %v7524
        %8407 = vmatprep.subr.bf16.mxu0 %v7541
        %8408 = vmatpush1.bf16.msra.mxu0 %v7540
        %8409 = vmatprep.subr.bf16.mxu0 %v7557
        %8410 = vmatpush1.bf16.msra.mxu0 %v7556
        %8411 = vmatprep.subr.bf16.mxu0 %v7573
        %8412 = vmatpush1.bf16.msra.mxu0 %v7572
        %8413 = vmatprep.mubr.bf16.mxu0 %v5021
        %8414 = vmatmul.mubr.bf16.gmra.mrb[0].mxu0 %v5020
        %v8415 = vpop.f32.mrb[0].mxu0
        %v8416 = vadd.f32 %v8375, %v8415
        %v8417 = vpop.f32.mrb[0].mxu0
        %v8418 = vadd.f32 %v8377, %v8417
        %v8419 = vpop.f32.mrb[0].mxu0
        %v8420 = vpop.f32.mrb[0].mxu0
        %8421 = vdwg.mxu0
        %8422 = vmatprep.subr.bf16.mxu0 %v7079
        %8423 = vmatpush1.bf16.msra.mxu0 %v7078
        %8424 = vmatprep.subr.bf16.mxu0 %v7095
        %8425 = vmatpush1.bf16.msra.mxu0 %v7094
        %8426 = vmatprep.subr.bf16.mxu0 %v7111
        %8427 = vmatpush1.bf16.msra.mxu0 %v7110
        %8428 = vmatprep.subr.bf16.mxu0 %v7127
        %8429 = vmatpush1.bf16.msra.mxu0 %v7126
        %8430 = vmatprep.subr.bf16.mxu0 %v7143
        %8431 = vmatpush1.bf16.msra.mxu0 %v7142
        %8432 = vmatprep.subr.bf16.mxu0 %v7159
        %8433 = vmatpush1.bf16.msra.mxu0 %v7158
        %8434 = vmatprep.subr.bf16.mxu0 %v7175
        %8435 = vmatpush1.bf16.msra.mxu0 %v7174
        %8436 = vmatprep.subr.bf16.mxu0 %v7191
        %8437 = vmatpush1.bf16.msra.mxu0 %v7190
        %8438 = vmatprep.subr.bf16.mxu0 %v7207
        %8439 = vmatpush1.bf16.msra.mxu0 %v7206
        %8440 = vmatprep.subr.bf16.mxu0 %v7223
        %8441 = vmatpush1.bf16.msra.mxu0 %v7222
        %8442 = vmatprep.subr.bf16.mxu0 %v7239
        %8443 = vmatpush1.bf16.msra.mxu0 %v7238
        %8444 = vmatprep.subr.bf16.mxu0 %v7255
        %8445 = vmatpush1.bf16.msra.mxu0 %v7254
        %8446 = vmatprep.subr.bf16.mxu0 %v7271
        %8447 = vmatpush1.bf16.msra.mxu0 %v7270
        %8448 = vmatprep.subr.bf16.mxu0 %v7287
        %8449 = vmatpush1.bf16.msra.mxu0 %v7286
        %8450 = vmatprep.subr.bf16.mxu0 %v7303
        %8451 = vmatpush1.bf16.msra.mxu0 %v7302
        %8452 = vmatprep.subr.bf16.mxu0 %v7319
        %8453 = vmatpush1.bf16.msra.mxu0 %v7318
        %8454 = vmatprep.mubr.bf16.mxu0 %v5019
        %8455 = vmatmul.mubr.bf16.gmra.mrb[0].mxu0 %v5018
        %v8456 = vpop.f32.mrb[0].mxu0
        %v8457 = vadd.f32 0.0, %v8456
        %v8458 = vpop.f32.mrb[0].mxu0
        %v8459 = vadd.f32 0.0, %v8458
        %v8460 = vpop.f32.mrb[0].mxu0
        %v8461 = vpop.f32.mrb[0].mxu0
        %8462 = vdwg.mxu0
        %8463 = vmatprep.subr.bf16.mxu0 %v7335
        %8464 = vmatpush1.bf16.msra.mxu0 %v7334
        %8465 = vmatprep.subr.bf16.mxu0 %v7351
        %8466 = vmatpush1.bf16.msra.mxu0 %v7350
        %8467 = vmatprep.subr.bf16.mxu0 %v7367
        %8468 = vmatpush1.bf16.msra.mxu0 %v7366
        %8469 = vmatprep.subr.bf16.mxu0 %v7383
        %8470 = vmatpush1.bf16.msra.mxu0 %v7382
        %8471 = vmatprep.subr.bf16.mxu0 %v7399
        %8472 = vmatpush1.bf16.msra.mxu0 %v7398
        %8473 = vmatprep.subr.bf16.mxu0 %v7415
        %8474 = vmatpush1.bf16.msra.mxu0 %v7414
        %8475 = vmatprep.subr.bf16.mxu0 %v7431
        %8476 = vmatpush1.bf16.msra.mxu0 %v7430
        %8477 = vmatprep.subr.bf16.mxu0 %v7447
        %8478 = vmatpush1.bf16.msra.mxu0 %v7446
        %8479 = vmatprep.subr.bf16.mxu0 %v7463
        %8480 = vmatpush1.bf16.msra.mxu0 %v7462
        %8481 = vmatprep.subr.bf16.mxu0 %v7479
        %8482 = vmatpush1.bf16.msra.mxu0 %v7478
        %8483 = vmatprep.subr.bf16.mxu0 %v7495
        %8484 = vmatpush1.bf16.msra.mxu0 %v7494
        %8485 = vmatprep.subr.bf16.mxu0 %v7511
        %8486 = vmatpush1.bf16.msra.mxu0 %v7510
        %8487 = vmatprep.subr.bf16.mxu0 %v7527
        %8488 = vmatpush1.bf16.msra.mxu0 %v7526
        %8489 = vmatprep.subr.bf16.mxu0 %v7543
        %8490 = vmatpush1.bf16.msra.mxu0 %v7542
        %8491 = vmatprep.subr.bf16.mxu0 %v7559
        %8492 = vmatpush1.bf16.msra.mxu0 %v7558
        %8493 = vmatprep.subr.bf16.mxu0 %v7575
        %8494 = vmatpush1.bf16.msra.mxu0 %v7574
        %8495 = vmatprep.mubr.bf16.mxu0 %v5021
        %8496 = vmatmul.mubr.bf16.gmra.mrb[0].mxu0 %v5020
        %v8497 = vpop.f32.mrb[0].mxu0
        %v8498 = vadd.f32 %v8457, %v8497
        %v8499 = vpop.f32.mrb[0].mxu0
        %v8500 = vadd.f32 %v8459, %v8499
        %v8501 = vpop.f32.mrb[0].mxu0
        %v8502 = vpop.f32.mrb[0].mxu0
        %8503 = vdwg.mxu0
        %8504 = vmatprep.subr.bf16.mxu0 %v7081
        %8505 = vmatpush1.bf16.msra.mxu0 %v7080
        %8506 = vmatprep.subr.bf16.mxu0 %v7097
        %8507 = vmatpush1.bf16.msra.mxu0 %v7096
        %8508 = vmatprep.subr.bf16.mxu0 %v7113
        %8509 = vmatpush1.bf16.msra.mxu0 %v7112
        %8510 = vmatprep.subr.bf16.mxu0 %v7129
        %8511 = vmatpush1.bf16.msra.mxu0 %v7128
        %8512 = vmatprep.subr.bf16.mxu0 %v7145
        %8513 = vmatpush1.bf16.msra.mxu0 %v7144
        %8514 = vmatprep.subr.bf16.mxu0 %v7161
        %8515 = vmatpush1.bf16.msra.mxu0 %v7160
        %8516 = vmatprep.subr.bf16.mxu0 %v7177
        %8517 = vmatpush1.bf16.msra.mxu0 %v7176
        %8518 = vmatprep.subr.bf16.mxu0 %v7193
        %8519 = vmatpush1.bf16.msra.mxu0 %v7192
        %8520 = vmatprep.subr.bf16.mxu0 %v7209
        %8521 = vmatpush1.bf16.msra.mxu0 %v7208
        %8522 = vmatprep.subr.bf16.mxu0 %v7225
        %8523 = vmatpush1.bf16.msra.mxu0 %v7224
        %8524 = vmatprep.subr.bf16.mxu0 %v7241
        %8525 = vmatpush1.bf16.msra.mxu0 %v7240
        %8526 = vmatprep.subr.bf16.mxu0 %v7257
        %8527 = vmatpush1.bf16.msra.mxu0 %v7256
        %8528 = vmatprep.subr.bf16.mxu0 %v7273
        %8529 = vmatpush1.bf16.msra.mxu0 %v7272
        %8530 = vmatprep.subr.bf16.mxu0 %v7289
        %8531 = vmatpush1.bf16.msra.mxu0 %v7288
        %8532 = vmatprep.subr.bf16.mxu0 %v7305
        %8533 = vmatpush1.bf16.msra.mxu0 %v7304
        %8534 = vmatprep.subr.bf16.mxu0 %v7321
        %8535 = vmatpush1.bf16.msra.mxu0 %v7320
        %8536 = vmatprep.mubr.bf16.mxu0 %v5019
        %8537 = vmatmul.mubr.bf16.gmra.mrb[0].mxu0 %v5018
        %v8538 = vpop.f32.mrb[0].mxu0
        %v8539 = vadd.f32 0.0, %v8538
        %v8540 = vpop.f32.mrb[0].mxu0
        %v8541 = vadd.f32 0.0, %v8540
        %v8542 = vpop.f32.mrb[0].mxu0
        %v8543 = vpop.f32.mrb[0].mxu0
        %8544 = vdwg.mxu0
        %8545 = vmatprep.subr.bf16.mxu0 %v7337
        %8546 = vmatpush1.bf16.msra.mxu0 %v7336
        %8547 = vmatprep.subr.bf16.mxu0 %v7353
        %8548 = vmatpush1.bf16.msra.mxu0 %v7352
        %8549 = vmatprep.subr.bf16.mxu0 %v7369
        %8550 = vmatpush1.bf16.msra.mxu0 %v7368
        %8551 = vmatprep.subr.bf16.mxu0 %v7385
        %8552 = vmatpush1.bf16.msra.mxu0 %v7384
        %8553 = vmatprep.subr.bf16.mxu0 %v7401
        %8554 = vmatpush1.bf16.msra.mxu0 %v7400
        %8555 = vmatprep.subr.bf16.mxu0 %v7417
        %8556 = vmatpush1.bf16.msra.mxu0 %v7416
        %8557 = vmatprep.subr.bf16.mxu0 %v7433
        %8558 = vmatpush1.bf16.msra.mxu0 %v7432
        %8559 = vmatprep.subr.bf16.mxu0 %v7449
        %8560 = vmatpush1.bf16.msra.mxu0 %v7448
        %8561 = vmatprep.subr.bf16.mxu0 %v7465
        %8562 = vmatpush1.bf16.msra.mxu0 %v7464
        %8563 = vmatprep.subr.bf16.mxu0 %v7481
        %8564 = vmatpush1.bf16.msra.mxu0 %v7480
        %8565 = vmatprep.subr.bf16.mxu0 %v7497
        %8566 = vmatpush1.bf16.msra.mxu0 %v7496
        %8567 = vmatprep.subr.bf16.mxu0 %v7513
        %8568 = vmatpush1.bf16.msra.mxu0 %v7512
        %8569 = vmatprep.subr.bf16.mxu0 %v7529
        %8570 = vmatpush1.bf16.msra.mxu0 %v7528
        %8571 = vmatprep.subr.bf16.mxu0 %v7545
        %8572 = vmatpush1.bf16.msra.mxu0 %v7544
        %8573 = vmatprep.subr.bf16.mxu0 %v7561
        %8574 = vmatpush1.bf16.msra.mxu0 %v7560
        %8575 = vmatprep.subr.bf16.mxu0 %v7577
        %8576 = vmatpush1.bf16.msra.mxu0 %v7576
        %8577 = vmatprep.mubr.bf16.mxu0 %v5021
        %8578 = vmatmul.mubr.bf16.gmra.mrb[0].mxu0 %v5020
        %v8579 = vpop.f32.mrb[0].mxu0
        %v8580 = vadd.f32 %v8539, %v8579
        %v8581 = vpop.f32.mrb[0].mxu0
        %v8582 = vadd.f32 %v8541, %v8581
        %v8583 = vpop.f32.mrb[0].mxu0
        %v8584 = vpop.f32.mrb[0].mxu0
        %8585 = vdwg.mxu0
        %8586 = vmatprep.subr.bf16.mxu0 %v7083
        %8587 = vmatpush1.bf16.msra.mxu0 %v7082
        %8588 = vmatprep.subr.bf16.mxu0 %v7099
        %8589 = vmatpush1.bf16.msra.mxu0 %v7098
        %8590 = vmatprep.subr.bf16.mxu0 %v7115
        %8591 = vmatpush1.bf16.msra.mxu0 %v7114
        %8592 = vmatprep.subr.bf16.mxu0 %v7131
        %8593 = vmatpush1.bf16.msra.mxu0 %v7130
        %8594 = vmatprep.subr.bf16.mxu0 %v7147
        %8595 = vmatpush1.bf16.msra.mxu0 %v7146
        %8596 = vmatprep.subr.bf16.mxu0 %v7163
        %8597 = vmatpush1.bf16.msra.mxu0 %v7162
        %8598 = vmatprep.subr.bf16.mxu0 %v7179
        %8599 = vmatpush1.bf16.msra.mxu0 %v7178
        %8600 = vmatprep.subr.bf16.mxu0 %v7195
        %8601 = vmatpush1.bf16.msra.mxu0 %v7194
        %8602 = vmatprep.subr.bf16.mxu0 %v7211
        %8603 = vmatpush1.bf16.msra.mxu0 %v7210
        %8604 = vmatprep.subr.bf16.mxu0 %v7227
        %8605 = vmatpush1.bf16.msra.mxu0 %v7226
        %8606 = vmatprep.subr.bf16.mxu0 %v7243
        %8607 = vmatpush1.bf16.msra.mxu0 %v7242
        %8608 = vmatprep.subr.bf16.mxu0 %v7259
        %8609 = vmatpush1.bf16.msra.mxu0 %v7258
        %8610 = vmatprep.subr.bf16.mxu0 %v7275
        %8611 = vmatpush1.bf16.msra.mxu0 %v7274
        %8612 = vmatprep.subr.bf16.mxu0 %v7291
        %8613 = vmatpush1.bf16.msra.mxu0 %v7290
        %8614 = vmatprep.subr.bf16.mxu0 %v7307
        %8615 = vmatpush1.bf16.msra.mxu0 %v7306
        %8616 = vmatprep.subr.bf16.mxu0 %v7323
        %8617 = vmatpush1.bf16.msra.mxu0 %v7322
        %8618 = vmatprep.mubr.bf16.mxu0 %v5019
        %8619 = vmatmul.mubr.bf16.gmra.mrb[0].mxu0 %v5018
        %v8620 = vpop.f32.mrb[0].mxu0
        %v8621 = vadd.f32 0.0, %v8620
        %v8622 = vpop.f32.mrb[0].mxu0
        %v8623 = vadd.f32 0.0, %v8622
        %v8624 = vpop.f32.mrb[0].mxu0
        %v8625 = vpop.f32.mrb[0].mxu0
        %8626 = vdwg.mxu0
        %8627 = vmatprep.subr.bf16.mxu0 %v7339
        %8628 = vmatpush1.bf16.msra.mxu0 %v7338
        %8629 = vmatprep.subr.bf16.mxu0 %v7355
        %8630 = vmatpush1.bf16.msra.mxu0 %v7354
        %8631 = vmatprep.subr.bf16.mxu0 %v7371
        %8632 = vmatpush1.bf16.msra.mxu0 %v7370
        %8633 = vmatprep.subr.bf16.mxu0 %v7387
        %8634 = vmatpush1.bf16.msra.mxu0 %v7386
        %8635 = vmatprep.subr.bf16.mxu0 %v7403
        %8636 = vmatpush1.bf16.msra.mxu0 %v7402
        %8637 = vmatprep.subr.bf16.mxu0 %v7419
        %8638 = vmatpush1.bf16.msra.mxu0 %v7418
        %8639 = vmatprep.subr.bf16.mxu0 %v7435
        %8640 = vmatpush1.bf16.msra.mxu0 %v7434
        %8641 = vmatprep.subr.bf16.mxu0 %v7451
        %8642 = vmatpush1.bf16.msra.mxu0 %v7450
        %8643 = vmatprep.subr.bf16.mxu0 %v7467
        %8644 = vmatpush1.bf16.msra.mxu0 %v7466
        %8645 = vmatprep.subr.bf16.mxu0 %v7483
        %8646 = vmatpush1.bf16.msra.mxu0 %v7482
        %8647 = vmatprep.subr.bf16.mxu0 %v7499
        %8648 = vmatpush1.bf16.msra.mxu0 %v7498
        %8649 = vmatprep.subr.bf16.mxu0 %v7515
        %8650 = vmatpush1.bf16.msra.mxu0 %v7514
        %8651 = vmatprep.subr.bf16.mxu0 %v7531
        %8652 = vmatpush1.bf16.msra.mxu0 %v7530
        %8653 = vmatprep.subr.bf16.mxu0 %v7547
        %8654 = vmatpush1.bf16.msra.mxu0 %v7546
        %8655 = vmatprep.subr.bf16.mxu0 %v7563
        %8656 = vmatpush1.bf16.msra.mxu0 %v7562
        %8657 = vmatprep.subr.bf16.mxu0 %v7579
        %8658 = vmatpush1.bf16.msra.mxu0 %v7578
        %8659 = vmatprep.mubr.bf16.mxu0 %v5021
        %8660 = vmatmul.mubr.bf16.gmra.mrb[0].mxu0 %v5020
        %v8661 = vpop.f32.mrb[0].mxu0
        %v8662 = vadd.f32 %v8621, %v8661
        %v8663 = vpop.f32.mrb[0].mxu0
        %v8664 = vadd.f32 %v8623, %v8663
        %v8665 = vpop.f32.mrb[0].mxu0
        %v8666 = vpop.f32.mrb[0].mxu0
        %8667 = vdwg.mxu0
        %8668 = vmatprep.subr.bf16.mxu0 %v7085
        %8669 = vmatpush1.bf16.msra.mxu0 %v7084
        %8670 = vmatprep.subr.bf16.mxu0 %v7101
        %8671 = vmatpush1.bf16.msra.mxu0 %v7100
        %8672 = vmatprep.subr.bf16.mxu0 %v7117
        %8673 = vmatpush1.bf16.msra.mxu0 %v7116
        %8674 = vmatprep.subr.bf16.mxu0 %v7133
        %8675 = vmatpush1.bf16.msra.mxu0 %v7132
        %8676 = vmatprep.subr.bf16.mxu0 %v7149
        %8677 = vmatpush1.bf16.msra.mxu0 %v7148
        %8678 = vmatprep.subr.bf16.mxu0 %v7165
        %8679 = vmatpush1.bf16.msra.mxu0 %v7164
        %8680 = vmatprep.subr.bf16.mxu0 %v7181
        %8681 = vmatpush1.bf16.msra.mxu0 %v7180
        %8682 = vmatprep.subr.bf16.mxu0 %v7197
        %8683 = vmatpush1.bf16.msra.mxu0 %v7196
        %8684 = vmatprep.subr.bf16.mxu0 %v7213
        %8685 = vmatpush1.bf16.msra.mxu0 %v7212
        %8686 = vmatprep.subr.bf16.mxu0 %v7229
        %8687 = vmatpush1.bf16.msra.mxu0 %v7228
        %8688 = vmatprep.subr.bf16.mxu0 %v7245
        %8689 = vmatpush1.bf16.msra.mxu0 %v7244
        %8690 = vmatprep.subr.bf16.mxu0 %v7261
        %8691 = vmatpush1.bf16.msra.mxu0 %v7260
        %8692 = vmatprep.subr.bf16.mxu0 %v7277
        %8693 = vmatpush1.bf16.msra.mxu0 %v7276
        %8694 = vmatprep.subr.bf16.mxu0 %v7293
        %8695 = vmatpush1.bf16.msra.mxu0 %v7292
        %8696 = vmatprep.subr.bf16.mxu0 %v7309
        %8697 = vmatpush1.bf16.msra.mxu0 %v7308
        %8698 = vmatprep.subr.bf16.mxu0 %v7325
        %8699 = vmatpush1.bf16.msra.mxu0 %v7324
        %8700 = vmatprep.mubr.bf16.mxu0 %v5019
        %8701 = vmatmul.mubr.bf16.gmra.mrb[0].mxu0 %v5018
        %v8702 = vpop.f32.mrb[0].mxu0
        %v8703 = vadd.f32 0.0, %v8702
        %v8704 = vpop.f32.mrb[0].mxu0
        %v8705 = vadd.f32 0.0, %v8704
        %v8706 = vpop.f32.mrb[0].mxu0
        %v8707 = vpop.f32.mrb[0].mxu0
        %8708 = vdwg.mxu0
        %8709 = vmatprep.subr.bf16.mxu0 %v7341
        %8710 = vmatpush1.bf16.msra.mxu0 %v7340
        %8711 = vmatprep.subr.bf16.mxu0 %v7357
        %8712 = vmatpush1.bf16.msra.mxu0 %v7356
        %8713 = vmatprep.subr.bf16.mxu0 %v7373
        %8714 = vmatpush1.bf16.msra.mxu0 %v7372
        %8715 = vmatprep.subr.bf16.mxu0 %v7389
        %8716 = vmatpush1.bf16.msra.mxu0 %v7388
        %8717 = vmatprep.subr.bf16.mxu0 %v7405
        %8718 = vmatpush1.bf16.msra.mxu0 %v7404
        %8719 = vmatprep.subr.bf16.mxu0 %v7421
        %8720 = vmatpush1.bf16.msra.mxu0 %v7420
        %8721 = vmatprep.subr.bf16.mxu0 %v7437
        %8722 = vmatpush1.bf16.msra.mxu0 %v7436
        %8723 = vmatprep.subr.bf16.mxu0 %v7453
        %8724 = vmatpush1.bf16.msra.mxu0 %v7452
        %8725 = vmatprep.subr.bf16.mxu0 %v7469
        %8726 = vmatpush1.bf16.msra.mxu0 %v7468
        %8727 = vmatprep.subr.bf16.mxu0 %v7485
        %8728 = vmatpush1.bf16.msra.mxu0 %v7484
        %8729 = vmatprep.subr.bf16.mxu0 %v7501
        %8730 = vmatpush1.bf16.msra.mxu0 %v7500
        %8731 = vmatprep.subr.bf16.mxu0 %v7517
        %8732 = vmatpush1.bf16.msra.mxu0 %v7516
        %8733 = vmatprep.subr.bf16.mxu0 %v7533
        %8734 = vmatpush1.bf16.msra.mxu0 %v7532
        %8735 = vmatprep.subr.bf16.mxu0 %v7549
        %8736 = vmatpush1.bf16.msra.mxu0 %v7548
        %8737 = vmatprep.subr.bf16.mxu0 %v7565
        %8738 = vmatpush1.bf16.msra.mxu0 %v7564
        %8739 = vmatprep.subr.bf16.mxu0 %v7581
        %8740 = vmatpush1.bf16.msra.mxu0 %v7580
        %8741 = vmatprep.mubr.bf16.mxu0 %v5021
        %8742 = vmatmul.mubr.bf16.gmra.mrb[0].mxu0 %v5020
        %v8743 = vpop.f32.mrb[0].mxu0
        %v8744 = vadd.f32 %v8703, %v8743
        %v8745 = vpop.f32.mrb[0].mxu0
        %v8746 = vadd.f32 %v8705, %v8745
        %v8747 = vpop.f32.mrb[0].mxu0
        %v8748 = vpop.f32.mrb[0].mxu0
        %8749 = vdwg.mxu0
        %v8750 = vmax.f32 %v8170, 0.0
        %v8751 = vmax.f32 %v8172, 0.0
        %v8752 = vmax.f32 %v8252, 0.0
        %v8753 = vmax.f32 %v8254, 0.0
        %v8754 = vmax.f32 %v8334, 0.0
        %v8755 = vmax.f32 %v8336, 0.0
        %v8756 = vmax.f32 %v8416, 0.0
        %v8757 = vmax.f32 %v8418, 0.0
        %v8758 = vmax.f32 %v8498, 0.0
        %v8759 = vmax.f32 %v8500, 0.0
        %v8760 = vmax.f32 %v8580, 0.0
        %v8761 = vmax.f32 %v8582, 0.0
        %v8762 = vmax.f32 %v8662, 0.0
        %v8763 = vmax.f32 %v8664, 0.0
        %v8764 = vmax.f32 %v8744, 0.0
        %v8765 = vmax.f32 %v8746, 0.0
        %v8766 = vpack.c.bf16 %v8750, %v8750
        %v8767 = vpack.c.bf16 %v8751, %v8751
        %v8768 = vpack.c.bf16 %v8752, %v8752
        %v8769 = vpack.c.bf16 %v8753, %v8753
        %v8770 = vpack.c.bf16 %v8754, %v8754
        %v8771 = vpack.c.bf16 %v8755, %v8755
        %v8772 = vpack.c.bf16 %v8756, %v8756
        %v8773 = vpack.c.bf16 %v8757, %v8757
        %v8774 = vpack.c.bf16 %v8758, %v8758
        %v8775 = vpack.c.bf16 %v8759, %v8759
        %v8776 = vpack.c.bf16 %v8760, %v8760
        %v8777 = vpack.c.bf16 %v8761, %v8761
        %v8778 = vpack.c.bf16 %v8762, %v8762
        %v8779 = vpack.c.bf16 %v8763, %v8763
        %v8780 = vpack.c.bf16 %v8764, %v8764
        %v8781 = vpack.c.bf16 %v8765, %v8765
        %v8782 = vld [vmem:[%s5] sm:$0xff]
        %v8783 = vld [vmem:[%s5 + $0x8] sm:$0xff]
        %v8784 = vld [vmem:[%s5 + $0x10] sm:$0xff]
        %v8785 = vld [vmem:[%s5 + $0x18] sm:$0xff]
        %v8786 = vld [vmem:[%s5 + $0x20] sm:$0xff]
        %v8787 = vld [vmem:[%s5 + $0x28] sm:$0xff]
        %v8788 = vld [vmem:[%s5 + $0x30] sm:$0xff]
        %v8789 = vld [vmem:[%s5 + $0x38] sm:$0xff]
        %v8790 = vld [vmem:[%s5 + $0x40] sm:$0xff]
        %v8791 = vld [vmem:[%s5 + $0x48] sm:$0xff]
        %v8792 = vld [vmem:[%s5 + $0x50] sm:$0xff]
        %v8793 = vld [vmem:[%s5 + $0x58] sm:$0xff]
        %v8794 = vld [vmem:[%s5 + $0x60] sm:$0xff]
        %v8795 = vld [vmem:[%s5 + $0x68] sm:$0xff]
        %v8796 = vld [vmem:[%s5 + $0x70] sm:$0xff]
        %v8797 = vld [vmem:[%s5 + $0x78] sm:$0xff]
        %v8798 = vld [vmem:[%s5 + $0x80] sm:$0xff]
        %v8799 = vld [vmem:[%s5 + $0x88] sm:$0xff]
        %v8800 = vld [vmem:[%s5 + $0x90] sm:$0xff]
        %v8801 = vld [vmem:[%s5 + $0x98] sm:$0xff]
        %v8802 = vld [vmem:[%s5 + $0xa0] sm:$0xff]
        %v8803 = vld [vmem:[%s5 + $0xa8] sm:$0xff]
        %v8804 = vld [vmem:[%s5 + $0xb0] sm:$0xff]
        %v8805 = vld [vmem:[%s5 + $0xb8] sm:$0xff]
        %v8806 = vld [vmem:[%s5 + $0xc0] sm:$0xff]
        %v8807 = vld [vmem:[%s5 + $0xc8] sm:$0xff]
        %v8808 = vld [vmem:[%s5 + $0xd0] sm:$0xff]
        %v8809 = vld [vmem:[%s5 + $0xd8] sm:$0xff]
        %v8810 = vld [vmem:[%s5 + $0xe0] sm:$0xff]
        %v8811 = vld [vmem:[%s5 + $0xe8] sm:$0xff]
        %v8812 = vld [vmem:[%s5 + $0xf0] sm:$0xff]
        %v8813 = vld [vmem:[%s5 + $0xf8] sm:$0xff]
        %v8814 = vld [vmem:[%s5 + $0x100] sm:$0xff]
        %v8815 = vld [vmem:[%s5 + $0x108] sm:$0xff]
        %v8816 = vld [vmem:[%s5 + $0x110] sm:$0xff]
        %v8817 = vld [vmem:[%s5 + $0x118] sm:$0xff]
        %v8818 = vld [vmem:[%s5 + $0x120] sm:$0xff]
        %v8819 = vld [vmem:[%s5 + $0x128] sm:$0xff]
        %v8820 = vld [vmem:[%s5 + $0x130] sm:$0xff]
        %v8821 = vld [vmem:[%s5 + $0x138] sm:$0xff]
        %v8822 = vld [vmem:[%s5 + $0x140] sm:$0xff]
        %v8823 = vld [vmem:[%s5 + $0x148] sm:$0xff]
        %v8824 = vld [vmem:[%s5 + $0x150] sm:$0xff]
        %v8825 = vld [vmem:[%s5 + $0x158] sm:$0xff]
        %v8826 = vld [vmem:[%s5 + $0x160] sm:$0xff]
        %v8827 = vld [vmem:[%s5 + $0x168] sm:$0xff]
        %v8828 = vld [vmem:[%s5 + $0x170] sm:$0xff]
        %v8829 = vld [vmem:[%s5 + $0x178] sm:$0xff]
        %v8830 = vld [vmem:[%s5 + $0x180] sm:$0xff]
        %v8831 = vld [vmem:[%s5 + $0x188] sm:$0xff]
        %v8832 = vld [vmem:[%s5 + $0x190] sm:$0xff]
        %v8833 = vld [vmem:[%s5 + $0x198] sm:$0xff]
        %v8834 = vld [vmem:[%s5 + $0x1a0] sm:$0xff]
        %v8835 = vld [vmem:[%s5 + $0x1a8] sm:$0xff]
        %v8836 = vld [vmem:[%s5 + $0x1b0] sm:$0xff]
        %v8837 = vld [vmem:[%s5 + $0x1b8] sm:$0xff]
        %v8838 = vld [vmem:[%s5 + $0x1c0] sm:$0xff]
        %v8839 = vld [vmem:[%s5 + $0x1c8] sm:$0xff]
        %v8840 = vld [vmem:[%s5 + $0x1d0] sm:$0xff]
        %v8841 = vld [vmem:[%s5 + $0x1d8] sm:$0xff]
        %v8842 = vld [vmem:[%s5 + $0x1e0] sm:$0xff]
        %v8843 = vld [vmem:[%s5 + $0x1e8] sm:$0xff]
        %v8844 = vld [vmem:[%s5 + $0x1f0] sm:$0xff]
        %v8845 = vld [vmem:[%s5 + $0x1f8] sm:$0xff]
        %v8846 = vld [vmem:[%s5 + $0x200] sm:$0xff]
        %v8847 = vld [vmem:[%s5 + $0x208] sm:$0xff]
        %v8848 = vld [vmem:[%s5 + $0x210] sm:$0xff]
        %v8849 = vld [vmem:[%s5 + $0x218] sm:$0xff]
        %v8850 = vld [vmem:[%s5 + $0x220] sm:$0xff]
        %v8851 = vld [vmem:[%s5 + $0x228] sm:$0xff]
        %v8852 = vld [vmem:[%s5 + $0x230] sm:$0xff]
        %v8853 = vld [vmem:[%s5 + $0x238] sm:$0xff]
        %v8854 = vld [vmem:[%s5 + $0x240] sm:$0xff]
        %v8855 = vld [vmem:[%s5 + $0x248] sm:$0xff]
        %v8856 = vld [vmem:[%s5 + $0x250] sm:$0xff]
        %v8857 = vld [vmem:[%s5 + $0x258] sm:$0xff]
        %v8858 = vld [vmem:[%s5 + $0x260] sm:$0xff]
        %v8859 = vld [vmem:[%s5 + $0x268] sm:$0xff]
        %v8860 = vld [vmem:[%s5 + $0x270] sm:$0xff]
        %v8861 = vld [vmem:[%s5 + $0x278] sm:$0xff]
        %v8862 = vld [vmem:[%s5 + $0x280] sm:$0xff]
        %v8863 = vld [vmem:[%s5 + $0x288] sm:$0xff]
        %v8864 = vld [vmem:[%s5 + $0x290] sm:$0xff]
        %v8865 = vld [vmem:[%s5 + $0x298] sm:$0xff]
        %v8866 = vld [vmem:[%s5 + $0x2a0] sm:$0xff]
        %v8867 = vld [vmem:[%s5 + $0x2a8] sm:$0xff]
        %v8868 = vld [vmem:[%s5 + $0x2b0] sm:$0xff]
        %v8869 = vld [vmem:[%s5 + $0x2b8] sm:$0xff]
        %v8870 = vld [vmem:[%s5 + $0x2c0] sm:$0xff]
        %v8871 = vld [vmem:[%s5 + $0x2c8] sm:$0xff]
        %v8872 = vld [vmem:[%s5 + $0x2d0] sm:$0xff]
        %v8873 = vld [vmem:[%s5 + $0x2d8] sm:$0xff]
        %v8874 = vld [vmem:[%s5 + $0x2e0] sm:$0xff]
        %v8875 = vld [vmem:[%s5 + $0x2e8] sm:$0xff]
        %v8876 = vld [vmem:[%s5 + $0x2f0] sm:$0xff]
        %v8877 = vld [vmem:[%s5 + $0x2f8] sm:$0xff]
        %v8878 = vld [vmem:[%s5 + $0x300] sm:$0xff]
        %v8879 = vld [vmem:[%s5 + $0x308] sm:$0xff]
        %v8880 = vld [vmem:[%s5 + $0x310] sm:$0xff]
        %v8881 = vld [vmem:[%s5 + $0x318] sm:$0xff]
        %v8882 = vld [vmem:[%s5 + $0x320] sm:$0xff]
        %v8883 = vld [vmem:[%s5 + $0x328] sm:$0xff]
        %v8884 = vld [vmem:[%s5 + $0x330] sm:$0xff]
        %v8885 = vld [vmem:[%s5 + $0x338] sm:$0xff]
        %v8886 = vld [vmem:[%s5 + $0x340] sm:$0xff]
        %v8887 = vld [vmem:[%s5 + $0x348] sm:$0xff]
        %v8888 = vld [vmem:[%s5 + $0x350] sm:$0xff]
        %v8889 = vld [vmem:[%s5 + $0x358] sm:$0xff]
        %v8890 = vld [vmem:[%s5 + $0x360] sm:$0xff]
        %v8891 = vld [vmem:[%s5 + $0x368] sm:$0xff]
        %v8892 = vld [vmem:[%s5 + $0x370] sm:$0xff]
        %v8893 = vld [vmem:[%s5 + $0x378] sm:$0xff]
        %v8894 = vld [vmem:[%s5 + $0x380] sm:$0xff]
        %v8895 = vld [vmem:[%s5 + $0x388] sm:$0xff]
        %v8896 = vld [vmem:[%s5 + $0x390] sm:$0xff]
        %v8897 = vld [vmem:[%s5 + $0x398] sm:$0xff]
        %v8898 = vld [vmem:[%s5 + $0x3a0] sm:$0xff]
        %v8899 = vld [vmem:[%s5 + $0x3a8] sm:$0xff]
        %v8900 = vld [vmem:[%s5 + $0x3b0] sm:$0xff]
        %v8901 = vld [vmem:[%s5 + $0x3b8] sm:$0xff]
        %v8902 = vld [vmem:[%s5 + $0x3c0] sm:$0xff]
        %v8903 = vld [vmem:[%s5 + $0x3c8] sm:$0xff]
        %v8904 = vld [vmem:[%s5 + $0x3d0] sm:$0xff]
        %v8905 = vld [vmem:[%s5 + $0x3d8] sm:$0xff]
        %v8906 = vld [vmem:[%s5 + $0x3e0] sm:$0xff]
        %v8907 = vld [vmem:[%s5 + $0x3e8] sm:$0xff]
        %v8908 = vld [vmem:[%s5 + $0x3f0] sm:$0xff]
        %v8909 = vld [vmem:[%s5 + $0x3f8] sm:$0xff]
        %v8910 = vld [vmem:[%s5 + $0x400] sm:$0xff]
        %v8911 = vld [vmem:[%s5 + $0x408] sm:$0xff]
        %v8912 = vld [vmem:[%s5 + $0x410] sm:$0xff]
        %v8913 = vld [vmem:[%s5 + $0x418] sm:$0xff]
        %v8914 = vld [vmem:[%s5 + $0x420] sm:$0xff]
        %v8915 = vld [vmem:[%s5 + $0x428] sm:$0xff]
        %v8916 = vld [vmem:[%s5 + $0x430] sm:$0xff]
        %v8917 = vld [vmem:[%s5 + $0x438] sm:$0xff]
        %v8918 = vld [vmem:[%s5 + $0x440] sm:$0xff]
        %v8919 = vld [vmem:[%s5 + $0x448] sm:$0xff]
        %v8920 = vld [vmem:[%s5 + $0x450] sm:$0xff]
        %v8921 = vld [vmem:[%s5 + $0x458] sm:$0xff]
        %v8922 = vld [vmem:[%s5 + $0x460] sm:$0xff]
        %v8923 = vld [vmem:[%s5 + $0x468] sm:$0xff]
        %v8924 = vld [vmem:[%s5 + $0x470] sm:$0xff]
        %v8925 = vld [vmem:[%s5 + $0x478] sm:$0xff]
        %v8926 = vld [vmem:[%s5 + $0x480] sm:$0xff]
        %v8927 = vld [vmem:[%s5 + $0x488] sm:$0xff]
        %v8928 = vld [vmem:[%s5 + $0x490] sm:$0xff]
        %v8929 = vld [vmem:[%s5 + $0x498] sm:$0xff]
        %v8930 = vld [vmem:[%s5 + $0x4a0] sm:$0xff]
        %v8931 = vld [vmem:[%s5 + $0x4a8] sm:$0xff]
        %v8932 = vld [vmem:[%s5 + $0x4b0] sm:$0xff]
        %v8933 = vld [vmem:[%s5 + $0x4b8] sm:$0xff]
        %v8934 = vld [vmem:[%s5 + $0x4c0] sm:$0xff]
        %v8935 = vld [vmem:[%s5 + $0x4c8] sm:$0xff]
        %v8936 = vld [vmem:[%s5 + $0x4d0] sm:$0xff]
        %v8937 = vld [vmem:[%s5 + $0x4d8] sm:$0xff]
        %v8938 = vld [vmem:[%s5 + $0x4e0] sm:$0xff]
        %v8939 = vld [vmem:[%s5 + $0x4e8] sm:$0xff]
        %v8940 = vld [vmem:[%s5 + $0x4f0] sm:$0xff]
        %v8941 = vld [vmem:[%s5 + $0x4f8] sm:$0xff]
        %v8942 = vld [vmem:[%s5 + $0x500] sm:$0xff]
        %v8943 = vld [vmem:[%s5 + $0x508] sm:$0xff]
        %v8944 = vld [vmem:[%s5 + $0x510] sm:$0xff]
        %v8945 = vld [vmem:[%s5 + $0x518] sm:$0xff]
        %v8946 = vld [vmem:[%s5 + $0x520] sm:$0xff]
        %v8947 = vld [vmem:[%s5 + $0x528] sm:$0xff]
        %v8948 = vld [vmem:[%s5 + $0x530] sm:$0xff]
        %v8949 = vld [vmem:[%s5 + $0x538] sm:$0xff]
        %v8950 = vld [vmem:[%s5 + $0x540] sm:$0xff]
        %v8951 = vld [vmem:[%s5 + $0x548] sm:$0xff]
        %v8952 = vld [vmem:[%s5 + $0x550] sm:$0xff]
        %v8953 = vld [vmem:[%s5 + $0x558] sm:$0xff]
        %v8954 = vld [vmem:[%s5 + $0x560] sm:$0xff]
        %v8955 = vld [vmem:[%s5 + $0x568] sm:$0xff]
        %v8956 = vld [vmem:[%s5 + $0x570] sm:$0xff]
        %v8957 = vld [vmem:[%s5 + $0x578] sm:$0xff]
        %v8958 = vld [vmem:[%s5 + $0x580] sm:$0xff]
        %v8959 = vld [vmem:[%s5 + $0x588] sm:$0xff]
        %v8960 = vld [vmem:[%s5 + $0x590] sm:$0xff]
        %v8961 = vld [vmem:[%s5 + $0x598] sm:$0xff]
        %v8962 = vld [vmem:[%s5 + $0x5a0] sm:$0xff]
        %v8963 = vld [vmem:[%s5 + $0x5a8] sm:$0xff]
        %v8964 = vld [vmem:[%s5 + $0x5b0] sm:$0xff]
        %v8965 = vld [vmem:[%s5 + $0x5b8] sm:$0xff]
        %v8966 = vld [vmem:[%s5 + $0x5c0] sm:$0xff]
        %v8967 = vld [vmem:[%s5 + $0x5c8] sm:$0xff]
        %v8968 = vld [vmem:[%s5 + $0x5d0] sm:$0xff]
        %v8969 = vld [vmem:[%s5 + $0x5d8] sm:$0xff]
        %v8970 = vld [vmem:[%s5 + $0x5e0] sm:$0xff]
        %v8971 = vld [vmem:[%s5 + $0x5e8] sm:$0xff]
        %v8972 = vld [vmem:[%s5 + $0x5f0] sm:$0xff]
        %v8973 = vld [vmem:[%s5 + $0x5f8] sm:$0xff]
        %v8974 = vld [vmem:[%s5 + $0x600] sm:$0xff]
        %v8975 = vld [vmem:[%s5 + $0x608] sm:$0xff]
        %v8976 = vld [vmem:[%s5 + $0x610] sm:$0xff]
        %v8977 = vld [vmem:[%s5 + $0x618] sm:$0xff]
        %v8978 = vld [vmem:[%s5 + $0x620] sm:$0xff]
        %v8979 = vld [vmem:[%s5 + $0x628] sm:$0xff]
        %v8980 = vld [vmem:[%s5 + $0x630] sm:$0xff]
        %v8981 = vld [vmem:[%s5 + $0x638] sm:$0xff]
        %v8982 = vld [vmem:[%s5 + $0x640] sm:$0xff]
        %v8983 = vld [vmem:[%s5 + $0x648] sm:$0xff]
        %v8984 = vld [vmem:[%s5 + $0x650] sm:$0xff]
        %v8985 = vld [vmem:[%s5 + $0x658] sm:$0xff]
        %v8986 = vld [vmem:[%s5 + $0x660] sm:$0xff]
        %v8987 = vld [vmem:[%s5 + $0x668] sm:$0xff]
        %v8988 = vld [vmem:[%s5 + $0x670] sm:$0xff]
        %v8989 = vld [vmem:[%s5 + $0x678] sm:$0xff]
        %v8990 = vld [vmem:[%s5 + $0x680] sm:$0xff]
        %v8991 = vld [vmem:[%s5 + $0x688] sm:$0xff]
        %v8992 = vld [vmem:[%s5 + $0x690] sm:$0xff]
        %v8993 = vld [vmem:[%s5 + $0x698] sm:$0xff]
        %v8994 = vld [vmem:[%s5 + $0x6a0] sm:$0xff]
        %v8995 = vld [vmem:[%s5 + $0x6a8] sm:$0xff]
        %v8996 = vld [vmem:[%s5 + $0x6b0] sm:$0xff]
        %v8997 = vld [vmem:[%s5 + $0x6b8] sm:$0xff]
        %v8998 = vld [vmem:[%s5 + $0x6c0] sm:$0xff]
        %v8999 = vld [vmem:[%s5 + $0x6c8] sm:$0xff]
        %v9000 = vld [vmem:[%s5 + $0x6d0] sm:$0xff]
        %v9001 = vld [vmem:[%s5 + $0x6d8] sm:$0xff]
        %v9002 = vld [vmem:[%s5 + $0x6e0] sm:$0xff]
        %v9003 = vld [vmem:[%s5 + $0x6e8] sm:$0xff]
        %v9004 = vld [vmem:[%s5 + $0x6f0] sm:$0xff]
        %v9005 = vld [vmem:[%s5 + $0x6f8] sm:$0xff]
        %v9006 = vld [vmem:[%s5 + $0x700] sm:$0xff]
        %v9007 = vld [vmem:[%s5 + $0x708] sm:$0xff]
        %v9008 = vld [vmem:[%s5 + $0x710] sm:$0xff]
        %v9009 = vld [vmem:[%s5 + $0x718] sm:$0xff]
        %v9010 = vld [vmem:[%s5 + $0x720] sm:$0xff]
        %v9011 = vld [vmem:[%s5 + $0x728] sm:$0xff]
        %v9012 = vld [vmem:[%s5 + $0x730] sm:$0xff]
        %v9013 = vld [vmem:[%s5 + $0x738] sm:$0xff]
        %v9014 = vld [vmem:[%s5 + $0x740] sm:$0xff]
        %v9015 = vld [vmem:[%s5 + $0x748] sm:$0xff]
        %v9016 = vld [vmem:[%s5 + $0x750] sm:$0xff]
        %v9017 = vld [vmem:[%s5 + $0x758] sm:$0xff]
        %v9018 = vld [vmem:[%s5 + $0x760] sm:$0xff]
        %v9019 = vld [vmem:[%s5 + $0x768] sm:$0xff]
        %v9020 = vld [vmem:[%s5 + $0x770] sm:$0xff]
        %v9021 = vld [vmem:[%s5 + $0x778] sm:$0xff]
        %v9022 = vld [vmem:[%s5 + $0x780] sm:$0xff]
        %v9023 = vld [vmem:[%s5 + $0x788] sm:$0xff]
        %v9024 = vld [vmem:[%s5 + $0x790] sm:$0xff]
        %v9025 = vld [vmem:[%s5 + $0x798] sm:$0xff]
        %v9026 = vld [vmem:[%s5 + $0x7a0] sm:$0xff]
        %v9027 = vld [vmem:[%s5 + $0x7a8] sm:$0xff]
        %v9028 = vld [vmem:[%s5 + $0x7b0] sm:$0xff]
        %v9029 = vld [vmem:[%s5 + $0x7b8] sm:$0xff]
        %v9030 = vld [vmem:[%s5 + $0x7c0] sm:$0xff]
        %v9031 = vld [vmem:[%s5 + $0x7c8] sm:$0xff]
        %v9032 = vld [vmem:[%s5 + $0x7d0] sm:$0xff]
        %v9033 = vld [vmem:[%s5 + $0x7d8] sm:$0xff]
        %v9034 = vld [vmem:[%s5 + $0x7e0] sm:$0xff]
        %v9035 = vld [vmem:[%s5 + $0x7e8] sm:$0xff]
        %v9036 = vld [vmem:[%s5 + $0x7f0] sm:$0xff]
        %v9037 = vld [vmem:[%s5 + $0x7f8] sm:$0xff]
        %v9038 = vld [vmem:[%s5 + $0x800] sm:$0xff]
        %v9039 = vld [vmem:[%s5 + $0x808] sm:$0xff]
        %v9040 = vld [vmem:[%s5 + $0x810] sm:$0xff]
        %v9041 = vld [vmem:[%s5 + $0x818] sm:$0xff]
        %v9042 = vld [vmem:[%s5 + $0x820] sm:$0xff]
        %v9043 = vld [vmem:[%s5 + $0x828] sm:$0xff]
        %v9044 = vld [vmem:[%s5 + $0x830] sm:$0xff]
        %v9045 = vld [vmem:[%s5 + $0x838] sm:$0xff]
        %v9046 = vld [vmem:[%s5 + $0x840] sm:$0xff]
        %v9047 = vld [vmem:[%s5 + $0x848] sm:$0xff]
        %v9048 = vld [vmem:[%s5 + $0x850] sm:$0xff]
        %v9049 = vld [vmem:[%s5 + $0x858] sm:$0xff]
        %v9050 = vld [vmem:[%s5 + $0x860] sm:$0xff]
        %v9051 = vld [vmem:[%s5 + $0x868] sm:$0xff]
        %v9052 = vld [vmem:[%s5 + $0x870] sm:$0xff]
        %v9053 = vld [vmem:[%s5 + $0x878] sm:$0xff]
        %v9054 = vld [vmem:[%s5 + $0x880] sm:$0xff]
        %v9055 = vld [vmem:[%s5 + $0x888] sm:$0xff]
        %v9056 = vld [vmem:[%s5 + $0x890] sm:$0xff]
        %v9057 = vld [vmem:[%s5 + $0x898] sm:$0xff]
        %v9058 = vld [vmem:[%s5 + $0x8a0] sm:$0xff]
        %v9059 = vld [vmem:[%s5 + $0x8a8] sm:$0xff]
        %v9060 = vld [vmem:[%s5 + $0x8b0] sm:$0xff]
        %v9061 = vld [vmem:[%s5 + $0x8b8] sm:$0xff]
        %v9062 = vld [vmem:[%s5 + $0x8c0] sm:$0xff]
        %v9063 = vld [vmem:[%s5 + $0x8c8] sm:$0xff]
        %v9064 = vld [vmem:[%s5 + $0x8d0] sm:$0xff]
        %v9065 = vld [vmem:[%s5 + $0x8d8] sm:$0xff]
        %v9066 = vld [vmem:[%s5 + $0x8e0] sm:$0xff]
        %v9067 = vld [vmem:[%s5 + $0x8e8] sm:$0xff]
        %v9068 = vld [vmem:[%s5 + $0x8f0] sm:$0xff]
        %v9069 = vld [vmem:[%s5 + $0x8f8] sm:$0xff]
        %v9070 = vld [vmem:[%s5 + $0x900] sm:$0xff]
        %v9071 = vld [vmem:[%s5 + $0x908] sm:$0xff]
        %v9072 = vld [vmem:[%s5 + $0x910] sm:$0xff]
        %v9073 = vld [vmem:[%s5 + $0x918] sm:$0xff]
        %v9074 = vld [vmem:[%s5 + $0x920] sm:$0xff]
        %v9075 = vld [vmem:[%s5 + $0x928] sm:$0xff]
        %v9076 = vld [vmem:[%s5 + $0x930] sm:$0xff]
        %v9077 = vld [vmem:[%s5 + $0x938] sm:$0xff]
        %v9078 = vld [vmem:[%s5 + $0x940] sm:$0xff]
        %v9079 = vld [vmem:[%s5 + $0x948] sm:$0xff]
        %v9080 = vld [vmem:[%s5 + $0x950] sm:$0xff]
        %v9081 = vld [vmem:[%s5 + $0x958] sm:$0xff]
        %v9082 = vld [vmem:[%s5 + $0x960] sm:$0xff]
        %v9083 = vld [vmem:[%s5 + $0x968] sm:$0xff]
        %v9084 = vld [vmem:[%s5 + $0x970] sm:$0xff]
        %v9085 = vld [vmem:[%s5 + $0x978] sm:$0xff]
        %v9086 = vld [vmem:[%s5 + $0x980] sm:$0xff]
        %v9087 = vld [vmem:[%s5 + $0x988] sm:$0xff]
        %v9088 = vld [vmem:[%s5 + $0x990] sm:$0xff]
        %v9089 = vld [vmem:[%s5 + $0x998] sm:$0xff]
        %v9090 = vld [vmem:[%s5 + $0x9a0] sm:$0xff]
        %v9091 = vld [vmem:[%s5 + $0x9a8] sm:$0xff]
        %v9092 = vld [vmem:[%s5 + $0x9b0] sm:$0xff]
        %v9093 = vld [vmem:[%s5 + $0x9b8] sm:$0xff]
        %v9094 = vld [vmem:[%s5 + $0x9c0] sm:$0xff]
        %v9095 = vld [vmem:[%s5 + $0x9c8] sm:$0xff]
        %v9096 = vld [vmem:[%s5 + $0x9d0] sm:$0xff]
        %v9097 = vld [vmem:[%s5 + $0x9d8] sm:$0xff]
        %v9098 = vld [vmem:[%s5 + $0x9e0] sm:$0xff]
        %v9099 = vld [vmem:[%s5 + $0x9e8] sm:$0xff]
        %v9100 = vld [vmem:[%s5 + $0x9f0] sm:$0xff]
        %v9101 = vld [vmem:[%s5 + $0x9f8] sm:$0xff]
        %v9102 = vld [vmem:[%s5 + $0xa00] sm:$0xff]
        %v9103 = vld [vmem:[%s5 + $0xa08] sm:$0xff]
        %v9104 = vld [vmem:[%s5 + $0xa10] sm:$0xff]
        %v9105 = vld [vmem:[%s5 + $0xa18] sm:$0xff]
        %v9106 = vld [vmem:[%s5 + $0xa20] sm:$0xff]
        %v9107 = vld [vmem:[%s5 + $0xa28] sm:$0xff]
        %v9108 = vld [vmem:[%s5 + $0xa30] sm:$0xff]
        %v9109 = vld [vmem:[%s5 + $0xa38] sm:$0xff]
        %v9110 = vld [vmem:[%s5 + $0xa40] sm:$0xff]
        %v9111 = vld [vmem:[%s5 + $0xa48] sm:$0xff]
        %v9112 = vld [vmem:[%s5 + $0xa50] sm:$0xff]
        %v9113 = vld [vmem:[%s5 + $0xa58] sm:$0xff]
        %v9114 = vld [vmem:[%s5 + $0xa60] sm:$0xff]
        %v9115 = vld [vmem:[%s5 + $0xa68] sm:$0xff]
        %v9116 = vld [vmem:[%s5 + $0xa70] sm:$0xff]
        %v9117 = vld [vmem:[%s5 + $0xa78] sm:$0xff]
        %v9118 = vld [vmem:[%s5 + $0xa80] sm:$0xff]
        %v9119 = vld [vmem:[%s5 + $0xa88] sm:$0xff]
        %v9120 = vld [vmem:[%s5 + $0xa90] sm:$0xff]
        %v9121 = vld [vmem:[%s5 + $0xa98] sm:$0xff]
        %v9122 = vld [vmem:[%s5 + $0xaa0] sm:$0xff]
        %v9123 = vld [vmem:[%s5 + $0xaa8] sm:$0xff]
        %v9124 = vld [vmem:[%s5 + $0xab0] sm:$0xff]
        %v9125 = vld [vmem:[%s5 + $0xab8] sm:$0xff]
        %v9126 = vld [vmem:[%s5 + $0xac0] sm:$0xff]
        %v9127 = vld [vmem:[%s5 + $0xac8] sm:$0xff]
        %v9128 = vld [vmem:[%s5 + $0xad0] sm:$0xff]
        %v9129 = vld [vmem:[%s5 + $0xad8] sm:$0xff]
        %v9130 = vld [vmem:[%s5 + $0xae0] sm:$0xff]
        %v9131 = vld [vmem:[%s5 + $0xae8] sm:$0xff]
        %v9132 = vld [vmem:[%s5 + $0xaf0] sm:$0xff]
        %v9133 = vld [vmem:[%s5 + $0xaf8] sm:$0xff]
        %v9134 = vld [vmem:[%s5 + $0xb00] sm:$0xff]
        %v9135 = vld [vmem:[%s5 + $0xb08] sm:$0xff]
        %v9136 = vld [vmem:[%s5 + $0xb10] sm:$0xff]
        %v9137 = vld [vmem:[%s5 + $0xb18] sm:$0xff]
        %v9138 = vld [vmem:[%s5 + $0xb20] sm:$0xff]
        %v9139 = vld [vmem:[%s5 + $0xb28] sm:$0xff]
        %v9140 = vld [vmem:[%s5 + $0xb30] sm:$0xff]
        %v9141 = vld [vmem:[%s5 + $0xb38] sm:$0xff]
        %v9142 = vld [vmem:[%s5 + $0xb40] sm:$0xff]
        %v9143 = vld [vmem:[%s5 + $0xb48] sm:$0xff]
        %v9144 = vld [vmem:[%s5 + $0xb50] sm:$0xff]
        %v9145 = vld [vmem:[%s5 + $0xb58] sm:$0xff]
        %v9146 = vld [vmem:[%s5 + $0xb60] sm:$0xff]
        %v9147 = vld [vmem:[%s5 + $0xb68] sm:$0xff]
        %v9148 = vld [vmem:[%s5 + $0xb70] sm:$0xff]
        %v9149 = vld [vmem:[%s5 + $0xb78] sm:$0xff]
        %v9150 = vld [vmem:[%s5 + $0xb80] sm:$0xff]
        %v9151 = vld [vmem:[%s5 + $0xb88] sm:$0xff]
        %v9152 = vld [vmem:[%s5 + $0xb90] sm:$0xff]
        %v9153 = vld [vmem:[%s5 + $0xb98] sm:$0xff]
        %v9154 = vld [vmem:[%s5 + $0xba0] sm:$0xff]
        %v9155 = vld [vmem:[%s5 + $0xba8] sm:$0xff]
        %v9156 = vld [vmem:[%s5 + $0xbb0] sm:$0xff]
        %v9157 = vld [vmem:[%s5 + $0xbb8] sm:$0xff]
        %v9158 = vld [vmem:[%s5 + $0xbc0] sm:$0xff]
        %v9159 = vld [vmem:[%s5 + $0xbc8] sm:$0xff]
        %v9160 = vld [vmem:[%s5 + $0xbd0] sm:$0xff]
        %v9161 = vld [vmem:[%s5 + $0xbd8] sm:$0xff]
        %v9162 = vld [vmem:[%s5 + $0xbe0] sm:$0xff]
        %v9163 = vld [vmem:[%s5 + $0xbe8] sm:$0xff]
        %v9164 = vld [vmem:[%s5 + $0xbf0] sm:$0xff]
        %v9165 = vld [vmem:[%s5 + $0xbf8] sm:$0xff]
        %v9166 = vld [vmem:[%s5 + $0xc00] sm:$0xff]
        %v9167 = vld [vmem:[%s5 + $0xc08] sm:$0xff]
        %v9168 = vld [vmem:[%s5 + $0xc10] sm:$0xff]
        %v9169 = vld [vmem:[%s5 + $0xc18] sm:$0xff]
        %v9170 = vld [vmem:[%s5 + $0xc20] sm:$0xff]
        %v9171 = vld [vmem:[%s5 + $0xc28] sm:$0xff]
        %v9172 = vld [vmem:[%s5 + $0xc30] sm:$0xff]
        %v9173 = vld [vmem:[%s5 + $0xc38] sm:$0xff]
        %v9174 = vld [vmem:[%s5 + $0xc40] sm:$0xff]
        %v9175 = vld [vmem:[%s5 + $0xc48] sm:$0xff]
        %v9176 = vld [vmem:[%s5 + $0xc50] sm:$0xff]
        %v9177 = vld [vmem:[%s5 + $0xc58] sm:$0xff]
        %v9178 = vld [vmem:[%s5 + $0xc60] sm:$0xff]
        %v9179 = vld [vmem:[%s5 + $0xc68] sm:$0xff]
        %v9180 = vld [vmem:[%s5 + $0xc70] sm:$0xff]
        %v9181 = vld [vmem:[%s5 + $0xc78] sm:$0xff]
        %v9182 = vld [vmem:[%s5 + $0xc80] sm:$0xff]
        %v9183 = vld [vmem:[%s5 + $0xc88] sm:$0xff]
        %v9184 = vld [vmem:[%s5 + $0xc90] sm:$0xff]
        %v9185 = vld [vmem:[%s5 + $0xc98] sm:$0xff]
        %v9186 = vld [vmem:[%s5 + $0xca0] sm:$0xff]
        %v9187 = vld [vmem:[%s5 + $0xca8] sm:$0xff]
        %v9188 = vld [vmem:[%s5 + $0xcb0] sm:$0xff]
        %v9189 = vld [vmem:[%s5 + $0xcb8] sm:$0xff]
        %v9190 = vld [vmem:[%s5 + $0xcc0] sm:$0xff]
        %v9191 = vld [vmem:[%s5 + $0xcc8] sm:$0xff]
        %v9192 = vld [vmem:[%s5 + $0xcd0] sm:$0xff]
        %v9193 = vld [vmem:[%s5 + $0xcd8] sm:$0xff]
        %v9194 = vld [vmem:[%s5 + $0xce0] sm:$0xff]
        %v9195 = vld [vmem:[%s5 + $0xce8] sm:$0xff]
        %v9196 = vld [vmem:[%s5 + $0xcf0] sm:$0xff]
        %v9197 = vld [vmem:[%s5 + $0xcf8] sm:$0xff]
        %v9198 = vld [vmem:[%s5 + $0xd00] sm:$0xff]
        %v9199 = vld [vmem:[%s5 + $0xd08] sm:$0xff]
        %v9200 = vld [vmem:[%s5 + $0xd10] sm:$0xff]
        %v9201 = vld [vmem:[%s5 + $0xd18] sm:$0xff]
        %v9202 = vld [vmem:[%s5 + $0xd20] sm:$0xff]
        %v9203 = vld [vmem:[%s5 + $0xd28] sm:$0xff]
        %v9204 = vld [vmem:[%s5 + $0xd30] sm:$0xff]
        %v9205 = vld [vmem:[%s5 + $0xd38] sm:$0xff]
        %v9206 = vld [vmem:[%s5 + $0xd40] sm:$0xff]
        %v9207 = vld [vmem:[%s5 + $0xd48] sm:$0xff]
        %v9208 = vld [vmem:[%s5 + $0xd50] sm:$0xff]
        %v9209 = vld [vmem:[%s5 + $0xd58] sm:$0xff]
        %v9210 = vld [vmem:[%s5 + $0xd60] sm:$0xff]
        %v9211 = vld [vmem:[%s5 + $0xd68] sm:$0xff]
        %v9212 = vld [vmem:[%s5 + $0xd70] sm:$0xff]
        %v9213 = vld [vmem:[%s5 + $0xd78] sm:$0xff]
        %v9214 = vld [vmem:[%s5 + $0xd80] sm:$0xff]
        %v9215 = vld [vmem:[%s5 + $0xd88] sm:$0xff]
        %v9216 = vld [vmem:[%s5 + $0xd90] sm:$0xff]
        %v9217 = vld [vmem:[%s5 + $0xd98] sm:$0xff]
        %v9218 = vld [vmem:[%s5 + $0xda0] sm:$0xff]
        %v9219 = vld [vmem:[%s5 + $0xda8] sm:$0xff]
        %v9220 = vld [vmem:[%s5 + $0xdb0] sm:$0xff]
        %v9221 = vld [vmem:[%s5 + $0xdb8] sm:$0xff]
        %v9222 = vld [vmem:[%s5 + $0xdc0] sm:$0xff]
        %v9223 = vld [vmem:[%s5 + $0xdc8] sm:$0xff]
        %v9224 = vld [vmem:[%s5 + $0xdd0] sm:$0xff]
        %v9225 = vld [vmem:[%s5 + $0xdd8] sm:$0xff]
        %v9226 = vld [vmem:[%s5 + $0xde0] sm:$0xff]
        %v9227 = vld [vmem:[%s5 + $0xde8] sm:$0xff]
        %v9228 = vld [vmem:[%s5 + $0xdf0] sm:$0xff]
        %v9229 = vld [vmem:[%s5 + $0xdf8] sm:$0xff]
        %v9230 = vld [vmem:[%s5 + $0xe00] sm:$0xff]
        %v9231 = vld [vmem:[%s5 + $0xe08] sm:$0xff]
        %v9232 = vld [vmem:[%s5 + $0xe10] sm:$0xff]
        %v9233 = vld [vmem:[%s5 + $0xe18] sm:$0xff]
        %v9234 = vld [vmem:[%s5 + $0xe20] sm:$0xff]
        %v9235 = vld [vmem:[%s5 + $0xe28] sm:$0xff]
        %v9236 = vld [vmem:[%s5 + $0xe30] sm:$0xff]
        %v9237 = vld [vmem:[%s5 + $0xe38] sm:$0xff]
        %v9238 = vld [vmem:[%s5 + $0xe40] sm:$0xff]
        %v9239 = vld [vmem:[%s5 + $0xe48] sm:$0xff]
        %v9240 = vld [vmem:[%s5 + $0xe50] sm:$0xff]
        %v9241 = vld [vmem:[%s5 + $0xe58] sm:$0xff]
        %v9242 = vld [vmem:[%s5 + $0xe60] sm:$0xff]
        %v9243 = vld [vmem:[%s5 + $0xe68] sm:$0xff]
        %v9244 = vld [vmem:[%s5 + $0xe70] sm:$0xff]
        %v9245 = vld [vmem:[%s5 + $0xe78] sm:$0xff]
        %v9246 = vld [vmem:[%s5 + $0xe80] sm:$0xff]
        %v9247 = vld [vmem:[%s5 + $0xe88] sm:$0xff]
        %v9248 = vld [vmem:[%s5 + $0xe90] sm:$0xff]
        %v9249 = vld [vmem:[%s5 + $0xe98] sm:$0xff]
        %v9250 = vld [vmem:[%s5 + $0xea0] sm:$0xff]
        %v9251 = vld [vmem:[%s5 + $0xea8] sm:$0xff]
        %v9252 = vld [vmem:[%s5 + $0xeb0] sm:$0xff]
        %v9253 = vld [vmem:[%s5 + $0xeb8] sm:$0xff]
        %v9254 = vld [vmem:[%s5 + $0xec0] sm:$0xff]
        %v9255 = vld [vmem:[%s5 + $0xec8] sm:$0xff]
        %v9256 = vld [vmem:[%s5 + $0xed0] sm:$0xff]
        %v9257 = vld [vmem:[%s5 + $0xed8] sm:$0xff]
        %v9258 = vld [vmem:[%s5 + $0xee0] sm:$0xff]
        %v9259 = vld [vmem:[%s5 + $0xee8] sm:$0xff]
        %v9260 = vld [vmem:[%s5 + $0xef0] sm:$0xff]
        %v9261 = vld [vmem:[%s5 + $0xef8] sm:$0xff]
        %v9262 = vld [vmem:[%s5 + $0xf00] sm:$0xff]
        %v9263 = vld [vmem:[%s5 + $0xf08] sm:$0xff]
        %v9264 = vld [vmem:[%s5 + $0xf10] sm:$0xff]
        %v9265 = vld [vmem:[%s5 + $0xf18] sm:$0xff]
        %v9266 = vld [vmem:[%s5 + $0xf20] sm:$0xff]
        %v9267 = vld [vmem:[%s5 + $0xf28] sm:$0xff]
        %v9268 = vld [vmem:[%s5 + $0xf30] sm:$0xff]
        %v9269 = vld [vmem:[%s5 + $0xf38] sm:$0xff]
        %v9270 = vld [vmem:[%s5 + $0xf40] sm:$0xff]
        %v9271 = vld [vmem:[%s5 + $0xf48] sm:$0xff]
        %v9272 = vld [vmem:[%s5 + $0xf50] sm:$0xff]
        %v9273 = vld [vmem:[%s5 + $0xf58] sm:$0xff]
        %v9274 = vld [vmem:[%s5 + $0xf60] sm:$0xff]
        %v9275 = vld [vmem:[%s5 + $0xf68] sm:$0xff]
        %v9276 = vld [vmem:[%s5 + $0xf70] sm:$0xff]
        %v9277 = vld [vmem:[%s5 + $0xf78] sm:$0xff]
        %v9278 = vld [vmem:[%s5 + $0xf80] sm:$0xff]
        %v9279 = vld [vmem:[%s5 + $0xf88] sm:$0xff]
        %v9280 = vld [vmem:[%s5 + $0xf90] sm:$0xff]
        %v9281 = vld [vmem:[%s5 + $0xf98] sm:$0xff]
        %v9282 = vld [vmem:[%s5 + $0xfa0] sm:$0xff]
        %v9283 = vld [vmem:[%s5 + $0xfa8] sm:$0xff]
        %v9284 = vld [vmem:[%s5 + $0xfb0] sm:$0xff]
        %v9285 = vld [vmem:[%s5 + $0xfb8] sm:$0xff]
        %v9286 = vld [vmem:[%s5 + $0xfc0] sm:$0xff]
        %v9287 = vld [vmem:[%s5 + $0xfc8] sm:$0xff]
        %v9288 = vld [vmem:[%s5 + $0xfd0] sm:$0xff]
        %v9289 = vld [vmem:[%s5 + $0xfd8] sm:$0xff]
        %v9290 = vld [vmem:[%s5 + $0xfe0] sm:$0xff]
        %v9291 = vld [vmem:[%s5 + $0xfe8] sm:$0xff]
        %v9292 = vld [vmem:[%s5 + $0xff0] sm:$0xff]
        %v9293 = vld [vmem:[%s5 + $0xff8] sm:$0xff]
        %v9806 = vunpack.c.l.b16 %v8782
        %v9807 = vunpack.c.h.b16 %v8782
        %v9808 = vunpack.c.l.b16 %v8783
        %v9809 = vunpack.c.h.b16 %v8783
        %v9810 = vunpack.c.l.b16 %v8784
        %v9811 = vunpack.c.h.b16 %v8784
        %v9812 = vunpack.c.l.b16 %v8785
        %v9813 = vunpack.c.h.b16 %v8785
        %v9814 = vunpack.c.l.b16 %v8786
        %v9815 = vunpack.c.h.b16 %v8786
        %v9816 = vunpack.c.l.b16 %v8787
        %v9817 = vunpack.c.h.b16 %v8787
        %v9818 = vunpack.c.l.b16 %v8788
        %v9819 = vunpack.c.h.b16 %v8788
        %v9820 = vunpack.c.l.b16 %v8789
        %v9821 = vunpack.c.h.b16 %v8789
        %v9822 = vunpack.c.l.b16 %v8790
        %v9823 = vunpack.c.h.b16 %v8790
        %v9824 = vunpack.c.l.b16 %v8791
        %v9825 = vunpack.c.h.b16 %v8791
        %v9826 = vunpack.c.l.b16 %v8792
        %v9827 = vunpack.c.h.b16 %v8792
        %v9828 = vunpack.c.l.b16 %v8793
        %v9829 = vunpack.c.h.b16 %v8793
        %v9830 = vunpack.c.l.b16 %v8794
        %v9831 = vunpack.c.h.b16 %v8794
        %v9832 = vunpack.c.l.b16 %v8795
        %v9833 = vunpack.c.h.b16 %v8795
        %v9834 = vunpack.c.l.b16 %v8796
        %v9835 = vunpack.c.h.b16 %v8796
        %v9836 = vunpack.c.l.b16 %v8797
        %v9837 = vunpack.c.h.b16 %v8797
        %v9838 = vunpack.c.l.b16 %v8798
        %v9839 = vunpack.c.h.b16 %v8798
        %v9840 = vunpack.c.l.b16 %v8799
        %v9841 = vunpack.c.h.b16 %v8799
        %v9842 = vunpack.c.l.b16 %v8800
        %v9843 = vunpack.c.h.b16 %v8800
        %v9844 = vunpack.c.l.b16 %v8801
        %v9845 = vunpack.c.h.b16 %v8801
        %v9846 = vunpack.c.l.b16 %v8802
        %v9847 = vunpack.c.h.b16 %v8802
        %v9848 = vunpack.c.l.b16 %v8803
        %v9849 = vunpack.c.h.b16 %v8803
        %v9850 = vunpack.c.l.b16 %v8804
        %v9851 = vunpack.c.h.b16 %v8804
        %v9852 = vunpack.c.l.b16 %v8805
        %v9853 = vunpack.c.h.b16 %v8805
        %v9854 = vunpack.c.l.b16 %v8806
        %v9855 = vunpack.c.h.b16 %v8806
        %v9856 = vunpack.c.l.b16 %v8807
        %v9857 = vunpack.c.h.b16 %v8807
        %v9858 = vunpack.c.l.b16 %v8808
        %v9859 = vunpack.c.h.b16 %v8808
        %v9860 = vunpack.c.l.b16 %v8809
        %v9861 = vunpack.c.h.b16 %v8809
        %v9862 = vunpack.c.l.b16 %v8810
        %v9863 = vunpack.c.h.b16 %v8810
        %v9864 = vunpack.c.l.b16 %v8811
        %v9865 = vunpack.c.h.b16 %v8811
        %v9866 = vunpack.c.l.b16 %v8812
        %v9867 = vunpack.c.h.b16 %v8812
        %v9868 = vunpack.c.l.b16 %v8813
        %v9869 = vunpack.c.h.b16 %v8813
        %v9870 = vunpack.c.l.b16 %v8814
        %v9871 = vunpack.c.h.b16 %v8814
        %v9872 = vunpack.c.l.b16 %v8815
        %v9873 = vunpack.c.h.b16 %v8815
        %v9874 = vunpack.c.l.b16 %v8816
        %v9875 = vunpack.c.h.b16 %v8816
        %v9876 = vunpack.c.l.b16 %v8817
        %v9877 = vunpack.c.h.b16 %v8817
        %v9878 = vunpack.c.l.b16 %v8818
        %v9879 = vunpack.c.h.b16 %v8818
        %v9880 = vunpack.c.l.b16 %v8819
        %v9881 = vunpack.c.h.b16 %v8819
        %v9882 = vunpack.c.l.b16 %v8820
        %v9883 = vunpack.c.h.b16 %v8820
        %v9884 = vunpack.c.l.b16 %v8821
        %v9885 = vunpack.c.h.b16 %v8821
        %v9886 = vunpack.c.l.b16 %v8822
        %v9887 = vunpack.c.h.b16 %v8822
        %v9888 = vunpack.c.l.b16 %v8823
        %v9889 = vunpack.c.h.b16 %v8823
        %v9890 = vunpack.c.l.b16 %v8824
        %v9891 = vunpack.c.h.b16 %v8824
        %v9892 = vunpack.c.l.b16 %v8825
        %v9893 = vunpack.c.h.b16 %v8825
        %v9894 = vunpack.c.l.b16 %v8826
        %v9895 = vunpack.c.h.b16 %v8826
        %v9896 = vunpack.c.l.b16 %v8827
        %v9897 = vunpack.c.h.b16 %v8827
        %v9898 = vunpack.c.l.b16 %v8828
        %v9899 = vunpack.c.h.b16 %v8828
        %v9900 = vunpack.c.l.b16 %v8829
        %v9901 = vunpack.c.h.b16 %v8829
        %v9902 = vunpack.c.l.b16 %v8830
        %v9903 = vunpack.c.h.b16 %v8830
        %v9904 = vunpack.c.l.b16 %v8831
        %v9905 = vunpack.c.h.b16 %v8831
        %v9906 = vunpack.c.l.b16 %v8832
        %v9907 = vunpack.c.h.b16 %v8832
        %v9908 = vunpack.c.l.b16 %v8833
        %v9909 = vunpack.c.h.b16 %v8833
        %v9910 = vunpack.c.l.b16 %v8834
        %v9911 = vunpack.c.h.b16 %v8834
        %v9912 = vunpack.c.l.b16 %v8835
        %v9913 = vunpack.c.h.b16 %v8835
        %v9914 = vunpack.c.l.b16 %v8836
        %v9915 = vunpack.c.h.b16 %v8836
        %v9916 = vunpack.c.l.b16 %v8837
        %v9917 = vunpack.c.h.b16 %v8837
        %v9918 = vunpack.c.l.b16 %v8838
        %v9919 = vunpack.c.h.b16 %v8838
        %v9920 = vunpack.c.l.b16 %v8839
        %v9921 = vunpack.c.h.b16 %v8839
        %v9922 = vunpack.c.l.b16 %v8840
        %v9923 = vunpack.c.h.b16 %v8840
        %v9924 = vunpack.c.l.b16 %v8841
        %v9925 = vunpack.c.h.b16 %v8841
        %v9926 = vunpack.c.l.b16 %v8842
        %v9927 = vunpack.c.h.b16 %v8842
        %v9928 = vunpack.c.l.b16 %v8843
        %v9929 = vunpack.c.h.b16 %v8843
        %v9930 = vunpack.c.l.b16 %v8844
        %v9931 = vunpack.c.h.b16 %v8844
        %v9932 = vunpack.c.l.b16 %v8845
        %v9933 = vunpack.c.h.b16 %v8845
        %v9934 = vunpack.c.l.b16 %v8846
        %v9935 = vunpack.c.h.b16 %v8846
        %v9936 = vunpack.c.l.b16 %v8847
        %v9937 = vunpack.c.h.b16 %v8847
        %v9938 = vunpack.c.l.b16 %v8848
        %v9939 = vunpack.c.h.b16 %v8848
        %v9940 = vunpack.c.l.b16 %v8849
        %v9941 = vunpack.c.h.b16 %v8849
        %v9942 = vunpack.c.l.b16 %v8850
        %v9943 = vunpack.c.h.b16 %v8850
        %v9944 = vunpack.c.l.b16 %v8851
        %v9945 = vunpack.c.h.b16 %v8851
        %v9946 = vunpack.c.l.b16 %v8852
        %v9947 = vunpack.c.h.b16 %v8852
        %v9948 = vunpack.c.l.b16 %v8853
        %v9949 = vunpack.c.h.b16 %v8853
        %v9950 = vunpack.c.l.b16 %v8854
        %v9951 = vunpack.c.h.b16 %v8854
        %v9952 = vunpack.c.l.b16 %v8855
        %v9953 = vunpack.c.h.b16 %v8855
        %v9954 = vunpack.c.l.b16 %v8856
        %v9955 = vunpack.c.h.b16 %v8856
        %v9956 = vunpack.c.l.b16 %v8857
        %v9957 = vunpack.c.h.b16 %v8857
        %v9958 = vunpack.c.l.b16 %v8858
        %v9959 = vunpack.c.h.b16 %v8858
        %v9960 = vunpack.c.l.b16 %v8859
        %v9961 = vunpack.c.h.b16 %v8859
        %v9962 = vunpack.c.l.b16 %v8860
        %v9963 = vunpack.c.h.b16 %v8860
        %v9964 = vunpack.c.l.b16 %v8861
        %v9965 = vunpack.c.h.b16 %v8861
        %v9966 = vunpack.c.l.b16 %v8862
        %v9967 = vunpack.c.h.b16 %v8862
        %v9968 = vunpack.c.l.b16 %v8863
        %v9969 = vunpack.c.h.b16 %v8863
        %v9970 = vunpack.c.l.b16 %v8864
        %v9971 = vunpack.c.h.b16 %v8864
        %v9972 = vunpack.c.l.b16 %v8865
        %v9973 = vunpack.c.h.b16 %v8865
        %v9974 = vunpack.c.l.b16 %v8866
        %v9975 = vunpack.c.h.b16 %v8866
        %v9976 = vunpack.c.l.b16 %v8867
        %v9977 = vunpack.c.h.b16 %v8867
        %v9978 = vunpack.c.l.b16 %v8868
        %v9979 = vunpack.c.h.b16 %v8868
        %v9980 = vunpack.c.l.b16 %v8869
        %v9981 = vunpack.c.h.b16 %v8869
        %v9982 = vunpack.c.l.b16 %v8870
        %v9983 = vunpack.c.h.b16 %v8870
        %v9984 = vunpack.c.l.b16 %v8871
        %v9985 = vunpack.c.h.b16 %v8871
        %v9986 = vunpack.c.l.b16 %v8872
        %v9987 = vunpack.c.h.b16 %v8872
        %v9988 = vunpack.c.l.b16 %v8873
        %v9989 = vunpack.c.h.b16 %v8873
        %v9990 = vunpack.c.l.b16 %v8874
        %v9991 = vunpack.c.h.b16 %v8874
        %v9992 = vunpack.c.l.b16 %v8875
        %v9993 = vunpack.c.h.b16 %v8875
        %v9994 = vunpack.c.l.b16 %v8876
        %v9995 = vunpack.c.h.b16 %v8876
        %v9996 = vunpack.c.l.b16 %v8877
        %v9997 = vunpack.c.h.b16 %v8877
        %v9998 = vunpack.c.l.b16 %v8878
        %v9999 = vunpack.c.h.b16 %v8878
        %v10000 = vunpack.c.l.b16 %v8879
        %v10001 = vunpack.c.h.b16 %v8879
        %v10002 = vunpack.c.l.b16 %v8880
        %v10003 = vunpack.c.h.b16 %v8880
        %v10004 = vunpack.c.l.b16 %v8881
        %v10005 = vunpack.c.h.b16 %v8881
        %v10006 = vunpack.c.l.b16 %v8882
        %v10007 = vunpack.c.h.b16 %v8882
        %v10008 = vunpack.c.l.b16 %v8883
        %v10009 = vunpack.c.h.b16 %v8883
        %v10010 = vunpack.c.l.b16 %v8884
        %v10011 = vunpack.c.h.b16 %v8884
        %v10012 = vunpack.c.l.b16 %v8885
        %v10013 = vunpack.c.h.b16 %v8885
        %v10014 = vunpack.c.l.b16 %v8886
        %v10015 = vunpack.c.h.b16 %v8886
        %v10016 = vunpack.c.l.b16 %v8887
        %v10017 = vunpack.c.h.b16 %v8887
        %v10018 = vunpack.c.l.b16 %v8888
        %v10019 = vunpack.c.h.b16 %v8888
        %v10020 = vunpack.c.l.b16 %v8889
        %v10021 = vunpack.c.h.b16 %v8889
        %v10022 = vunpack.c.l.b16 %v8890
        %v10023 = vunpack.c.h.b16 %v8890
        %v10024 = vunpack.c.l.b16 %v8891
        %v10025 = vunpack.c.h.b16 %v8891
        %v10026 = vunpack.c.l.b16 %v8892
        %v10027 = vunpack.c.h.b16 %v8892
        %v10028 = vunpack.c.l.b16 %v8893
        %v10029 = vunpack.c.h.b16 %v8893
        %v10030 = vunpack.c.l.b16 %v8894
        %v10031 = vunpack.c.h.b16 %v8894
        %v10032 = vunpack.c.l.b16 %v8895
        %v10033 = vunpack.c.h.b16 %v8895
        %v10034 = vunpack.c.l.b16 %v8896
        %v10035 = vunpack.c.h.b16 %v8896
        %v10036 = vunpack.c.l.b16 %v8897
        %v10037 = vunpack.c.h.b16 %v8897
        %v10038 = vunpack.c.l.b16 %v8898
        %v10039 = vunpack.c.h.b16 %v8898
        %v10040 = vunpack.c.l.b16 %v8899
        %v10041 = vunpack.c.h.b16 %v8899
        %v10042 = vunpack.c.l.b16 %v8900
        %v10043 = vunpack.c.h.b16 %v8900
        %v10044 = vunpack.c.l.b16 %v8901
        %v10045 = vunpack.c.h.b16 %v8901
        %v10046 = vunpack.c.l.b16 %v8902
        %v10047 = vunpack.c.h.b16 %v8902
        %v10048 = vunpack.c.l.b16 %v8903
        %v10049 = vunpack.c.h.b16 %v8903
        %v10050 = vunpack.c.l.b16 %v8904
        %v10051 = vunpack.c.h.b16 %v8904
        %v10052 = vunpack.c.l.b16 %v8905
        %v10053 = vunpack.c.h.b16 %v8905
        %v10054 = vunpack.c.l.b16 %v8906
        %v10055 = vunpack.c.h.b16 %v8906
        %v10056 = vunpack.c.l.b16 %v8907
        %v10057 = vunpack.c.h.b16 %v8907
        %v10058 = vunpack.c.l.b16 %v8908
        %v10059 = vunpack.c.h.b16 %v8908
        %v10060 = vunpack.c.l.b16 %v8909
        %v10061 = vunpack.c.h.b16 %v8909
        %v10062 = vunpack.c.l.b16 %v8910
        %v10063 = vunpack.c.h.b16 %v8910
        %v10064 = vunpack.c.l.b16 %v8911
        %v10065 = vunpack.c.h.b16 %v8911
        %v10066 = vunpack.c.l.b16 %v8912
        %v10067 = vunpack.c.h.b16 %v8912
        %v10068 = vunpack.c.l.b16 %v8913
        %v10069 = vunpack.c.h.b16 %v8913
        %v10070 = vunpack.c.l.b16 %v8914
        %v10071 = vunpack.c.h.b16 %v8914
        %v10072 = vunpack.c.l.b16 %v8915
        %v10073 = vunpack.c.h.b16 %v8915
        %v10074 = vunpack.c.l.b16 %v8916
        %v10075 = vunpack.c.h.b16 %v8916
        %v10076 = vunpack.c.l.b16 %v8917
        %v10077 = vunpack.c.h.b16 %v8917
        %v10078 = vunpack.c.l.b16 %v8918
        %v10079 = vunpack.c.h.b16 %v8918
        %v10080 = vunpack.c.l.b16 %v8919
        %v10081 = vunpack.c.h.b16 %v8919
        %v10082 = vunpack.c.l.b16 %v8920
        %v10083 = vunpack.c.h.b16 %v8920
        %v10084 = vunpack.c.l.b16 %v8921
        %v10085 = vunpack.c.h.b16 %v8921
        %v10086 = vunpack.c.l.b16 %v8922
        %v10087 = vunpack.c.h.b16 %v8922
        %v10088 = vunpack.c.l.b16 %v8923
        %v10089 = vunpack.c.h.b16 %v8923
        %v10090 = vunpack.c.l.b16 %v8924
        %v10091 = vunpack.c.h.b16 %v8924
        %v10092 = vunpack.c.l.b16 %v8925
        %v10093 = vunpack.c.h.b16 %v8925
        %v10094 = vunpack.c.l.b16 %v8926
        %v10095 = vunpack.c.h.b16 %v8926
        %v10096 = vunpack.c.l.b16 %v8927
        %v10097 = vunpack.c.h.b16 %v8927
        %v10098 = vunpack.c.l.b16 %v8928
        %v10099 = vunpack.c.h.b16 %v8928
        %v10100 = vunpack.c.l.b16 %v8929
        %v10101 = vunpack.c.h.b16 %v8929
        %v10102 = vunpack.c.l.b16 %v8930
        %v10103 = vunpack.c.h.b16 %v8930
        %v10104 = vunpack.c.l.b16 %v8931
        %v10105 = vunpack.c.h.b16 %v8931
        %v10106 = vunpack.c.l.b16 %v8932
        %v10107 = vunpack.c.h.b16 %v8932
        %v10108 = vunpack.c.l.b16 %v8933
        %v10109 = vunpack.c.h.b16 %v8933
        %v10110 = vunpack.c.l.b16 %v8934
        %v10111 = vunpack.c.h.b16 %v8934
        %v10112 = vunpack.c.l.b16 %v8935
        %v10113 = vunpack.c.h.b16 %v8935
        %v10114 = vunpack.c.l.b16 %v8936
        %v10115 = vunpack.c.h.b16 %v8936
        %v10116 = vunpack.c.l.b16 %v8937
        %v10117 = vunpack.c.h.b16 %v8937
        %v10118 = vunpack.c.l.b16 %v8938
        %v10119 = vunpack.c.h.b16 %v8938
        %v10120 = vunpack.c.l.b16 %v8939
        %v10121 = vunpack.c.h.b16 %v8939
        %v10122 = vunpack.c.l.b16 %v8940
        %v10123 = vunpack.c.h.b16 %v8940
        %v10124 = vunpack.c.l.b16 %v8941
        %v10125 = vunpack.c.h.b16 %v8941
        %v10126 = vunpack.c.l.b16 %v8942
        %v10127 = vunpack.c.h.b16 %v8942
        %v10128 = vunpack.c.l.b16 %v8943
        %v10129 = vunpack.c.h.b16 %v8943
        %v10130 = vunpack.c.l.b16 %v8944
        %v10131 = vunpack.c.h.b16 %v8944
        %v10132 = vunpack.c.l.b16 %v8945
        %v10133 = vunpack.c.h.b16 %v8945
        %v10134 = vunpack.c.l.b16 %v8946
        %v10135 = vunpack.c.h.b16 %v8946
        %v10136 = vunpack.c.l.b16 %v8947
        %v10137 = vunpack.c.h.b16 %v8947
        %v10138 = vunpack.c.l.b16 %v8948
        %v10139 = vunpack.c.h.b16 %v8948
        %v10140 = vunpack.c.l.b16 %v8949
        %v10141 = vunpack.c.h.b16 %v8949
        %v10142 = vunpack.c.l.b16 %v8950
        %v10143 = vunpack.c.h.b16 %v8950
        %v10144 = vunpack.c.l.b16 %v8951
        %v10145 = vunpack.c.h.b16 %v8951
        %v10146 = vunpack.c.l.b16 %v8952
        %v10147 = vunpack.c.h.b16 %v8952
        %v10148 = vunpack.c.l.b16 %v8953
        %v10149 = vunpack.c.h.b16 %v8953
        %v10150 = vunpack.c.l.b16 %v8954
        %v10151 = vunpack.c.h.b16 %v8954
        %v10152 = vunpack.c.l.b16 %v8955
        %v10153 = vunpack.c.h.b16 %v8955
        %v10154 = vunpack.c.l.b16 %v8956
        %v10155 = vunpack.c.h.b16 %v8956
        %v10156 = vunpack.c.l.b16 %v8957
        %v10157 = vunpack.c.h.b16 %v8957
        %v10158 = vunpack.c.l.b16 %v8958
        %v10159 = vunpack.c.h.b16 %v8958
        %v10160 = vunpack.c.l.b16 %v8959
        %v10161 = vunpack.c.h.b16 %v8959
        %v10162 = vunpack.c.l.b16 %v8960
        %v10163 = vunpack.c.h.b16 %v8960
        %v10164 = vunpack.c.l.b16 %v8961
        %v10165 = vunpack.c.h.b16 %v8961
        %v10166 = vunpack.c.l.b16 %v8962
        %v10167 = vunpack.c.h.b16 %v8962
        %v10168 = vunpack.c.l.b16 %v8963
        %v10169 = vunpack.c.h.b16 %v8963
        %v10170 = vunpack.c.l.b16 %v8964
        %v10171 = vunpack.c.h.b16 %v8964
        %v10172 = vunpack.c.l.b16 %v8965
        %v10173 = vunpack.c.h.b16 %v8965
        %v10174 = vunpack.c.l.b16 %v8966
        %v10175 = vunpack.c.h.b16 %v8966
        %v10176 = vunpack.c.l.b16 %v8967
        %v10177 = vunpack.c.h.b16 %v8967
        %v10178 = vunpack.c.l.b16 %v8968
        %v10179 = vunpack.c.h.b16 %v8968
        %v10180 = vunpack.c.l.b16 %v8969
        %v10181 = vunpack.c.h.b16 %v8969
        %v10182 = vunpack.c.l.b16 %v8970
        %v10183 = vunpack.c.h.b16 %v8970
        %v10184 = vunpack.c.l.b16 %v8971
        %v10185 = vunpack.c.h.b16 %v8971
        %v10186 = vunpack.c.l.b16 %v8972
        %v10187 = vunpack.c.h.b16 %v8972
        %v10188 = vunpack.c.l.b16 %v8973
        %v10189 = vunpack.c.h.b16 %v8973
        %v10190 = vunpack.c.l.b16 %v8974
        %v10191 = vunpack.c.h.b16 %v8974
        %v10192 = vunpack.c.l.b16 %v8975
        %v10193 = vunpack.c.h.b16 %v8975
        %v10194 = vunpack.c.l.b16 %v8976
        %v10195 = vunpack.c.h.b16 %v8976
        %v10196 = vunpack.c.l.b16 %v8977
        %v10197 = vunpack.c.h.b16 %v8977
        %v10198 = vunpack.c.l.b16 %v8978
        %v10199 = vunpack.c.h.b16 %v8978
        %v10200 = vunpack.c.l.b16 %v8979
        %v10201 = vunpack.c.h.b16 %v8979
        %v10202 = vunpack.c.l.b16 %v8980
        %v10203 = vunpack.c.h.b16 %v8980
        %v10204 = vunpack.c.l.b16 %v8981
        %v10205 = vunpack.c.h.b16 %v8981
        %v10206 = vunpack.c.l.b16 %v8982
        %v10207 = vunpack.c.h.b16 %v8982
        %v10208 = vunpack.c.l.b16 %v8983
        %v10209 = vunpack.c.h.b16 %v8983
        %v10210 = vunpack.c.l.b16 %v8984
        %v10211 = vunpack.c.h.b16 %v8984
        %v10212 = vunpack.c.l.b16 %v8985
        %v10213 = vunpack.c.h.b16 %v8985
        %v10214 = vunpack.c.l.b16 %v8986
        %v10215 = vunpack.c.h.b16 %v8986
        %v10216 = vunpack.c.l.b16 %v8987
        %v10217 = vunpack.c.h.b16 %v8987
        %v10218 = vunpack.c.l.b16 %v8988
        %v10219 = vunpack.c.h.b16 %v8988
        %v10220 = vunpack.c.l.b16 %v8989
        %v10221 = vunpack.c.h.b16 %v8989
        %v10222 = vunpack.c.l.b16 %v8990
        %v10223 = vunpack.c.h.b16 %v8990
        %v10224 = vunpack.c.l.b16 %v8991
        %v10225 = vunpack.c.h.b16 %v8991
        %v10226 = vunpack.c.l.b16 %v8992
        %v10227 = vunpack.c.h.b16 %v8992
        %v10228 = vunpack.c.l.b16 %v8993
        %v10229 = vunpack.c.h.b16 %v8993
        %v10230 = vunpack.c.l.b16 %v8994
        %v10231 = vunpack.c.h.b16 %v8994
        %v10232 = vunpack.c.l.b16 %v8995
        %v10233 = vunpack.c.h.b16 %v8995
        %v10234 = vunpack.c.l.b16 %v8996
        %v10235 = vunpack.c.h.b16 %v8996
        %v10236 = vunpack.c.l.b16 %v8997
        %v10237 = vunpack.c.h.b16 %v8997
        %v10238 = vunpack.c.l.b16 %v8998
        %v10239 = vunpack.c.h.b16 %v8998
        %v10240 = vunpack.c.l.b16 %v8999
        %v10241 = vunpack.c.h.b16 %v8999
        %v10242 = vunpack.c.l.b16 %v9000
        %v10243 = vunpack.c.h.b16 %v9000
        %v10244 = vunpack.c.l.b16 %v9001
        %v10245 = vunpack.c.h.b16 %v9001
        %v10246 = vunpack.c.l.b16 %v9002
        %v10247 = vunpack.c.h.b16 %v9002
        %v10248 = vunpack.c.l.b16 %v9003
        %v10249 = vunpack.c.h.b16 %v9003
        %v10250 = vunpack.c.l.b16 %v9004
        %v10251 = vunpack.c.h.b16 %v9004
        %v10252 = vunpack.c.l.b16 %v9005
        %v10253 = vunpack.c.h.b16 %v9005
        %v10254 = vunpack.c.l.b16 %v9006
        %v10255 = vunpack.c.h.b16 %v9006
        %v10256 = vunpack.c.l.b16 %v9007
        %v10257 = vunpack.c.h.b16 %v9007
        %v10258 = vunpack.c.l.b16 %v9008
        %v10259 = vunpack.c.h.b16 %v9008
        %v10260 = vunpack.c.l.b16 %v9009
        %v10261 = vunpack.c.h.b16 %v9009
        %v10262 = vunpack.c.l.b16 %v9010
        %v10263 = vunpack.c.h.b16 %v9010
        %v10264 = vunpack.c.l.b16 %v9011
        %v10265 = vunpack.c.h.b16 %v9011
        %v10266 = vunpack.c.l.b16 %v9012
        %v10267 = vunpack.c.h.b16 %v9012
        %v10268 = vunpack.c.l.b16 %v9013
        %v10269 = vunpack.c.h.b16 %v9013
        %v10270 = vunpack.c.l.b16 %v9014
        %v10271 = vunpack.c.h.b16 %v9014
        %v10272 = vunpack.c.l.b16 %v9015
        %v10273 = vunpack.c.h.b16 %v9015
        %v10274 = vunpack.c.l.b16 %v9016
        %v10275 = vunpack.c.h.b16 %v9016
        %v10276 = vunpack.c.l.b16 %v9017
        %v10277 = vunpack.c.h.b16 %v9017
        %v10278 = vunpack.c.l.b16 %v9018
        %v10279 = vunpack.c.h.b16 %v9018
        %v10280 = vunpack.c.l.b16 %v9019
        %v10281 = vunpack.c.h.b16 %v9019
        %v10282 = vunpack.c.l.b16 %v9020
        %v10283 = vunpack.c.h.b16 %v9020
        %v10284 = vunpack.c.l.b16 %v9021
        %v10285 = vunpack.c.h.b16 %v9021
        %v10286 = vunpack.c.l.b16 %v9022
        %v10287 = vunpack.c.h.b16 %v9022
        %v10288 = vunpack.c.l.b16 %v9023
        %v10289 = vunpack.c.h.b16 %v9023
        %v10290 = vunpack.c.l.b16 %v9024
        %v10291 = vunpack.c.h.b16 %v9024
        %v10292 = vunpack.c.l.b16 %v9025
        %v10293 = vunpack.c.h.b16 %v9025
        %v10294 = vunpack.c.l.b16 %v9026
        %v10295 = vunpack.c.h.b16 %v9026
        %v10296 = vunpack.c.l.b16 %v9027
        %v10297 = vunpack.c.h.b16 %v9027
        %v10298 = vunpack.c.l.b16 %v9028
        %v10299 = vunpack.c.h.b16 %v9028
        %v10300 = vunpack.c.l.b16 %v9029
        %v10301 = vunpack.c.h.b16 %v9029
        %v10302 = vunpack.c.l.b16 %v9030
        %v10303 = vunpack.c.h.b16 %v9030
        %v10304 = vunpack.c.l.b16 %v9031
        %v10305 = vunpack.c.h.b16 %v9031
        %v10306 = vunpack.c.l.b16 %v9032
        %v10307 = vunpack.c.h.b16 %v9032
        %v10308 = vunpack.c.l.b16 %v9033
        %v10309 = vunpack.c.h.b16 %v9033
        %v10310 = vunpack.c.l.b16 %v9034
        %v10311 = vunpack.c.h.b16 %v9034
        %v10312 = vunpack.c.l.b16 %v9035
        %v10313 = vunpack.c.h.b16 %v9035
        %v10314 = vunpack.c.l.b16 %v9036
        %v10315 = vunpack.c.h.b16 %v9036
        %v10316 = vunpack.c.l.b16 %v9037
        %v10317 = vunpack.c.h.b16 %v9037
        %v10318 = vunpack.c.l.b16 %v9038
        %v10319 = vunpack.c.h.b16 %v9038
        %v10320 = vunpack.c.l.b16 %v9039
        %v10321 = vunpack.c.h.b16 %v9039
        %v10322 = vunpack.c.l.b16 %v9040
        %v10323 = vunpack.c.h.b16 %v9040
        %v10324 = vunpack.c.l.b16 %v9041
        %v10325 = vunpack.c.h.b16 %v9041
        %v10326 = vunpack.c.l.b16 %v9042
        %v10327 = vunpack.c.h.b16 %v9042
        %v10328 = vunpack.c.l.b16 %v9043
        %v10329 = vunpack.c.h.b16 %v9043
        %v10330 = vunpack.c.l.b16 %v9044
        %v10331 = vunpack.c.h.b16 %v9044
        %v10332 = vunpack.c.l.b16 %v9045
        %v10333 = vunpack.c.h.b16 %v9045
        %v10334 = vunpack.c.l.b16 %v9046
        %v10335 = vunpack.c.h.b16 %v9046
        %v10336 = vunpack.c.l.b16 %v9047
        %v10337 = vunpack.c.h.b16 %v9047
        %v10338 = vunpack.c.l.b16 %v9048
        %v10339 = vunpack.c.h.b16 %v9048
        %v10340 = vunpack.c.l.b16 %v9049
        %v10341 = vunpack.c.h.b16 %v9049
        %v10342 = vunpack.c.l.b16 %v9050
        %v10343 = vunpack.c.h.b16 %v9050
        %v10344 = vunpack.c.l.b16 %v9051
        %v10345 = vunpack.c.h.b16 %v9051
        %v10346 = vunpack.c.l.b16 %v9052
        %v10347 = vunpack.c.h.b16 %v9052
        %v10348 = vunpack.c.l.b16 %v9053
        %v10349 = vunpack.c.h.b16 %v9053
        %v10350 = vunpack.c.l.b16 %v9054
        %v10351 = vunpack.c.h.b16 %v9054
        %v10352 = vunpack.c.l.b16 %v9055
        %v10353 = vunpack.c.h.b16 %v9055
        %v10354 = vunpack.c.l.b16 %v9056
        %v10355 = vunpack.c.h.b16 %v9056
        %v10356 = vunpack.c.l.b16 %v9057
        %v10357 = vunpack.c.h.b16 %v9057
        %v10358 = vunpack.c.l.b16 %v9058
        %v10359 = vunpack.c.h.b16 %v9058
        %v10360 = vunpack.c.l.b16 %v9059
        %v10361 = vunpack.c.h.b16 %v9059
        %v10362 = vunpack.c.l.b16 %v9060
        %v10363 = vunpack.c.h.b16 %v9060
        %v10364 = vunpack.c.l.b16 %v9061
        %v10365 = vunpack.c.h.b16 %v9061
        %v10366 = vunpack.c.l.b16 %v9062
        %v10367 = vunpack.c.h.b16 %v9062
        %v10368 = vunpack.c.l.b16 %v9063
        %v10369 = vunpack.c.h.b16 %v9063
        %v10370 = vunpack.c.l.b16 %v9064
        %v10371 = vunpack.c.h.b16 %v9064
        %v10372 = vunpack.c.l.b16 %v9065
        %v10373 = vunpack.c.h.b16 %v9065
        %v10374 = vunpack.c.l.b16 %v9066
        %v10375 = vunpack.c.h.b16 %v9066
        %v10376 = vunpack.c.l.b16 %v9067
        %v10377 = vunpack.c.h.b16 %v9067
        %v10378 = vunpack.c.l.b16 %v9068
        %v10379 = vunpack.c.h.b16 %v9068
        %v10380 = vunpack.c.l.b16 %v9069
        %v10381 = vunpack.c.h.b16 %v9069
        %v10382 = vunpack.c.l.b16 %v9070
        %v10383 = vunpack.c.h.b16 %v9070
        %v10384 = vunpack.c.l.b16 %v9071
        %v10385 = vunpack.c.h.b16 %v9071
        %v10386 = vunpack.c.l.b16 %v9072
        %v10387 = vunpack.c.h.b16 %v9072
        %v10388 = vunpack.c.l.b16 %v9073
        %v10389 = vunpack.c.h.b16 %v9073
        %v10390 = vunpack.c.l.b16 %v9074
        %v10391 = vunpack.c.h.b16 %v9074
        %v10392 = vunpack.c.l.b16 %v9075
        %v10393 = vunpack.c.h.b16 %v9075
        %v10394 = vunpack.c.l.b16 %v9076
        %v10395 = vunpack.c.h.b16 %v9076
        %v10396 = vunpack.c.l.b16 %v9077
        %v10397 = vunpack.c.h.b16 %v9077
        %v10398 = vunpack.c.l.b16 %v9078
        %v10399 = vunpack.c.h.b16 %v9078
        %v10400 = vunpack.c.l.b16 %v9079
        %v10401 = vunpack.c.h.b16 %v9079
        %v10402 = vunpack.c.l.b16 %v9080
        %v10403 = vunpack.c.h.b16 %v9080
        %v10404 = vunpack.c.l.b16 %v9081
        %v10405 = vunpack.c.h.b16 %v9081
        %v10406 = vunpack.c.l.b16 %v9082
        %v10407 = vunpack.c.h.b16 %v9082
        %v10408 = vunpack.c.l.b16 %v9083
        %v10409 = vunpack.c.h.b16 %v9083
        %v10410 = vunpack.c.l.b16 %v9084
        %v10411 = vunpack.c.h.b16 %v9084
        %v10412 = vunpack.c.l.b16 %v9085
        %v10413 = vunpack.c.h.b16 %v9085
        %v10414 = vunpack.c.l.b16 %v9086
        %v10415 = vunpack.c.h.b16 %v9086
        %v10416 = vunpack.c.l.b16 %v9087
        %v10417 = vunpack.c.h.b16 %v9087
        %v10418 = vunpack.c.l.b16 %v9088
        %v10419 = vunpack.c.h.b16 %v9088
        %v10420 = vunpack.c.l.b16 %v9089
        %v10421 = vunpack.c.h.b16 %v9089
        %v10422 = vunpack.c.l.b16 %v9090
        %v10423 = vunpack.c.h.b16 %v9090
        %v10424 = vunpack.c.l.b16 %v9091
        %v10425 = vunpack.c.h.b16 %v9091
        %v10426 = vunpack.c.l.b16 %v9092
        %v10427 = vunpack.c.h.b16 %v9092
        %v10428 = vunpack.c.l.b16 %v9093
        %v10429 = vunpack.c.h.b16 %v9093
        %v10430 = vunpack.c.l.b16 %v9094
        %v10431 = vunpack.c.h.b16 %v9094
        %v10432 = vunpack.c.l.b16 %v9095
        %v10433 = vunpack.c.h.b16 %v9095
        %v10434 = vunpack.c.l.b16 %v9096
        %v10435 = vunpack.c.h.b16 %v9096
        %v10436 = vunpack.c.l.b16 %v9097
        %v10437 = vunpack.c.h.b16 %v9097
        %v10438 = vunpack.c.l.b16 %v9098
        %v10439 = vunpack.c.h.b16 %v9098
        %v10440 = vunpack.c.l.b16 %v9099
        %v10441 = vunpack.c.h.b16 %v9099
        %v10442 = vunpack.c.l.b16 %v9100
        %v10443 = vunpack.c.h.b16 %v9100
        %v10444 = vunpack.c.l.b16 %v9101
        %v10445 = vunpack.c.h.b16 %v9101
        %v10446 = vunpack.c.l.b16 %v9102
        %v10447 = vunpack.c.h.b16 %v9102
        %v10448 = vunpack.c.l.b16 %v9103
        %v10449 = vunpack.c.h.b16 %v9103
        %v10450 = vunpack.c.l.b16 %v9104
        %v10451 = vunpack.c.h.b16 %v9104
        %v10452 = vunpack.c.l.b16 %v9105
        %v10453 = vunpack.c.h.b16 %v9105
        %v10454 = vunpack.c.l.b16 %v9106
        %v10455 = vunpack.c.h.b16 %v9106
        %v10456 = vunpack.c.l.b16 %v9107
        %v10457 = vunpack.c.h.b16 %v9107
        %v10458 = vunpack.c.l.b16 %v9108
        %v10459 = vunpack.c.h.b16 %v9108
        %v10460 = vunpack.c.l.b16 %v9109
        %v10461 = vunpack.c.h.b16 %v9109
        %v10462 = vunpack.c.l.b16 %v9110
        %v10463 = vunpack.c.h.b16 %v9110
        %v10464 = vunpack.c.l.b16 %v9111
        %v10465 = vunpack.c.h.b16 %v9111
        %v10466 = vunpack.c.l.b16 %v9112
        %v10467 = vunpack.c.h.b16 %v9112
        %v10468 = vunpack.c.l.b16 %v9113
        %v10469 = vunpack.c.h.b16 %v9113
        %v10470 = vunpack.c.l.b16 %v9114
        %v10471 = vunpack.c.h.b16 %v9114
        %v10472 = vunpack.c.l.b16 %v9115
        %v10473 = vunpack.c.h.b16 %v9115
        %v10474 = vunpack.c.l.b16 %v9116
        %v10475 = vunpack.c.h.b16 %v9116
        %v10476 = vunpack.c.l.b16 %v9117
        %v10477 = vunpack.c.h.b16 %v9117
        %v10478 = vunpack.c.l.b16 %v9118
        %v10479 = vunpack.c.h.b16 %v9118
        %v10480 = vunpack.c.l.b16 %v9119
        %v10481 = vunpack.c.h.b16 %v9119
        %v10482 = vunpack.c.l.b16 %v9120
        %v10483 = vunpack.c.h.b16 %v9120
        %v10484 = vunpack.c.l.b16 %v9121
        %v10485 = vunpack.c.h.b16 %v9121
        %v10486 = vunpack.c.l.b16 %v9122
        %v10487 = vunpack.c.h.b16 %v9122
        %v10488 = vunpack.c.l.b16 %v9123
        %v10489 = vunpack.c.h.b16 %v9123
        %v10490 = vunpack.c.l.b16 %v9124
        %v10491 = vunpack.c.h.b16 %v9124
        %v10492 = vunpack.c.l.b16 %v9125
        %v10493 = vunpack.c.h.b16 %v9125
        %v10494 = vunpack.c.l.b16 %v9126
        %v10495 = vunpack.c.h.b16 %v9126
        %v10496 = vunpack.c.l.b16 %v9127
        %v10497 = vunpack.c.h.b16 %v9127
        %v10498 = vunpack.c.l.b16 %v9128
        %v10499 = vunpack.c.h.b16 %v9128
        %v10500 = vunpack.c.l.b16 %v9129
        %v10501 = vunpack.c.h.b16 %v9129
        %v10502 = vunpack.c.l.b16 %v9130
        %v10503 = vunpack.c.h.b16 %v9130
        %v10504 = vunpack.c.l.b16 %v9131
        %v10505 = vunpack.c.h.b16 %v9131
        %v10506 = vunpack.c.l.b16 %v9132
        %v10507 = vunpack.c.h.b16 %v9132
        %v10508 = vunpack.c.l.b16 %v9133
        %v10509 = vunpack.c.h.b16 %v9133
        %v10510 = vunpack.c.l.b16 %v9134
        %v10511 = vunpack.c.h.b16 %v9134
        %v10512 = vunpack.c.l.b16 %v9135
        %v10513 = vunpack.c.h.b16 %v9135
        %v10514 = vunpack.c.l.b16 %v9136
        %v10515 = vunpack.c.h.b16 %v9136
        %v10516 = vunpack.c.l.b16 %v9137
        %v10517 = vunpack.c.h.b16 %v9137
        %v10518 = vunpack.c.l.b16 %v9138
        %v10519 = vunpack.c.h.b16 %v9138
        %v10520 = vunpack.c.l.b16 %v9139
        %v10521 = vunpack.c.h.b16 %v9139
        %v10522 = vunpack.c.l.b16 %v9140
        %v10523 = vunpack.c.h.b16 %v9140
        %v10524 = vunpack.c.l.b16 %v9141
        %v10525 = vunpack.c.h.b16 %v9141
        %v10526 = vunpack.c.l.b16 %v9142
        %v10527 = vunpack.c.h.b16 %v9142
        %v10528 = vunpack.c.l.b16 %v9143
        %v10529 = vunpack.c.h.b16 %v9143
        %v10530 = vunpack.c.l.b16 %v9144
        %v10531 = vunpack.c.h.b16 %v9144
        %v10532 = vunpack.c.l.b16 %v9145
        %v10533 = vunpack.c.h.b16 %v9145
        %v10534 = vunpack.c.l.b16 %v9146
        %v10535 = vunpack.c.h.b16 %v9146
        %v10536 = vunpack.c.l.b16 %v9147
        %v10537 = vunpack.c.h.b16 %v9147
        %v10538 = vunpack.c.l.b16 %v9148
        %v10539 = vunpack.c.h.b16 %v9148
        %v10540 = vunpack.c.l.b16 %v9149
        %v10541 = vunpack.c.h.b16 %v9149
        %v10542 = vunpack.c.l.b16 %v9150
        %v10543 = vunpack.c.h.b16 %v9150
        %v10544 = vunpack.c.l.b16 %v9151
        %v10545 = vunpack.c.h.b16 %v9151
        %v10546 = vunpack.c.l.b16 %v9152
        %v10547 = vunpack.c.h.b16 %v9152
        %v10548 = vunpack.c.l.b16 %v9153
        %v10549 = vunpack.c.h.b16 %v9153
        %v10550 = vunpack.c.l.b16 %v9154
        %v10551 = vunpack.c.h.b16 %v9154
        %v10552 = vunpack.c.l.b16 %v9155
        %v10553 = vunpack.c.h.b16 %v9155
        %v10554 = vunpack.c.l.b16 %v9156
        %v10555 = vunpack.c.h.b16 %v9156
        %v10556 = vunpack.c.l.b16 %v9157
        %v10557 = vunpack.c.h.b16 %v9157
        %v10558 = vunpack.c.l.b16 %v9158
        %v10559 = vunpack.c.h.b16 %v9158
        %v10560 = vunpack.c.l.b16 %v9159
        %v10561 = vunpack.c.h.b16 %v9159
        %v10562 = vunpack.c.l.b16 %v9160
        %v10563 = vunpack.c.h.b16 %v9160
        %v10564 = vunpack.c.l.b16 %v9161
        %v10565 = vunpack.c.h.b16 %v9161
        %v10566 = vunpack.c.l.b16 %v9162
        %v10567 = vunpack.c.h.b16 %v9162
        %v10568 = vunpack.c.l.b16 %v9163
        %v10569 = vunpack.c.h.b16 %v9163
        %v10570 = vunpack.c.l.b16 %v9164
        %v10571 = vunpack.c.h.b16 %v9164
        %v10572 = vunpack.c.l.b16 %v9165
        %v10573 = vunpack.c.h.b16 %v9165
        %v10574 = vunpack.c.l.b16 %v9166
        %v10575 = vunpack.c.h.b16 %v9166
        %v10576 = vunpack.c.l.b16 %v9167
        %v10577 = vunpack.c.h.b16 %v9167
        %v10578 = vunpack.c.l.b16 %v9168
        %v10579 = vunpack.c.h.b16 %v9168
        %v10580 = vunpack.c.l.b16 %v9169
        %v10581 = vunpack.c.h.b16 %v9169
        %v10582 = vunpack.c.l.b16 %v9170
        %v10583 = vunpack.c.h.b16 %v9170
        %v10584 = vunpack.c.l.b16 %v9171
        %v10585 = vunpack.c.h.b16 %v9171
        %v10586 = vunpack.c.l.b16 %v9172
        %v10587 = vunpack.c.h.b16 %v9172
        %v10588 = vunpack.c.l.b16 %v9173
        %v10589 = vunpack.c.h.b16 %v9173
        %v10590 = vunpack.c.l.b16 %v9174
        %v10591 = vunpack.c.h.b16 %v9174
        %v10592 = vunpack.c.l.b16 %v9175
        %v10593 = vunpack.c.h.b16 %v9175
        %v10594 = vunpack.c.l.b16 %v9176
        %v10595 = vunpack.c.h.b16 %v9176
        %v10596 = vunpack.c.l.b16 %v9177
        %v10597 = vunpack.c.h.b16 %v9177
        %v10598 = vunpack.c.l.b16 %v9178
        %v10599 = vunpack.c.h.b16 %v9178
        %v10600 = vunpack.c.l.b16 %v9179
        %v10601 = vunpack.c.h.b16 %v9179
        %v10602 = vunpack.c.l.b16 %v9180
        %v10603 = vunpack.c.h.b16 %v9180
        %v10604 = vunpack.c.l.b16 %v9181
        %v10605 = vunpack.c.h.b16 %v9181
        %v10606 = vunpack.c.l.b16 %v9182
        %v10607 = vunpack.c.h.b16 %v9182
        %v10608 = vunpack.c.l.b16 %v9183
        %v10609 = vunpack.c.h.b16 %v9183
        %v10610 = vunpack.c.l.b16 %v9184
        %v10611 = vunpack.c.h.b16 %v9184
        %v10612 = vunpack.c.l.b16 %v9185
        %v10613 = vunpack.c.h.b16 %v9185
        %v10614 = vunpack.c.l.b16 %v9186
        %v10615 = vunpack.c.h.b16 %v9186
        %v10616 = vunpack.c.l.b16 %v9187
        %v10617 = vunpack.c.h.b16 %v9187
        %v10618 = vunpack.c.l.b16 %v9188
        %v10619 = vunpack.c.h.b16 %v9188
        %v10620 = vunpack.c.l.b16 %v9189
        %v10621 = vunpack.c.h.b16 %v9189
        %v10622 = vunpack.c.l.b16 %v9190
        %v10623 = vunpack.c.h.b16 %v9190
        %v10624 = vunpack.c.l.b16 %v9191
        %v10625 = vunpack.c.h.b16 %v9191
        %v10626 = vunpack.c.l.b16 %v9192
        %v10627 = vunpack.c.h.b16 %v9192
        %v10628 = vunpack.c.l.b16 %v9193
        %v10629 = vunpack.c.h.b16 %v9193
        %v10630 = vunpack.c.l.b16 %v9194
        %v10631 = vunpack.c.h.b16 %v9194
        %v10632 = vunpack.c.l.b16 %v9195
        %v10633 = vunpack.c.h.b16 %v9195
        %v10634 = vunpack.c.l.b16 %v9196
        %v10635 = vunpack.c.h.b16 %v9196
        %v10636 = vunpack.c.l.b16 %v9197
        %v10637 = vunpack.c.h.b16 %v9197
        %v10638 = vunpack.c.l.b16 %v9198
        %v10639 = vunpack.c.h.b16 %v9198
        %v10640 = vunpack.c.l.b16 %v9199
        %v10641 = vunpack.c.h.b16 %v9199
        %v10642 = vunpack.c.l.b16 %v9200
        %v10643 = vunpack.c.h.b16 %v9200
        %v10644 = vunpack.c.l.b16 %v9201
        %v10645 = vunpack.c.h.b16 %v9201
        %v10646 = vunpack.c.l.b16 %v9202
        %v10647 = vunpack.c.h.b16 %v9202
        %v10648 = vunpack.c.l.b16 %v9203
        %v10649 = vunpack.c.h.b16 %v9203
        %v10650 = vunpack.c.l.b16 %v9204
        %v10651 = vunpack.c.h.b16 %v9204
        %v10652 = vunpack.c.l.b16 %v9205
        %v10653 = vunpack.c.h.b16 %v9205
        %v10654 = vunpack.c.l.b16 %v9206
        %v10655 = vunpack.c.h.b16 %v9206
        %v10656 = vunpack.c.l.b16 %v9207
        %v10657 = vunpack.c.h.b16 %v9207
        %v10658 = vunpack.c.l.b16 %v9208
        %v10659 = vunpack.c.h.b16 %v9208
        %v10660 = vunpack.c.l.b16 %v9209
        %v10661 = vunpack.c.h.b16 %v9209
        %v10662 = vunpack.c.l.b16 %v9210
        %v10663 = vunpack.c.h.b16 %v9210
        %v10664 = vunpack.c.l.b16 %v9211
        %v10665 = vunpack.c.h.b16 %v9211
        %v10666 = vunpack.c.l.b16 %v9212
        %v10667 = vunpack.c.h.b16 %v9212
        %v10668 = vunpack.c.l.b16 %v9213
        %v10669 = vunpack.c.h.b16 %v9213
        %v10670 = vunpack.c.l.b16 %v9214
        %v10671 = vunpack.c.h.b16 %v9214
        %v10672 = vunpack.c.l.b16 %v9215
        %v10673 = vunpack.c.h.b16 %v9215
        %v10674 = vunpack.c.l.b16 %v9216
        %v10675 = vunpack.c.h.b16 %v9216
        %v10676 = vunpack.c.l.b16 %v9217
        %v10677 = vunpack.c.h.b16 %v9217
        %v10678 = vunpack.c.l.b16 %v9218
        %v10679 = vunpack.c.h.b16 %v9218
        %v10680 = vunpack.c.l.b16 %v9219
        %v10681 = vunpack.c.h.b16 %v9219
        %v10682 = vunpack.c.l.b16 %v9220
        %v10683 = vunpack.c.h.b16 %v9220
        %v10684 = vunpack.c.l.b16 %v9221
        %v10685 = vunpack.c.h.b16 %v9221
        %v10686 = vunpack.c.l.b16 %v9222
        %v10687 = vunpack.c.h.b16 %v9222
        %v10688 = vunpack.c.l.b16 %v9223
        %v10689 = vunpack.c.h.b16 %v9223
        %v10690 = vunpack.c.l.b16 %v9224
        %v10691 = vunpack.c.h.b16 %v9224
        %v10692 = vunpack.c.l.b16 %v9225
        %v10693 = vunpack.c.h.b16 %v9225
        %v10694 = vunpack.c.l.b16 %v9226
        %v10695 = vunpack.c.h.b16 %v9226
        %v10696 = vunpack.c.l.b16 %v9227
        %v10697 = vunpack.c.h.b16 %v9227
        %v10698 = vunpack.c.l.b16 %v9228
        %v10699 = vunpack.c.h.b16 %v9228
        %v10700 = vunpack.c.l.b16 %v9229
        %v10701 = vunpack.c.h.b16 %v9229
        %v10702 = vunpack.c.l.b16 %v9230
        %v10703 = vunpack.c.h.b16 %v9230
        %v10704 = vunpack.c.l.b16 %v9231
        %v10705 = vunpack.c.h.b16 %v9231
        %v10706 = vunpack.c.l.b16 %v9232
        %v10707 = vunpack.c.h.b16 %v9232
        %v10708 = vunpack.c.l.b16 %v9233
        %v10709 = vunpack.c.h.b16 %v9233
        %v10710 = vunpack.c.l.b16 %v9234
        %v10711 = vunpack.c.h.b16 %v9234
        %v10712 = vunpack.c.l.b16 %v9235
        %v10713 = vunpack.c.h.b16 %v9235
        %v10714 = vunpack.c.l.b16 %v9236
        %v10715 = vunpack.c.h.b16 %v9236
        %v10716 = vunpack.c.l.b16 %v9237
        %v10717 = vunpack.c.h.b16 %v9237
        %v10718 = vunpack.c.l.b16 %v9238
        %v10719 = vunpack.c.h.b16 %v9238
        %v10720 = vunpack.c.l.b16 %v9239
        %v10721 = vunpack.c.h.b16 %v9239
        %v10722 = vunpack.c.l.b16 %v9240
        %v10723 = vunpack.c.h.b16 %v9240
        %v10724 = vunpack.c.l.b16 %v9241
        %v10725 = vunpack.c.h.b16 %v9241
        %v10726 = vunpack.c.l.b16 %v9242
        %v10727 = vunpack.c.h.b16 %v9242
        %v10728 = vunpack.c.l.b16 %v9243
        %v10729 = vunpack.c.h.b16 %v9243
        %v10730 = vunpack.c.l.b16 %v9244
        %v10731 = vunpack.c.h.b16 %v9244
        %v10732 = vunpack.c.l.b16 %v9245
        %v10733 = vunpack.c.h.b16 %v9245
        %v10734 = vunpack.c.l.b16 %v9246
        %v10735 = vunpack.c.h.b16 %v9246
        %v10736 = vunpack.c.l.b16 %v9247
        %v10737 = vunpack.c.h.b16 %v9247
        %v10738 = vunpack.c.l.b16 %v9248
        %v10739 = vunpack.c.h.b16 %v9248
        %v10740 = vunpack.c.l.b16 %v9249
        %v10741 = vunpack.c.h.b16 %v9249
        %v10742 = vunpack.c.l.b16 %v9250
        %v10743 = vunpack.c.h.b16 %v9250
        %v10744 = vunpack.c.l.b16 %v9251
        %v10745 = vunpack.c.h.b16 %v9251
        %v10746 = vunpack.c.l.b16 %v9252
        %v10747 = vunpack.c.h.b16 %v9252
        %v10748 = vunpack.c.l.b16 %v9253
        %v10749 = vunpack.c.h.b16 %v9253
        %v10750 = vunpack.c.l.b16 %v9254
        %v10751 = vunpack.c.h.b16 %v9254
        %v10752 = vunpack.c.l.b16 %v9255
        %v10753 = vunpack.c.h.b16 %v9255
        %v10754 = vunpack.c.l.b16 %v9256
        %v10755 = vunpack.c.h.b16 %v9256
        %v10756 = vunpack.c.l.b16 %v9257
        %v10757 = vunpack.c.h.b16 %v9257
        %v10758 = vunpack.c.l.b16 %v9258
        %v10759 = vunpack.c.h.b16 %v9258
        %v10760 = vunpack.c.l.b16 %v9259
        %v10761 = vunpack.c.h.b16 %v9259
        %v10762 = vunpack.c.l.b16 %v9260
        %v10763 = vunpack.c.h.b16 %v9260
        %v10764 = vunpack.c.l.b16 %v9261
        %v10765 = vunpack.c.h.b16 %v9261
        %v10766 = vunpack.c.l.b16 %v9262
        %v10767 = vunpack.c.h.b16 %v9262
        %v10768 = vunpack.c.l.b16 %v9263
        %v10769 = vunpack.c.h.b16 %v9263
        %v10770 = vunpack.c.l.b16 %v9264
        %v10771 = vunpack.c.h.b16 %v9264
        %v10772 = vunpack.c.l.b16 %v9265
        %v10773 = vunpack.c.h.b16 %v9265
        %v10774 = vunpack.c.l.b16 %v9266
        %v10775 = vunpack.c.h.b16 %v9266
        %v10776 = vunpack.c.l.b16 %v9267
        %v10777 = vunpack.c.h.b16 %v9267
        %v10778 = vunpack.c.l.b16 %v9268
        %v10779 = vunpack.c.h.b16 %v9268
        %v10780 = vunpack.c.l.b16 %v9269
        %v10781 = vunpack.c.h.b16 %v9269
        %v10782 = vunpack.c.l.b16 %v9270
        %v10783 = vunpack.c.h.b16 %v9270
        %v10784 = vunpack.c.l.b16 %v9271
        %v10785 = vunpack.c.h.b16 %v9271
        %v10786 = vunpack.c.l.b16 %v9272
        %v10787 = vunpack.c.h.b16 %v9272
        %v10788 = vunpack.c.l.b16 %v9273
        %v10789 = vunpack.c.h.b16 %v9273
        %v10790 = vunpack.c.l.b16 %v9274
        %v10791 = vunpack.c.h.b16 %v9274
        %v10792 = vunpack.c.l.b16 %v9275
        %v10793 = vunpack.c.h.b16 %v9275
        %v10794 = vunpack.c.l.b16 %v9276
        %v10795 = vunpack.c.h.b16 %v9276
        %v10796 = vunpack.c.l.b16 %v9277
        %v10797 = vunpack.c.h.b16 %v9277
        %v10798 = vunpack.c.l.b16 %v9278
        %v10799 = vunpack.c.h.b16 %v9278
        %v10800 = vunpack.c.l.b16 %v9279
        %v10801 = vunpack.c.h.b16 %v9279
        %v10802 = vunpack.c.l.b16 %v9280
        %v10803 = vunpack.c.h.b16 %v9280
        %v10804 = vunpack.c.l.b16 %v9281
        %v10805 = vunpack.c.h.b16 %v9281
        %v10806 = vunpack.c.l.b16 %v9282
        %v10807 = vunpack.c.h.b16 %v9282
        %v10808 = vunpack.c.l.b16 %v9283
        %v10809 = vunpack.c.h.b16 %v9283
        %v10810 = vunpack.c.l.b16 %v9284
        %v10811 = vunpack.c.h.b16 %v9284
        %v10812 = vunpack.c.l.b16 %v9285
        %v10813 = vunpack.c.h.b16 %v9285
        %v10814 = vunpack.c.l.b16 %v9286
        %v10815 = vunpack.c.h.b16 %v9286
        %v10816 = vunpack.c.l.b16 %v9287
        %v10817 = vunpack.c.h.b16 %v9287
        %v10818 = vunpack.c.l.b16 %v9288
        %v10819 = vunpack.c.h.b16 %v9288
        %v10820 = vunpack.c.l.b16 %v9289
        %v10821 = vunpack.c.h.b16 %v9289
        %v10822 = vunpack.c.l.b16 %v9290
        %v10823 = vunpack.c.h.b16 %v9290
        %v10824 = vunpack.c.l.b16 %v9291
        %v10825 = vunpack.c.h.b16 %v9291
        %v10826 = vunpack.c.l.b16 %v9292
        %v10827 = vunpack.c.h.b16 %v9292
        %v10828 = vunpack.c.l.b16 %v9293
        %v10829 = vunpack.c.h.b16 %v9293
        %v10830 = vpack.c.b16 %v9810, %v9806
        %v10831 = vpack.c.b16 %v9811, %v9807
        %v10832 = vpack.c.b16 %v9812, %v9808
        %v10833 = vpack.c.b16 %v9813, %v9809
        %v10834 = vpack.c.b16 %v9818, %v9814
        %v10835 = vpack.c.b16 %v9819, %v9815
        %v10836 = vpack.c.b16 %v9820, %v9816
        %v10837 = vpack.c.b16 %v9821, %v9817
        %v10838 = vpack.c.b16 %v9826, %v9822
        %v10839 = vpack.c.b16 %v9827, %v9823
        %v10840 = vpack.c.b16 %v9828, %v9824
        %v10841 = vpack.c.b16 %v9829, %v9825
        %v10842 = vpack.c.b16 %v9834, %v9830
        %v10843 = vpack.c.b16 %v9835, %v9831
        %v10844 = vpack.c.b16 %v9836, %v9832
        %v10845 = vpack.c.b16 %v9837, %v9833
        %v10846 = vpack.c.b16 %v9842, %v9838
        %v10847 = vpack.c.b16 %v9843, %v9839
        %v10848 = vpack.c.b16 %v9844, %v9840
        %v10849 = vpack.c.b16 %v9845, %v9841
        %v10850 = vpack.c.b16 %v9850, %v9846
        %v10851 = vpack.c.b16 %v9851, %v9847
        %v10852 = vpack.c.b16 %v9852, %v9848
        %v10853 = vpack.c.b16 %v9853, %v9849
        %v10854 = vpack.c.b16 %v9858, %v9854
        %v10855 = vpack.c.b16 %v9859, %v9855
        %v10856 = vpack.c.b16 %v9860, %v9856
        %v10857 = vpack.c.b16 %v9861, %v9857
        %v10858 = vpack.c.b16 %v9866, %v9862
        %v10859 = vpack.c.b16 %v9867, %v9863
        %v10860 = vpack.c.b16 %v9868, %v9864
        %v10861 = vpack.c.b16 %v9869, %v9865
        %v10862 = vpack.c.b16 %v9874, %v9870
        %v10863 = vpack.c.b16 %v9875, %v9871
        %v10864 = vpack.c.b16 %v9876, %v9872
        %v10865 = vpack.c.b16 %v9877, %v9873
        %v10866 = vpack.c.b16 %v9882, %v9878
        %v10867 = vpack.c.b16 %v9883, %v9879
        %v10868 = vpack.c.b16 %v9884, %v9880
        %v10869 = vpack.c.b16 %v9885, %v9881
        %v10870 = vpack.c.b16 %v9890, %v9886
        %v10871 = vpack.c.b16 %v9891, %v9887
        %v10872 = vpack.c.b16 %v9892, %v9888
        %v10873 = vpack.c.b16 %v9893, %v9889
        %v10874 = vpack.c.b16 %v9898, %v9894
        %v10875 = vpack.c.b16 %v9899, %v9895
        %v10876 = vpack.c.b16 %v9900, %v9896
        %v10877 = vpack.c.b16 %v9901, %v9897
        %v10878 = vpack.c.b16 %v9906, %v9902
        %v10879 = vpack.c.b16 %v9907, %v9903
        %v10880 = vpack.c.b16 %v9908, %v9904
        %v10881 = vpack.c.b16 %v9909, %v9905
        %v10882 = vpack.c.b16 %v9914, %v9910
        %v10883 = vpack.c.b16 %v9915, %v9911
        %v10884 = vpack.c.b16 %v9916, %v9912
        %v10885 = vpack.c.b16 %v9917, %v9913
        %v10886 = vpack.c.b16 %v9922, %v9918
        %v10887 = vpack.c.b16 %v9923, %v9919
        %v10888 = vpack.c.b16 %v9924, %v9920
        %v10889 = vpack.c.b16 %v9925, %v9921
        %v10890 = vpack.c.b16 %v9930, %v9926
        %v10891 = vpack.c.b16 %v9931, %v9927
        %v10892 = vpack.c.b16 %v9932, %v9928
        %v10893 = vpack.c.b16 %v9933, %v9929
        %v10894 = vpack.c.b16 %v9938, %v9934
        %v10895 = vpack.c.b16 %v9939, %v9935
        %v10896 = vpack.c.b16 %v9940, %v9936
        %v10897 = vpack.c.b16 %v9941, %v9937
        %v10898 = vpack.c.b16 %v9946, %v9942
        %v10899 = vpack.c.b16 %v9947, %v9943
        %v10900 = vpack.c.b16 %v9948, %v9944
        %v10901 = vpack.c.b16 %v9949, %v9945
        %v10902 = vpack.c.b16 %v9954, %v9950
        %v10903 = vpack.c.b16 %v9955, %v9951
        %v10904 = vpack.c.b16 %v9956, %v9952
        %v10905 = vpack.c.b16 %v9957, %v9953
        %v10906 = vpack.c.b16 %v9962, %v9958
        %v10907 = vpack.c.b16 %v9963, %v9959
        %v10908 = vpack.c.b16 %v9964, %v9960
        %v10909 = vpack.c.b16 %v9965, %v9961
        %v10910 = vpack.c.b16 %v9970, %v9966
        %v10911 = vpack.c.b16 %v9971, %v9967
        %v10912 = vpack.c.b16 %v9972, %v9968
        %v10913 = vpack.c.b16 %v9973, %v9969
        %v10914 = vpack.c.b16 %v9978, %v9974
        %v10915 = vpack.c.b16 %v9979, %v9975
        %v10916 = vpack.c.b16 %v9980, %v9976
        %v10917 = vpack.c.b16 %v9981, %v9977
        %v10918 = vpack.c.b16 %v9986, %v9982
        %v10919 = vpack.c.b16 %v9987, %v9983
        %v10920 = vpack.c.b16 %v9988, %v9984
        %v10921 = vpack.c.b16 %v9989, %v9985
        %v10922 = vpack.c.b16 %v9994, %v9990
        %v10923 = vpack.c.b16 %v9995, %v9991
        %v10924 = vpack.c.b16 %v9996, %v9992
        %v10925 = vpack.c.b16 %v9997, %v9993
        %v10926 = vpack.c.b16 %v10002, %v9998
        %v10927 = vpack.c.b16 %v10003, %v9999
        %v10928 = vpack.c.b16 %v10004, %v10000
        %v10929 = vpack.c.b16 %v10005, %v10001
        %v10930 = vpack.c.b16 %v10010, %v10006
        %v10931 = vpack.c.b16 %v10011, %v10007
        %v10932 = vpack.c.b16 %v10012, %v10008
        %v10933 = vpack.c.b16 %v10013, %v10009
        %v10934 = vpack.c.b16 %v10018, %v10014
        %v10935 = vpack.c.b16 %v10019, %v10015
        %v10936 = vpack.c.b16 %v10020, %v10016
        %v10937 = vpack.c.b16 %v10021, %v10017
        %v10938 = vpack.c.b16 %v10026, %v10022
        %v10939 = vpack.c.b16 %v10027, %v10023
        %v10940 = vpack.c.b16 %v10028, %v10024
        %v10941 = vpack.c.b16 %v10029, %v10025
        %v10942 = vpack.c.b16 %v10034, %v10030
        %v10943 = vpack.c.b16 %v10035, %v10031
        %v10944 = vpack.c.b16 %v10036, %v10032
        %v10945 = vpack.c.b16 %v10037, %v10033
        %v10946 = vpack.c.b16 %v10042, %v10038
        %v10947 = vpack.c.b16 %v10043, %v10039
        %v10948 = vpack.c.b16 %v10044, %v10040
        %v10949 = vpack.c.b16 %v10045, %v10041
        %v10950 = vpack.c.b16 %v10050, %v10046
        %v10951 = vpack.c.b16 %v10051, %v10047
        %v10952 = vpack.c.b16 %v10052, %v10048
        %v10953 = vpack.c.b16 %v10053, %v10049
        %v10954 = vpack.c.b16 %v10058, %v10054
        %v10955 = vpack.c.b16 %v10059, %v10055
        %v10956 = vpack.c.b16 %v10060, %v10056
        %v10957 = vpack.c.b16 %v10061, %v10057
        %v10958 = vpack.c.b16 %v10066, %v10062
        %v10959 = vpack.c.b16 %v10067, %v10063
        %v10960 = vpack.c.b16 %v10068, %v10064
        %v10961 = vpack.c.b16 %v10069, %v10065
        %v10962 = vpack.c.b16 %v10074, %v10070
        %v10963 = vpack.c.b16 %v10075, %v10071
        %v10964 = vpack.c.b16 %v10076, %v10072
        %v10965 = vpack.c.b16 %v10077, %v10073
        %v10966 = vpack.c.b16 %v10082, %v10078
        %v10967 = vpack.c.b16 %v10083, %v10079
        %v10968 = vpack.c.b16 %v10084, %v10080
        %v10969 = vpack.c.b16 %v10085, %v10081
        %v10970 = vpack.c.b16 %v10090, %v10086
        %v10971 = vpack.c.b16 %v10091, %v10087
        %v10972 = vpack.c.b16 %v10092, %v10088
        %v10973 = vpack.c.b16 %v10093, %v10089
        %v10974 = vpack.c.b16 %v10098, %v10094
        %v10975 = vpack.c.b16 %v10099, %v10095
        %v10976 = vpack.c.b16 %v10100, %v10096
        %v10977 = vpack.c.b16 %v10101, %v10097
        %v10978 = vpack.c.b16 %v10106, %v10102
        %v10979 = vpack.c.b16 %v10107, %v10103
        %v10980 = vpack.c.b16 %v10108, %v10104
        %v10981 = vpack.c.b16 %v10109, %v10105
        %v10982 = vpack.c.b16 %v10114, %v10110
        %v10983 = vpack.c.b16 %v10115, %v10111
        %v10984 = vpack.c.b16 %v10116, %v10112
        %v10985 = vpack.c.b16 %v10117, %v10113
        %v10986 = vpack.c.b16 %v10122, %v10118
        %v10987 = vpack.c.b16 %v10123, %v10119
        %v10988 = vpack.c.b16 %v10124, %v10120
        %v10989 = vpack.c.b16 %v10125, %v10121
        %v10990 = vpack.c.b16 %v10130, %v10126
        %v10991 = vpack.c.b16 %v10131, %v10127
        %v10992 = vpack.c.b16 %v10132, %v10128
        %v10993 = vpack.c.b16 %v10133, %v10129
        %v10994 = vpack.c.b16 %v10138, %v10134
        %v10995 = vpack.c.b16 %v10139, %v10135
        %v10996 = vpack.c.b16 %v10140, %v10136
        %v10997 = vpack.c.b16 %v10141, %v10137
        %v10998 = vpack.c.b16 %v10146, %v10142
        %v10999 = vpack.c.b16 %v10147, %v10143
        %v11000 = vpack.c.b16 %v10148, %v10144
        %v11001 = vpack.c.b16 %v10149, %v10145
        %v11002 = vpack.c.b16 %v10154, %v10150
        %v11003 = vpack.c.b16 %v10155, %v10151
        %v11004 = vpack.c.b16 %v10156, %v10152
        %v11005 = vpack.c.b16 %v10157, %v10153
        %v11006 = vpack.c.b16 %v10162, %v10158
        %v11007 = vpack.c.b16 %v10163, %v10159
        %v11008 = vpack.c.b16 %v10164, %v10160
        %v11009 = vpack.c.b16 %v10165, %v10161
        %v11010 = vpack.c.b16 %v10170, %v10166
        %v11011 = vpack.c.b16 %v10171, %v10167
        %v11012 = vpack.c.b16 %v10172, %v10168
        %v11013 = vpack.c.b16 %v10173, %v10169
        %v11014 = vpack.c.b16 %v10178, %v10174
        %v11015 = vpack.c.b16 %v10179, %v10175
        %v11016 = vpack.c.b16 %v10180, %v10176
        %v11017 = vpack.c.b16 %v10181, %v10177
        %v11018 = vpack.c.b16 %v10186, %v10182
        %v11019 = vpack.c.b16 %v10187, %v10183
        %v11020 = vpack.c.b16 %v10188, %v10184
        %v11021 = vpack.c.b16 %v10189, %v10185
        %v11022 = vpack.c.b16 %v10194, %v10190
        %v11023 = vpack.c.b16 %v10195, %v10191
        %v11024 = vpack.c.b16 %v10196, %v10192
        %v11025 = vpack.c.b16 %v10197, %v10193
        %v11026 = vpack.c.b16 %v10202, %v10198
        %v11027 = vpack.c.b16 %v10203, %v10199
        %v11028 = vpack.c.b16 %v10204, %v10200
        %v11029 = vpack.c.b16 %v10205, %v10201
        %v11030 = vpack.c.b16 %v10210, %v10206
        %v11031 = vpack.c.b16 %v10211, %v10207
        %v11032 = vpack.c.b16 %v10212, %v10208
        %v11033 = vpack.c.b16 %v10213, %v10209
        %v11034 = vpack.c.b16 %v10218, %v10214
        %v11035 = vpack.c.b16 %v10219, %v10215
        %v11036 = vpack.c.b16 %v10220, %v10216
        %v11037 = vpack.c.b16 %v10221, %v10217
        %v11038 = vpack.c.b16 %v10226, %v10222
        %v11039 = vpack.c.b16 %v10227, %v10223
        %v11040 = vpack.c.b16 %v10228, %v10224
        %v11041 = vpack.c.b16 %v10229, %v10225
        %v11042 = vpack.c.b16 %v10234, %v10230
        %v11043 = vpack.c.b16 %v10235, %v10231
        %v11044 = vpack.c.b16 %v10236, %v10232
        %v11045 = vpack.c.b16 %v10237, %v10233
        %v11046 = vpack.c.b16 %v10242, %v10238
        %v11047 = vpack.c.b16 %v10243, %v10239
        %v11048 = vpack.c.b16 %v10244, %v10240
        %v11049 = vpack.c.b16 %v10245, %v10241
        %v11050 = vpack.c.b16 %v10250, %v10246
        %v11051 = vpack.c.b16 %v10251, %v10247
        %v11052 = vpack.c.b16 %v10252, %v10248
        %v11053 = vpack.c.b16 %v10253, %v10249
        %v11054 = vpack.c.b16 %v10258, %v10254
        %v11055 = vpack.c.b16 %v10259, %v10255
        %v11056 = vpack.c.b16 %v10260, %v10256
        %v11057 = vpack.c.b16 %v10261, %v10257
        %v11058 = vpack.c.b16 %v10266, %v10262
        %v11059 = vpack.c.b16 %v10267, %v10263
        %v11060 = vpack.c.b16 %v10268, %v10264
        %v11061 = vpack.c.b16 %v10269, %v10265
        %v11062 = vpack.c.b16 %v10274, %v10270
        %v11063 = vpack.c.b16 %v10275, %v10271
        %v11064 = vpack.c.b16 %v10276, %v10272
        %v11065 = vpack.c.b16 %v10277, %v10273
        %v11066 = vpack.c.b16 %v10282, %v10278
        %v11067 = vpack.c.b16 %v10283, %v10279
        %v11068 = vpack.c.b16 %v10284, %v10280
        %v11069 = vpack.c.b16 %v10285, %v10281
        %v11070 = vpack.c.b16 %v10290, %v10286
        %v11071 = vpack.c.b16 %v10291, %v10287
        %v11072 = vpack.c.b16 %v10292, %v10288
        %v11073 = vpack.c.b16 %v10293, %v10289
        %v11074 = vpack.c.b16 %v10298, %v10294
        %v11075 = vpack.c.b16 %v10299, %v10295
        %v11076 = vpack.c.b16 %v10300, %v10296
        %v11077 = vpack.c.b16 %v10301, %v10297
        %v11078 = vpack.c.b16 %v10306, %v10302
        %v11079 = vpack.c.b16 %v10307, %v10303
        %v11080 = vpack.c.b16 %v10308, %v10304
        %v11081 = vpack.c.b16 %v10309, %v10305
        %v11082 = vpack.c.b16 %v10314, %v10310
        %v11083 = vpack.c.b16 %v10315, %v10311
        %v11084 = vpack.c.b16 %v10316, %v10312
        %v11085 = vpack.c.b16 %v10317, %v10313
        %v11086 = vpack.c.b16 %v10322, %v10318
        %v11087 = vpack.c.b16 %v10323, %v10319
        %v11088 = vpack.c.b16 %v10324, %v10320
        %v11089 = vpack.c.b16 %v10325, %v10321
        %v11090 = vpack.c.b16 %v10330, %v10326
        %v11091 = vpack.c.b16 %v10331, %v10327
        %v11092 = vpack.c.b16 %v10332, %v10328
        %v11093 = vpack.c.b16 %v10333, %v10329
        %v11094 = vpack.c.b16 %v10338, %v10334
        %v11095 = vpack.c.b16 %v10339, %v10335
        %v11096 = vpack.c.b16 %v10340, %v10336
        %v11097 = vpack.c.b16 %v10341, %v10337
        %v11098 = vpack.c.b16 %v10346, %v10342
        %v11099 = vpack.c.b16 %v10347, %v10343
        %v11100 = vpack.c.b16 %v10348, %v10344
        %v11101 = vpack.c.b16 %v10349, %v10345
        %v11102 = vpack.c.b16 %v10354, %v10350
        %v11103 = vpack.c.b16 %v10355, %v10351
        %v11104 = vpack.c.b16 %v10356, %v10352
        %v11105 = vpack.c.b16 %v10357, %v10353
        %v11106 = vpack.c.b16 %v10362, %v10358
        %v11107 = vpack.c.b16 %v10363, %v10359
        %v11108 = vpack.c.b16 %v10364, %v10360
        %v11109 = vpack.c.b16 %v10365, %v10361
        %v11110 = vpack.c.b16 %v10370, %v10366
        %v11111 = vpack.c.b16 %v10371, %v10367
        %v11112 = vpack.c.b16 %v10372, %v10368
        %v11113 = vpack.c.b16 %v10373, %v10369
        %v11114 = vpack.c.b16 %v10378, %v10374
        %v11115 = vpack.c.b16 %v10379, %v10375
        %v11116 = vpack.c.b16 %v10380, %v10376
        %v11117 = vpack.c.b16 %v10381, %v10377
        %v11118 = vpack.c.b16 %v10386, %v10382
        %v11119 = vpack.c.b16 %v10387, %v10383
        %v11120 = vpack.c.b16 %v10388, %v10384
        %v11121 = vpack.c.b16 %v10389, %v10385
        %v11122 = vpack.c.b16 %v10394, %v10390
        %v11123 = vpack.c.b16 %v10395, %v10391
        %v11124 = vpack.c.b16 %v10396, %v10392
        %v11125 = vpack.c.b16 %v10397, %v10393
        %v11126 = vpack.c.b16 %v10402, %v10398
        %v11127 = vpack.c.b16 %v10403, %v10399
        %v11128 = vpack.c.b16 %v10404, %v10400
        %v11129 = vpack.c.b16 %v10405, %v10401
        %v11130 = vpack.c.b16 %v10410, %v10406
        %v11131 = vpack.c.b16 %v10411, %v10407
        %v11132 = vpack.c.b16 %v10412, %v10408
        %v11133 = vpack.c.b16 %v10413, %v10409
        %v11134 = vpack.c.b16 %v10418, %v10414
        %v11135 = vpack.c.b16 %v10419, %v10415
        %v11136 = vpack.c.b16 %v10420, %v10416
        %v11137 = vpack.c.b16 %v10421, %v10417
        %v11138 = vpack.c.b16 %v10426, %v10422
        %v11139 = vpack.c.b16 %v10427, %v10423
        %v11140 = vpack.c.b16 %v10428, %v10424
        %v11141 = vpack.c.b16 %v10429, %v10425
        %v11142 = vpack.c.b16 %v10434, %v10430
        %v11143 = vpack.c.b16 %v10435, %v10431
        %v11144 = vpack.c.b16 %v10436, %v10432
        %v11145 = vpack.c.b16 %v10437, %v10433
        %v11146 = vpack.c.b16 %v10442, %v10438
        %v11147 = vpack.c.b16 %v10443, %v10439
        %v11148 = vpack.c.b16 %v10444, %v10440
        %v11149 = vpack.c.b16 %v10445, %v10441
        %v11150 = vpack.c.b16 %v10450, %v10446
        %v11151 = vpack.c.b16 %v10451, %v10447
        %v11152 = vpack.c.b16 %v10452, %v10448
        %v11153 = vpack.c.b16 %v10453, %v10449
        %v11154 = vpack.c.b16 %v10458, %v10454
        %v11155 = vpack.c.b16 %v10459, %v10455
        %v11156 = vpack.c.b16 %v10460, %v10456
        %v11157 = vpack.c.b16 %v10461, %v10457
        %v11158 = vpack.c.b16 %v10466, %v10462
        %v11159 = vpack.c.b16 %v10467, %v10463
        %v11160 = vpack.c.b16 %v10468, %v10464
        %v11161 = vpack.c.b16 %v10469, %v10465
        %v11162 = vpack.c.b16 %v10474, %v10470
        %v11163 = vpack.c.b16 %v10475, %v10471
        %v11164 = vpack.c.b16 %v10476, %v10472
        %v11165 = vpack.c.b16 %v10477, %v10473
        %v11166 = vpack.c.b16 %v10482, %v10478
        %v11167 = vpack.c.b16 %v10483, %v10479
        %v11168 = vpack.c.b16 %v10484, %v10480
        %v11169 = vpack.c.b16 %v10485, %v10481
        %v11170 = vpack.c.b16 %v10490, %v10486
        %v11171 = vpack.c.b16 %v10491, %v10487
        %v11172 = vpack.c.b16 %v10492, %v10488
        %v11173 = vpack.c.b16 %v10493, %v10489
        %v11174 = vpack.c.b16 %v10498, %v10494
        %v11175 = vpack.c.b16 %v10499, %v10495
        %v11176 = vpack.c.b16 %v10500, %v10496
        %v11177 = vpack.c.b16 %v10501, %v10497
        %v11178 = vpack.c.b16 %v10506, %v10502
        %v11179 = vpack.c.b16 %v10507, %v10503
        %v11180 = vpack.c.b16 %v10508, %v10504
        %v11181 = vpack.c.b16 %v10509, %v10505
        %v11182 = vpack.c.b16 %v10514, %v10510
        %v11183 = vpack.c.b16 %v10515, %v10511
        %v11184 = vpack.c.b16 %v10516, %v10512
        %v11185 = vpack.c.b16 %v10517, %v10513
        %v11186 = vpack.c.b16 %v10522, %v10518
        %v11187 = vpack.c.b16 %v10523, %v10519
        %v11188 = vpack.c.b16 %v10524, %v10520
        %v11189 = vpack.c.b16 %v10525, %v10521
        %v11190 = vpack.c.b16 %v10530, %v10526
        %v11191 = vpack.c.b16 %v10531, %v10527
        %v11192 = vpack.c.b16 %v10532, %v10528
        %v11193 = vpack.c.b16 %v10533, %v10529
        %v11194 = vpack.c.b16 %v10538, %v10534
        %v11195 = vpack.c.b16 %v10539, %v10535
        %v11196 = vpack.c.b16 %v10540, %v10536
        %v11197 = vpack.c.b16 %v10541, %v10537
        %v11198 = vpack.c.b16 %v10546, %v10542
        %v11199 = vpack.c.b16 %v10547, %v10543
        %v11200 = vpack.c.b16 %v10548, %v10544
        %v11201 = vpack.c.b16 %v10549, %v10545
        %v11202 = vpack.c.b16 %v10554, %v10550
        %v11203 = vpack.c.b16 %v10555, %v10551
        %v11204 = vpack.c.b16 %v10556, %v10552
        %v11205 = vpack.c.b16 %v10557, %v10553
        %v11206 = vpack.c.b16 %v10562, %v10558
        %v11207 = vpack.c.b16 %v10563, %v10559
        %v11208 = vpack.c.b16 %v10564, %v10560
        %v11209 = vpack.c.b16 %v10565, %v10561
        %v11210 = vpack.c.b16 %v10570, %v10566
        %v11211 = vpack.c.b16 %v10571, %v10567
        %v11212 = vpack.c.b16 %v10572, %v10568
        %v11213 = vpack.c.b16 %v10573, %v10569
        %v11214 = vpack.c.b16 %v10578, %v10574
        %v11215 = vpack.c.b16 %v10579, %v10575
        %v11216 = vpack.c.b16 %v10580, %v10576
        %v11217 = vpack.c.b16 %v10581, %v10577
        %v11218 = vpack.c.b16 %v10586, %v10582
        %v11219 = vpack.c.b16 %v10587, %v10583
        %v11220 = vpack.c.b16 %v10588, %v10584
        %v11221 = vpack.c.b16 %v10589, %v10585
        %v11222 = vpack.c.b16 %v10594, %v10590
        %v11223 = vpack.c.b16 %v10595, %v10591
        %v11224 = vpack.c.b16 %v10596, %v10592
        %v11225 = vpack.c.b16 %v10597, %v10593
        %v11226 = vpack.c.b16 %v10602, %v10598
        %v11227 = vpack.c.b16 %v10603, %v10599
        %v11228 = vpack.c.b16 %v10604, %v10600
        %v11229 = vpack.c.b16 %v10605, %v10601
        %v11230 = vpack.c.b16 %v10610, %v10606
        %v11231 = vpack.c.b16 %v10611, %v10607
        %v11232 = vpack.c.b16 %v10612, %v10608
        %v11233 = vpack.c.b16 %v10613, %v10609
        %v11234 = vpack.c.b16 %v10618, %v10614
        %v11235 = vpack.c.b16 %v10619, %v10615
        %v11236 = vpack.c.b16 %v10620, %v10616
        %v11237 = vpack.c.b16 %v10621, %v10617
        %v11238 = vpack.c.b16 %v10626, %v10622
        %v11239 = vpack.c.b16 %v10627, %v10623
        %v11240 = vpack.c.b16 %v10628, %v10624
        %v11241 = vpack.c.b16 %v10629, %v10625
        %v11242 = vpack.c.b16 %v10634, %v10630
        %v11243 = vpack.c.b16 %v10635, %v10631
        %v11244 = vpack.c.b16 %v10636, %v10632
        %v11245 = vpack.c.b16 %v10637, %v10633
        %v11246 = vpack.c.b16 %v10642, %v10638
        %v11247 = vpack.c.b16 %v10643, %v10639
        %v11248 = vpack.c.b16 %v10644, %v10640
        %v11249 = vpack.c.b16 %v10645, %v10641
        %v11250 = vpack.c.b16 %v10650, %v10646
        %v11251 = vpack.c.b16 %v10651, %v10647
        %v11252 = vpack.c.b16 %v10652, %v10648
        %v11253 = vpack.c.b16 %v10653, %v10649
        %v11254 = vpack.c.b16 %v10658, %v10654
        %v11255 = vpack.c.b16 %v10659, %v10655
        %v11256 = vpack.c.b16 %v10660, %v10656
        %v11257 = vpack.c.b16 %v10661, %v10657
        %v11258 = vpack.c.b16 %v10666, %v10662
        %v11259 = vpack.c.b16 %v10667, %v10663
        %v11260 = vpack.c.b16 %v10668, %v10664
        %v11261 = vpack.c.b16 %v10669, %v10665
        %v11262 = vpack.c.b16 %v10674, %v10670
        %v11263 = vpack.c.b16 %v10675, %v10671
        %v11264 = vpack.c.b16 %v10676, %v10672
        %v11265 = vpack.c.b16 %v10677, %v10673
        %v11266 = vpack.c.b16 %v10682, %v10678
        %v11267 = vpack.c.b16 %v10683, %v10679
        %v11268 = vpack.c.b16 %v10684, %v10680
        %v11269 = vpack.c.b16 %v10685, %v10681
        %v11270 = vpack.c.b16 %v10690, %v10686
        %v11271 = vpack.c.b16 %v10691, %v10687
        %v11272 = vpack.c.b16 %v10692, %v10688
        %v11273 = vpack.c.b16 %v10693, %v10689
        %v11274 = vpack.c.b16 %v10698, %v10694
        %v11275 = vpack.c.b16 %v10699, %v10695
        %v11276 = vpack.c.b16 %v10700, %v10696
        %v11277 = vpack.c.b16 %v10701, %v10697
        %v11278 = vpack.c.b16 %v10706, %v10702
        %v11279 = vpack.c.b16 %v10707, %v10703
        %v11280 = vpack.c.b16 %v10708, %v10704
        %v11281 = vpack.c.b16 %v10709, %v10705
        %v11282 = vpack.c.b16 %v10714, %v10710
        %v11283 = vpack.c.b16 %v10715, %v10711
        %v11284 = vpack.c.b16 %v10716, %v10712
        %v11285 = vpack.c.b16 %v10717, %v10713
        %v11286 = vpack.c.b16 %v10722, %v10718
        %v11287 = vpack.c.b16 %v10723, %v10719
        %v11288 = vpack.c.b16 %v10724, %v10720
        %v11289 = vpack.c.b16 %v10725, %v10721
        %v11290 = vpack.c.b16 %v10730, %v10726
        %v11291 = vpack.c.b16 %v10731, %v10727
        %v11292 = vpack.c.b16 %v10732, %v10728
        %v11293 = vpack.c.b16 %v10733, %v10729
        %v11294 = vpack.c.b16 %v10738, %v10734
        %v11295 = vpack.c.b16 %v10739, %v10735
        %v11296 = vpack.c.b16 %v10740, %v10736
        %v11297 = vpack.c.b16 %v10741, %v10737
        %v11298 = vpack.c.b16 %v10746, %v10742
        %v11299 = vpack.c.b16 %v10747, %v10743
        %v11300 = vpack.c.b16 %v10748, %v10744
        %v11301 = vpack.c.b16 %v10749, %v10745
        %v11302 = vpack.c.b16 %v10754, %v10750
        %v11303 = vpack.c.b16 %v10755, %v10751
        %v11304 = vpack.c.b16 %v10756, %v10752
        %v11305 = vpack.c.b16 %v10757, %v10753
        %v11306 = vpack.c.b16 %v10762, %v10758
        %v11307 = vpack.c.b16 %v10763, %v10759
        %v11308 = vpack.c.b16 %v10764, %v10760
        %v11309 = vpack.c.b16 %v10765, %v10761
        %v11310 = vpack.c.b16 %v10770, %v10766
        %v11311 = vpack.c.b16 %v10771, %v10767
        %v11312 = vpack.c.b16 %v10772, %v10768
        %v11313 = vpack.c.b16 %v10773, %v10769
        %v11314 = vpack.c.b16 %v10778, %v10774
        %v11315 = vpack.c.b16 %v10779, %v10775
        %v11316 = vpack.c.b16 %v10780, %v10776
        %v11317 = vpack.c.b16 %v10781, %v10777
        %v11318 = vpack.c.b16 %v10786, %v10782
        %v11319 = vpack.c.b16 %v10787, %v10783
        %v11320 = vpack.c.b16 %v10788, %v10784
        %v11321 = vpack.c.b16 %v10789, %v10785
        %v11322 = vpack.c.b16 %v10794, %v10790
        %v11323 = vpack.c.b16 %v10795, %v10791
        %v11324 = vpack.c.b16 %v10796, %v10792
        %v11325 = vpack.c.b16 %v10797, %v10793
        %v11326 = vpack.c.b16 %v10802, %v10798
        %v11327 = vpack.c.b16 %v10803, %v10799
        %v11328 = vpack.c.b16 %v10804, %v10800
        %v11329 = vpack.c.b16 %v10805, %v10801
        %v11330 = vpack.c.b16 %v10810, %v10806
        %v11331 = vpack.c.b16 %v10811, %v10807
        %v11332 = vpack.c.b16 %v10812, %v10808
        %v11333 = vpack.c.b16 %v10813, %v10809
        %v11334 = vpack.c.b16 %v10818, %v10814
        %v11335 = vpack.c.b16 %v10819, %v10815
        %v11336 = vpack.c.b16 %v10820, %v10816
        %v11337 = vpack.c.b16 %v10821, %v10817
        %v11338 = vpack.c.b16 %v10826, %v10822
        %v11339 = vpack.c.b16 %v10827, %v10823
        %v11340 = vpack.c.b16 %v10828, %v10824
        %v11341 = vpack.c.b16 %v10829, %v10825
        %11854 = vmatprep.subr.bf16.mxu0 %v10831
        %11855 = vmatpush1.bf16.msra.mxu0 %v10830
        %11856 = vmatprep.subr.bf16.mxu0 %v10835
        %11857 = vmatpush1.bf16.msra.mxu0 %v10834
        %11858 = vmatprep.subr.bf16.mxu0 %v10839
        %11859 = vmatpush1.bf16.msra.mxu0 %v10838
        %11860 = vmatprep.subr.bf16.mxu0 %v10843
        %11861 = vmatpush1.bf16.msra.mxu0 %v10842
        %11862 = vmatprep.subr.bf16.mxu0 %v10847
        %11863 = vmatpush1.bf16.msra.mxu0 %v10846
        %11864 = vmatprep.subr.bf16.mxu0 %v10851
        %11865 = vmatpush1.bf16.msra.mxu0 %v10850
        %11866 = vmatprep.subr.bf16.mxu0 %v10855
        %11867 = vmatpush1.bf16.msra.mxu0 %v10854
        %11868 = vmatprep.subr.bf16.mxu0 %v10859
        %11869 = vmatpush1.bf16.msra.mxu0 %v10858
        %11870 = vmatprep.subr.bf16.mxu0 %v10863
        %11871 = vmatpush1.bf16.msra.mxu0 %v10862
        %11872 = vmatprep.subr.bf16.mxu0 %v10867
        %11873 = vmatpush1.bf16.msra.mxu0 %v10866
        %11874 = vmatprep.subr.bf16.mxu0 %v10871
        %11875 = vmatpush1.bf16.msra.mxu0 %v10870
        %11876 = vmatprep.subr.bf16.mxu0 %v10875
        %11877 = vmatpush1.bf16.msra.mxu0 %v10874
        %11878 = vmatprep.subr.bf16.mxu0 %v10879
        %11879 = vmatpush1.bf16.msra.mxu0 %v10878
        %11880 = vmatprep.subr.bf16.mxu0 %v10883
        %11881 = vmatpush1.bf16.msra.mxu0 %v10882
        %11882 = vmatprep.subr.bf16.mxu0 %v10887
        %11883 = vmatpush1.bf16.msra.mxu0 %v10886
        %11884 = vmatprep.subr.bf16.mxu0 %v10891
        %11885 = vmatpush1.bf16.msra.mxu0 %v10890
        %11886 = vmatprep.mubr.bf16.mxu0 %v8767
        %11887 = vmatmul.mubr.bf16.gmra.mrb[0].mxu0 %v8766
        %v11888 = vpop.f32.mrb[0].mxu0
        %v11889 = vadd.f32 %v5014, %v11888
        %v11890 = vpop.f32.mrb[0].mxu0
        %v11891 = vadd.f32 %v5015, %v11890
        %v11892 = vpop.f32.mrb[0].mxu0
        %v11893 = vpop.f32.mrb[0].mxu0
        %11894 = vdwg.mxu0
        %11895 = vmatprep.subr.bf16.mxu0 %v10895
        %11896 = vmatpush1.bf16.msra.mxu0 %v10894
        %11897 = vmatprep.subr.bf16.mxu0 %v10899
        %11898 = vmatpush1.bf16.msra.mxu0 %v10898
        %11899 = vmatprep.subr.bf16.mxu0 %v10903
        %11900 = vmatpush1.bf16.msra.mxu0 %v10902
        %11901 = vmatprep.subr.bf16.mxu0 %v10907
        %11902 = vmatpush1.bf16.msra.mxu0 %v10906
        %11903 = vmatprep.subr.bf16.mxu0 %v10911
        %11904 = vmatpush1.bf16.msra.mxu0 %v10910
        %11905 = vmatprep.subr.bf16.mxu0 %v10915
        %11906 = vmatpush1.bf16.msra.mxu0 %v10914
        %11907 = vmatprep.subr.bf16.mxu0 %v10919
        %11908 = vmatpush1.bf16.msra.mxu0 %v10918
        %11909 = vmatprep.subr.bf16.mxu0 %v10923
        %11910 = vmatpush1.bf16.msra.mxu0 %v10922
        %11911 = vmatprep.subr.bf16.mxu0 %v10927
        %11912 = vmatpush1.bf16.msra.mxu0 %v10926
        %11913 = vmatprep.subr.bf16.mxu0 %v10931
        %11914 = vmatpush1.bf16.msra.mxu0 %v10930
        %11915 = vmatprep.subr.bf16.mxu0 %v10935
        %11916 = vmatpush1.bf16.msra.mxu0 %v10934
        %11917 = vmatprep.subr.bf16.mxu0 %v10939
        %11918 = vmatpush1.bf16.msra.mxu0 %v10938
        %11919 = vmatprep.subr.bf16.mxu0 %v10943
        %11920 = vmatpush1.bf16.msra.mxu0 %v10942
        %11921 = vmatprep.subr.bf16.mxu0 %v10947
        %11922 = vmatpush1.bf16.msra.mxu0 %v10946
        %11923 = vmatprep.subr.bf16.mxu0 %v10951
        %11924 = vmatpush1.bf16.msra.mxu0 %v10950
        %11925 = vmatprep.subr.bf16.mxu0 %v10955
        %11926 = vmatpush1.bf16.msra.mxu0 %v10954
        %11927 = vmatprep.mubr.bf16.mxu0 %v8769
        %11928 = vmatmul.mubr.bf16.gmra.mrb[0].mxu0 %v8768
        %v11929 = vpop.f32.mrb[0].mxu0
        %v11930 = vadd.f32 %v11889, %v11929
        %v11931 = vpop.f32.mrb[0].mxu0
        %v11932 = vadd.f32 %v11891, %v11931
        %v11933 = vpop.f32.mrb[0].mxu0
        %v11934 = vpop.f32.mrb[0].mxu0
        %11935 = vdwg.mxu0
        %11936 = vmatprep.subr.bf16.mxu0 %v10959
        %11937 = vmatpush1.bf16.msra.mxu0 %v10958
        %11938 = vmatprep.subr.bf16.mxu0 %v10963
        %11939 = vmatpush1.bf16.msra.mxu0 %v10962
        %11940 = vmatprep.subr.bf16.mxu0 %v10967
        %11941 = vmatpush1.bf16.msra.mxu0 %v10966
        %11942 = vmatprep.subr.bf16.mxu0 %v10971
        %11943 = vmatpush1.bf16.msra.mxu0 %v10970
        %11944 = vmatprep.subr.bf16.mxu0 %v10975
        %11945 = vmatpush1.bf16.msra.mxu0 %v10974
        %11946 = vmatprep.subr.bf16.mxu0 %v10979
        %11947 = vmatpush1.bf16.msra.mxu0 %v10978
        %11948 = vmatprep.subr.bf16.mxu0 %v10983
        %11949 = vmatpush1.bf16.msra.mxu0 %v10982
        %11950 = vmatprep.subr.bf16.mxu0 %v10987
        %11951 = vmatpush1.bf16.msra.mxu0 %v10986
        %11952 = vmatprep.subr.bf16.mxu0 %v10991
        %11953 = vmatpush1.bf16.msra.mxu0 %v10990
        %11954 = vmatprep.subr.bf16.mxu0 %v10995
        %11955 = vmatpush1.bf16.msra.mxu0 %v10994
        %11956 = vmatprep.subr.bf16.mxu0 %v10999
        %11957 = vmatpush1.bf16.msra.mxu0 %v10998
        %11958 = vmatprep.subr.bf16.mxu0 %v11003
        %11959 = vmatpush1.bf16.msra.mxu0 %v11002
        %11960 = vmatprep.subr.bf16.mxu0 %v11007
        %11961 = vmatpush1.bf16.msra.mxu0 %v11006
        %11962 = vmatprep.subr.bf16.mxu0 %v11011
        %11963 = vmatpush1.bf16.msra.mxu0 %v11010
        %11964 = vmatprep.subr.bf16.mxu0 %v11015
        %11965 = vmatpush1.bf16.msra.mxu0 %v11014
        %11966 = vmatprep.subr.bf16.mxu0 %v11019
        %11967 = vmatpush1.bf16.msra.mxu0 %v11018
        %11968 = vmatprep.mubr.bf16.mxu0 %v8771
        %11969 = vmatmul.mubr.bf16.gmra.mrb[0].mxu0 %v8770
        %v11970 = vpop.f32.mrb[0].mxu0
        %v11971 = vadd.f32 %v11930, %v11970
        %v11972 = vpop.f32.mrb[0].mxu0
        %v11973 = vadd.f32 %v11932, %v11972
        %v11974 = vpop.f32.mrb[0].mxu0
        %v11975 = vpop.f32.mrb[0].mxu0
        %11976 = vdwg.mxu0
        %11977 = vmatprep.subr.bf16.mxu0 %v11023
        %11978 = vmatpush1.bf16.msra.mxu0 %v11022
        %11979 = vmatprep.subr.bf16.mxu0 %v11027
        %11980 = vmatpush1.bf16.msra.mxu0 %v11026
        %11981 = vmatprep.subr.bf16.mxu0 %v11031
        %11982 = vmatpush1.bf16.msra.mxu0 %v11030
        %11983 = vmatprep.subr.bf16.mxu0 %v11035
        %11984 = vmatpush1.bf16.msra.mxu0 %v11034
        %11985 = vmatprep.subr.bf16.mxu0 %v11039
        %11986 = vmatpush1.bf16.msra.mxu0 %v11038
        %11987 = vmatprep.subr.bf16.mxu0 %v11043
        %11988 = vmatpush1.bf16.msra.mxu0 %v11042
        %11989 = vmatprep.subr.bf16.mxu0 %v11047
        %11990 = vmatpush1.bf16.msra.mxu0 %v11046
        %11991 = vmatprep.subr.bf16.mxu0 %v11051
        %11992 = vmatpush1.bf16.msra.mxu0 %v11050
        %11993 = vmatprep.subr.bf16.mxu0 %v11055
        %11994 = vmatpush1.bf16.msra.mxu0 %v11054
        %11995 = vmatprep.subr.bf16.mxu0 %v11059
        %11996 = vmatpush1.bf16.msra.mxu0 %v11058
        %11997 = vmatprep.subr.bf16.mxu0 %v11063
        %11998 = vmatpush1.bf16.msra.mxu0 %v11062
        %11999 = vmatprep.subr.bf16.mxu0 %v11067
        %12000 = vmatpush1.bf16.msra.mxu0 %v11066
        %12001 = vmatprep.subr.bf16.mxu0 %v11071
        %12002 = vmatpush1.bf16.msra.mxu0 %v11070
        %12003 = vmatprep.subr.bf16.mxu0 %v11075
        %12004 = vmatpush1.bf16.msra.mxu0 %v11074
        %12005 = vmatprep.subr.bf16.mxu0 %v11079
        %12006 = vmatpush1.bf16.msra.mxu0 %v11078
        %12007 = vmatprep.subr.bf16.mxu0 %v11083
        %12008 = vmatpush1.bf16.msra.mxu0 %v11082
        %12009 = vmatprep.mubr.bf16.mxu0 %v8773
        %12010 = vmatmul.mubr.bf16.gmra.mrb[0].mxu0 %v8772
        %v12011 = vpop.f32.mrb[0].mxu0
        %v12012 = vadd.f32 %v11971, %v12011
        %v12013 = vpop.f32.mrb[0].mxu0
        %v12014 = vadd.f32 %v11973, %v12013
        %v12015 = vpop.f32.mrb[0].mxu0
        %v12016 = vpop.f32.mrb[0].mxu0
        %12017 = vdwg.mxu0
        %12018 = vmatprep.subr.bf16.mxu0 %v11087
        %12019 = vmatpush1.bf16.msra.mxu0 %v11086
        %12020 = vmatprep.subr.bf16.mxu0 %v11091
        %12021 = vmatpush1.bf16.msra.mxu0 %v11090
        %12022 = vmatprep.subr.bf16.mxu0 %v11095
        %12023 = vmatpush1.bf16.msra.mxu0 %v11094
        %12024 = vmatprep.subr.bf16.mxu0 %v11099
        %12025 = vmatpush1.bf16.msra.mxu0 %v11098
        %12026 = vmatprep.subr.bf16.mxu0 %v11103
        %12027 = vmatpush1.bf16.msra.mxu0 %v11102
        %12028 = vmatprep.subr.bf16.mxu0 %v11107
        %12029 = vmatpush1.bf16.msra.mxu0 %v11106
        %12030 = vmatprep.subr.bf16.mxu0 %v11111
        %12031 = vmatpush1.bf16.msra.mxu0 %v11110
        %12032 = vmatprep.subr.bf16.mxu0 %v11115
        %12033 = vmatpush1.bf16.msra.mxu0 %v11114
        %12034 = vmatprep.subr.bf16.mxu0 %v11119
        %12035 = vmatpush1.bf16.msra.mxu0 %v11118
        %12036 = vmatprep.subr.bf16.mxu0 %v11123
        %12037 = vmatpush1.bf16.msra.mxu0 %v11122
        %12038 = vmatprep.subr.bf16.mxu0 %v11127
        %12039 = vmatpush1.bf16.msra.mxu0 %v11126
        %12040 = vmatprep.subr.bf16.mxu0 %v11131
        %12041 = vmatpush1.bf16.msra.mxu0 %v11130
        %12042 = vmatprep.subr.bf16.mxu0 %v11135
        %12043 = vmatpush1.bf16.msra.mxu0 %v11134
        %12044 = vmatprep.subr.bf16.mxu0 %v11139
        %12045 = vmatpush1.bf16.msra.mxu0 %v11138
        %12046 = vmatprep.subr.bf16.mxu0 %v11143
        %12047 = vmatpush1.bf16.msra.mxu0 %v11142
        %12048 = vmatprep.subr.bf16.mxu0 %v11147
        %12049 = vmatpush1.bf16.msra.mxu0 %v11146
        %12050 = vmatprep.mubr.bf16.mxu0 %v8775
        %12051 = vmatmul.mubr.bf16.gmra.mrb[0].mxu0 %v8774
        %v12052 = vpop.f32.mrb[0].mxu0
        %v12053 = vadd.f32 %v12012, %v12052
        %v12054 = vpop.f32.mrb[0].mxu0
        %v12055 = vadd.f32 %v12014, %v12054
        %v12056 = vpop.f32.mrb[0].mxu0
        %v12057 = vpop.f32.mrb[0].mxu0
        %12058 = vdwg.mxu0
        %12059 = vmatprep.subr.bf16.mxu0 %v11151
        %12060 = vmatpush1.bf16.msra.mxu0 %v11150
        %12061 = vmatprep.subr.bf16.mxu0 %v11155
        %12062 = vmatpush1.bf16.msra.mxu0 %v11154
        %12063 = vmatprep.subr.bf16.mxu0 %v11159
        %12064 = vmatpush1.bf16.msra.mxu0 %v11158
        %12065 = vmatprep.subr.bf16.mxu0 %v11163
        %12066 = vmatpush1.bf16.msra.mxu0 %v11162
        %12067 = vmatprep.subr.bf16.mxu0 %v11167
        %12068 = vmatpush1.bf16.msra.mxu0 %v11166
        %12069 = vmatprep.subr.bf16.mxu0 %v11171
        %12070 = vmatpush1.bf16.msra.mxu0 %v11170
        %12071 = vmatprep.subr.bf16.mxu0 %v11175
        %12072 = vmatpush1.bf16.msra.mxu0 %v11174
        %12073 = vmatprep.subr.bf16.mxu0 %v11179
        %12074 = vmatpush1.bf16.msra.mxu0 %v11178
        %12075 = vmatprep.subr.bf16.mxu0 %v11183
        %12076 = vmatpush1.bf16.msra.mxu0 %v11182
        %12077 = vmatprep.subr.bf16.mxu0 %v11187
        %12078 = vmatpush1.bf16.msra.mxu0 %v11186
        %12079 = vmatprep.subr.bf16.mxu0 %v11191
        %12080 = vmatpush1.bf16.msra.mxu0 %v11190
        %12081 = vmatprep.subr.bf16.mxu0 %v11195
        %12082 = vmatpush1.bf16.msra.mxu0 %v11194
        %12083 = vmatprep.subr.bf16.mxu0 %v11199
        %12084 = vmatpush1.bf16.msra.mxu0 %v11198
        %12085 = vmatprep.subr.bf16.mxu0 %v11203
        %12086 = vmatpush1.bf16.msra.mxu0 %v11202
        %12087 = vmatprep.subr.bf16.mxu0 %v11207
        %12088 = vmatpush1.bf16.msra.mxu0 %v11206
        %12089 = vmatprep.subr.bf16.mxu0 %v11211
        %12090 = vmatpush1.bf16.msra.mxu0 %v11210
        %12091 = vmatprep.mubr.bf16.mxu0 %v8777
        %12092 = vmatmul.mubr.bf16.gmra.mrb[0].mxu0 %v8776
        %v12093 = vpop.f32.mrb[0].mxu0
        %v12094 = vadd.f32 %v12053, %v12093
        %v12095 = vpop.f32.mrb[0].mxu0
        %v12096 = vadd.f32 %v12055, %v12095
        %v12097 = vpop.f32.mrb[0].mxu0
        %v12098 = vpop.f32.mrb[0].mxu0
        %12099 = vdwg.mxu0
        %12100 = vmatprep.subr.bf16.mxu0 %v11215
        %12101 = vmatpush1.bf16.msra.mxu0 %v11214
        %12102 = vmatprep.subr.bf16.mxu0 %v11219
        %12103 = vmatpush1.bf16.msra.mxu0 %v11218
        %12104 = vmatprep.subr.bf16.mxu0 %v11223
        %12105 = vmatpush1.bf16.msra.mxu0 %v11222
        %12106 = vmatprep.subr.bf16.mxu0 %v11227
        %12107 = vmatpush1.bf16.msra.mxu0 %v11226
        %12108 = vmatprep.subr.bf16.mxu0 %v11231
        %12109 = vmatpush1.bf16.msra.mxu0 %v11230
        %12110 = vmatprep.subr.bf16.mxu0 %v11235
        %12111 = vmatpush1.bf16.msra.mxu0 %v11234
        %12112 = vmatprep.subr.bf16.mxu0 %v11239
        %12113 = vmatpush1.bf16.msra.mxu0 %v11238
        %12114 = vmatprep.subr.bf16.mxu0 %v11243
        %12115 = vmatpush1.bf16.msra.mxu0 %v11242
        %12116 = vmatprep.subr.bf16.mxu0 %v11247
        %12117 = vmatpush1.bf16.msra.mxu0 %v11246
        %12118 = vmatprep.subr.bf16.mxu0 %v11251
        %12119 = vmatpush1.bf16.msra.mxu0 %v11250
        %12120 = vmatprep.subr.bf16.mxu0 %v11255
        %12121 = vmatpush1.bf16.msra.mxu0 %v11254
        %12122 = vmatprep.subr.bf16.mxu0 %v11259
        %12123 = vmatpush1.bf16.msra.mxu0 %v11258
        %12124 = vmatprep.subr.bf16.mxu0 %v11263
        %12125 = vmatpush1.bf16.msra.mxu0 %v11262
        %12126 = vmatprep.subr.bf16.mxu0 %v11267
        %12127 = vmatpush1.bf16.msra.mxu0 %v11266
        %12128 = vmatprep.subr.bf16.mxu0 %v11271
        %12129 = vmatpush1.bf16.msra.mxu0 %v11270
        %12130 = vmatprep.subr.bf16.mxu0 %v11275
        %12131 = vmatpush1.bf16.msra.mxu0 %v11274
        %12132 = vmatprep.mubr.bf16.mxu0 %v8779
        %12133 = vmatmul.mubr.bf16.gmra.mrb[0].mxu0 %v8778
        %v12134 = vpop.f32.mrb[0].mxu0
        %v12135 = vadd.f32 %v12094, %v12134
        %v12136 = vpop.f32.mrb[0].mxu0
        %v12137 = vadd.f32 %v12096, %v12136
        %v12138 = vpop.f32.mrb[0].mxu0
        %v12139 = vpop.f32.mrb[0].mxu0
        %12140 = vdwg.mxu0
        %12141 = vmatprep.subr.bf16.mxu0 %v11279
        %12142 = vmatpush1.bf16.msra.mxu0 %v11278
        %12143 = vmatprep.subr.bf16.mxu0 %v11283
        %12144 = vmatpush1.bf16.msra.mxu0 %v11282
        %12145 = vmatprep.subr.bf16.mxu0 %v11287
        %12146 = vmatpush1.bf16.msra.mxu0 %v11286
        %12147 = vmatprep.subr.bf16.mxu0 %v11291
        %12148 = vmatpush1.bf16.msra.mxu0 %v11290
        %12149 = vmatprep.subr.bf16.mxu0 %v11295
        %12150 = vmatpush1.bf16.msra.mxu0 %v11294
        %12151 = vmatprep.subr.bf16.mxu0 %v11299
        %12152 = vmatpush1.bf16.msra.mxu0 %v11298
        %12153 = vmatprep.subr.bf16.mxu0 %v11303
        %12154 = vmatpush1.bf16.msra.mxu0 %v11302
        %12155 = vmatprep.subr.bf16.mxu0 %v11307
        %12156 = vmatpush1.bf16.msra.mxu0 %v11306
        %12157 = vmatprep.subr.bf16.mxu0 %v11311
        %12158 = vmatpush1.bf16.msra.mxu0 %v11310
        %12159 = vmatprep.subr.bf16.mxu0 %v11315
        %12160 = vmatpush1.bf16.msra.mxu0 %v11314
        %12161 = vmatprep.subr.bf16.mxu0 %v11319
        %12162 = vmatpush1.bf16.msra.mxu0 %v11318
        %12163 = vmatprep.subr.bf16.mxu0 %v11323
        %12164 = vmatpush1.bf16.msra.mxu0 %v11322
        %12165 = vmatprep.subr.bf16.mxu0 %v11327
        %12166 = vmatpush1.bf16.msra.mxu0 %v11326
        %12167 = vmatprep.subr.bf16.mxu0 %v11331
        %12168 = vmatpush1.bf16.msra.mxu0 %v11330
        %12169 = vmatprep.subr.bf16.mxu0 %v11335
        %12170 = vmatpush1.bf16.msra.mxu0 %v11334
        %12171 = vmatprep.subr.bf16.mxu0 %v11339
        %12172 = vmatpush1.bf16.msra.mxu0 %v11338
        %12173 = vmatprep.mubr.bf16.mxu0 %v8781
        %12174 = vmatmul.mubr.bf16.gmra.mrb[0].mxu0 %v8780
        %v12175 = vpop.f32.mrb[0].mxu0
        %v12176 = vadd.f32 %v12135, %v12175
        %v12177 = vpop.f32.mrb[0].mxu0
        %v12178 = vadd.f32 %v12137, %v12177
        %v12179 = vpop.f32.mrb[0].mxu0
        %v12180 = vpop.f32.mrb[0].mxu0
        %12181 = vdwg.mxu0
        %12182 = vmatprep.subr.bf16.mxu0 %v10833
        %12183 = vmatpush1.bf16.msra.mxu0 %v10832
        %12184 = vmatprep.subr.bf16.mxu0 %v10837
        %12185 = vmatpush1.bf16.msra.mxu0 %v10836
        %12186 = vmatprep.subr.bf16.mxu0 %v10841
        %12187 = vmatpush1.bf16.msra.mxu0 %v10840
        %12188 = vmatprep.subr.bf16.mxu0 %v10845
        %12189 = vmatpush1.bf16.msra.mxu0 %v10844
        %12190 = vmatprep.subr.bf16.mxu0 %v10849
        %12191 = vmatpush1.bf16.msra.mxu0 %v10848
        %12192 = vmatprep.subr.bf16.mxu0 %v10853
        %12193 = vmatpush1.bf16.msra.mxu0 %v10852
        %12194 = vmatprep.subr.bf16.mxu0 %v10857
        %12195 = vmatpush1.bf16.msra.mxu0 %v10856
        %12196 = vmatprep.subr.bf16.mxu0 %v10861
        %12197 = vmatpush1.bf16.msra.mxu0 %v10860
        %12198 = vmatprep.subr.bf16.mxu0 %v10865
        %12199 = vmatpush1.bf16.msra.mxu0 %v10864
        %12200 = vmatprep.subr.bf16.mxu0 %v10869
        %12201 = vmatpush1.bf16.msra.mxu0 %v10868
        %12202 = vmatprep.subr.bf16.mxu0 %v10873
        %12203 = vmatpush1.bf16.msra.mxu0 %v10872
        %12204 = vmatprep.subr.bf16.mxu0 %v10877
        %12205 = vmatpush1.bf16.msra.mxu0 %v10876
        %12206 = vmatprep.subr.bf16.mxu0 %v10881
        %12207 = vmatpush1.bf16.msra.mxu0 %v10880
        %12208 = vmatprep.subr.bf16.mxu0 %v10885
        %12209 = vmatpush1.bf16.msra.mxu0 %v10884
        %12210 = vmatprep.subr.bf16.mxu0 %v10889
        %12211 = vmatpush1.bf16.msra.mxu0 %v10888
        %12212 = vmatprep.subr.bf16.mxu0 %v10893
        %12213 = vmatpush1.bf16.msra.mxu0 %v10892
        %12214 = vmatprep.mubr.bf16.mxu0 %v8767
        %12215 = vmatmul.mubr.bf16.gmra.mrb[0].mxu0 %v8766
        %v12216 = vpop.f32.mrb[0].mxu0
        %v12217 = vadd.f32 %v5016, %v12216
        %v12218 = vpop.f32.mrb[0].mxu0
        %v12219 = vadd.f32 %v5017, %v12218
        %v12220 = vpop.f32.mrb[0].mxu0
        %v12221 = vpop.f32.mrb[0].mxu0
        %12222 = vdwg.mxu0
        %12223 = vmatprep.subr.bf16.mxu0 %v10897
        %12224 = vmatpush1.bf16.msra.mxu0 %v10896
        %12225 = vmatprep.subr.bf16.mxu0 %v10901
        %12226 = vmatpush1.bf16.msra.mxu0 %v10900
        %12227 = vmatprep.subr.bf16.mxu0 %v10905
        %12228 = vmatpush1.bf16.msra.mxu0 %v10904
        %12229 = vmatprep.subr.bf16.mxu0 %v10909
        %12230 = vmatpush1.bf16.msra.mxu0 %v10908
        %12231 = vmatprep.subr.bf16.mxu0 %v10913
        %12232 = vmatpush1.bf16.msra.mxu0 %v10912
        %12233 = vmatprep.subr.bf16.mxu0 %v10917
        %12234 = vmatpush1.bf16.msra.mxu0 %v10916
        %12235 = vmatprep.subr.bf16.mxu0 %v10921
        %12236 = vmatpush1.bf16.msra.mxu0 %v10920
        %12237 = vmatprep.subr.bf16.mxu0 %v10925
        %12238 = vmatpush1.bf16.msra.mxu0 %v10924
        %12239 = vmatprep.subr.bf16.mxu0 %v10929
        %12240 = vmatpush1.bf16.msra.mxu0 %v10928
        %12241 = vmatprep.subr.bf16.mxu0 %v10933
        %12242 = vmatpush1.bf16.msra.mxu0 %v10932
        %12243 = vmatprep.subr.bf16.mxu0 %v10937
        %12244 = vmatpush1.bf16.msra.mxu0 %v10936
        %12245 = vmatprep.subr.bf16.mxu0 %v10941
        %12246 = vmatpush1.bf16.msra.mxu0 %v10940
        %12247 = vmatprep.subr.bf16.mxu0 %v10945
        %12248 = vmatpush1.bf16.msra.mxu0 %v10944
        %12249 = vmatprep.subr.bf16.mxu0 %v10949
        %12250 = vmatpush1.bf16.msra.mxu0 %v10948
        %12251 = vmatprep.subr.bf16.mxu0 %v10953
        %12252 = vmatpush1.bf16.msra.mxu0 %v10952
        %12253 = vmatprep.subr.bf16.mxu0 %v10957
        %12254 = vmatpush1.bf16.msra.mxu0 %v10956
        %12255 = vmatprep.mubr.bf16.mxu0 %v8769
        %12256 = vmatmul.mubr.bf16.gmra.mrb[0].mxu0 %v8768
        %v12257 = vpop.f32.mrb[0].mxu0
        %v12258 = vadd.f32 %v12217, %v12257
        %v12259 = vpop.f32.mrb[0].mxu0
        %v12260 = vadd.f32 %v12219, %v12259
        %v12261 = vpop.f32.mrb[0].mxu0
        %v12262 = vpop.f32.mrb[0].mxu0
        %12263 = vdwg.mxu0
        %12264 = vmatprep.subr.bf16.mxu0 %v10961
        %12265 = vmatpush1.bf16.msra.mxu0 %v10960
        %12266 = vmatprep.subr.bf16.mxu0 %v10965
        %12267 = vmatpush1.bf16.msra.mxu0 %v10964
        %12268 = vmatprep.subr.bf16.mxu0 %v10969
        %12269 = vmatpush1.bf16.msra.mxu0 %v10968
        %12270 = vmatprep.subr.bf16.mxu0 %v10973
        %12271 = vmatpush1.bf16.msra.mxu0 %v10972
        %12272 = vmatprep.subr.bf16.mxu0 %v10977
        %12273 = vmatpush1.bf16.msra.mxu0 %v10976
        %12274 = vmatprep.subr.bf16.mxu0 %v10981
        %12275 = vmatpush1.bf16.msra.mxu0 %v10980
        %12276 = vmatprep.subr.bf16.mxu0 %v10985
        %12277 = vmatpush1.bf16.msra.mxu0 %v10984
        %12278 = vmatprep.subr.bf16.mxu0 %v10989
        %12279 = vmatpush1.bf16.msra.mxu0 %v10988
        %12280 = vmatprep.subr.bf16.mxu0 %v10993
        %12281 = vmatpush1.bf16.msra.mxu0 %v10992
        %12282 = vmatprep.subr.bf16.mxu0 %v10997
        %12283 = vmatpush1.bf16.msra.mxu0 %v10996
        %12284 = vmatprep.subr.bf16.mxu0 %v11001
        %12285 = vmatpush1.bf16.msra.mxu0 %v11000
        %12286 = vmatprep.subr.bf16.mxu0 %v11005
        %12287 = vmatpush1.bf16.msra.mxu0 %v11004
        %12288 = vmatprep.subr.bf16.mxu0 %v11009
        %12289 = vmatpush1.bf16.msra.mxu0 %v11008
        %12290 = vmatprep.subr.bf16.mxu0 %v11013
        %12291 = vmatpush1.bf16.msra.mxu0 %v11012
        %12292 = vmatprep.subr.bf16.mxu0 %v11017
        %12293 = vmatpush1.bf16.msra.mxu0 %v11016
        %12294 = vmatprep.subr.bf16.mxu0 %v11021
        %12295 = vmatpush1.bf16.msra.mxu0 %v11020
        %12296 = vmatprep.mubr.bf16.mxu0 %v8771
        %12297 = vmatmul.mubr.bf16.gmra.mrb[0].mxu0 %v8770
        %v12298 = vpop.f32.mrb[0].mxu0
        %v12299 = vadd.f32 %v12258, %v12298
        %v12300 = vpop.f32.mrb[0].mxu0
        %v12301 = vadd.f32 %v12260, %v12300
        %v12302 = vpop.f32.mrb[0].mxu0
        %v12303 = vpop.f32.mrb[0].mxu0
        %12304 = vdwg.mxu0
        %12305 = vmatprep.subr.bf16.mxu0 %v11025
        %12306 = vmatpush1.bf16.msra.mxu0 %v11024
        %12307 = vmatprep.subr.bf16.mxu0 %v11029
        %12308 = vmatpush1.bf16.msra.mxu0 %v11028
        %12309 = vmatprep.subr.bf16.mxu0 %v11033
        %12310 = vmatpush1.bf16.msra.mxu0 %v11032
        %12311 = vmatprep.subr.bf16.mxu0 %v11037
        %12312 = vmatpush1.bf16.msra.mxu0 %v11036
        %12313 = vmatprep.subr.bf16.mxu0 %v11041
        %12314 = vmatpush1.bf16.msra.mxu0 %v11040
        %12315 = vmatprep.subr.bf16.mxu0 %v11045
        %12316 = vmatpush1.bf16.msra.mxu0 %v11044
        %12317 = vmatprep.subr.bf16.mxu0 %v11049
        %12318 = vmatpush1.bf16.msra.mxu0 %v11048
        %12319 = vmatprep.subr.bf16.mxu0 %v11053
        %12320 = vmatpush1.bf16.msra.mxu0 %v11052
        %12321 = vmatprep.subr.bf16.mxu0 %v11057
        %12322 = vmatpush1.bf16.msra.mxu0 %v11056
        %12323 = vmatprep.subr.bf16.mxu0 %v11061
        %12324 = vmatpush1.bf16.msra.mxu0 %v11060
        %12325 = vmatprep.subr.bf16.mxu0 %v11065
        %12326 = vmatpush1.bf16.msra.mxu0 %v11064
        %12327 = vmatprep.subr.bf16.mxu0 %v11069
        %12328 = vmatpush1.bf16.msra.mxu0 %v11068
        %12329 = vmatprep.subr.bf16.mxu0 %v11073
        %12330 = vmatpush1.bf16.msra.mxu0 %v11072
        %12331 = vmatprep.subr.bf16.mxu0 %v11077
        %12332 = vmatpush1.bf16.msra.mxu0 %v11076
        %12333 = vmatprep.subr.bf16.mxu0 %v11081
        %12334 = vmatpush1.bf16.msra.mxu0 %v11080
        %12335 = vmatprep.subr.bf16.mxu0 %v11085
        %12336 = vmatpush1.bf16.msra.mxu0 %v11084
        %12337 = vmatprep.mubr.bf16.mxu0 %v8773
        %12338 = vmatmul.mubr.bf16.gmra.mrb[0].mxu0 %v8772
        %v12339 = vpop.f32.mrb[0].mxu0
        %v12340 = vadd.f32 %v12299, %v12339
        %v12341 = vpop.f32.mrb[0].mxu0
        %v12342 = vadd.f32 %v12301, %v12341
        %v12343 = vpop.f32.mrb[0].mxu0
        %v12344 = vpop.f32.mrb[0].mxu0
        %12345 = vdwg.mxu0
        %12346 = vmatprep.subr.bf16.mxu0 %v11089
        %12347 = vmatpush1.bf16.msra.mxu0 %v11088
        %12348 = vmatprep.subr.bf16.mxu0 %v11093
        %12349 = vmatpush1.bf16.msra.mxu0 %v11092
        %12350 = vmatprep.subr.bf16.mxu0 %v11097
        %12351 = vmatpush1.bf16.msra.mxu0 %v11096
        %12352 = vmatprep.subr.bf16.mxu0 %v11101
        %12353 = vmatpush1.bf16.msra.mxu0 %v11100
        %12354 = vmatprep.subr.bf16.mxu0 %v11105
        %12355 = vmatpush1.bf16.msra.mxu0 %v11104
        %12356 = vmatprep.subr.bf16.mxu0 %v11109
        %12357 = vmatpush1.bf16.msra.mxu0 %v11108
        %12358 = vmatprep.subr.bf16.mxu0 %v11113
        %12359 = vmatpush1.bf16.msra.mxu0 %v11112
        %12360 = vmatprep.subr.bf16.mxu0 %v11117
        %12361 = vmatpush1.bf16.msra.mxu0 %v11116
        %12362 = vmatprep.subr.bf16.mxu0 %v11121
        %12363 = vmatpush1.bf16.msra.mxu0 %v11120
        %12364 = vmatprep.subr.bf16.mxu0 %v11125
        %12365 = vmatpush1.bf16.msra.mxu0 %v11124
        %12366 = vmatprep.subr.bf16.mxu0 %v11129
        %12367 = vmatpush1.bf16.msra.mxu0 %v11128
        %12368 = vmatprep.subr.bf16.mxu0 %v11133
        %12369 = vmatpush1.bf16.msra.mxu0 %v11132
        %12370 = vmatprep.subr.bf16.mxu0 %v11137
        %12371 = vmatpush1.bf16.msra.mxu0 %v11136
        %12372 = vmatprep.subr.bf16.mxu0 %v11141
        %12373 = vmatpush1.bf16.msra.mxu0 %v11140
        %12374 = vmatprep.subr.bf16.mxu0 %v11145
        %12375 = vmatpush1.bf16.msra.mxu0 %v11144
        %12376 = vmatprep.subr.bf16.mxu0 %v11149
        %12377 = vmatpush1.bf16.msra.mxu0 %v11148
        %12378 = vmatprep.mubr.bf16.mxu0 %v8775
        %12379 = vmatmul.mubr.bf16.gmra.mrb[0].mxu0 %v8774
        %v12380 = vpop.f32.mrb[0].mxu0
        %v12381 = vadd.f32 %v12340, %v12380
        %v12382 = vpop.f32.mrb[0].mxu0
        %v12383 = vadd.f32 %v12342, %v12382
        %v12384 = vpop.f32.mrb[0].mxu0
        %v12385 = vpop.f32.mrb[0].mxu0
        %12386 = vdwg.mxu0
        %12387 = vmatprep.subr.bf16.mxu0 %v11153
        %12388 = vmatpush1.bf16.msra.mxu0 %v11152
        %12389 = vmatprep.subr.bf16.mxu0 %v11157
        %12390 = vmatpush1.bf16.msra.mxu0 %v11156
        %12391 = vmatprep.subr.bf16.mxu0 %v11161
        %12392 = vmatpush1.bf16.msra.mxu0 %v11160
        %12393 = vmatprep.subr.bf16.mxu0 %v11165
        %12394 = vmatpush1.bf16.msra.mxu0 %v11164
        %12395 = vmatprep.subr.bf16.mxu0 %v11169
        %12396 = vmatpush1.bf16.msra.mxu0 %v11168
        %12397 = vmatprep.subr.bf16.mxu0 %v11173
        %12398 = vmatpush1.bf16.msra.mxu0 %v11172
        %12399 = vmatprep.subr.bf16.mxu0 %v11177
        %12400 = vmatpush1.bf16.msra.mxu0 %v11176
        %12401 = vmatprep.subr.bf16.mxu0 %v11181
        %12402 = vmatpush1.bf16.msra.mxu0 %v11180
        %12403 = vmatprep.subr.bf16.mxu0 %v11185
        %12404 = vmatpush1.bf16.msra.mxu0 %v11184
        %12405 = vmatprep.subr.bf16.mxu0 %v11189
        %12406 = vmatpush1.bf16.msra.mxu0 %v11188
        %12407 = vmatprep.subr.bf16.mxu0 %v11193
        %12408 = vmatpush1.bf16.msra.mxu0 %v11192
        %12409 = vmatprep.subr.bf16.mxu0 %v11197
        %12410 = vmatpush1.bf16.msra.mxu0 %v11196
        %12411 = vmatprep.subr.bf16.mxu0 %v11201
        %12412 = vmatpush1.bf16.msra.mxu0 %v11200
        %12413 = vmatprep.subr.bf16.mxu0 %v11205
        %12414 = vmatpush1.bf16.msra.mxu0 %v11204
        %12415 = vmatprep.subr.bf16.mxu0 %v11209
        %12416 = vmatpush1.bf16.msra.mxu0 %v11208
        %12417 = vmatprep.subr.bf16.mxu0 %v11213
        %12418 = vmatpush1.bf16.msra.mxu0 %v11212
        %12419 = vmatprep.mubr.bf16.mxu0 %v8777
        %12420 = vmatmul.mubr.bf16.gmra.mrb[0].mxu0 %v8776
        %v12421 = vpop.f32.mrb[0].mxu0
        %v12422 = vadd.f32 %v12381, %v12421
        %v12423 = vpop.f32.mrb[0].mxu0
        %v12424 = vadd.f32 %v12383, %v12423
        %v12425 = vpop.f32.mrb[0].mxu0
        %v12426 = vpop.f32.mrb[0].mxu0
        %12427 = vdwg.mxu0
        %12428 = vmatprep.subr.bf16.mxu0 %v11217
        %12429 = vmatpush1.bf16.msra.mxu0 %v11216
        %12430 = vmatprep.subr.bf16.mxu0 %v11221
        %12431 = vmatpush1.bf16.msra.mxu0 %v11220
        %12432 = vmatprep.subr.bf16.mxu0 %v11225
        %12433 = vmatpush1.bf16.msra.mxu0 %v11224
        %12434 = vmatprep.subr.bf16.mxu0 %v11229
        %12435 = vmatpush1.bf16.msra.mxu0 %v11228
        %12436 = vmatprep.subr.bf16.mxu0 %v11233
        %12437 = vmatpush1.bf16.msra.mxu0 %v11232
        %12438 = vmatprep.subr.bf16.mxu0 %v11237
        %12439 = vmatpush1.bf16.msra.mxu0 %v11236
        %12440 = vmatprep.subr.bf16.mxu0 %v11241
        %12441 = vmatpush1.bf16.msra.mxu0 %v11240
        %12442 = vmatprep.subr.bf16.mxu0 %v11245
        %12443 = vmatpush1.bf16.msra.mxu0 %v11244
        %12444 = vmatprep.subr.bf16.mxu0 %v11249
        %12445 = vmatpush1.bf16.msra.mxu0 %v11248
        %12446 = vmatprep.subr.bf16.mxu0 %v11253
        %12447 = vmatpush1.bf16.msra.mxu0 %v11252
        %12448 = vmatprep.subr.bf16.mxu0 %v11257
        %12449 = vmatpush1.bf16.msra.mxu0 %v11256
        %12450 = vmatprep.subr.bf16.mxu0 %v11261
        %12451 = vmatpush1.bf16.msra.mxu0 %v11260
        %12452 = vmatprep.subr.bf16.mxu0 %v11265
        %12453 = vmatpush1.bf16.msra.mxu0 %v11264
        %12454 = vmatprep.subr.bf16.mxu0 %v11269
        %12455 = vmatpush1.bf16.msra.mxu0 %v11268
        %12456 = vmatprep.subr.bf16.mxu0 %v11273
        %12457 = vmatpush1.bf16.msra.mxu0 %v11272
        %12458 = vmatprep.subr.bf16.mxu0 %v11277
        %12459 = vmatpush1.bf16.msra.mxu0 %v11276
        %12460 = vmatprep.mubr.bf16.mxu0 %v8779
        %12461 = vmatmul.mubr.bf16.gmra.mrb[0].mxu0 %v8778
        %v12462 = vpop.f32.mrb[0].mxu0
        %v12463 = vadd.f32 %v12422, %v12462
        %v12464 = vpop.f32.mrb[0].mxu0
        %v12465 = vadd.f32 %v12424, %v12464
        %v12466 = vpop.f32.mrb[0].mxu0
        %v12467 = vpop.f32.mrb[0].mxu0
        %12468 = vdwg.mxu0
        %12469 = vmatprep.subr.bf16.mxu0 %v11281
        %12470 = vmatpush1.bf16.msra.mxu0 %v11280
        %12471 = vmatprep.subr.bf16.mxu0 %v11285
        %12472 = vmatpush1.bf16.msra.mxu0 %v11284
        %12473 = vmatprep.subr.bf16.mxu0 %v11289
        %12474 = vmatpush1.bf16.msra.mxu0 %v11288
        %12475 = vmatprep.subr.bf16.mxu0 %v11293
        %12476 = vmatpush1.bf16.msra.mxu0 %v11292
        %12477 = vmatprep.subr.bf16.mxu0 %v11297
        %12478 = vmatpush1.bf16.msra.mxu0 %v11296
        %12479 = vmatprep.subr.bf16.mxu0 %v11301
        %12480 = vmatpush1.bf16.msra.mxu0 %v11300
        %12481 = vmatprep.subr.bf16.mxu0 %v11305
        %12482 = vmatpush1.bf16.msra.mxu0 %v11304
        %12483 = vmatprep.subr.bf16.mxu0 %v11309
        %12484 = vmatpush1.bf16.msra.mxu0 %v11308
        %12485 = vmatprep.subr.bf16.mxu0 %v11313
        %12486 = vmatpush1.bf16.msra.mxu0 %v11312
        %12487 = vmatprep.subr.bf16.mxu0 %v11317
        %12488 = vmatpush1.bf16.msra.mxu0 %v11316
        %12489 = vmatprep.subr.bf16.mxu0 %v11321
        %12490 = vmatpush1.bf16.msra.mxu0 %v11320
        %12491 = vmatprep.subr.bf16.mxu0 %v11325
        %12492 = vmatpush1.bf16.msra.mxu0 %v11324
        %12493 = vmatprep.subr.bf16.mxu0 %v11329
        %12494 = vmatpush1.bf16.msra.mxu0 %v11328
        %12495 = vmatprep.subr.bf16.mxu0 %v11333
        %12496 = vmatpush1.bf16.msra.mxu0 %v11332
        %12497 = vmatprep.subr.bf16.mxu0 %v11337
        %12498 = vmatpush1.bf16.msra.mxu0 %v11336
        %12499 = vmatprep.subr.bf16.mxu0 %v11341
        %12500 = vmatpush1.bf16.msra.mxu0 %v11340
        %12501 = vmatprep.mubr.bf16.mxu0 %v8781
        %12502 = vmatmul.mubr.bf16.gmra.mrb[0].mxu0 %v8780
        %v12503 = vpop.f32.mrb[0].mxu0
        %v12504 = vadd.f32 %v12463, %v12503
        %v12505 = vpop.f32.mrb[0].mxu0
        %v12506 = vadd.f32 %v12465, %v12505
        %v12507 = vpop.f32.mrb[0].mxu0
        %v12508 = vpop.f32.mrb[0].mxu0
        %12509 = vdwg.mxu0
        %v12510 = vadd.f32 %v12176, %v12178
        %v12511 = vadd.f32 %v12510, %v12504
        %v12512 = vadd.f32 %v12511, %v12506
        %12513 = vadd.xlane.f32.xlu0 %v12512
        %v12514 = vpop.xlane.xlu0 %12513
        %v12515 = vmul.f32 %v12514, %v4996
        %v12516 = vsub.f32 %v12176, %v12515
        %v12517 = vsub.f32 %v12178, %v12515
        %v12518 = vsub.f32 %v12504, %v12515
        %v12519 = vsub.f32 %v12506, %v12515
        %v12520 = vmul.f32 %v12516, %v12516
        %v12521 = vmul.f32 %v12517, %v12517
        %v12522 = vmul.f32 %v12518, %v12518
        %v12523 = vmul.f32 %v12519, %v12519
        %v12524 = vadd.f32 %v12520, %v12521
        %v12525 = vadd.f32 %v12524, %v12522
        %v12526 = vadd.f32 %v12525, %v12523
        %12527 = vadd.xlane.f32.xlu0 %v12526
        %v12528 = vpop.xlane.xlu0 %12527
        %v12529 = vmul.f32 %v12528, %v4996
        %v12530 = vadd.f32 %v12529, 1e-05
        %v12531 = vrsqrt.pop %v12530
        %v12532 = vmul.f32 %v12516, %v12531
        %v12533 = vmul.f32 %v12517, %v12531
        %v12534 = vmul.f32 %v12518, %v12531
        %v12535 = vmul.f32 %v12519, %v12531
        %12536 = vst [vmem:[%s288] sm:$0xff] %v12532
        %12537 = vst [vmem:[%s288 + $0x8] sm:$0xff] %v12533
        %12538 = vst [vmem:[%s288 + $0x10] sm:$0xff] %v12534
        %12539 = vst [vmem:[%s288 + $0x18] sm:$0xff] %v12535
        %s12540 = sand.u32 %s169, 1
        %s12541 = scalar_lea.sflag [#allocation4], %s12540
        %s12542 = sand.u32 %s169, 1
        %s12543 = smul.addr %s12542, 32
        %s12544 = scalar_lea.vmem [#allocation3], %s12543
        %s12545 = sand.u32 %s195, 1
        %s12546 = scalar_lea.sflag [#allocation6], %s12545
        %s12547 = sand.u32 %s195, 1
        %s12548 = smul.addr %s12547, 64
        %s12549 = scalar_lea.vmem [#allocation5], %s12548
        // Predicated region
        $region45: #{encoder_layer.1} parent=43 // pred_check
          %p12550 = pneg %p179
        $region46: #{encoder_layer.1} parent=43 // pred_check_branch
          %12552 = sbr.rel (%p12550) target = $region48
        $region47: #{encoder_layer.1} parent=43 // pred_region
          %s12554 = ssub.s32 512, 512
          %12555 = vsyncadd %s12541, %s12554
          %s12556 = smul.addr %s25, 4
          %s12557 = smul.addr %s12556, 128
          %s12558 = scalar_lea.hbm %s6, %s12557
          %s12560 = sshll.u32 %s12544, 4
          %s12561 = int_to_ptr.vmem [resolvable:$true] %s12560
          %12563 = dma.vmem_to_hbm [thread:$0]  %s12561, 512, %s12558, %s12541
        $region48: #{encoder_layer.1} parent=43 // pred_fallthru
          _
        // Predicated region
        $region49: #{encoder_layer.1} parent=43 // pred_check
          %p12564 = pneg %p205
        $region50: #{encoder_layer.1} parent=43 // pred_check_branch
          %12566 = sbr.rel (%p12564) target = $region52
        $region51: #{encoder_layer.1} parent=43 // pred_region
          %s12568 = ssub.s32 1024, 1024
          %12569 = vsyncadd %s12546, %s12568
          %s12570 = smul.addr %s25, 8
          %s12571 = smul.addr %s12570, 128
          %s12572 = scalar_lea.hbm %s7, %s12571
          %s12573 = sshll.u32 %s12549, 4
          %s12574 = int_to_ptr.vmem [resolvable:$true] %s12573
          %12579 = dma.vmem_to_hbm [thread:$0]  %s12574, 1024, %s12572, %s12546, 128, 128, 8
        $region52: #{encoder_layer.1} parent=43 // pred_fallthru
          _
      $region44: #{encoder_layer.1} parent=5 // pred_fallthru
        _
      %p12580 = scmp.le.s32.totalorder 2, %s20
      // Predicated region
      $region53: #{encoder_layer.1} parent=5 // pred_check
        %p12581 = pneg %p12580
      $region54: #{encoder_layer.1} parent=5 // pred_check_branch
        %12583 = sbr.rel (%p12581) target = $region56
      $region55: #{encoder_layer.1} parent=5 // pred_region
        %s12584 = ssub.s32 %s20, 2
        // Predicated region
        $region57: #{encoder_layer.1} parent=55 // pred_check
          %p12585 = pneg %p185
        $region58: #{encoder_layer.1} parent=55 // pred_check_branch
          %12587 = sbr.rel (%p12585) target = $region60
        $region59: #{encoder_layer.1} parent=55 // pred_region
          %s12588 = sand.u32 %s170, 1
          %s12589 = scalar_lea.sflag [#allocation4], %s12588
          %s12590 = sand.u32 %s170, 1
          %s12591 = smul.addr %s12590, 32
          %s12592 = scalar_lea.vmem [#allocation3], %s12591
          %12593 = dma.done %s12589, 512
        $region60: #{encoder_layer.1} parent=55 // pred_fallthru
          _
        // Predicated region
        $region61: #{encoder_layer.1} parent=55 // pred_check
          %p12594 = pneg %p211
        $region62: #{encoder_layer.1} parent=55 // pred_check_branch
          %12596 = sbr.rel (%p12594) target = $region64
        $region63: #{encoder_layer.1} parent=55 // pred_region
          %s12597 = sand.u32 %s196, 1
          %s12598 = scalar_lea.sflag [#allocation6], %s12597
          %s12599 = sand.u32 %s196, 1
          %s12600 = smul.addr %s12599, 64
          %s12601 = scalar_lea.vmem [#allocation5], %s12600
          %12602 = dma.done %s12598, 1024
        $region64: #{encoder_layer.1} parent=55 // pred_fallthru
          _
      $region56: #{encoder_layer.1} parent=5 // pred_fallthru
        _
    $region6: #{encoder_layer.1} parent=1 // loop_footer
      %s24 = sadd.s32 1, %s20
    $region7: #{encoder_layer.1} parent=1 // loop_footer_branch
      %19 = sbr.rel target = $region3
    $region8: #{encoder_layer.1} parent=1 // loop_exit
      _
    %12603 = vsyncpa [#allocation4], 1
    %s12604 = scalar_lea.sflag [#allocation4], 1
    %12605 = vsyncpa %s12604, 1
    %12606 = vsyncpa [#allocation6], 1
    %s12607 = scalar_lea.sflag [#allocation6], 1
    %12608 = vsyncpa %s12607, 1

</llo_original>
